<compile_context>
chip_gen: v7x
topology: tpu7x:2x2x1
jax: 0.10.0
libtpu: 0.0.40
codegen_flags: <defaults>
</compile_context>

<pallas_src>
import jax
import jax.numpy as jnp
import numpy as np
from jax import lax
from jax.experimental import pallas as pl
from jax.experimental.pallas import tpu as pltpu

LATENT_DIM = 32            # power of two; in-kernel index math relies on it
LOG2_LATENT = 5
C_MID = 16
H_MID = 32
W_MID = 32
H_OUT = 2 * H_MID          # 64
W_OUT = 2 * W_MID          # 64
FC_OUT = C_MID * H_MID * W_MID   # 16384

assert LATENT_DIM == 32 and (LATENT_DIM & (LATENT_DIM - 1)) == 0


# ----------------------------------------------------------------------------
# Fused kernel: one batch element per grid step.
# ----------------------------------------------------------------------------
def _decoder_kernel(z_ref, wfc_ref, bfc_ref, u_ref, vt_ref, wtap_ref, bdc_ref,
                    o_ref):
    f32 = jnp.float32
    b = pl.program_id(0)
    z_row = z_ref[pl.ds(b, 1), :]                        # (1, 32)

    # ---- fc:  X_all[m, c*32+n] = sum_k z[k]*Wfc[c,m,n,k] + bfc[c,m,n] ----
    # Build Z_blk[m, m*32+k] = z[k] (block-diagonal replication of z); a single
    # MXU matmul against the (m,k)-major fc weight then yields the feature map
    # with spatial rows on sublanes and (channel, col) lane-dense on 512 lanes.
    shape_zb = (H_MID, H_MID * LATENT_DIM)               # (32, 1024)
    row = lax.broadcasted_iota(jnp.int32, shape_zb, 0)
    col = lax.broadcasted_iota(jnp.int32, shape_zb, 1)
    tsel = (jnp.bitwise_and(col, LATENT_DIM - 1) == row).astype(f32)
    z_tiled = jnp.dot(z_row, tsel, preferred_element_type=f32)      # (1, 1024)
    blockmask = (jnp.right_shift(col, LOG2_LATENT) == row).astype(f32)
    z_blk = z_tiled * blockmask                                      # (32, 1024)

    x_all = jnp.dot(z_blk, wfc_ref[...], preferred_element_type=f32)
    x_all = x_all + bfc_ref[...]                                     # (32, 512)

    # ---- deconv channel reduction: 9 tap planes T[ky*3+kx] of shape (32,32) ---
    xcs = [x_all[:, c * W_MID:(c + 1) * W_MID] for c in range(C_MID)]
    taps = []
    for t in range(9):
        acc = xcs[0] * wtap_ref[t, 0]
        for c in range(1, C_MID):
            acc = acc + xcs[c] * wtap_ref[t, c]
        taps.append(acc)

    # ---- ConvTranspose2d stride-2 scatter + 2x upsample on the MXU ----
    #   out[r, s] = sum_{ky,kx,m,n} U[ky][r,m] * T[ky*3+kx][m,n] * Vt[kx][n,s]
    # with U[ky][r,m] = [r == 2m+ky-1], Vt[kx][n,s] = [s == 2n+kx-1]
    # (boundaries handled automatically since m,n only range over [0, 32)).
    out = None
    for ky in range(3):
        a = jnp.dot(taps[3 * ky], vt_ref[0], preferred_element_type=f32)
        for kx in (1, 2):
            a = a + jnp.dot(taps[3 * ky + kx], vt_ref[kx],
                            preferred_element_type=f32)
        term = jnp.dot(u_ref[ky], a, preferred_element_type=f32)    # (64, 64)
        out = term if out is None else out + term

    o_ref[0, 0] = jax.nn.sigmoid(out + bdc_ref[0])


def decoder_forward(z, params):
    B = z.shape[0]
    return pl.pallas_call(
        _decoder_kernel,
        out_shape=jax.ShapeDtypeStruct((B, 1, H_OUT, W_OUT), jnp.float32),
        grid=(B,),
        in_specs=[
            pl.BlockSpec((B, LATENT_DIM), lambda b: (0, 0)),
            pl.BlockSpec((H_MID * LATENT_DIM, C_MID * W_MID), lambda b: (0, 0)),
            pl.BlockSpec((H_MID, C_MID * W_MID), lambda b: (0, 0)),
            pl.BlockSpec((3, H_OUT, H_MID), lambda b: (0, 0, 0)),
            pl.BlockSpec((3, W_MID, W_OUT), lambda b: (0, 0, 0)),
            pl.BlockSpec(memory_space=pltpu.MemorySpace.SMEM),   # tap weights
            pl.BlockSpec(memory_space=pltpu.MemorySpace.SMEM),   # deconv bias
        ],
        out_specs=pl.BlockSpec((1, 1, H_OUT, W_OUT), lambda b: (b, 0, 0, 0)),
        compiler_params=pltpu.CompilerParams(
            dimension_semantics=("parallel",)),
    )(z, params["wfc_mk_cn"], params["bfc_m_cn"], params["u_mats"],
      params["vt_mats"], params["w_tap"], params["deconv_b"])


# ----------------------------------------------------------------------------
# Parameters (torch-style init) + kernel-side layouts (pure permutations).
# ----------------------------------------------------------------------------
def make_params(key):
    k1, k2, k3, k4 = jax.random.split(key, 4)
    bound_fc = 1.0 / np.sqrt(LATENT_DIM)
    fc_w = jax.random.uniform(k1, (FC_OUT, LATENT_DIM), jnp.float32,
                              -bound_fc, bound_fc)           # torch (out, in)
    fc_b = jax.random.uniform(k2, (FC_OUT,), jnp.float32, -bound_fc, bound_fc)
    bound_dc = 1.0 / np.sqrt(C_MID * 3 * 3)
    deconv_w = jax.random.uniform(k3, (C_MID, 1, 3, 3), jnp.float32,
                                  -bound_dc, bound_dc)       # torch (in,out,kh,kw)
    deconv_b = jax.random.uniform(k4, (1,), jnp.float32, -bound_dc, bound_dc)

    # Wfc[(c,m,n), k]  ->  wfc_mk_cn[(m,k), (c,n)]   (pure permutation)
    wfc_mk_cn = (fc_w.reshape(C_MID, H_MID, W_MID, LATENT_DIM)
                 .transpose(1, 3, 0, 2)
                 .reshape(H_MID * LATENT_DIM, C_MID * W_MID))
    # bfc[(c,m,n)]  ->  bfc_m_cn[m, (c,n)]
    bfc_m_cn = (fc_b.reshape(C_MID, H_MID, W_MID)
                .transpose(1, 0, 2)
                .reshape(H_MID, C_MID * W_MID))
    # w_tap[ky*3+kx, c] = deconv_w[c, 0, ky, kx]
    w_tap = deconv_w[:, 0, :, :].transpose(1, 2, 0).reshape(9, C_MID)

    # 0/1 scatter matrices of ConvTranspose2d(k=3, s=2, p=1, op=1):
    r = np.arange(H_OUT)[:, None]
    m = np.arange(H_MID)[None, :]
    u_mats = np.stack([(r == 2 * m + ky - 1) for ky in range(3)]
                      ).astype(np.float32)                    # (3, 64, 32)
    s = np.arange(W_OUT)[None, :]
    n = np.arange(W_MID)[:, None]
    vt_mats = np.stack([(s == 2 * n + kx - 1) for kx in range(3)]
                       ).astype(np.float32)                   # (3, 32, 64)

    return {
        # torch-layout parameters (used by the XLA reference)
        "fc_w": fc_w, "fc_b": fc_b, "deconv_w": deconv_w, "deconv_b": deconv_b,
        # kernel-layout parameters
        "wfc_mk_cn": wfc_mk_cn, "bfc_m_cn": bfc_m_cn, "w_tap": w_tap,
        "u_mats": jnp.asarray(u_mats), "vt_mats": jnp.asarray(vt_mats),
    }


# ----------------------------------------------------------------------------
# Plain-XLA reference (straightforward implementation of the PyTorch module).
# ----------------------------------------------------------------------------
def reference_forward(z, params):
    y = jnp.dot(z, params["fc_w"].T,
                precision=lax.Precision.HIGHEST) + params["fc_b"]
    x = y.reshape(z.shape[0], C_MID, H_MID, W_MID)
    # ConvTranspose2d == conv with lhs_dilation, flipped kernel, swapped chans
    w_conv = jnp.flip(params["deconv_w"], axis=(2, 3)).transpose(1, 0, 2, 3)
    out = lax.conv_general_dilated(
        x, w_conv, window_strides=(1, 1),
        padding=[(1, 2), (1, 2)], lhs_dilation=(2, 2),
        dimension_numbers=("NCHW", "OIHW", "NCHW"),
        precision=lax.Precision.HIGHEST)
    return jax.nn.sigmoid(out + params["deconv_b"][None, :, None, None])


if __name__ == "__main__":
    key = jax.random.PRNGKey(0)
    kp, kz = jax.random.split(key)
    params = make_params(kp)

    B = 2
    z = jax.random.normal(kz, (B, LATENT_DIM), jnp.float32)

    fwd = jax.jit(decoder_forward)
    out = jax.block_until_ready(fwd(z, params))
    assert out.shape == (B, 1, H_OUT, W_OUT), out.shape

    ref = jax.block_until_ready(reference_forward(z, params))
    np.testing.assert_allclose(np.asarray(out), np.asarray(ref),
                               rtol=1e-4, atol=1e-4)

    print("KERNEL_OK")
</pallas_src>

<mosaic_0001>
module attributes {stable_mosaic.version = 11 : i64} {
  func.func @_decoder_kernel(%arg0: i32, %arg1: memref<2x32xf32, #tpu.memory_space<vmem>>, %arg2: memref<1024x512xf32, #tpu.memory_space<vmem>>, %arg3: memref<32x512xf32, #tpu.memory_space<vmem>>, %arg4: memref<3x64x32xf32, #tpu.memory_space<vmem>>, %arg5: memref<3x32x64xf32, #tpu.memory_space<vmem>>, %arg6: memref<9x16xf32, #tpu.memory_space<smem>>, %arg7: memref<1xf32, #tpu.memory_space<smem>>, %arg8: memref<1x1x64x64xf32, #tpu.memory_space<vmem>>) attributes {dimension_semantics = [#tpu.dimension_semantics<parallel>], iteration_bounds = array<i64: 2>, scalar_prefetch = 0 : i64, scratch_operands = 0 : i64, tpu.core_type = #tpu.core_type<tc>, window_params = [{pipeline_mode = #tpu.pipeline_mode<synchronous>, transform_indices = @transform_0, window_bounds = array<i64: 2, 32>}, {pipeline_mode = #tpu.pipeline_mode<synchronous>, transform_indices = @transform_1, window_bounds = array<i64: 1024, 512>}, {pipeline_mode = #tpu.pipeline_mode<synchronous>, transform_indices = @transform_2, window_bounds = array<i64: 32, 512>}, {pipeline_mode = #tpu.pipeline_mode<synchronous>, transform_indices = @transform_3, window_bounds = array<i64: 3, 64, 32>}, {pipeline_mode = #tpu.pipeline_mode<synchronous>, transform_indices = @transform_4, window_bounds = array<i64: 3, 32, 64>}, {transform_indices = @transform_5, window_bounds = array<i64: 9, 16>}, {transform_indices = @transform_6, window_bounds = array<i64: 1>}, {transform_indices = @transform_7, window_bounds = array<i64: 1, 1, 64, 64>}]} {
    %0 = arith.index_cast %arg0 : i32 to index
    %c0 = arith.constant 0 : index
    %1 = vector.load %arg1[%0, %c0] : memref<2x32xf32, #tpu.memory_space<vmem>>, vector<1x32xf32>
    %2 = tpu.iota {dimensions = array<i32: 0>} : vector<32x1024xi32>
    %3 = tpu.iota {dimensions = array<i32: 1>} : vector<32x1024xi32>
    %c31_i32 = arith.constant 31 : i32
    %4 = vector.broadcast %c31_i32 : i32 to vector<32x1024xi32>
    %5 = arith.andi %3, %4 : vector<32x1024xi32>
    %6 = arith.cmpi eq, %5, %2 : vector<32x1024xi32>
    %7 = arith.extui %6 : vector<32x1024xi1> to vector<32x1024xi32>
    %8 = arith.sitofp %7 : vector<32x1024xi32> to vector<32x1024xf32>
    %cst = arith.constant dense<0.000000e+00> : vector<1x1024xf32>
    %9 = tpu.matmul %1, %8, %cst {dimension_numbers = #tpu.dot_dimension_numbers<[1], [0], [0], [1], [0, 0, 1, 1], [], []>} : vector<1x32xf32>, vector<32x1024xf32>, vector<1x1024xf32> -> vector<1x1024xf32>
    %c5_i32 = arith.constant 5 : i32
    %10 = vector.broadcast %c5_i32 : i32 to vector<32x1024xi32>
    %11 = arith.shrsi %3, %10 : vector<32x1024xi32>
    %12 = arith.cmpi eq, %11, %2 : vector<32x1024xi32>
    %13 = arith.extui %12 : vector<32x1024xi1> to vector<32x1024xi32>
    %14 = arith.sitofp %13 : vector<32x1024xi32> to vector<32x1024xf32>
    %15 = vector.broadcast %9 : vector<1x1024xf32> to vector<32x1024xf32>
    %16 = arith.mulf %15, %14 : vector<32x1024xf32>
    %c0_0 = arith.constant 0 : index
    %c0_1 = arith.constant 0 : index
    %17 = vector.load %arg2[%c0_0, %c0_1] : memref<1024x512xf32, #tpu.memory_space<vmem>>, vector<1024x512xf32>
    %cst_2 = arith.constant dense<0.000000e+00> : vector<32x512xf32>
    %18 = tpu.matmul %16, %17, %cst_2 {dimension_numbers = #tpu.dot_dimension_numbers<[1], [0], [0], [1], [0, 0, 1, 1], [], []>} : vector<32x1024xf32>, vector<1024x512xf32>, vector<32x512xf32> -> vector<32x512xf32>
    %c0_3 = arith.constant 0 : index
    %c0_4 = arith.constant 0 : index
    %19 = vector.load %arg3[%c0_3, %c0_4] : memref<32x512xf32, #tpu.memory_space<vmem>>, vector<32x512xf32>
    %20 = arith.addf %18, %19 : vector<32x512xf32>
    %21 = vector.extract_strided_slice %20 {offsets = [0, 0], sizes = [32, 32], strides = [1, 1]} : vector<32x512xf32> to vector<32x32xf32>
    %22 = vector.extract_strided_slice %20 {offsets = [0, 32], sizes = [32, 32], strides = [1, 1]} : vector<32x512xf32> to vector<32x32xf32>
    %23 = vector.extract_strided_slice %20 {offsets = [0, 64], sizes = [32, 32], strides = [1, 1]} : vector<32x512xf32> to vector<32x32xf32>
    %24 = vector.extract_strided_slice %20 {offsets = [0, 96], sizes = [32, 32], strides = [1, 1]} : vector<32x512xf32> to vector<32x32xf32>
    %25 = vector.extract_strided_slice %20 {offsets = [0, 128], sizes = [32, 32], strides = [1, 1]} : vector<32x512xf32> to vector<32x32xf32>
    %26 = vector.extract_strided_slice %20 {offsets = [0, 160], sizes = [32, 32], strides = [1, 1]} : vector<32x512xf32> to vector<32x32xf32>
    %27 = vector.extract_strided_slice %20 {offsets = [0, 192], sizes = [32, 32], strides = [1, 1]} : vector<32x512xf32> to vector<32x32xf32>
    %28 = vector.extract_strided_slice %20 {offsets = [0, 224], sizes = [32, 32], strides = [1, 1]} : vector<32x512xf32> to vector<32x32xf32>
    %29 = vector.extract_strided_slice %20 {offsets = [0, 256], sizes = [32, 32], strides = [1, 1]} : vector<32x512xf32> to vector<32x32xf32>
    %30 = vector.extract_strided_slice %20 {offsets = [0, 288], sizes = [32, 32], strides = [1, 1]} : vector<32x512xf32> to vector<32x32xf32>
    %31 = vector.extract_strided_slice %20 {offsets = [0, 320], sizes = [32, 32], strides = [1, 1]} : vector<32x512xf32> to vector<32x32xf32>
    %32 = vector.extract_strided_slice %20 {offsets = [0, 352], sizes = [32, 32], strides = [1, 1]} : vector<32x512xf32> to vector<32x32xf32>
    %33 = vector.extract_strided_slice %20 {offsets = [0, 384], sizes = [32, 32], strides = [1, 1]} : vector<32x512xf32> to vector<32x32xf32>
    %34 = vector.extract_strided_slice %20 {offsets = [0, 416], sizes = [32, 32], strides = [1, 1]} : vector<32x512xf32> to vector<32x32xf32>
    %35 = vector.extract_strided_slice %20 {offsets = [0, 448], sizes = [32, 32], strides = [1, 1]} : vector<32x512xf32> to vector<32x32xf32>
    %36 = vector.extract_strided_slice %20 {offsets = [0, 480], sizes = [32, 32], strides = [1, 1]} : vector<32x512xf32> to vector<32x32xf32>
    %c0_5 = arith.constant 0 : index
    %c0_6 = arith.constant 0 : index
    %37 = memref.load %arg6[%c0_5, %c0_6] : memref<9x16xf32, #tpu.memory_space<smem>>
    %38 = vector.broadcast %37 : f32 to vector<32x32xf32>
    %39 = arith.mulf %21, %38 : vector<32x32xf32>
    %c0_7 = arith.constant 0 : index
    %c1 = arith.constant 1 : index
    %40 = memref.load %arg6[%c0_7, %c1] : memref<9x16xf32, #tpu.memory_space<smem>>
    %41 = vector.broadcast %40 : f32 to vector<32x32xf32>
    %42 = arith.mulf %22, %41 : vector<32x32xf32>
    %43 = arith.addf %39, %42 : vector<32x32xf32>
    %c0_8 = arith.constant 0 : index
    %c2 = arith.constant 2 : index
    %44 = memref.load %arg6[%c0_8, %c2] : memref<9x16xf32, #tpu.memory_space<smem>>
    %45 = vector.broadcast %44 : f32 to vector<32x32xf32>
    %46 = arith.mulf %23, %45 : vector<32x32xf32>
    %47 = arith.addf %43, %46 : vector<32x32xf32>
    %c0_9 = arith.constant 0 : index
    %c3 = arith.constant 3 : index
    %48 = memref.load %arg6[%c0_9, %c3] : memref<9x16xf32, #tpu.memory_space<smem>>
    %49 = vector.broadcast %48 : f32 to vector<32x32xf32>
    %50 = arith.mulf %24, %49 : vector<32x32xf32>
    %51 = arith.addf %47, %50 : vector<32x32xf32>
    %c0_10 = arith.constant 0 : index
    %c4 = arith.constant 4 : index
    %52 = memref.load %arg6[%c0_10, %c4] : memref<9x16xf32, #tpu.memory_space<smem>>
    %53 = vector.broadcast %52 : f32 to vector<32x32xf32>
    %54 = arith.mulf %25, %53 : vector<32x32xf32>
    %55 = arith.addf %51, %54 : vector<32x32xf32>
    %c0_11 = arith.constant 0 : index
    %c5 = arith.constant 5 : index
    %56 = memref.load %arg6[%c0_11, %c5] : memref<9x16xf32, #tpu.memory_space<smem>>
    %57 = vector.broadcast %56 : f32 to vector<32x32xf32>
    %58 = arith.mulf %26, %57 : vector<32x32xf32>
    %59 = arith.addf %55, %58 : vector<32x32xf32>
    %c0_12 = arith.constant 0 : index
    %c6 = arith.constant 6 : index
    %60 = memref.load %arg6[%c0_12, %c6] : memref<9x16xf32, #tpu.memory_space<smem>>
    %61 = vector.broadcast %60 : f32 to vector<32x32xf32>
    %62 = arith.mulf %27, %61 : vector<32x32xf32>
    %63 = arith.addf %59, %62 : vector<32x32xf32>
    %c0_13 = arith.constant 0 : index
    %c7 = arith.constant 7 : index
    %64 = memref.load %arg6[%c0_13, %c7] : memref<9x16xf32, #tpu.memory_space<smem>>
    %65 = vector.broadcast %64 : f32 to vector<32x32xf32>
    %66 = arith.mulf %28, %65 : vector<32x32xf32>
    %67 = arith.addf %63, %66 : vector<32x32xf32>
    %c0_14 = arith.constant 0 : index
    %c8 = arith.constant 8 : index
    %68 = memref.load %arg6[%c0_14, %c8] : memref<9x16xf32, #tpu.memory_space<smem>>
    %69 = vector.broadcast %68 : f32 to vector<32x32xf32>
    %70 = arith.mulf %29, %69 : vector<32x32xf32>
    %71 = arith.addf %67, %70 : vector<32x32xf32>
    %c0_15 = arith.constant 0 : index
    %c9 = arith.constant 9 : index
    %72 = memref.load %arg6[%c0_15, %c9] : memref<9x16xf32, #tpu.memory_space<smem>>
    %73 = vector.broadcast %72 : f32 to vector<32x32xf32>
    %74 = arith.mulf %30, %73 : vector<32x32xf32>
    %75 = arith.addf %71, %74 : vector<32x32xf32>
    %c0_16 = arith.constant 0 : index
    %c10 = arith.constant 10 : index
    %76 = memref.load %arg6[%c0_16, %c10] : memref<9x16xf32, #tpu.memory_space<smem>>
    %77 = vector.broadcast %76 : f32 to vector<32x32xf32>
    %78 = arith.mulf %31, %77 : vector<32x32xf32>
    %79 = arith.addf %75, %78 : vector<32x32xf32>
    %c0_17 = arith.constant 0 : index
    %c11 = arith.constant 11 : index
    %80 = memref.load %arg6[%c0_17, %c11] : memref<9x16xf32, #tpu.memory_space<smem>>
    %81 = vector.broadcast %80 : f32 to vector<32x32xf32>
    %82 = arith.mulf %32, %81 : vector<32x32xf32>
    %83 = arith.addf %79, %82 : vector<32x32xf32>
    %c0_18 = arith.constant 0 : index
    %c12 = arith.constant 12 : index
    %84 = memref.load %arg6[%c0_18, %c12] : memref<9x16xf32, #tpu.memory_space<smem>>
    %85 = vector.broadcast %84 : f32 to vector<32x32xf32>
    %86 = arith.mulf %33, %85 : vector<32x32xf32>
    %87 = arith.addf %83, %86 : vector<32x32xf32>
    %c0_19 = arith.constant 0 : index
    %c13 = arith.constant 13 : index
    %88 = memref.load %arg6[%c0_19, %c13] : memref<9x16xf32, #tpu.memory_space<smem>>
    %89 = vector.broadcast %88 : f32 to vector<32x32xf32>
    %90 = arith.mulf %34, %89 : vector<32x32xf32>
    %91 = arith.addf %87, %90 : vector<32x32xf32>
    %c0_20 = arith.constant 0 : index
    %c14 = arith.constant 14 : index
    %92 = memref.load %arg6[%c0_20, %c14] : memref<9x16xf32, #tpu.memory_space<smem>>
    %93 = vector.broadcast %92 : f32 to vector<32x32xf32>
    %94 = arith.mulf %35, %93 : vector<32x32xf32>
    %95 = arith.addf %91, %94 : vector<32x32xf32>
    %c0_21 = arith.constant 0 : index
    %c15 = arith.constant 15 : index
    %96 = memref.load %arg6[%c0_21, %c15] : memref<9x16xf32, #tpu.memory_space<smem>>
    %97 = vector.broadcast %96 : f32 to vector<32x32xf32>
    %98 = arith.mulf %36, %97 : vector<32x32xf32>
    %99 = arith.addf %95, %98 : vector<32x32xf32>
    %c1_22 = arith.constant 1 : index
    %c0_23 = arith.constant 0 : index
    %100 = memref.load %arg6[%c1_22, %c0_23] : memref<9x16xf32, #tpu.memory_space<smem>>
    %101 = vector.broadcast %100 : f32 to vector<32x32xf32>
    %102 = arith.mulf %21, %101 : vector<32x32xf32>
    %c1_24 = arith.constant 1 : index
    %c1_25 = arith.constant 1 : index
    %103 = memref.load %arg6[%c1_24, %c1_25] : memref<9x16xf32, #tpu.memory_space<smem>>
    %104 = vector.broadcast %103 : f32 to vector<32x32xf32>
    %105 = arith.mulf %22, %104 : vector<32x32xf32>
    %106 = arith.addf %102, %105 : vector<32x32xf32>
    %c1_26 = arith.constant 1 : index
    %c2_27 = arith.constant 2 : index
    %107 = memref.load %arg6[%c1_26, %c2_27] : memref<9x16xf32, #tpu.memory_space<smem>>
    %108 = vector.broadcast %107 : f32 to vector<32x32xf32>
    %109 = arith.mulf %23, %108 : vector<32x32xf32>
    %110 = arith.addf %106, %109 : vector<32x32xf32>
    %c1_28 = arith.constant 1 : index
    %c3_29 = arith.constant 3 : index
    %111 = memref.load %arg6[%c1_28, %c3_29] : memref<9x16xf32, #tpu.memory_space<smem>>
    %112 = vector.broadcast %111 : f32 to vector<32x32xf32>
    %113 = arith.mulf %24, %112 : vector<32x32xf32>
    %114 = arith.addf %110, %113 : vector<32x32xf32>
    %c1_30 = arith.constant 1 : index
    %c4_31 = arith.constant 4 : index
    %115 = memref.load %arg6[%c1_30, %c4_31] : memref<9x16xf32, #tpu.memory_space<smem>>
    %116 = vector.broadcast %115 : f32 to vector<32x32xf32>
    %117 = arith.mulf %25, %116 : vector<32x32xf32>
    %118 = arith.addf %114, %117 : vector<32x32xf32>
    %c1_32 = arith.constant 1 : index
    %c5_33 = arith.constant 5 : index
    %119 = memref.load %arg6[%c1_32, %c5_33] : memref<9x16xf32, #tpu.memory_space<smem>>
    %120 = vector.broadcast %119 : f32 to vector<32x32xf32>
    %121 = arith.mulf %26, %120 : vector<32x32xf32>
    %122 = arith.addf %118, %121 : vector<32x32xf32>
    %c1_34 = arith.constant 1 : index
    %c6_35 = arith.constant 6 : index
    %123 = memref.load %arg6[%c1_34, %c6_35] : memref<9x16xf32, #tpu.memory_space<smem>>
    %124 = vector.broadcast %123 : f32 to vector<32x32xf32>
    %125 = arith.mulf %27, %124 : vector<32x32xf32>
    %126 = arith.addf %122, %125 : vector<32x32xf32>
    %c1_36 = arith.constant 1 : index
    %c7_37 = arith.constant 7 : index
    %127 = memref.load %arg6[%c1_36, %c7_37] : memref<9x16xf32, #tpu.memory_space<smem>>
    %128 = vector.broadcast %127 : f32 to vector<32x32xf32>
    %129 = arith.mulf %28, %128 : vector<32x32xf32>
    %130 = arith.addf %126, %129 : vector<32x32xf32>
    %c1_38 = arith.constant 1 : index
    %c8_39 = arith.constant 8 : index
    %131 = memref.load %arg6[%c1_38, %c8_39] : memref<9x16xf32, #tpu.memory_space<smem>>
    %132 = vector.broadcast %131 : f32 to vector<32x32xf32>
    %133 = arith.mulf %29, %132 : vector<32x32xf32>
    %134 = arith.addf %130, %133 : vector<32x32xf32>
    %c1_40 = arith.constant 1 : index
    %c9_41 = arith.constant 9 : index
    %135 = memref.load %arg6[%c1_40, %c9_41] : memref<9x16xf32, #tpu.memory_space<smem>>
    %136 = vector.broadcast %135 : f32 to vector<32x32xf32>
    %137 = arith.mulf %30, %136 : vector<32x32xf32>
    %138 = arith.addf %134, %137 : vector<32x32xf32>
    %c1_42 = arith.constant 1 : index
    %c10_43 = arith.constant 10 : index
    %139 = memref.load %arg6[%c1_42, %c10_43] : memref<9x16xf32, #tpu.memory_space<smem>>
    %140 = vector.broadcast %139 : f32 to vector<32x32xf32>
    %141 = arith.mulf %31, %140 : vector<32x32xf32>
    %142 = arith.addf %138, %141 : vector<32x32xf32>
    %c1_44 = arith.constant 1 : index
    %c11_45 = arith.constant 11 : index
    %143 = memref.load %arg6[%c1_44, %c11_45] : memref<9x16xf32, #tpu.memory_space<smem>>
    %144 = vector.broadcast %143 : f32 to vector<32x32xf32>
    %145 = arith.mulf %32, %144 : vector<32x32xf32>
    %146 = arith.addf %142, %145 : vector<32x32xf32>
    %c1_46 = arith.constant 1 : index
    %c12_47 = arith.constant 12 : index
    %147 = memref.load %arg6[%c1_46, %c12_47] : memref<9x16xf32, #tpu.memory_space<smem>>
    %148 = vector.broadcast %147 : f32 to vector<32x32xf32>
    %149 = arith.mulf %33, %148 : vector<32x32xf32>
    %150 = arith.addf %146, %149 : vector<32x32xf32>
    %c1_48 = arith.constant 1 : index
    %c13_49 = arith.constant 13 : index
    %151 = memref.load %arg6[%c1_48, %c13_49] : memref<9x16xf32, #tpu.memory_space<smem>>
    %152 = vector.broadcast %151 : f32 to vector<32x32xf32>
    %153 = arith.mulf %34, %152 : vector<32x32xf32>
    %154 = arith.addf %150, %153 : vector<32x32xf32>
    %c1_50 = arith.constant 1 : index
    %c14_51 = arith.constant 14 : index
    %155 = memref.load %arg6[%c1_50, %c14_51] : memref<9x16xf32, #tpu.memory_space<smem>>
    %156 = vector.broadcast %155 : f32 to vector<32x32xf32>
    %157 = arith.mulf %35, %156 : vector<32x32xf32>
    %158 = arith.addf %154, %157 : vector<32x32xf32>
    %c1_52 = arith.constant 1 : index
    %c15_53 = arith.constant 15 : index
    %159 = memref.load %arg6[%c1_52, %c15_53] : memref<9x16xf32, #tpu.memory_space<smem>>
    %160 = vector.broadcast %159 : f32 to vector<32x32xf32>
    %161 = arith.mulf %36, %160 : vector<32x32xf32>
    %162 = arith.addf %158, %161 : vector<32x32xf32>
    %c2_54 = arith.constant 2 : index
    %c0_55 = arith.constant 0 : index
    %163 = memref.load %arg6[%c2_54, %c0_55] : memref<9x16xf32, #tpu.memory_space<smem>>
    %164 = vector.broadcast %163 : f32 to vector<32x32xf32>
    %165 = arith.mulf %21, %164 : vector<32x32xf32>
    %c2_56 = arith.constant 2 : index
    %c1_57 = arith.constant 1 : index
    %166 = memref.load %arg6[%c2_56, %c1_57] : memref<9x16xf32, #tpu.memory_space<smem>>
    %167 = vector.broadcast %166 : f32 to vector<32x32xf32>
    %168 = arith.mulf %22, %167 : vector<32x32xf32>
    %169 = arith.addf %165, %168 : vector<32x32xf32>
    %c2_58 = arith.constant 2 : index
    %c2_59 = arith.constant 2 : index
    %170 = memref.load %arg6[%c2_58, %c2_59] : memref<9x16xf32, #tpu.memory_space<smem>>
    %171 = vector.broadcast %170 : f32 to vector<32x32xf32>
    %172 = arith.mulf %23, %171 : vector<32x32xf32>
    %173 = arith.addf %169, %172 : vector<32x32xf32>
    %c2_60 = arith.constant 2 : index
    %c3_61 = arith.constant 3 : index
    %174 = memref.load %arg6[%c2_60, %c3_61] : memref<9x16xf32, #tpu.memory_space<smem>>
    %175 = vector.broadcast %174 : f32 to vector<32x32xf32>
    %176 = arith.mulf %24, %175 : vector<32x32xf32>
    %177 = arith.addf %173, %176 : vector<32x32xf32>
    %c2_62 = arith.constant 2 : index
    %c4_63 = arith.constant 4 : index
    %178 = memref.load %arg6[%c2_62, %c4_63] : memref<9x16xf32, #tpu.memory_space<smem>>
    %179 = vector.broadcast %178 : f32 to vector<32x32xf32>
    %180 = arith.mulf %25, %179 : vector<32x32xf32>
    %181 = arith.addf %177, %180 : vector<32x32xf32>
    %c2_64 = arith.constant 2 : index
    %c5_65 = arith.constant 5 : index
    %182 = memref.load %arg6[%c2_64, %c5_65] : memref<9x16xf32, #tpu.memory_space<smem>>
    %183 = vector.broadcast %182 : f32 to vector<32x32xf32>
    %184 = arith.mulf %26, %183 : vector<32x32xf32>
    %185 = arith.addf %181, %184 : vector<32x32xf32>
    %c2_66 = arith.constant 2 : index
    %c6_67 = arith.constant 6 : index
    %186 = memref.load %arg6[%c2_66, %c6_67] : memref<9x16xf32, #tpu.memory_space<smem>>
    %187 = vector.broadcast %186 : f32 to vector<32x32xf32>
    %188 = arith.mulf %27, %187 : vector<32x32xf32>
    %189 = arith.addf %185, %188 : vector<32x32xf32>
    %c2_68 = arith.constant 2 : index
    %c7_69 = arith.constant 7 : index
    %190 = memref.load %arg6[%c2_68, %c7_69] : memref<9x16xf32, #tpu.memory_space<smem>>
    %191 = vector.broadcast %190 : f32 to vector<32x32xf32>
    %192 = arith.mulf %28, %191 : vector<32x32xf32>
    %193 = arith.addf %189, %192 : vector<32x32xf32>
    %c2_70 = arith.constant 2 : index
    %c8_71 = arith.constant 8 : index
    %194 = memref.load %arg6[%c2_70, %c8_71] : memref<9x16xf32, #tpu.memory_space<smem>>
    %195 = vector.broadcast %194 : f32 to vector<32x32xf32>
    %196 = arith.mulf %29, %195 : vector<32x32xf32>
    %197 = arith.addf %193, %196 : vector<32x32xf32>
    %c2_72 = arith.constant 2 : index
    %c9_73 = arith.constant 9 : index
    %198 = memref.load %arg6[%c2_72, %c9_73] : memref<9x16xf32, #tpu.memory_space<smem>>
    %199 = vector.broadcast %198 : f32 to vector<32x32xf32>
    %200 = arith.mulf %30, %199 : vector<32x32xf32>
    %201 = arith.addf %197, %200 : vector<32x32xf32>
    %c2_74 = arith.constant 2 : index
    %c10_75 = arith.constant 10 : index
    %202 = memref.load %arg6[%c2_74, %c10_75] : memref<9x16xf32, #tpu.memory_space<smem>>
    %203 = vector.broadcast %202 : f32 to vector<32x32xf32>
    %204 = arith.mulf %31, %203 : vector<32x32xf32>
    %205 = arith.addf %201, %204 : vector<32x32xf32>
    %c2_76 = arith.constant 2 : index
    %c11_77 = arith.constant 11 : index
    %206 = memref.load %arg6[%c2_76, %c11_77] : memref<9x16xf32, #tpu.memory_space<smem>>
    %207 = vector.broadcast %206 : f32 to vector<32x32xf32>
    %208 = arith.mulf %32, %207 : vector<32x32xf32>
    %209 = arith.addf %205, %208 : vector<32x32xf32>
    %c2_78 = arith.constant 2 : index
    %c12_79 = arith.constant 12 : index
    %210 = memref.load %arg6[%c2_78, %c12_79] : memref<9x16xf32, #tpu.memory_space<smem>>
    %211 = vector.broadcast %210 : f32 to vector<32x32xf32>
    %212 = arith.mulf %33, %211 : vector<32x32xf32>
    %213 = arith.addf %209, %212 : vector<32x32xf32>
    %c2_80 = arith.constant 2 : index
    %c13_81 = arith.constant 13 : index
    %214 = memref.load %arg6[%c2_80, %c13_81] : memref<9x16xf32, #tpu.memory_space<smem>>
    %215 = vector.broadcast %214 : f32 to vector<32x32xf32>
    %216 = arith.mulf %34, %215 : vector<32x32xf32>
    %217 = arith.addf %213, %216 : vector<32x32xf32>
    %c2_82 = arith.constant 2 : index
    %c14_83 = arith.constant 14 : index
    %218 = memref.load %arg6[%c2_82, %c14_83] : memref<9x16xf32, #tpu.memory_space<smem>>
    %219 = vector.broadcast %218 : f32 to vector<32x32xf32>
    %220 = arith.mulf %35, %219 : vector<32x32xf32>
    %221 = arith.addf %217, %220 : vector<32x32xf32>
    %c2_84 = arith.constant 2 : index
    %c15_85 = arith.constant 15 : index
    %222 = memref.load %arg6[%c2_84, %c15_85] : memref<9x16xf32, #tpu.memory_space<smem>>
    %223 = vector.broadcast %222 : f32 to vector<32x32xf32>
    %224 = arith.mulf %36, %223 : vector<32x32xf32>
    %225 = arith.addf %221, %224 : vector<32x32xf32>
    %c3_86 = arith.constant 3 : index
    %c0_87 = arith.constant 0 : index
    %226 = memref.load %arg6[%c3_86, %c0_87] : memref<9x16xf32, #tpu.memory_space<smem>>
    %227 = vector.broadcast %226 : f32 to vector<32x32xf32>
    %228 = arith.mulf %21, %227 : vector<32x32xf32>
    %c3_88 = arith.constant 3 : index
    %c1_89 = arith.constant 1 : index
    %229 = memref.load %arg6[%c3_88, %c1_89] : memref<9x16xf32, #tpu.memory_space<smem>>
    %230 = vector.broadcast %229 : f32 to vector<32x32xf32>
    %231 = arith.mulf %22, %230 : vector<32x32xf32>
    %232 = arith.addf %228, %231 : vector<32x32xf32>
    %c3_90 = arith.constant 3 : index
    %c2_91 = arith.constant 2 : index
    %233 = memref.load %arg6[%c3_90, %c2_91] : memref<9x16xf32, #tpu.memory_space<smem>>
    %234 = vector.broadcast %233 : f32 to vector<32x32xf32>
    %235 = arith.mulf %23, %234 : vector<32x32xf32>
    %236 = arith.addf %232, %235 : vector<32x32xf32>
    %c3_92 = arith.constant 3 : index
    %c3_93 = arith.constant 3 : index
    %237 = memref.load %arg6[%c3_92, %c3_93] : memref<9x16xf32, #tpu.memory_space<smem>>
    %238 = vector.broadcast %237 : f32 to vector<32x32xf32>
    %239 = arith.mulf %24, %238 : vector<32x32xf32>
    %240 = arith.addf %236, %239 : vector<32x32xf32>
    %c3_94 = arith.constant 3 : index
    %c4_95 = arith.constant 4 : index
    %241 = memref.load %arg6[%c3_94, %c4_95] : memref<9x16xf32, #tpu.memory_space<smem>>
    %242 = vector.broadcast %241 : f32 to vector<32x32xf32>
    %243 = arith.mulf %25, %242 : vector<32x32xf32>
    %244 = arith.addf %240, %243 : vector<32x32xf32>
    %c3_96 = arith.constant 3 : index
    %c5_97 = arith.constant 5 : index
    %245 = memref.load %arg6[%c3_96, %c5_97] : memref<9x16xf32, #tpu.memory_space<smem>>
    %246 = vector.broadcast %245 : f32 to vector<32x32xf32>
    %247 = arith.mulf %26, %246 : vector<32x32xf32>
    %248 = arith.addf %244, %247 : vector<32x32xf32>
    %c3_98 = arith.constant 3 : index
    %c6_99 = arith.constant 6 : index
    %249 = memref.load %arg6[%c3_98, %c6_99] : memref<9x16xf32, #tpu.memory_space<smem>>
    %250 = vector.broadcast %249 : f32 to vector<32x32xf32>
    %251 = arith.mulf %27, %250 : vector<32x32xf32>
    %252 = arith.addf %248, %251 : vector<32x32xf32>
    %c3_100 = arith.constant 3 : index
    %c7_101 = arith.constant 7 : index
    %253 = memref.load %arg6[%c3_100, %c7_101] : memref<9x16xf32, #tpu.memory_space<smem>>
    %254 = vector.broadcast %253 : f32 to vector<32x32xf32>
    %255 = arith.mulf %28, %254 : vector<32x32xf32>
    %256 = arith.addf %252, %255 : vector<32x32xf32>
    %c3_102 = arith.constant 3 : index
    %c8_103 = arith.constant 8 : index
    %257 = memref.load %arg6[%c3_102, %c8_103] : memref<9x16xf32, #tpu.memory_space<smem>>
    %258 = vector.broadcast %257 : f32 to vector<32x32xf32>
    %259 = arith.mulf %29, %258 : vector<32x32xf32>
    %260 = arith.addf %256, %259 : vector<32x32xf32>
    %c3_104 = arith.constant 3 : index
    %c9_105 = arith.constant 9 : index
    %261 = memref.load %arg6[%c3_104, %c9_105] : memref<9x16xf32, #tpu.memory_space<smem>>
    %262 = vector.broadcast %261 : f32 to vector<32x32xf32>
    %263 = arith.mulf %30, %262 : vector<32x32xf32>
    %264 = arith.addf %260, %263 : vector<32x32xf32>
    %c3_106 = arith.constant 3 : index
    %c10_107 = arith.constant 10 : index
    %265 = memref.load %arg6[%c3_106, %c10_107] : memref<9x16xf32, #tpu.memory_space<smem>>
    %266 = vector.broadcast %265 : f32 to vector<32x32xf32>
    %267 = arith.mulf %31, %266 : vector<32x32xf32>
    %268 = arith.addf %264, %267 : vector<32x32xf32>
    %c3_108 = arith.constant 3 : index
    %c11_109 = arith.constant 11 : index
    %269 = memref.load %arg6[%c3_108, %c11_109] : memref<9x16xf32, #tpu.memory_space<smem>>
    %270 = vector.broadcast %269 : f32 to vector<32x32xf32>
    %271 = arith.mulf %32, %270 : vector<32x32xf32>
    %272 = arith.addf %268, %271 : vector<32x32xf32>
    %c3_110 = arith.constant 3 : index
    %c12_111 = arith.constant 12 : index
    %273 = memref.load %arg6[%c3_110, %c12_111] : memref<9x16xf32, #tpu.memory_space<smem>>
    %274 = vector.broadcast %273 : f32 to vector<32x32xf32>
    %275 = arith.mulf %33, %274 : vector<32x32xf32>
    %276 = arith.addf %272, %275 : vector<32x32xf32>
    %c3_112 = arith.constant 3 : index
    %c13_113 = arith.constant 13 : index
    %277 = memref.load %arg6[%c3_112, %c13_113] : memref<9x16xf32, #tpu.memory_space<smem>>
    %278 = vector.broadcast %277 : f32 to vector<32x32xf32>
    %279 = arith.mulf %34, %278 : vector<32x32xf32>
    %280 = arith.addf %276, %279 : vector<32x32xf32>
    %c3_114 = arith.constant 3 : index
    %c14_115 = arith.constant 14 : index
    %281 = memref.load %arg6[%c3_114, %c14_115] : memref<9x16xf32, #tpu.memory_space<smem>>
    %282 = vector.broadcast %281 : f32 to vector<32x32xf32>
    %283 = arith.mulf %35, %282 : vector<32x32xf32>
    %284 = arith.addf %280, %283 : vector<32x32xf32>
    %c3_116 = arith.constant 3 : index
    %c15_117 = arith.constant 15 : index
    %285 = memref.load %arg6[%c3_116, %c15_117] : memref<9x16xf32, #tpu.memory_space<smem>>
    %286 = vector.broadcast %285 : f32 to vector<32x32xf32>
    %287 = arith.mulf %36, %286 : vector<32x32xf32>
    %288 = arith.addf %284, %287 : vector<32x32xf32>
    %c4_118 = arith.constant 4 : index
    %c0_119 = arith.constant 0 : index
    %289 = memref.load %arg6[%c4_118, %c0_119] : memref<9x16xf32, #tpu.memory_space<smem>>
    %290 = vector.broadcast %289 : f32 to vector<32x32xf32>
    %291 = arith.mulf %21, %290 : vector<32x32xf32>
    %c4_120 = arith.constant 4 : index
    %c1_121 = arith.constant 1 : index
    %292 = memref.load %arg6[%c4_120, %c1_121] : memref<9x16xf32, #tpu.memory_space<smem>>
    %293 = vector.broadcast %292 : f32 to vector<32x32xf32>
    %294 = arith.mulf %22, %293 : vector<32x32xf32>
    %295 = arith.addf %291, %294 : vector<32x32xf32>
    %c4_122 = arith.constant 4 : index
    %c2_123 = arith.constant 2 : index
    %296 = memref.load %arg6[%c4_122, %c2_123] : memref<9x16xf32, #tpu.memory_space<smem>>
    %297 = vector.broadcast %296 : f32 to vector<32x32xf32>
    %298 = arith.mulf %23, %297 : vector<32x32xf32>
    %299 = arith.addf %295, %298 : vector<32x32xf32>
    %c4_124 = arith.constant 4 : index
    %c3_125 = arith.constant 3 : index
    %300 = memref.load %arg6[%c4_124, %c3_125] : memref<9x16xf32, #tpu.memory_space<smem>>
    %301 = vector.broadcast %300 : f32 to vector<32x32xf32>
    %302 = arith.mulf %24, %301 : vector<32x32xf32>
    %303 = arith.addf %299, %302 : vector<32x32xf32>
    %c4_126 = arith.constant 4 : index
    %c4_127 = arith.constant 4 : index
    %304 = memref.load %arg6[%c4_126, %c4_127] : memref<9x16xf32, #tpu.memory_space<smem>>
    %305 = vector.broadcast %304 : f32 to vector<32x32xf32>
    %306 = arith.mulf %25, %305 : vector<32x32xf32>
    %307 = arith.addf %303, %306 : vector<32x32xf32>
    %c4_128 = arith.constant 4 : index
    %c5_129 = arith.constant 5 : index
    %308 = memref.load %arg6[%c4_128, %c5_129] : memref<9x16xf32, #tpu.memory_space<smem>>
    %309 = vector.broadcast %308 : f32 to vector<32x32xf32>
    %310 = arith.mulf %26, %309 : vector<32x32xf32>
    %311 = arith.addf %307, %310 : vector<32x32xf32>
    %c4_130 = arith.constant 4 : index
    %c6_131 = arith.constant 6 : index
    %312 = memref.load %arg6[%c4_130, %c6_131] : memref<9x16xf32, #tpu.memory_space<smem>>
    %313 = vector.broadcast %312 : f32 to vector<32x32xf32>
    %314 = arith.mulf %27, %313 : vector<32x32xf32>
    %315 = arith.addf %311, %314 : vector<32x32xf32>
    %c4_132 = arith.constant 4 : index
    %c7_133 = arith.constant 7 : index
    %316 = memref.load %arg6[%c4_132, %c7_133] : memref<9x16xf32, #tpu.memory_space<smem>>
    %317 = vector.broadcast %316 : f32 to vector<32x32xf32>
    %318 = arith.mulf %28, %317 : vector<32x32xf32>
    %319 = arith.addf %315, %318 : vector<32x32xf32>
    %c4_134 = arith.constant 4 : index
    %c8_135 = arith.constant 8 : index
    %320 = memref.load %arg6[%c4_134, %c8_135] : memref<9x16xf32, #tpu.memory_space<smem>>
    %321 = vector.broadcast %320 : f32 to vector<32x32xf32>
    %322 = arith.mulf %29, %321 : vector<32x32xf32>
    %323 = arith.addf %319, %322 : vector<32x32xf32>
    %c4_136 = arith.constant 4 : index
    %c9_137 = arith.constant 9 : index
    %324 = memref.load %arg6[%c4_136, %c9_137] : memref<9x16xf32, #tpu.memory_space<smem>>
    %325 = vector.broadcast %324 : f32 to vector<32x32xf32>
    %326 = arith.mulf %30, %325 : vector<32x32xf32>
    %327 = arith.addf %323, %326 : vector<32x32xf32>
    %c4_138 = arith.constant 4 : index
    %c10_139 = arith.constant 10 : index
    %328 = memref.load %arg6[%c4_138, %c10_139] : memref<9x16xf32, #tpu.memory_space<smem>>
    %329 = vector.broadcast %328 : f32 to vector<32x32xf32>
    %330 = arith.mulf %31, %329 : vector<32x32xf32>
    %331 = arith.addf %327, %330 : vector<32x32xf32>
    %c4_140 = arith.constant 4 : index
    %c11_141 = arith.constant 11 : index
    %332 = memref.load %arg6[%c4_140, %c11_141] : memref<9x16xf32, #tpu.memory_space<smem>>
    %333 = vector.broadcast %332 : f32 to vector<32x32xf32>
    %334 = arith.mulf %32, %333 : vector<32x32xf32>
    %335 = arith.addf %331, %334 : vector<32x32xf32>
    %c4_142 = arith.constant 4 : index
    %c12_143 = arith.constant 12 : index
    %336 = memref.load %arg6[%c4_142, %c12_143] : memref<9x16xf32, #tpu.memory_space<smem>>
    %337 = vector.broadcast %336 : f32 to vector<32x32xf32>
    %338 = arith.mulf %33, %337 : vector<32x32xf32>
    %339 = arith.addf %335, %338 : vector<32x32xf32>
    %c4_144 = arith.constant 4 : index
    %c13_145 = arith.constant 13 : index
    %340 = memref.load %arg6[%c4_144, %c13_145] : memref<9x16xf32, #tpu.memory_space<smem>>
    %341 = vector.broadcast %340 : f32 to vector<32x32xf32>
    %342 = arith.mulf %34, %341 : vector<32x32xf32>
    %343 = arith.addf %339, %342 : vector<32x32xf32>
    %c4_146 = arith.constant 4 : index
    %c14_147 = arith.constant 14 : index
    %344 = memref.load %arg6[%c4_146, %c14_147] : memref<9x16xf32, #tpu.memory_space<smem>>
    %345 = vector.broadcast %344 : f32 to vector<32x32xf32>
    %346 = arith.mulf %35, %345 : vector<32x32xf32>
    %347 = arith.addf %343, %346 : vector<32x32xf32>
    %c4_148 = arith.constant 4 : index
    %c15_149 = arith.constant 15 : index
    %348 = memref.load %arg6[%c4_148, %c15_149] : memref<9x16xf32, #tpu.memory_space<smem>>
    %349 = vector.broadcast %348 : f32 to vector<32x32xf32>
    %350 = arith.mulf %36, %349 : vector<32x32xf32>
    %351 = arith.addf %347, %350 : vector<32x32xf32>
    %c5_150 = arith.constant 5 : index
    %c0_151 = arith.constant 0 : index
    %352 = memref.load %arg6[%c5_150, %c0_151] : memref<9x16xf32, #tpu.memory_space<smem>>
    %353 = vector.broadcast %352 : f32 to vector<32x32xf32>
    %354 = arith.mulf %21, %353 : vector<32x32xf32>
    %c5_152 = arith.constant 5 : index
    %c1_153 = arith.constant 1 : index
    %355 = memref.load %arg6[%c5_152, %c1_153] : memref<9x16xf32, #tpu.memory_space<smem>>
    %356 = vector.broadcast %355 : f32 to vector<32x32xf32>
    %357 = arith.mulf %22, %356 : vector<32x32xf32>
    %358 = arith.addf %354, %357 : vector<32x32xf32>
    %c5_154 = arith.constant 5 : index
    %c2_155 = arith.constant 2 : index
    %359 = memref.load %arg6[%c5_154, %c2_155] : memref<9x16xf32, #tpu.memory_space<smem>>
    %360 = vector.broadcast %359 : f32 to vector<32x32xf32>
    %361 = arith.mulf %23, %360 : vector<32x32xf32>
    %362 = arith.addf %358, %361 : vector<32x32xf32>
    %c5_156 = arith.constant 5 : index
    %c3_157 = arith.constant 3 : index
    %363 = memref.load %arg6[%c5_156, %c3_157] : memref<9x16xf32, #tpu.memory_space<smem>>
    %364 = vector.broadcast %363 : f32 to vector<32x32xf32>
    %365 = arith.mulf %24, %364 : vector<32x32xf32>
    %366 = arith.addf %362, %365 : vector<32x32xf32>
    %c5_158 = arith.constant 5 : index
    %c4_159 = arith.constant 4 : index
    %367 = memref.load %arg6[%c5_158, %c4_159] : memref<9x16xf32, #tpu.memory_space<smem>>
    %368 = vector.broadcast %367 : f32 to vector<32x32xf32>
    %369 = arith.mulf %25, %368 : vector<32x32xf32>
    %370 = arith.addf %366, %369 : vector<32x32xf32>
    %c5_160 = arith.constant 5 : index
    %c5_161 = arith.constant 5 : index
    %371 = memref.load %arg6[%c5_160, %c5_161] : memref<9x16xf32, #tpu.memory_space<smem>>
    %372 = vector.broadcast %371 : f32 to vector<32x32xf32>
    %373 = arith.mulf %26, %372 : vector<32x32xf32>
    %374 = arith.addf %370, %373 : vector<32x32xf32>
    %c5_162 = arith.constant 5 : index
    %c6_163 = arith.constant 6 : index
    %375 = memref.load %arg6[%c5_162, %c6_163] : memref<9x16xf32, #tpu.memory_space<smem>>
    %376 = vector.broadcast %375 : f32 to vector<32x32xf32>
    %377 = arith.mulf %27, %376 : vector<32x32xf32>
    %378 = arith.addf %374, %377 : vector<32x32xf32>
    %c5_164 = arith.constant 5 : index
    %c7_165 = arith.constant 7 : index
    %379 = memref.load %arg6[%c5_164, %c7_165] : memref<9x16xf32, #tpu.memory_space<smem>>
    %380 = vector.broadcast %379 : f32 to vector<32x32xf32>
    %381 = arith.mulf %28, %380 : vector<32x32xf32>
    %382 = arith.addf %378, %381 : vector<32x32xf32>
    %c5_166 = arith.constant 5 : index
    %c8_167 = arith.constant 8 : index
    %383 = memref.load %arg6[%c5_166, %c8_167] : memref<9x16xf32, #tpu.memory_space<smem>>
    %384 = vector.broadcast %383 : f32 to vector<32x32xf32>
    %385 = arith.mulf %29, %384 : vector<32x32xf32>
    %386 = arith.addf %382, %385 : vector<32x32xf32>
    %c5_168 = arith.constant 5 : index
    %c9_169 = arith.constant 9 : index
    %387 = memref.load %arg6[%c5_168, %c9_169] : memref<9x16xf32, #tpu.memory_space<smem>>
    %388 = vector.broadcast %387 : f32 to vector<32x32xf32>
    %389 = arith.mulf %30, %388 : vector<32x32xf32>
    %390 = arith.addf %386, %389 : vector<32x32xf32>
    %c5_170 = arith.constant 5 : index
    %c10_171 = arith.constant 10 : index
    %391 = memref.load %arg6[%c5_170, %c10_171] : memref<9x16xf32, #tpu.memory_space<smem>>
    %392 = vector.broadcast %391 : f32 to vector<32x32xf32>
    %393 = arith.mulf %31, %392 : vector<32x32xf32>
    %394 = arith.addf %390, %393 : vector<32x32xf32>
    %c5_172 = arith.constant 5 : index
    %c11_173 = arith.constant 11 : index
    %395 = memref.load %arg6[%c5_172, %c11_173] : memref<9x16xf32, #tpu.memory_space<smem>>
    %396 = vector.broadcast %395 : f32 to vector<32x32xf32>
    %397 = arith.mulf %32, %396 : vector<32x32xf32>
    %398 = arith.addf %394, %397 : vector<32x32xf32>
    %c5_174 = arith.constant 5 : index
    %c12_175 = arith.constant 12 : index
    %399 = memref.load %arg6[%c5_174, %c12_175] : memref<9x16xf32, #tpu.memory_space<smem>>
    %400 = vector.broadcast %399 : f32 to vector<32x32xf32>
    %401 = arith.mulf %33, %400 : vector<32x32xf32>
    %402 = arith.addf %398, %401 : vector<32x32xf32>
    %c5_176 = arith.constant 5 : index
    %c13_177 = arith.constant 13 : index
    %403 = memref.load %arg6[%c5_176, %c13_177] : memref<9x16xf32, #tpu.memory_space<smem>>
    %404 = vector.broadcast %403 : f32 to vector<32x32xf32>
    %405 = arith.mulf %34, %404 : vector<32x32xf32>
    %406 = arith.addf %402, %405 : vector<32x32xf32>
    %c5_178 = arith.constant 5 : index
    %c14_179 = arith.constant 14 : index
    %407 = memref.load %arg6[%c5_178, %c14_179] : memref<9x16xf32, #tpu.memory_space<smem>>
    %408 = vector.broadcast %407 : f32 to vector<32x32xf32>
    %409 = arith.mulf %35, %408 : vector<32x32xf32>
    %410 = arith.addf %406, %409 : vector<32x32xf32>
    %c5_180 = arith.constant 5 : index
    %c15_181 = arith.constant 15 : index
    %411 = memref.load %arg6[%c5_180, %c15_181] : memref<9x16xf32, #tpu.memory_space<smem>>
    %412 = vector.broadcast %411 : f32 to vector<32x32xf32>
    %413 = arith.mulf %36, %412 : vector<32x32xf32>
    %414 = arith.addf %410, %413 : vector<32x32xf32>
    %c6_182 = arith.constant 6 : index
    %c0_183 = arith.constant 0 : index
    %415 = memref.load %arg6[%c6_182, %c0_183] : memref<9x16xf32, #tpu.memory_space<smem>>
    %416 = vector.broadcast %415 : f32 to vector<32x32xf32>
    %417 = arith.mulf %21, %416 : vector<32x32xf32>
    %c6_184 = arith.constant 6 : index
    %c1_185 = arith.constant 1 : index
    %418 = memref.load %arg6[%c6_184, %c1_185] : memref<9x16xf32, #tpu.memory_space<smem>>
    %419 = vector.broadcast %418 : f32 to vector<32x32xf32>
    %420 = arith.mulf %22, %419 : vector<32x32xf32>
    %421 = arith.addf %417, %420 : vector<32x32xf32>
    %c6_186 = arith.constant 6 : index
    %c2_187 = arith.constant 2 : index
    %422 = memref.load %arg6[%c6_186, %c2_187] : memref<9x16xf32, #tpu.memory_space<smem>>
    %423 = vector.broadcast %422 : f32 to vector<32x32xf32>
    %424 = arith.mulf %23, %423 : vector<32x32xf32>
    %425 = arith.addf %421, %424 : vector<32x32xf32>
    %c6_188 = arith.constant 6 : index
    %c3_189 = arith.constant 3 : index
    %426 = memref.load %arg6[%c6_188, %c3_189] : memref<9x16xf32, #tpu.memory_space<smem>>
    %427 = vector.broadcast %426 : f32 to vector<32x32xf32>
    %428 = arith.mulf %24, %427 : vector<32x32xf32>
    %429 = arith.addf %425, %428 : vector<32x32xf32>
    %c6_190 = arith.constant 6 : index
    %c4_191 = arith.constant 4 : index
    %430 = memref.load %arg6[%c6_190, %c4_191] : memref<9x16xf32, #tpu.memory_space<smem>>
    %431 = vector.broadcast %430 : f32 to vector<32x32xf32>
    %432 = arith.mulf %25, %431 : vector<32x32xf32>
    %433 = arith.addf %429, %432 : vector<32x32xf32>
    %c6_192 = arith.constant 6 : index
    %c5_193 = arith.constant 5 : index
    %434 = memref.load %arg6[%c6_192, %c5_193] : memref<9x16xf32, #tpu.memory_space<smem>>
    %435 = vector.broadcast %434 : f32 to vector<32x32xf32>
    %436 = arith.mulf %26, %435 : vector<32x32xf32>
    %437 = arith.addf %433, %436 : vector<32x32xf32>
    %c6_194 = arith.constant 6 : index
    %c6_195 = arith.constant 6 : index
    %438 = memref.load %arg6[%c6_194, %c6_195] : memref<9x16xf32, #tpu.memory_space<smem>>
    %439 = vector.broadcast %438 : f32 to vector<32x32xf32>
    %440 = arith.mulf %27, %439 : vector<32x32xf32>
    %441 = arith.addf %437, %440 : vector<32x32xf32>
    %c6_196 = arith.constant 6 : index
    %c7_197 = arith.constant 7 : index
    %442 = memref.load %arg6[%c6_196, %c7_197] : memref<9x16xf32, #tpu.memory_space<smem>>
    %443 = vector.broadcast %442 : f32 to vector<32x32xf32>
    %444 = arith.mulf %28, %443 : vector<32x32xf32>
    %445 = arith.addf %441, %444 : vector<32x32xf32>
    %c6_198 = arith.constant 6 : index
    %c8_199 = arith.constant 8 : index
    %446 = memref.load %arg6[%c6_198, %c8_199] : memref<9x16xf32, #tpu.memory_space<smem>>
    %447 = vector.broadcast %446 : f32 to vector<32x32xf32>
    %448 = arith.mulf %29, %447 : vector<32x32xf32>
    %449 = arith.addf %445, %448 : vector<32x32xf32>
    %c6_200 = arith.constant 6 : index
    %c9_201 = arith.constant 9 : index
    %450 = memref.load %arg6[%c6_200, %c9_201] : memref<9x16xf32, #tpu.memory_space<smem>>
    %451 = vector.broadcast %450 : f32 to vector<32x32xf32>
    %452 = arith.mulf %30, %451 : vector<32x32xf32>
    %453 = arith.addf %449, %452 : vector<32x32xf32>
    %c6_202 = arith.constant 6 : index
    %c10_203 = arith.constant 10 : index
    %454 = memref.load %arg6[%c6_202, %c10_203] : memref<9x16xf32, #tpu.memory_space<smem>>
    %455 = vector.broadcast %454 : f32 to vector<32x32xf32>
    %456 = arith.mulf %31, %455 : vector<32x32xf32>
    %457 = arith.addf %453, %456 : vector<32x32xf32>
    %c6_204 = arith.constant 6 : index
    %c11_205 = arith.constant 11 : index
    %458 = memref.load %arg6[%c6_204, %c11_205] : memref<9x16xf32, #tpu.memory_space<smem>>
    %459 = vector.broadcast %458 : f32 to vector<32x32xf32>
    %460 = arith.mulf %32, %459 : vector<32x32xf32>
    %461 = arith.addf %457, %460 : vector<32x32xf32>
    %c6_206 = arith.constant 6 : index
    %c12_207 = arith.constant 12 : index
    %462 = memref.load %arg6[%c6_206, %c12_207] : memref<9x16xf32, #tpu.memory_space<smem>>
    %463 = vector.broadcast %462 : f32 to vector<32x32xf32>
    %464 = arith.mulf %33, %463 : vector<32x32xf32>
    %465 = arith.addf %461, %464 : vector<32x32xf32>
    %c6_208 = arith.constant 6 : index
    %c13_209 = arith.constant 13 : index
    %466 = memref.load %arg6[%c6_208, %c13_209] : memref<9x16xf32, #tpu.memory_space<smem>>
    %467 = vector.broadcast %466 : f32 to vector<32x32xf32>
    %468 = arith.mulf %34, %467 : vector<32x32xf32>
    %469 = arith.addf %465, %468 : vector<32x32xf32>
    %c6_210 = arith.constant 6 : index
    %c14_211 = arith.constant 14 : index
    %470 = memref.load %arg6[%c6_210, %c14_211] : memref<9x16xf32, #tpu.memory_space<smem>>
    %471 = vector.broadcast %470 : f32 to vector<32x32xf32>
    %472 = arith.mulf %35, %471 : vector<32x32xf32>
    %473 = arith.addf %469, %472 : vector<32x32xf32>
    %c6_212 = arith.constant 6 : index
    %c15_213 = arith.constant 15 : index
    %474 = memref.load %arg6[%c6_212, %c15_213] : memref<9x16xf32, #tpu.memory_space<smem>>
    %475 = vector.broadcast %474 : f32 to vector<32x32xf32>
    %476 = arith.mulf %36, %475 : vector<32x32xf32>
    %477 = arith.addf %473, %476 : vector<32x32xf32>
    %c7_214 = arith.constant 7 : index
    %c0_215 = arith.constant 0 : index
    %478 = memref.load %arg6[%c7_214, %c0_215] : memref<9x16xf32, #tpu.memory_space<smem>>
    %479 = vector.broadcast %478 : f32 to vector<32x32xf32>
    %480 = arith.mulf %21, %479 : vector<32x32xf32>
    %c7_216 = arith.constant 7 : index
    %c1_217 = arith.constant 1 : index
    %481 = memref.load %arg6[%c7_216, %c1_217] : memref<9x16xf32, #tpu.memory_space<smem>>
    %482 = vector.broadcast %481 : f32 to vector<32x32xf32>
    %483 = arith.mulf %22, %482 : vector<32x32xf32>
    %484 = arith.addf %480, %483 : vector<32x32xf32>
    %c7_218 = arith.constant 7 : index
    %c2_219 = arith.constant 2 : index
    %485 = memref.load %arg6[%c7_218, %c2_219] : memref<9x16xf32, #tpu.memory_space<smem>>
    %486 = vector.broadcast %485 : f32 to vector<32x32xf32>
    %487 = arith.mulf %23, %486 : vector<32x32xf32>
    %488 = arith.addf %484, %487 : vector<32x32xf32>
    %c7_220 = arith.constant 7 : index
    %c3_221 = arith.constant 3 : index
    %489 = memref.load %arg6[%c7_220, %c3_221] : memref<9x16xf32, #tpu.memory_space<smem>>
    %490 = vector.broadcast %489 : f32 to vector<32x32xf32>
    %491 = arith.mulf %24, %490 : vector<32x32xf32>
    %492 = arith.addf %488, %491 : vector<32x32xf32>
    %c7_222 = arith.constant 7 : index
    %c4_223 = arith.constant 4 : index
    %493 = memref.load %arg6[%c7_222, %c4_223] : memref<9x16xf32, #tpu.memory_space<smem>>
    %494 = vector.broadcast %493 : f32 to vector<32x32xf32>
    %495 = arith.mulf %25, %494 : vector<32x32xf32>
    %496 = arith.addf %492, %495 : vector<32x32xf32>
    %c7_224 = arith.constant 7 : index
    %c5_225 = arith.constant 5 : index
    %497 = memref.load %arg6[%c7_224, %c5_225] : memref<9x16xf32, #tpu.memory_space<smem>>
    %498 = vector.broadcast %497 : f32 to vector<32x32xf32>
    %499 = arith.mulf %26, %498 : vector<32x32xf32>
    %500 = arith.addf %496, %499 : vector<32x32xf32>
    %c7_226 = arith.constant 7 : index
    %c6_227 = arith.constant 6 : index
    %501 = memref.load %arg6[%c7_226, %c6_227] : memref<9x16xf32, #tpu.memory_space<smem>>
    %502 = vector.broadcast %501 : f32 to vector<32x32xf32>
    %503 = arith.mulf %27, %502 : vector<32x32xf32>
    %504 = arith.addf %500, %503 : vector<32x32xf32>
    %c7_228 = arith.constant 7 : index
    %c7_229 = arith.constant 7 : index
    %505 = memref.load %arg6[%c7_228, %c7_229] : memref<9x16xf32, #tpu.memory_space<smem>>
    %506 = vector.broadcast %505 : f32 to vector<32x32xf32>
    %507 = arith.mulf %28, %506 : vector<32x32xf32>
    %508 = arith.addf %504, %507 : vector<32x32xf32>
    %c7_230 = arith.constant 7 : index
    %c8_231 = arith.constant 8 : index
    %509 = memref.load %arg6[%c7_230, %c8_231] : memref<9x16xf32, #tpu.memory_space<smem>>
    %510 = vector.broadcast %509 : f32 to vector<32x32xf32>
    %511 = arith.mulf %29, %510 : vector<32x32xf32>
    %512 = arith.addf %508, %511 : vector<32x32xf32>
    %c7_232 = arith.constant 7 : index
    %c9_233 = arith.constant 9 : index
    %513 = memref.load %arg6[%c7_232, %c9_233] : memref<9x16xf32, #tpu.memory_space<smem>>
    %514 = vector.broadcast %513 : f32 to vector<32x32xf32>
    %515 = arith.mulf %30, %514 : vector<32x32xf32>
    %516 = arith.addf %512, %515 : vector<32x32xf32>
    %c7_234 = arith.constant 7 : index
    %c10_235 = arith.constant 10 : index
    %517 = memref.load %arg6[%c7_234, %c10_235] : memref<9x16xf32, #tpu.memory_space<smem>>
    %518 = vector.broadcast %517 : f32 to vector<32x32xf32>
    %519 = arith.mulf %31, %518 : vector<32x32xf32>
    %520 = arith.addf %516, %519 : vector<32x32xf32>
    %c7_236 = arith.constant 7 : index
    %c11_237 = arith.constant 11 : index
    %521 = memref.load %arg6[%c7_236, %c11_237] : memref<9x16xf32, #tpu.memory_space<smem>>
    %522 = vector.broadcast %521 : f32 to vector<32x32xf32>
    %523 = arith.mulf %32, %522 : vector<32x32xf32>
    %524 = arith.addf %520, %523 : vector<32x32xf32>
    %c7_238 = arith.constant 7 : index
    %c12_239 = arith.constant 12 : index
    %525 = memref.load %arg6[%c7_238, %c12_239] : memref<9x16xf32, #tpu.memory_space<smem>>
    %526 = vector.broadcast %525 : f32 to vector<32x32xf32>
    %527 = arith.mulf %33, %526 : vector<32x32xf32>
    %528 = arith.addf %524, %527 : vector<32x32xf32>
    %c7_240 = arith.constant 7 : index
    %c13_241 = arith.constant 13 : index
    %529 = memref.load %arg6[%c7_240, %c13_241] : memref<9x16xf32, #tpu.memory_space<smem>>
    %530 = vector.broadcast %529 : f32 to vector<32x32xf32>
    %531 = arith.mulf %34, %530 : vector<32x32xf32>
    %532 = arith.addf %528, %531 : vector<32x32xf32>
    %c7_242 = arith.constant 7 : index
    %c14_243 = arith.constant 14 : index
    %533 = memref.load %arg6[%c7_242, %c14_243] : memref<9x16xf32, #tpu.memory_space<smem>>
    %534 = vector.broadcast %533 : f32 to vector<32x32xf32>
    %535 = arith.mulf %35, %534 : vector<32x32xf32>
    %536 = arith.addf %532, %535 : vector<32x32xf32>
    %c7_244 = arith.constant 7 : index
    %c15_245 = arith.constant 15 : index
    %537 = memref.load %arg6[%c7_244, %c15_245] : memref<9x16xf32, #tpu.memory_space<smem>>
    %538 = vector.broadcast %537 : f32 to vector<32x32xf32>
    %539 = arith.mulf %36, %538 : vector<32x32xf32>
    %540 = arith.addf %536, %539 : vector<32x32xf32>
    %c8_246 = arith.constant 8 : index
    %c0_247 = arith.constant 0 : index
    %541 = memref.load %arg6[%c8_246, %c0_247] : memref<9x16xf32, #tpu.memory_space<smem>>
    %542 = vector.broadcast %541 : f32 to vector<32x32xf32>
    %543 = arith.mulf %21, %542 : vector<32x32xf32>
    %c8_248 = arith.constant 8 : index
    %c1_249 = arith.constant 1 : index
    %544 = memref.load %arg6[%c8_248, %c1_249] : memref<9x16xf32, #tpu.memory_space<smem>>
    %545 = vector.broadcast %544 : f32 to vector<32x32xf32>
    %546 = arith.mulf %22, %545 : vector<32x32xf32>
    %547 = arith.addf %543, %546 : vector<32x32xf32>
    %c8_250 = arith.constant 8 : index
    %c2_251 = arith.constant 2 : index
    %548 = memref.load %arg6[%c8_250, %c2_251] : memref<9x16xf32, #tpu.memory_space<smem>>
    %549 = vector.broadcast %548 : f32 to vector<32x32xf32>
    %550 = arith.mulf %23, %549 : vector<32x32xf32>
    %551 = arith.addf %547, %550 : vector<32x32xf32>
    %c8_252 = arith.constant 8 : index
    %c3_253 = arith.constant 3 : index
    %552 = memref.load %arg6[%c8_252, %c3_253] : memref<9x16xf32, #tpu.memory_space<smem>>
    %553 = vector.broadcast %552 : f32 to vector<32x32xf32>
    %554 = arith.mulf %24, %553 : vector<32x32xf32>
    %555 = arith.addf %551, %554 : vector<32x32xf32>
    %c8_254 = arith.constant 8 : index
    %c4_255 = arith.constant 4 : index
    %556 = memref.load %arg6[%c8_254, %c4_255] : memref<9x16xf32, #tpu.memory_space<smem>>
    %557 = vector.broadcast %556 : f32 to vector<32x32xf32>
    %558 = arith.mulf %25, %557 : vector<32x32xf32>
    %559 = arith.addf %555, %558 : vector<32x32xf32>
    %c8_256 = arith.constant 8 : index
    %c5_257 = arith.constant 5 : index
    %560 = memref.load %arg6[%c8_256, %c5_257] : memref<9x16xf32, #tpu.memory_space<smem>>
    %561 = vector.broadcast %560 : f32 to vector<32x32xf32>
    %562 = arith.mulf %26, %561 : vector<32x32xf32>
    %563 = arith.addf %559, %562 : vector<32x32xf32>
    %c8_258 = arith.constant 8 : index
    %c6_259 = arith.constant 6 : index
    %564 = memref.load %arg6[%c8_258, %c6_259] : memref<9x16xf32, #tpu.memory_space<smem>>
    %565 = vector.broadcast %564 : f32 to vector<32x32xf32>
    %566 = arith.mulf %27, %565 : vector<32x32xf32>
    %567 = arith.addf %563, %566 : vector<32x32xf32>
    %c8_260 = arith.constant 8 : index
    %c7_261 = arith.constant 7 : index
    %568 = memref.load %arg6[%c8_260, %c7_261] : memref<9x16xf32, #tpu.memory_space<smem>>
    %569 = vector.broadcast %568 : f32 to vector<32x32xf32>
    %570 = arith.mulf %28, %569 : vector<32x32xf32>
    %571 = arith.addf %567, %570 : vector<32x32xf32>
    %c8_262 = arith.constant 8 : index
    %c8_263 = arith.constant 8 : index
    %572 = memref.load %arg6[%c8_262, %c8_263] : memref<9x16xf32, #tpu.memory_space<smem>>
    %573 = vector.broadcast %572 : f32 to vector<32x32xf32>
    %574 = arith.mulf %29, %573 : vector<32x32xf32>
    %575 = arith.addf %571, %574 : vector<32x32xf32>
    %c8_264 = arith.constant 8 : index
    %c9_265 = arith.constant 9 : index
    %576 = memref.load %arg6[%c8_264, %c9_265] : memref<9x16xf32, #tpu.memory_space<smem>>
    %577 = vector.broadcast %576 : f32 to vector<32x32xf32>
    %578 = arith.mulf %30, %577 : vector<32x32xf32>
    %579 = arith.addf %575, %578 : vector<32x32xf32>
    %c8_266 = arith.constant 8 : index
    %c10_267 = arith.constant 10 : index
    %580 = memref.load %arg6[%c8_266, %c10_267] : memref<9x16xf32, #tpu.memory_space<smem>>
    %581 = vector.broadcast %580 : f32 to vector<32x32xf32>
    %582 = arith.mulf %31, %581 : vector<32x32xf32>
    %583 = arith.addf %579, %582 : vector<32x32xf32>
    %c8_268 = arith.constant 8 : index
    %c11_269 = arith.constant 11 : index
    %584 = memref.load %arg6[%c8_268, %c11_269] : memref<9x16xf32, #tpu.memory_space<smem>>
    %585 = vector.broadcast %584 : f32 to vector<32x32xf32>
    %586 = arith.mulf %32, %585 : vector<32x32xf32>
    %587 = arith.addf %583, %586 : vector<32x32xf32>
    %c8_270 = arith.constant 8 : index
    %c12_271 = arith.constant 12 : index
    %588 = memref.load %arg6[%c8_270, %c12_271] : memref<9x16xf32, #tpu.memory_space<smem>>
    %589 = vector.broadcast %588 : f32 to vector<32x32xf32>
    %590 = arith.mulf %33, %589 : vector<32x32xf32>
    %591 = arith.addf %587, %590 : vector<32x32xf32>
    %c8_272 = arith.constant 8 : index
    %c13_273 = arith.constant 13 : index
    %592 = memref.load %arg6[%c8_272, %c13_273] : memref<9x16xf32, #tpu.memory_space<smem>>
    %593 = vector.broadcast %592 : f32 to vector<32x32xf32>
    %594 = arith.mulf %34, %593 : vector<32x32xf32>
    %595 = arith.addf %591, %594 : vector<32x32xf32>
    %c8_274 = arith.constant 8 : index
    %c14_275 = arith.constant 14 : index
    %596 = memref.load %arg6[%c8_274, %c14_275] : memref<9x16xf32, #tpu.memory_space<smem>>
    %597 = vector.broadcast %596 : f32 to vector<32x32xf32>
    %598 = arith.mulf %35, %597 : vector<32x32xf32>
    %599 = arith.addf %595, %598 : vector<32x32xf32>
    %c8_276 = arith.constant 8 : index
    %c15_277 = arith.constant 15 : index
    %600 = memref.load %arg6[%c8_276, %c15_277] : memref<9x16xf32, #tpu.memory_space<smem>>
    %601 = vector.broadcast %600 : f32 to vector<32x32xf32>
    %602 = arith.mulf %36, %601 : vector<32x32xf32>
    %603 = arith.addf %599, %602 : vector<32x32xf32>
    %c0_278 = arith.constant 0 : index
    %c0_279 = arith.constant 0 : index
    %c0_280 = arith.constant 0 : index
    %604 = vector.load %arg5[%c0_278, %c0_279, %c0_280] : memref<3x32x64xf32, #tpu.memory_space<vmem>>, vector<1x32x64xf32>
    %605 = vector.shape_cast %604 : vector<1x32x64xf32> to vector<32x64xf32>
    %cst_281 = arith.constant dense<0.000000e+00> : vector<32x64xf32>
    %606 = tpu.matmul %99, %605, %cst_281 {dimension_numbers = #tpu.dot_dimension_numbers<[1], [0], [0], [1], [0, 0, 1, 1], [], []>} : vector<32x32xf32>, vector<32x64xf32>, vector<32x64xf32> -> vector<32x64xf32>
    %c1_282 = arith.constant 1 : index
    %c0_283 = arith.constant 0 : index
    %c0_284 = arith.constant 0 : index
    %607 = vector.load %arg5[%c1_282, %c0_283, %c0_284] : memref<3x32x64xf32, #tpu.memory_space<vmem>>, vector<1x32x64xf32>
    %608 = vector.shape_cast %607 : vector<1x32x64xf32> to vector<32x64xf32>
    %cst_285 = arith.constant dense<0.000000e+00> : vector<32x64xf32>
    %609 = tpu.matmul %162, %608, %cst_285 {dimension_numbers = #tpu.dot_dimension_numbers<[1], [0], [0], [1], [0, 0, 1, 1], [], []>} : vector<32x32xf32>, vector<32x64xf32>, vector<32x64xf32> -> vector<32x64xf32>
    %610 = arith.addf %606, %609 : vector<32x64xf32>
    %c2_286 = arith.constant 2 : index
    %c0_287 = arith.constant 0 : index
    %c0_288 = arith.constant 0 : index
    %611 = vector.load %arg5[%c2_286, %c0_287, %c0_288] : memref<3x32x64xf32, #tpu.memory_space<vmem>>, vector<1x32x64xf32>
    %612 = vector.shape_cast %611 : vector<1x32x64xf32> to vector<32x64xf32>
    %cst_289 = arith.constant dense<0.000000e+00> : vector<32x64xf32>
    %613 = tpu.matmul %225, %612, %cst_289 {dimension_numbers = #tpu.dot_dimension_numbers<[1], [0], [0], [1], [0, 0, 1, 1], [], []>} : vector<32x32xf32>, vector<32x64xf32>, vector<32x64xf32> -> vector<32x64xf32>
    %614 = arith.addf %610, %613 : vector<32x64xf32>
    %c0_290 = arith.constant 0 : index
    %c0_291 = arith.constant 0 : index
    %c0_292 = arith.constant 0 : index
    %615 = vector.load %arg4[%c0_290, %c0_291, %c0_292] : memref<3x64x32xf32, #tpu.memory_space<vmem>>, vector<1x64x32xf32>
    %616 = vector.shape_cast %615 : vector<1x64x32xf32> to vector<64x32xf32>
    %cst_293 = arith.constant dense<0.000000e+00> : vector<64x64xf32>
    %617 = tpu.matmul %616, %614, %cst_293 {dimension_numbers = #tpu.dot_dimension_numbers<[1], [0], [0], [1], [0, 0, 1, 1], [], []>} : vector<64x32xf32>, vector<32x64xf32>, vector<64x64xf32> -> vector<64x64xf32>
    %c0_294 = arith.constant 0 : index
    %c0_295 = arith.constant 0 : index
    %c0_296 = arith.constant 0 : index
    %618 = vector.load %arg5[%c0_294, %c0_295, %c0_296] : memref<3x32x64xf32, #tpu.memory_space<vmem>>, vector<1x32x64xf32>
    %619 = vector.shape_cast %618 : vector<1x32x64xf32> to vector<32x64xf32>
    %cst_297 = arith.constant dense<0.000000e+00> : vector<32x64xf32>
    %620 = tpu.matmul %288, %619, %cst_297 {dimension_numbers = #tpu.dot_dimension_numbers<[1], [0], [0], [1], [0, 0, 1, 1], [], []>} : vector<32x32xf32>, vector<32x64xf32>, vector<32x64xf32> -> vector<32x64xf32>
    %c1_298 = arith.constant 1 : index
    %c0_299 = arith.constant 0 : index
    %c0_300 = arith.constant 0 : index
    %621 = vector.load %arg5[%c1_298, %c0_299, %c0_300] : memref<3x32x64xf32, #tpu.memory_space<vmem>>, vector<1x32x64xf32>
    %622 = vector.shape_cast %621 : vector<1x32x64xf32> to vector<32x64xf32>
    %cst_301 = arith.constant dense<0.000000e+00> : vector<32x64xf32>
    %623 = tpu.matmul %351, %622, %cst_301 {dimension_numbers = #tpu.dot_dimension_numbers<[1], [0], [0], [1], [0, 0, 1, 1], [], []>} : vector<32x32xf32>, vector<32x64xf32>, vector<32x64xf32> -> vector<32x64xf32>
    %624 = arith.addf %620, %623 : vector<32x64xf32>
    %c2_302 = arith.constant 2 : index
    %c0_303 = arith.constant 0 : index
    %c0_304 = arith.constant 0 : index
    %625 = vector.load %arg5[%c2_302, %c0_303, %c0_304] : memref<3x32x64xf32, #tpu.memory_space<vmem>>, vector<1x32x64xf32>
    %626 = vector.shape_cast %625 : vector<1x32x64xf32> to vector<32x64xf32>
    %cst_305 = arith.constant dense<0.000000e+00> : vector<32x64xf32>
    %627 = tpu.matmul %414, %626, %cst_305 {dimension_numbers = #tpu.dot_dimension_numbers<[1], [0], [0], [1], [0, 0, 1, 1], [], []>} : vector<32x32xf32>, vector<32x64xf32>, vector<32x64xf32> -> vector<32x64xf32>
    %628 = arith.addf %624, %627 : vector<32x64xf32>
    %c1_306 = arith.constant 1 : index
    %c0_307 = arith.constant 0 : index
    %c0_308 = arith.constant 0 : index
    %629 = vector.load %arg4[%c1_306, %c0_307, %c0_308] : memref<3x64x32xf32, #tpu.memory_space<vmem>>, vector<1x64x32xf32>
    %630 = vector.shape_cast %629 : vector<1x64x32xf32> to vector<64x32xf32>
    %cst_309 = arith.constant dense<0.000000e+00> : vector<64x64xf32>
    %631 = tpu.matmul %630, %628, %cst_309 {dimension_numbers = #tpu.dot_dimension_numbers<[1], [0], [0], [1], [0, 0, 1, 1], [], []>} : vector<64x32xf32>, vector<32x64xf32>, vector<64x64xf32> -> vector<64x64xf32>
    %632 = arith.addf %617, %631 : vector<64x64xf32>
    %c0_310 = arith.constant 0 : index
    %c0_311 = arith.constant 0 : index
    %c0_312 = arith.constant 0 : index
    %633 = vector.load %arg5[%c0_310, %c0_311, %c0_312] : memref<3x32x64xf32, #tpu.memory_space<vmem>>, vector<1x32x64xf32>
    %634 = vector.shape_cast %633 : vector<1x32x64xf32> to vector<32x64xf32>
    %cst_313 = arith.constant dense<0.000000e+00> : vector<32x64xf32>
    %635 = tpu.matmul %477, %634, %cst_313 {dimension_numbers = #tpu.dot_dimension_numbers<[1], [0], [0], [1], [0, 0, 1, 1], [], []>} : vector<32x32xf32>, vector<32x64xf32>, vector<32x64xf32> -> vector<32x64xf32>
    %c1_314 = arith.constant 1 : index
    %c0_315 = arith.constant 0 : index
    %c0_316 = arith.constant 0 : index
    %636 = vector.load %arg5[%c1_314, %c0_315, %c0_316] : memref<3x32x64xf32, #tpu.memory_space<vmem>>, vector<1x32x64xf32>
    %637 = vector.shape_cast %636 : vector<1x32x64xf32> to vector<32x64xf32>
    %cst_317 = arith.constant dense<0.000000e+00> : vector<32x64xf32>
    %638 = tpu.matmul %540, %637, %cst_317 {dimension_numbers = #tpu.dot_dimension_numbers<[1], [0], [0], [1], [0, 0, 1, 1], [], []>} : vector<32x32xf32>, vector<32x64xf32>, vector<32x64xf32> -> vector<32x64xf32>
    %639 = arith.addf %635, %638 : vector<32x64xf32>
    %c2_318 = arith.constant 2 : index
    %c0_319 = arith.constant 0 : index
    %c0_320 = arith.constant 0 : index
    %640 = vector.load %arg5[%c2_318, %c0_319, %c0_320] : memref<3x32x64xf32, #tpu.memory_space<vmem>>, vector<1x32x64xf32>
    %641 = vector.shape_cast %640 : vector<1x32x64xf32> to vector<32x64xf32>
    %cst_321 = arith.constant dense<0.000000e+00> : vector<32x64xf32>
    %642 = tpu.matmul %603, %641, %cst_321 {dimension_numbers = #tpu.dot_dimension_numbers<[1], [0], [0], [1], [0, 0, 1, 1], [], []>} : vector<32x32xf32>, vector<32x64xf32>, vector<32x64xf32> -> vector<32x64xf32>
    %643 = arith.addf %639, %642 : vector<32x64xf32>
    %c2_322 = arith.constant 2 : index
    %c0_323 = arith.constant 0 : index
    %c0_324 = arith.constant 0 : index
    %644 = vector.load %arg4[%c2_322, %c0_323, %c0_324] : memref<3x64x32xf32, #tpu.memory_space<vmem>>, vector<1x64x32xf32>
    %645 = vector.shape_cast %644 : vector<1x64x32xf32> to vector<64x32xf32>
    %cst_325 = arith.constant dense<0.000000e+00> : vector<64x64xf32>
    %646 = tpu.matmul %645, %643, %cst_325 {dimension_numbers = #tpu.dot_dimension_numbers<[1], [0], [0], [1], [0, 0, 1, 1], [], []>} : vector<64x32xf32>, vector<32x64xf32>, vector<64x64xf32> -> vector<64x64xf32>
    %647 = arith.addf %632, %646 : vector<64x64xf32>
    %c0_326 = arith.constant 0 : index
    %648 = memref.load %arg7[%c0_326] : memref<1xf32, #tpu.memory_space<smem>>
    %649 = vector.broadcast %648 : f32 to vector<64x64xf32>
    %650 = arith.addf %647, %649 : vector<64x64xf32>
    %651 = arith.negf %650 : vector<64x64xf32>
    %652 = math.exp %651 : vector<64x64xf32>
    %cst_327 = arith.constant 1.000000e+00 : f32
    %653 = vector.broadcast %cst_327 : f32 to vector<64x64xf32>
    %654 = arith.addf %653, %652 : vector<64x64xf32>
    %655 = arith.divf %653, %654 : vector<64x64xf32>
    %c0_328 = arith.constant 0 : index
    %c0_329 = arith.constant 0 : index
    %c0_330 = arith.constant 0 : index
    %c0_331 = arith.constant 0 : index
    %656 = vector.load %arg8[%c0_328, %c0_329, %c0_330, %c0_331] : memref<1x1x64x64xf32, #tpu.memory_space<vmem>>, vector<1x1x64x64xf32>
    %657 = vector.shape_cast %656 : vector<1x1x64x64xf32> to vector<64x64xf32>
    %658 = vector.shape_cast %655 : vector<64x64xf32> to vector<1x1x64x64xf32>
    tpu.vector_store %arg8[%c0_328, %c0_329, %c0_330, %c0_331], %658 {strides = array<i32>} : memref<1x1x64x64xf32, #tpu.memory_space<vmem>>, vector<1x1x64x64xf32>,
    return
  }
  func.func @transform_0(%arg0: i32) -> (i32, i32) {
    %c0_i32 = arith.constant 0 : i32
    %c0_i32_0 = arith.constant 0 : i32
    %c0_i32_1 = arith.constant 0 : i32
    return %c0_i32, %c0_i32_0 : i32, i32
  }
  func.func @transform_1(%arg0: i32) -> (i32, i32) {
    %c0_i32 = arith.constant 0 : i32
    %c0_i32_0 = arith.constant 0 : i32
    %c0_i32_1 = arith.constant 0 : i32
    return %c0_i32, %c0_i32_0 : i32, i32
  }
  func.func @transform_2(%arg0: i32) -> (i32, i32) {
    %c0_i32 = arith.constant 0 : i32
    %c0_i32_0 = arith.constant 0 : i32
    %c0_i32_1 = arith.constant 0 : i32
    return %c0_i32, %c0_i32_0 : i32, i32
  }
  func.func @transform_3(%arg0: i32) -> (i32, i32, i32) {
    %c0_i32 = arith.constant 0 : i32
    %c0_i32_0 = arith.constant 0 : i32
    %c0_i32_1 = arith.constant 0 : i32
    %c0_i32_2 = arith.constant 0 : i32
    return %c0_i32, %c0_i32_0, %c0_i32_1 : i32, i32, i32
  }
  func.func @transform_4(%arg0: i32) -> (i32, i32, i32) {
    %c0_i32 = arith.constant 0 : i32
    %c0_i32_0 = arith.constant 0 : i32
    %c0_i32_1 = arith.constant 0 : i32
    %c0_i32_2 = arith.constant 0 : i32
    return %c0_i32, %c0_i32_0, %c0_i32_1 : i32, i32, i32
  }
  func.func @transform_5(%arg0: i32) -> (i32, i32) {
    %c0_i32 = arith.constant 0 : i32
    %c0_i32_0 = arith.constant 0 : i32
    %c0_i32_1 = arith.constant 0 : i32
    return %c0_i32, %c0_i32_0 : i32, i32
  }
  func.func @transform_6(%arg0: i32) -> i32 {
    %c0_i32 = arith.constant 0 : i32
    %c0_i32_0 = arith.constant 0 : i32
    return %c0_i32 : i32
  }
  func.func @transform_7(%arg0: i32) -> (i32, i32, i32, i32) {
    %c0_i32 = arith.constant 0 : i32
    %c0_i32_0 = arith.constant 0 : i32
    %c0_i32_1 = arith.constant 0 : i32
    %c0_i32_2 = arith.constant 0 : i32
    return %arg0, %c0_i32, %c0_i32_0, %c0_i32_1 : i32, i32, i32, i32
  }
}

</mosaic_0001>

<llo_original>
// kernel: decoder_forward.1
$region0: #{decoder_forward.1}
  #allocation0 [shape = 'u32[]', space=smem, size = 0x4, offset = 0x4, fixed_abs, tag = 'smem constant byte address 0x4 - core index']
  #allocation1 [shape = 'u32[144,128]{1,0:T(1,128)}', space=vmem, size = 0x12000, scoped, tag = 'internal scratch']
  #allocation2 [shape = 'f32[1]{0:T(128)S(6)}', space=smem, size = 0x200, scoped, tag = 'scoped memory for decoder_forward.1']
  %s0 = inlined_call_operand.hbm [shape: f32[2,32], index: 0, kind: input, shape index: {}]
  %s1 = inlined_call_operand.hbm [shape: f32[1024,512], index: 1, kind: input, shape index: {}]
  %s2 = inlined_call_operand.hbm [shape: f32[32,512], index: 2, kind: input, shape index: {}]
  %s3 = inlined_call_operand.vmem [shape: f32[3,64,32], index: 3, kind: input, shape index: {}]
  %s4 = inlined_call_operand.hbm [shape: f32[3,32,64], index: 4, kind: input, shape index: {}]
  %s5 = inlined_call_operand.hbm [shape: f32[9,16], index: 5, kind: input, shape index: {}]
  %s6 = inlined_call_operand.<no memory space> [shape: f32[1], index: 6, kind: input, shape index: {}]
  %s7 = inlined_call_operand.hbm [shape: f32[2,1,64,64], index: 7, kind: output, shape index: {}]
  %s8 = sld [smem:[#allocation0]]
  $region81: #{decoder_forward.1} parent=0
    _
  %s10 = ssub.s32 1, %s8
  %s11 = scalar_select 0, %s10, %s8
  %12 = sst [smem:[#allocation2]] %s6
  $region1: #{decoder_forward.1} parent=0
    #allocation3 [shape = 'u8[1024]{0}', space=vmem, size = 0x400, scoped, tag = 'input window, operand 0, single buffered']
    #allocation4 [shape = 's32[2]{0}', space=sflag, size = 0x8, scoped, tag = 'scoped memory for decoder_forward.1']
    #allocation5 [shape = 's32[2]{0}', space=sflag, size = 0x8, scoped, tag = 'scoped memory for decoder_forward.1']
    #allocation6 [shape = 's32[2]{0}', space=sflag, size = 0x8, scoped, tag = 'scoped memory for decoder_forward.1']
    #allocation7 [shape = 'u8[2097152]{0}', space=vmem, size = 0x200000, scoped, tag = 'input window, operand 1, single buffered']
    #allocation8 [shape = 's32[1]{0}', space=sflag, size = 0x4, scoped, tag = 'scoped memory for decoder_forward.1']
    #allocation9 [shape = 'u8[65536]{0}', space=vmem, size = 0x10000, scoped, tag = 'input window, operand 2, single buffered']
    #allocation10 [shape = 'u8[49152]{0}', space=vmem, size = 0xc000, scoped, tag = 'input window, operand 4, single buffered']
    #allocation11 [shape = 's32[1]{0}', space=sflag, size = 0x4, scoped, tag = 'scoped memory for decoder_forward.1']
    #allocation12 [shape = 'u8[8192]{0}', space=smem, size = 0x2000, scoped, tag = 'input window, operand 5, single buffered']
    #allocation13 [shape = 'u8[65536]{0}', space=vmem, size = 0x10000, scoped, tag = 'output window, operand 0']
    %13 = vsyncpa [#allocation4], 0
    %14 = vsyncpa [#allocation8], 0
    %15 = vsyncpa [#allocation11], 0
    %16 = vsyncpa [#allocation6], 0
    %17 = vsyncpa [#allocation5], 0
    %s18 = scalar_lea.sflag [#allocation5], 1
    %19 = vsyncpa %s18, 0
    loop: start=0, step=1, limit=4
    $region2: #{decoder_forward.1} parent=1 // loop_pre_header
      _
    $region3: #{decoder_forward.1} parent=1 // loop_header
      %s21 = sphi 0, %s25
      %p22 = scmp.ge.s32.totalorder %s21, 4
      %s29 = sphi 0, %s29
      %s31 = sphi 0, %s29
      %s32 = sphi 0, %s31
      %s46 = sphi 0, %s32
      %s50 = sphi 0, %s50
      %s52 = sphi 0, %s50
      %s53 = sphi 0, %s52
      %s67 = sphi 0, %s53
      %s71 = sphi 0, %s71
      %s73 = sphi 0, %s71
      %s74 = sphi 0, %s73
      %s88 = sphi 0, %s74
      %s92 = sphi 0, %s92
      %s94 = sphi 0, %s92
      %s95 = sphi 0, %s94
      %s109 = sphi 0, %s95
      %s113 = sphi 0, %s113
      %s115 = sphi 0, %s113
      %s116 = sphi 0, %s115
      %s130 = sphi 0, %s116
      %s134 = sphi 0, %s134
      %s136 = sphi 0, %s134
      %s137 = sphi 0, %s136
      %s151 = sphi 0, %s137
      %s155 = sphi 0, %s155
      %s157 = sphi 0, %s155
      %s158 = sphi 0, %s157
      %s172 = sphi 0, %s158
      %s178 = sphi 0, %s180
      %s181 = sphi 0, %s178
      %s182 = sphi 0, %s181
      %s198 = sphi 0, %s182
    $region4: #{decoder_forward.1} parent=1 // loop_header_branch
      %24 = sbr.rel (%p22) target = $region8
    $region5: #{decoder_forward.1} parent=1 // loop_body
      %s26 = ssub.s32 %s21, 1
      %s27 = ssub.s32 %s21, 2
      %s28 = sadd.s32 %s21, 1
      %s30 = sadd.s32 %s29, 1
      %p33 = scmp.eq.s32.totalorder %s21, 1
      %p34 = scmp.ne.s32.totalorder %s29, %s31
      %p35 = scmp.eq.s32.totalorder %s21, 0
      %p36 = por %p34, %p35
      %p37 = scmp.ne.s32.totalorder %s29, %s31
      %p38 = scmp.eq.s32.totalorder %s26, 1
      %p39 = por %p37, %p38
      %p40 = scmp.ne.s32.totalorder %s31, %s32
      %p41 = scmp.eq.s32.totalorder %s26, 0
      %p42 = por %p40, %p41
      %p43 = scmp.ne.s32.totalorder %s31, %s32
      %p44 = scmp.eq.s32.totalorder %s27, 1
      %p45 = por %p43, %p44
      %p47 = scmp.ne.s32.totalorder %s32, %s46
      %p48 = scmp.eq.s32.totalorder %s27, 0
      %p49 = por %p47, %p48
      %s51 = sadd.s32 %s50, 1
      %p54 = scmp.eq.s32.totalorder %s21, 1
      %p55 = scmp.ne.s32.totalorder %s50, %s52
      %p56 = scmp.eq.s32.totalorder %s21, 0
      %p57 = por %p55, %p56
      %p58 = scmp.ne.s32.totalorder %s50, %s52
      %p59 = scmp.eq.s32.totalorder %s26, 1
      %p60 = por %p58, %p59
      %p61 = scmp.ne.s32.totalorder %s52, %s53
      %p62 = scmp.eq.s32.totalorder %s26, 0
      %p63 = por %p61, %p62
      %p64 = scmp.ne.s32.totalorder %s52, %s53
      %p65 = scmp.eq.s32.totalorder %s27, 1
      %p66 = por %p64, %p65
      %p68 = scmp.ne.s32.totalorder %s53, %s67
      %p69 = scmp.eq.s32.totalorder %s27, 0
      %p70 = por %p68, %p69
      %s72 = sadd.s32 %s71, 1
      %p75 = scmp.eq.s32.totalorder %s21, 1
      %p76 = scmp.ne.s32.totalorder %s71, %s73
      %p77 = scmp.eq.s32.totalorder %s21, 0
      %p78 = por %p76, %p77
      %p79 = scmp.ne.s32.totalorder %s71, %s73
      %p80 = scmp.eq.s32.totalorder %s26, 1
      %p81 = por %p79, %p80
      %p82 = scmp.ne.s32.totalorder %s73, %s74
      %p83 = scmp.eq.s32.totalorder %s26, 0
      %p84 = por %p82, %p83
      %p85 = scmp.ne.s32.totalorder %s73, %s74
      %p86 = scmp.eq.s32.totalorder %s27, 1
      %p87 = por %p85, %p86
      %p89 = scmp.ne.s32.totalorder %s74, %s88
      %p90 = scmp.eq.s32.totalorder %s27, 0
      %p91 = por %p89, %p90
      %s93 = sadd.s32 %s92, 1
      %p96 = scmp.eq.s32.totalorder %s21, 1
      %p97 = scmp.ne.s32.totalorder %s92, %s94
      %p98 = scmp.eq.s32.totalorder %s21, 0
      %p99 = por %p97, %p98
      %p100 = scmp.ne.s32.totalorder %s92, %s94
      %p101 = scmp.eq.s32.totalorder %s26, 1
      %p102 = por %p100, %p101
      %p103 = scmp.ne.s32.totalorder %s94, %s95
      %p104 = scmp.eq.s32.totalorder %s26, 0
      %p105 = por %p103, %p104
      %p106 = scmp.ne.s32.totalorder %s94, %s95
      %p107 = scmp.eq.s32.totalorder %s27, 1
      %p108 = por %p106, %p107
      %p110 = scmp.ne.s32.totalorder %s95, %s109
      %p111 = scmp.eq.s32.totalorder %s27, 0
      %p112 = por %p110, %p111
      %s114 = sadd.s32 %s113, 1
      %p117 = scmp.eq.s32.totalorder %s21, 1
      %p118 = scmp.ne.s32.totalorder %s113, %s115
      %p119 = scmp.eq.s32.totalorder %s21, 0
      %p120 = por %p118, %p119
      %p121 = scmp.ne.s32.totalorder %s113, %s115
      %p122 = scmp.eq.s32.totalorder %s26, 1
      %p123 = por %p121, %p122
      %p124 = scmp.ne.s32.totalorder %s115, %s116
      %p125 = scmp.eq.s32.totalorder %s26, 0
      %p126 = por %p124, %p125
      %p127 = scmp.ne.s32.totalorder %s115, %s116
      %p128 = scmp.eq.s32.totalorder %s27, 1
      %p129 = por %p127, %p128
      %p131 = scmp.ne.s32.totalorder %s116, %s130
      %p132 = scmp.eq.s32.totalorder %s27, 0
      %p133 = por %p131, %p132
      %s135 = sadd.s32 %s134, 1
      %p138 = scmp.eq.s32.totalorder %s21, 1
      %p139 = scmp.ne.s32.totalorder %s134, %s136
      %p140 = scmp.eq.s32.totalorder %s21, 0
      %p141 = por %p139, %p140
      %p142 = scmp.ne.s32.totalorder %s134, %s136
      %p143 = scmp.eq.s32.totalorder %s26, 1
      %p144 = por %p142, %p143
      %p145 = scmp.ne.s32.totalorder %s136, %s137
      %p146 = scmp.eq.s32.totalorder %s26, 0
      %p147 = por %p145, %p146
      %p148 = scmp.ne.s32.totalorder %s136, %s137
      %p149 = scmp.eq.s32.totalorder %s27, 1
      %p150 = por %p148, %p149
      %p152 = scmp.ne.s32.totalorder %s137, %s151
      %p153 = scmp.eq.s32.totalorder %s27, 0
      %p154 = por %p152, %p153
      %s156 = sadd.s32 %s155, 1
      %p159 = scmp.eq.s32.totalorder %s21, 1
      %p160 = scmp.ne.s32.totalorder %s155, %s157
      %p161 = scmp.eq.s32.totalorder %s21, 0
      %p162 = por %p160, %p161
      %p163 = scmp.ne.s32.totalorder %s155, %s157
      %p164 = scmp.eq.s32.totalorder %s26, 1
      %p165 = por %p163, %p164
      %p166 = scmp.ne.s32.totalorder %s157, %s158
      %p167 = scmp.eq.s32.totalorder %s26, 0
      %p168 = por %p166, %p167
      %p169 = scmp.ne.s32.totalorder %s157, %s158
      %p170 = scmp.eq.s32.totalorder %s27, 1
      %p171 = por %p169, %p170
      %p173 = scmp.ne.s32.totalorder %s158, %s172
      %p174 = scmp.eq.s32.totalorder %s27, 0
      %p175 = por %p173, %p174
      %s176 = ssub.s32 %s21, %s28
      %p177 = scmp.eq.s32.totalorder %s176, 0
      %s179 = sadd.s32 %s178, 1
      %s180 = scalar_select %p177, %s178, %s179
      %p183 = pneg %p177
      %p184 = scmp.eq.s32.totalorder %s21, 1
      %p185 = por %p183, %p184
      %p186 = scmp.ne.s32.totalorder %s178, %s181
      %p187 = scmp.eq.s32.totalorder %s21, 0
      %p188 = por %p186, %p187
      %p189 = scmp.ne.s32.totalorder %s178, %s181
      %p190 = scmp.eq.s32.totalorder %s26, 1
      %p191 = por %p189, %p190
      %p192 = scmp.ne.s32.totalorder %s181, %s182
      %p193 = scmp.eq.s32.totalorder %s26, 0
      %p194 = por %p192, %p193
      %p195 = scmp.ne.s32.totalorder %s181, %s182
      %p196 = scmp.eq.s32.totalorder %s27, 1
      %p197 = por %p195, %p196
      %p199 = scmp.ne.s32.totalorder %s182, %s198
      %p200 = scmp.eq.s32.totalorder %s27, 0
      %p201 = por %p199, %p200
      %p202 = scmp.le.s32.totalorder 1, %s21
      %p203 = scmp.lt.s32.totalorder %s21, 3
      %p204 = pnand %p202, %p203
      %p205 = pneg %p204
      // Predicated region
      $region9: #{decoder_forward.1} parent=5 // pred_check
        _
      $region10: #{decoder_forward.1} parent=5 // pred_check_branch
        %207 = sbr.rel (%p204) target = $region12
      $region11: #{decoder_forward.1} parent=5 // pred_region
        %s208 = ssub.s32 %s21, 1
        // Predicated region
        $region13: #{decoder_forward.1} parent=11 // pred_check
          %p209 = pneg %p42
        $region14: #{decoder_forward.1} parent=11 // pred_check_branch
          %211 = sbr.rel (%p209) target = $region16
        $region15: #{decoder_forward.1} parent=11 // pred_region
          %s213 = ssub.s32 32, 32
          %214 = vsyncadd [#allocation4], %s213
          %s216 = sshll.u32 [#allocation3], 4
          %s217 = int_to_ptr.vmem [resolvable:$true] %s216
          %219 = dma.hbm_to_vmem [thread:$0]  %s0, 32, %s217, [#allocation4]
        $region16: #{decoder_forward.1} parent=11 // pred_fallthru
          _
        // Predicated region
        $region17: #{decoder_forward.1} parent=11 // pred_check
          %p220 = pneg %p63
        $region18: #{decoder_forward.1} parent=11 // pred_check_branch
          %222 = sbr.rel (%p220) target = $region20
        $region19: #{decoder_forward.1} parent=11 // pred_region
          %s224 = ssub.s32 65536, 65536
          %225 = vsyncadd [#allocation8], %s224
          %s226 = sshll.u32 [#allocation7], 4
          %s227 = int_to_ptr.vmem [resolvable:$true] %s226
          %232 = dma.hbm_to_vmem [thread:$0]  %s1, 65536, %s227, [#allocation8], 512, 512, 32
        $region20: #{decoder_forward.1} parent=11 // pred_fallthru
          _
        // Predicated region
        $region21: #{decoder_forward.1} parent=11 // pred_check
          %p233 = pneg %p84
        $region22: #{decoder_forward.1} parent=11 // pred_check_branch
          %235 = sbr.rel (%p233) target = $region24
        $region23: #{decoder_forward.1} parent=11 // pred_region
          %s237 = ssub.s32 2048, 2048
          %238 = vsyncadd [#allocation8], %s237
          %s239 = sshll.u32 [#allocation9], 4
          %s240 = int_to_ptr.vmem [resolvable:$true] %s239
          %245 = dma.hbm_to_vmem [thread:$0]  %s2, 2048, %s240, [#allocation8], 512, 512, 32
        $region24: #{decoder_forward.1} parent=11 // pred_fallthru
          _
        // Predicated region
        $region25: #{decoder_forward.1} parent=11 // pred_check
          %p246 = pneg %p105
        $region26: #{decoder_forward.1} parent=11 // pred_check_branch
          %248 = sbr.rel (%p246) target = $region28
        $region27: #{decoder_forward.1} parent=11 // pred_region
          _
        $region28: #{decoder_forward.1} parent=11 // pred_fallthru
          _
        // Predicated region
        $region29: #{decoder_forward.1} parent=11 // pred_check
          %p249 = pneg %p126
        $region30: #{decoder_forward.1} parent=11 // pred_check_branch
          %251 = sbr.rel (%p249) target = $region32
        $region31: #{decoder_forward.1} parent=11 // pred_region
          %s253 = ssub.s32 1536, 1536
          %254 = vsyncadd [#allocation11], %s253
          %s255 = sshll.u32 [#allocation10], 4
          %s256 = int_to_ptr.vmem [resolvable:$true] %s255
          %261 = dma.hbm_to_vmem [thread:$0]  %s4, 1536, %s256, [#allocation11], 128, 128, 8
        $region32: #{decoder_forward.1} parent=11 // pred_fallthru
          _
        // Predicated region
        $region33: #{decoder_forward.1} parent=11 // pred_check
          %p262 = pneg %p147
        $region34: #{decoder_forward.1} parent=11 // pred_check_branch
          %264 = sbr.rel (%p262) target = $region36
        $region35: #{decoder_forward.1} parent=11 // pred_region
          %s266 = ssub.s32 256, 256
          %267 = vsyncadd [#allocation6], %s266
          %272 = dma.hbm_to_smem %s5, 256, [#allocation12], [#allocation6], 128, 128, 8
        $region36: #{decoder_forward.1} parent=11 // pred_fallthru
          _
        // Predicated region
        $region37: #{decoder_forward.1} parent=11 // pred_check
          %p273 = pneg %p168
        $region38: #{decoder_forward.1} parent=11 // pred_check_branch
          %275 = sbr.rel (%p273) target = $region40
        $region39: #{decoder_forward.1} parent=11 // pred_region
          _
        $region40: #{decoder_forward.1} parent=11 // pred_fallthru
          _
      $region12: #{decoder_forward.1} parent=5 // pred_fallthru
        _
      %p276 = scmp.lt.s32.totalorder %s21, 2
      // Predicated region
      $region41: #{decoder_forward.1} parent=5 // pred_check
        %p277 = pneg %p276
      $region42: #{decoder_forward.1} parent=5 // pred_check_branch
        %279 = sbr.rel (%p277) target = $region44
      $region43: #{decoder_forward.1} parent=5 // pred_region
        _
      $region44: #{decoder_forward.1} parent=5 // pred_fallthru
        _
      %p280 = scmp.le.s32.totalorder 1, %s21
      %p281 = scmp.lt.s32.totalorder %s21, 3
      %p282 = pnand %p280, %p281
      %p283 = pneg %p282
      // Predicated region
      $region45: #{decoder_forward.1} parent=5 // pred_check
        _
      $region46: #{decoder_forward.1} parent=5 // pred_check_branch
        %285 = sbr.rel (%p282) target = $region48
      $region47: #{decoder_forward.1} parent=5 // pred_region
        %s286 = ssub.s32 %s21, 1
        // Predicated region
        $region49: #{decoder_forward.1} parent=47 // pred_check
          %p287 = pneg %p42
        $region50: #{decoder_forward.1} parent=47 // pred_check_branch
          %289 = sbr.rel (%p287) target = $region52
        $region51: #{decoder_forward.1} parent=47 // pred_region
          %290 = dma.done [#allocation4], 32
        $region52: #{decoder_forward.1} parent=47 // pred_fallthru
          _
        // Predicated region
        $region53: #{decoder_forward.1} parent=47 // pred_check
          %p291 = pneg %p63
        $region54: #{decoder_forward.1} parent=47 // pred_check_branch
          %293 = sbr.rel (%p291) target = $region56
        $region55: #{decoder_forward.1} parent=47 // pred_region
          %294 = dma.done [#allocation8], 65536
        $region56: #{decoder_forward.1} parent=47 // pred_fallthru
          _
        // Predicated region
        $region57: #{decoder_forward.1} parent=47 // pred_check
          %p295 = pneg %p84
        $region58: #{decoder_forward.1} parent=47 // pred_check_branch
          %297 = sbr.rel (%p295) target = $region60
        $region59: #{decoder_forward.1} parent=47 // pred_region
          %298 = dma.done [#allocation8], 2048
        $region60: #{decoder_forward.1} parent=47 // pred_fallthru
          _
        // Predicated region
        $region61: #{decoder_forward.1} parent=47 // pred_check
          %p299 = pneg %p126
        $region62: #{decoder_forward.1} parent=47 // pred_check_branch
          %301 = sbr.rel (%p299) target = $region64
        $region63: #{decoder_forward.1} parent=47 // pred_region
          %302 = dma.done [#allocation11], 1536
        $region64: #{decoder_forward.1} parent=47 // pred_fallthru
          _
        // Predicated region
        $region65: #{decoder_forward.1} parent=47 // pred_check
          %p303 = pneg %p147
        $region66: #{decoder_forward.1} parent=47 // pred_check_branch
          %305 = sbr.rel (%p303) target = $region68
        $region67: #{decoder_forward.1} parent=47 // pred_region
          %306 = dma.done [#allocation6], 256
        $region68: #{decoder_forward.1} parent=47 // pred_fallthru
          _
        %307 = sfence
        %p308 = pneg %p42
        %p309 = pneg %p39
        %p310 = pneg %p63
        %p311 = pneg %p60
        %p312 = pneg %p84
        %p313 = pneg %p81
        %p314 = pneg %p105
        %p315 = pneg %p102
        %p316 = pneg %p126
        %p317 = pneg %p123
        %p318 = pneg %p147
        %p319 = pneg %p144
        %p320 = pneg %p168
        %p321 = pneg %p165
        %p322 = pneg %p194
        %p323 = pneg %p191
        %s324 = sand.u32 %s181, 1
        %s325 = scalar_lea.sflag [#allocation5], %s324
        %s326 = sand.u32 %s181, 1
        %s327 = smul.addr %s326, 64
        %s328 = scalar_lea.vmem [#allocation13], %s327
        %s329 = scalar_lea.vmem [#allocation3], %s26
        %v330 = vld [vmem:[%s329] sm:$0x1]
        %v331 = vlaneseq
        %v332 = vshrl.u32 %v331, 7
        %v333 = vadd.s32 %v332, 8
        %v334 = vadd.s32 %v332, 16
        %v335 = vadd.s32 %v332, 24
        %v336 = vlaneseq
        %v337 = vand.u32 %v336, 127
        %v338 = vadd.s32 %v337, 128
        %v339 = vadd.s32 %v337, 256
        %v340 = vadd.s32 %v337, 384
        %v341 = vadd.s32 %v337, 512
        %v342 = vadd.s32 %v337, 640
        %v343 = vadd.s32 %v337, 768
        %v344 = vadd.s32 %v337, 896
        %v345 = vand.u32 %v337, 31
        %v346 = vand.u32 %v338, 31
        %v347 = vand.u32 %v339, 31
        %v348 = vand.u32 %v340, 31
        %v349 = vand.u32 %v341, 31
        %v350 = vand.u32 %v342, 31
        %v351 = vand.u32 %v343, 31
        %v352 = vand.u32 %v344, 31
        %vm353 = vcmp.eq.s32.totalorder %v345, %v332
        %vm354 = vcmp.eq.s32.totalorder %v346, %v332
        %vm355 = vcmp.eq.s32.totalorder %v347, %v332
        %vm356 = vcmp.eq.s32.totalorder %v348, %v332
        %vm357 = vcmp.eq.s32.totalorder %v349, %v332
        %vm358 = vcmp.eq.s32.totalorder %v350, %v332
        %vm359 = vcmp.eq.s32.totalorder %v351, %v332
        %vm360 = vcmp.eq.s32.totalorder %v352, %v332
        %vm361 = vcmp.eq.s32.totalorder %v345, %v333
        %vm362 = vcmp.eq.s32.totalorder %v346, %v333
        %vm363 = vcmp.eq.s32.totalorder %v347, %v333
        %vm364 = vcmp.eq.s32.totalorder %v348, %v333
        %vm365 = vcmp.eq.s32.totalorder %v349, %v333
        %vm366 = vcmp.eq.s32.totalorder %v350, %v333
        %vm367 = vcmp.eq.s32.totalorder %v351, %v333
        %vm368 = vcmp.eq.s32.totalorder %v352, %v333
        %vm369 = vcmp.eq.s32.totalorder %v345, %v334
        %vm370 = vcmp.eq.s32.totalorder %v346, %v334
        %vm371 = vcmp.eq.s32.totalorder %v347, %v334
        %vm372 = vcmp.eq.s32.totalorder %v348, %v334
        %vm373 = vcmp.eq.s32.totalorder %v349, %v334
        %vm374 = vcmp.eq.s32.totalorder %v350, %v334
        %vm375 = vcmp.eq.s32.totalorder %v351, %v334
        %vm376 = vcmp.eq.s32.totalorder %v352, %v334
        %vm377 = vcmp.eq.s32.totalorder %v345, %v335
        %vm378 = vcmp.eq.s32.totalorder %v346, %v335
        %vm379 = vcmp.eq.s32.totalorder %v347, %v335
        %vm380 = vcmp.eq.s32.totalorder %v348, %v335
        %vm381 = vcmp.eq.s32.totalorder %v349, %v335
        %vm382 = vcmp.eq.s32.totalorder %v350, %v335
        %vm383 = vcmp.eq.s32.totalorder %v351, %v335
        %vm384 = vcmp.eq.s32.totalorder %v352, %v335
        %v385 = vsel %vm353, 1, 0
        %v386 = vsel %vm354, 1, 0
        %v387 = vsel %vm355, 1, 0
        %v388 = vsel %vm356, 1, 0
        %v389 = vsel %vm357, 1, 0
        %v390 = vsel %vm358, 1, 0
        %v391 = vsel %vm359, 1, 0
        %v392 = vsel %vm360, 1, 0
        %v393 = vsel %vm361, 1, 0
        %v394 = vsel %vm362, 1, 0
        %v395 = vsel %vm363, 1, 0
        %v396 = vsel %vm364, 1, 0
        %v397 = vsel %vm365, 1, 0
        %v398 = vsel %vm366, 1, 0
        %v399 = vsel %vm367, 1, 0
        %v400 = vsel %vm368, 1, 0
        %v401 = vsel %vm369, 1, 0
        %v402 = vsel %vm370, 1, 0
        %v403 = vsel %vm371, 1, 0
        %v404 = vsel %vm372, 1, 0
        %v405 = vsel %vm373, 1, 0
        %v406 = vsel %vm374, 1, 0
        %v407 = vsel %vm375, 1, 0
        %v408 = vsel %vm376, 1, 0
        %v409 = vsel %vm377, 1, 0
        %v410 = vsel %vm378, 1, 0
        %v411 = vsel %vm379, 1, 0
        %v412 = vsel %vm380, 1, 0
        %v413 = vsel %vm381, 1, 0
        %v414 = vsel %vm382, 1, 0
        %v415 = vsel %vm383, 1, 0
        %v416 = vsel %vm384, 1, 0
        %v417 = vcvt.s32.f32 %v385
        %v418 = vcvt.s32.f32 %v386
        %v419 = vcvt.s32.f32 %v387
        %v420 = vcvt.s32.f32 %v388
        %v421 = vcvt.s32.f32 %v389
        %v422 = vcvt.s32.f32 %v390
        %v423 = vcvt.s32.f32 %v391
        %v424 = vcvt.s32.f32 %v392
        %v425 = vcvt.s32.f32 %v393
        %v426 = vcvt.s32.f32 %v394
        %v427 = vcvt.s32.f32 %v395
        %v428 = vcvt.s32.f32 %v396
        %v429 = vcvt.s32.f32 %v397
        %v430 = vcvt.s32.f32 %v398
        %v431 = vcvt.s32.f32 %v399
        %v432 = vcvt.s32.f32 %v400
        %v433 = vcvt.s32.f32 %v401
        %v434 = vcvt.s32.f32 %v402
        %v435 = vcvt.s32.f32 %v403
        %v436 = vcvt.s32.f32 %v404
        %v437 = vcvt.s32.f32 %v405
        %v438 = vcvt.s32.f32 %v406
        %v439 = vcvt.s32.f32 %v407
        %v440 = vcvt.s32.f32 %v408
        %v441 = vcvt.s32.f32 %v409
        %v442 = vcvt.s32.f32 %v410
        %v443 = vcvt.s32.f32 %v411
        %v444 = vcvt.s32.f32 %v412
        %v445 = vcvt.s32.f32 %v413
        %v446 = vcvt.s32.f32 %v414
        %v447 = vcvt.s32.f32 %v415
        %v448 = vcvt.s32.f32 %v416
        %vm449 = vcmask 261120
        %v451 = vsel %vm449, %v330, 0
        %453 = vmatprep.subr.mxu0 %v418
        %454 = vmatpush1.msra.mxu0 %v417
        %455 = vmatprep.subr.mxu0 %v426
        %456 = vmatpush1.msra.mxu0 %v425
        %457 = vmatprep.subr.mxu0 %v434
        %458 = vmatpush1.msra.mxu0 %v433
        %459 = vmatprep.subr.mxu0 %v442
        %460 = vmatpush1.msra.mxu0 %v441
        %461 = vmatprep.subr.mxu0 0.0
        %462 = vmatpush1.msra.mxu0 0.0
        %463 = vmatprep.subr.mxu0 0.0
        %464 = vmatpush1.msra.mxu0 0.0
        %465 = vmatprep.subr.mxu0 0.0
        %466 = vmatpush1.msra.mxu0 0.0
        %467 = vmatprep.subr.mxu0 0.0
        %468 = vmatpush1.msra.mxu0 0.0
        %469 = vmatprep.subr.mxu0 0.0
        %470 = vmatpush1.msra.mxu0 0.0
        %471 = vmatprep.subr.mxu0 0.0
        %472 = vmatpush1.msra.mxu0 0.0
        %473 = vmatprep.subr.mxu0 0.0
        %474 = vmatpush1.msra.mxu0 0.0
        %475 = vmatprep.subr.mxu0 0.0
        %476 = vmatpush1.msra.mxu0 0.0
        %477 = vmatprep.subr.mxu0 0.0
        %478 = vmatpush1.msra.mxu0 0.0
        %479 = vmatprep.subr.mxu0 0.0
        %480 = vmatpush1.msra.mxu0 0.0
        %481 = vmatprep.subr.mxu0 0.0
        %482 = vmatpush1.msra.mxu0 0.0
        %483 = vmatprep.subr.mxu0 0.0
        %484 = vmatpush1.msra.mxu0 0.0
        %485 = vmatprep.subr.mxu0 0.0
        %486 = vmatpush1.msra.mxu0 0.0
        %487 = vmatprep.subr.mxu0 0.0
        %488 = vmatpush1.msra.mxu0 0.0
        %489 = vmatprep.subr.mxu0 0.0
        %490 = vmatpush1.msra.mxu0 0.0
        %491 = vmatprep.subr.mxu0 0.0
        %492 = vmatpush1.msra.mxu0 0.0
        %493 = vmatprep.subr.mxu0 0.0
        %494 = vmatpush1.msra.mxu0 0.0
        %495 = vmatprep.subr.mxu0 0.0
        %496 = vmatpush1.msra.mxu0 0.0
        %497 = vmatprep.subr.mxu0 0.0
        %498 = vmatpush1.msra.mxu0 0.0
        %499 = vmatprep.subr.mxu0 0.0
        %500 = vmatpush1.msra.mxu0 0.0
        %501 = vmatprep.subr.mxu0 0.0
        %502 = vmatpush1.msra.mxu0 0.0
        %503 = vmatprep.subr.mxu0 0.0
        %504 = vmatpush1.msra.mxu0 0.0
        %505 = vmatprep.subr.mxu0 0.0
        %506 = vmatpush1.msra.mxu0 0.0
        %507 = vmatprep.subr.mxu0 0.0
        %508 = vmatpush1.msra.mxu0 0.0
        %509 = vmatprep.subr.mxu0 0.0
        %510 = vmatpush1.msra.mxu0 0.0
        %511 = vmatprep.subr.mxu0 0.0
        %512 = vmatpush1.msra.mxu0 0.0
        %513 = vmatprep.subr.mxu0 0.0
        %514 = vmatpush1.msra.mxu0 0.0
        %515 = vmatprep.subr.mxu0 0.0
        %516 = vmatpush1.msra.mxu0 0.0
        %517 = vmatprep.mubr.f32.mxu0 0.0
        %518 = vmatmul.mubr.f32.gmra.mrb[0].mxu0 %v451
        %v519 = vpop.f32.mrb[0].mxu0
        %v520 = vadd.f32 0.0, %v519
        %v521 = vpop.f32.mrb[0].mxu0
        %v522 = vadd.f32 0.0, %v521
        %523 = vdwg.mxu0
        %524 = vmatprep.subr.mxu0 %v420
        %525 = vmatpush1.msra.mxu0 %v419
        %526 = vmatprep.subr.mxu0 %v428
        %527 = vmatpush1.msra.mxu0 %v427
        %528 = vmatprep.subr.mxu0 %v436
        %529 = vmatpush1.msra.mxu0 %v435
        %530 = vmatprep.subr.mxu0 %v444
        %531 = vmatpush1.msra.mxu0 %v443
        %532 = vmatprep.subr.mxu0 0.0
        %533 = vmatpush1.msra.mxu0 0.0
        %534 = vmatprep.subr.mxu0 0.0
        %535 = vmatpush1.msra.mxu0 0.0
        %536 = vmatprep.subr.mxu0 0.0
        %537 = vmatpush1.msra.mxu0 0.0
        %538 = vmatprep.subr.mxu0 0.0
        %539 = vmatpush1.msra.mxu0 0.0
        %540 = vmatprep.subr.mxu0 0.0
        %541 = vmatpush1.msra.mxu0 0.0
        %542 = vmatprep.subr.mxu0 0.0
        %543 = vmatpush1.msra.mxu0 0.0
        %544 = vmatprep.subr.mxu0 0.0
        %545 = vmatpush1.msra.mxu0 0.0
        %546 = vmatprep.subr.mxu0 0.0
        %547 = vmatpush1.msra.mxu0 0.0
        %548 = vmatprep.subr.mxu0 0.0
        %549 = vmatpush1.msra.mxu0 0.0
        %550 = vmatprep.subr.mxu0 0.0
        %551 = vmatpush1.msra.mxu0 0.0
        %552 = vmatprep.subr.mxu0 0.0
        %553 = vmatpush1.msra.mxu0 0.0
        %554 = vmatprep.subr.mxu0 0.0
        %555 = vmatpush1.msra.mxu0 0.0
        %556 = vmatprep.subr.mxu0 0.0
        %557 = vmatpush1.msra.mxu0 0.0
        %558 = vmatprep.subr.mxu0 0.0
        %559 = vmatpush1.msra.mxu0 0.0
        %560 = vmatprep.subr.mxu0 0.0
        %561 = vmatpush1.msra.mxu0 0.0
        %562 = vmatprep.subr.mxu0 0.0
        %563 = vmatpush1.msra.mxu0 0.0
        %564 = vmatprep.subr.mxu0 0.0
        %565 = vmatpush1.msra.mxu0 0.0
        %566 = vmatprep.subr.mxu0 0.0
        %567 = vmatpush1.msra.mxu0 0.0
        %568 = vmatprep.subr.mxu0 0.0
        %569 = vmatpush1.msra.mxu0 0.0
        %570 = vmatprep.subr.mxu0 0.0
        %571 = vmatpush1.msra.mxu0 0.0
        %572 = vmatprep.subr.mxu0 0.0
        %573 = vmatpush1.msra.mxu0 0.0
        %574 = vmatprep.subr.mxu0 0.0
        %575 = vmatpush1.msra.mxu0 0.0
        %576 = vmatprep.subr.mxu0 0.0
        %577 = vmatpush1.msra.mxu0 0.0
        %578 = vmatprep.subr.mxu0 0.0
        %579 = vmatpush1.msra.mxu0 0.0
        %580 = vmatprep.subr.mxu0 0.0
        %581 = vmatpush1.msra.mxu0 0.0
        %582 = vmatprep.subr.mxu0 0.0
        %583 = vmatpush1.msra.mxu0 0.0
        %584 = vmatprep.subr.mxu0 0.0
        %585 = vmatpush1.msra.mxu0 0.0
        %586 = vmatprep.subr.mxu0 0.0
        %587 = vmatpush1.msra.mxu0 0.0
        %588 = vmatprep.mubr.f32.mxu0 0.0
        %589 = vmatmul.mubr.f32.gmra.mrb[0].mxu0 %v451
        %v590 = vpop.f32.mrb[0].mxu0
        %v591 = vadd.f32 0.0, %v590
        %v592 = vpop.f32.mrb[0].mxu0
        %v593 = vadd.f32 0.0, %v592
        %594 = vdwg.mxu0
        %595 = vmatprep.subr.mxu0 %v422
        %596 = vmatpush1.msra.mxu0 %v421
        %597 = vmatprep.subr.mxu0 %v430
        %598 = vmatpush1.msra.mxu0 %v429
        %599 = vmatprep.subr.mxu0 %v438
        %600 = vmatpush1.msra.mxu0 %v437
        %601 = vmatprep.subr.mxu0 %v446
        %602 = vmatpush1.msra.mxu0 %v445
        %603 = vmatprep.subr.mxu0 0.0
        %604 = vmatpush1.msra.mxu0 0.0
        %605 = vmatprep.subr.mxu0 0.0
        %606 = vmatpush1.msra.mxu0 0.0
        %607 = vmatprep.subr.mxu0 0.0
        %608 = vmatpush1.msra.mxu0 0.0
        %609 = vmatprep.subr.mxu0 0.0
        %610 = vmatpush1.msra.mxu0 0.0
        %611 = vmatprep.subr.mxu0 0.0
        %612 = vmatpush1.msra.mxu0 0.0
        %613 = vmatprep.subr.mxu0 0.0
        %614 = vmatpush1.msra.mxu0 0.0
        %615 = vmatprep.subr.mxu0 0.0
        %616 = vmatpush1.msra.mxu0 0.0
        %617 = vmatprep.subr.mxu0 0.0
        %618 = vmatpush1.msra.mxu0 0.0
        %619 = vmatprep.subr.mxu0 0.0
        %620 = vmatpush1.msra.mxu0 0.0
        %621 = vmatprep.subr.mxu0 0.0
        %622 = vmatpush1.msra.mxu0 0.0
        %623 = vmatprep.subr.mxu0 0.0
        %624 = vmatpush1.msra.mxu0 0.0
        %625 = vmatprep.subr.mxu0 0.0
        %626 = vmatpush1.msra.mxu0 0.0
        %627 = vmatprep.subr.mxu0 0.0
        %628 = vmatpush1.msra.mxu0 0.0
        %629 = vmatprep.subr.mxu0 0.0
        %630 = vmatpush1.msra.mxu0 0.0
        %631 = vmatprep.subr.mxu0 0.0
        %632 = vmatpush1.msra.mxu0 0.0
        %633 = vmatprep.subr.mxu0 0.0
        %634 = vmatpush1.msra.mxu0 0.0
        %635 = vmatprep.subr.mxu0 0.0
        %636 = vmatpush1.msra.mxu0 0.0
        %637 = vmatprep.subr.mxu0 0.0
        %638 = vmatpush1.msra.mxu0 0.0
        %639 = vmatprep.subr.mxu0 0.0
        %640 = vmatpush1.msra.mxu0 0.0
        %641 = vmatprep.subr.mxu0 0.0
        %642 = vmatpush1.msra.mxu0 0.0
        %643 = vmatprep.subr.mxu0 0.0
        %644 = vmatpush1.msra.mxu0 0.0
        %645 = vmatprep.subr.mxu0 0.0
        %646 = vmatpush1.msra.mxu0 0.0
        %647 = vmatprep.subr.mxu0 0.0
        %648 = vmatpush1.msra.mxu0 0.0
        %649 = vmatprep.subr.mxu0 0.0
        %650 = vmatpush1.msra.mxu0 0.0
        %651 = vmatprep.subr.mxu0 0.0
        %652 = vmatpush1.msra.mxu0 0.0
        %653 = vmatprep.subr.mxu0 0.0
        %654 = vmatpush1.msra.mxu0 0.0
        %655 = vmatprep.subr.mxu0 0.0
        %656 = vmatpush1.msra.mxu0 0.0
        %657 = vmatprep.subr.mxu0 0.0
        %658 = vmatpush1.msra.mxu0 0.0
        %659 = vmatprep.mubr.f32.mxu0 0.0
        %660 = vmatmul.mubr.f32.gmra.mrb[0].mxu0 %v451
        %v661 = vpop.f32.mrb[0].mxu0
        %v662 = vadd.f32 0.0, %v661
        %v663 = vpop.f32.mrb[0].mxu0
        %v664 = vadd.f32 0.0, %v663
        %665 = vdwg.mxu0
        %666 = vmatprep.subr.mxu0 %v424
        %667 = vmatpush1.msra.mxu0 %v423
        %668 = vmatprep.subr.mxu0 %v432
        %669 = vmatpush1.msra.mxu0 %v431
        %670 = vmatprep.subr.mxu0 %v440
        %671 = vmatpush1.msra.mxu0 %v439
        %672 = vmatprep.subr.mxu0 %v448
        %673 = vmatpush1.msra.mxu0 %v447
        %674 = vmatprep.subr.mxu0 0.0
        %675 = vmatpush1.msra.mxu0 0.0
        %676 = vmatprep.subr.mxu0 0.0
        %677 = vmatpush1.msra.mxu0 0.0
        %678 = vmatprep.subr.mxu0 0.0
        %679 = vmatpush1.msra.mxu0 0.0
        %680 = vmatprep.subr.mxu0 0.0
        %681 = vmatpush1.msra.mxu0 0.0
        %682 = vmatprep.subr.mxu0 0.0
        %683 = vmatpush1.msra.mxu0 0.0
        %684 = vmatprep.subr.mxu0 0.0
        %685 = vmatpush1.msra.mxu0 0.0
        %686 = vmatprep.subr.mxu0 0.0
        %687 = vmatpush1.msra.mxu0 0.0
        %688 = vmatprep.subr.mxu0 0.0
        %689 = vmatpush1.msra.mxu0 0.0
        %690 = vmatprep.subr.mxu0 0.0
        %691 = vmatpush1.msra.mxu0 0.0
        %692 = vmatprep.subr.mxu0 0.0
        %693 = vmatpush1.msra.mxu0 0.0
        %694 = vmatprep.subr.mxu0 0.0
        %695 = vmatpush1.msra.mxu0 0.0
        %696 = vmatprep.subr.mxu0 0.0
        %697 = vmatpush1.msra.mxu0 0.0
        %698 = vmatprep.subr.mxu0 0.0
        %699 = vmatpush1.msra.mxu0 0.0
        %700 = vmatprep.subr.mxu0 0.0
        %701 = vmatpush1.msra.mxu0 0.0
        %702 = vmatprep.subr.mxu0 0.0
        %703 = vmatpush1.msra.mxu0 0.0
        %704 = vmatprep.subr.mxu0 0.0
        %705 = vmatpush1.msra.mxu0 0.0
        %706 = vmatprep.subr.mxu0 0.0
        %707 = vmatpush1.msra.mxu0 0.0
        %708 = vmatprep.subr.mxu0 0.0
        %709 = vmatpush1.msra.mxu0 0.0
        %710 = vmatprep.subr.mxu0 0.0
        %711 = vmatpush1.msra.mxu0 0.0
        %712 = vmatprep.subr.mxu0 0.0
        %713 = vmatpush1.msra.mxu0 0.0
        %714 = vmatprep.subr.mxu0 0.0
        %715 = vmatpush1.msra.mxu0 0.0
        %716 = vmatprep.subr.mxu0 0.0
        %717 = vmatpush1.msra.mxu0 0.0
        %718 = vmatprep.subr.mxu0 0.0
        %719 = vmatpush1.msra.mxu0 0.0
        %720 = vmatprep.subr.mxu0 0.0
        %721 = vmatpush1.msra.mxu0 0.0
        %722 = vmatprep.subr.mxu0 0.0
        %723 = vmatpush1.msra.mxu0 0.0
        %724 = vmatprep.subr.mxu0 0.0
        %725 = vmatpush1.msra.mxu0 0.0
        %726 = vmatprep.subr.mxu0 0.0
        %727 = vmatpush1.msra.mxu0 0.0
        %728 = vmatprep.subr.mxu0 0.0
        %729 = vmatpush1.msra.mxu0 0.0
        %730 = vmatprep.mubr.f32.mxu0 0.0
        %731 = vmatmul.mubr.f32.gmra.mrb[0].mxu0 %v451
        %v732 = vpop.f32.mrb[0].mxu0
        %v733 = vadd.f32 0.0, %v732
        %v734 = vpop.f32.mrb[0].mxu0
        %v735 = vadd.f32 0.0, %v734
        %736 = vdwg.mxu0
        %v737 = vshra.s32 %v337, 5
        %v738 = vshra.s32 %v338, 5
        %v739 = vshra.s32 %v339, 5
        %v740 = vshra.s32 %v340, 5
        %v741 = vshra.s32 %v341, 5
        %v742 = vshra.s32 %v342, 5
        %v743 = vshra.s32 %v343, 5
        %v744 = vshra.s32 %v344, 5
        %vm745 = vcmp.eq.s32.totalorder %v737, %v332
        %vm746 = vcmp.eq.s32.totalorder %v738, %v332
        %vm747 = vcmp.eq.s32.totalorder %v739, %v332
        %vm748 = vcmp.eq.s32.totalorder %v740, %v332
        %vm749 = vcmp.eq.s32.totalorder %v741, %v332
        %vm750 = vcmp.eq.s32.totalorder %v742, %v332
        %vm751 = vcmp.eq.s32.totalorder %v743, %v332
        %vm752 = vcmp.eq.s32.totalorder %v744, %v332
        %vm753 = vcmp.eq.s32.totalorder %v737, %v333
        %vm754 = vcmp.eq.s32.totalorder %v738, %v333
        %vm755 = vcmp.eq.s32.totalorder %v739, %v333
        %vm756 = vcmp.eq.s32.totalorder %v740, %v333
        %vm757 = vcmp.eq.s32.totalorder %v741, %v333
        %vm758 = vcmp.eq.s32.totalorder %v742, %v333
        %vm759 = vcmp.eq.s32.totalorder %v743, %v333
        %vm760 = vcmp.eq.s32.totalorder %v744, %v333
        %vm761 = vcmp.eq.s32.totalorder %v737, %v334
        %vm762 = vcmp.eq.s32.totalorder %v738, %v334
        %vm763 = vcmp.eq.s32.totalorder %v739, %v334
        %vm764 = vcmp.eq.s32.totalorder %v740, %v334
        %vm765 = vcmp.eq.s32.totalorder %v741, %v334
        %vm766 = vcmp.eq.s32.totalorder %v742, %v334
        %vm767 = vcmp.eq.s32.totalorder %v743, %v334
        %vm768 = vcmp.eq.s32.totalorder %v744, %v334
        %vm769 = vcmp.eq.s32.totalorder %v737, %v335
        %vm770 = vcmp.eq.s32.totalorder %v738, %v335
        %vm771 = vcmp.eq.s32.totalorder %v739, %v335
        %vm772 = vcmp.eq.s32.totalorder %v740, %v335
        %vm773 = vcmp.eq.s32.totalorder %v741, %v335
        %vm774 = vcmp.eq.s32.totalorder %v742, %v335
        %vm775 = vcmp.eq.s32.totalorder %v743, %v335
        %vm776 = vcmp.eq.s32.totalorder %v744, %v335
        %v777 = vsel %vm745, 1, 0
        %v778 = vsel %vm746, 1, 0
        %v779 = vsel %vm747, 1, 0
        %v780 = vsel %vm748, 1, 0
        %v781 = vsel %vm749, 1, 0
        %v782 = vsel %vm750, 1, 0
        %v783 = vsel %vm751, 1, 0
        %v784 = vsel %vm752, 1, 0
        %v785 = vsel %vm753, 1, 0
        %v786 = vsel %vm754, 1, 0
        %v787 = vsel %vm755, 1, 0
        %v788 = vsel %vm756, 1, 0
        %v789 = vsel %vm757, 1, 0
        %v790 = vsel %vm758, 1, 0
        %v791 = vsel %vm759, 1, 0
        %v792 = vsel %vm760, 1, 0
        %v793 = vsel %vm761, 1, 0
        %v794 = vsel %vm762, 1, 0
        %v795 = vsel %vm763, 1, 0
        %v796 = vsel %vm764, 1, 0
        %v797 = vsel %vm765, 1, 0
        %v798 = vsel %vm766, 1, 0
        %v799 = vsel %vm767, 1, 0
        %v800 = vsel %vm768, 1, 0
        %v801 = vsel %vm769, 1, 0
        %v802 = vsel %vm770, 1, 0
        %v803 = vsel %vm771, 1, 0
        %v804 = vsel %vm772, 1, 0
        %v805 = vsel %vm773, 1, 0
        %v806 = vsel %vm774, 1, 0
        %v807 = vsel %vm775, 1, 0
        %v808 = vsel %vm776, 1, 0
        %v809 = vcvt.s32.f32 %v777
        %v810 = vcvt.s32.f32 %v778
        %v811 = vcvt.s32.f32 %v779
        %v812 = vcvt.s32.f32 %v780
        %v813 = vcvt.s32.f32 %v781
        %v814 = vcvt.s32.f32 %v782
        %v815 = vcvt.s32.f32 %v783
        %v816 = vcvt.s32.f32 %v784
        %v817 = vcvt.s32.f32 %v785
        %v818 = vcvt.s32.f32 %v786
        %v819 = vcvt.s32.f32 %v787
        %v820 = vcvt.s32.f32 %v788
        %v821 = vcvt.s32.f32 %v789
        %v822 = vcvt.s32.f32 %v790
        %v823 = vcvt.s32.f32 %v791
        %v824 = vcvt.s32.f32 %v792
        %v825 = vcvt.s32.f32 %v793
        %v826 = vcvt.s32.f32 %v794
        %v827 = vcvt.s32.f32 %v795
        %v828 = vcvt.s32.f32 %v796
        %v829 = vcvt.s32.f32 %v797
        %v830 = vcvt.s32.f32 %v798
        %v831 = vcvt.s32.f32 %v799
        %v832 = vcvt.s32.f32 %v800
        %v833 = vcvt.s32.f32 %v801
        %v834 = vcvt.s32.f32 %v802
        %v835 = vcvt.s32.f32 %v803
        %v836 = vcvt.s32.f32 %v804
        %v837 = vcvt.s32.f32 %v805
        %v838 = vcvt.s32.f32 %v806
        %v839 = vcvt.s32.f32 %v807
        %v840 = vcvt.s32.f32 %v808
        %v841 = vlaneseq
        %v842 = vshrl.u32 %v841, 7
        %v843 = vsub.s32 0, %v842
        %v844 = vrot.slane %v520, %v843
        %v845 = vlaneseq
        %v846 = vshrl.u32 %v845, 7
        %v847 = vsub.s32 0, %v846
        %v848 = vrot.slane %v522, %v847
        %v849 = vlaneseq
        %v850 = vshrl.u32 %v849, 7
        %v851 = vsub.s32 0, %v850
        %v852 = vrot.slane %v591, %v851
        %v853 = vlaneseq
        %v854 = vshrl.u32 %v853, 7
        %v855 = vsub.s32 0, %v854
        %v856 = vrot.slane %v593, %v855
        %v857 = vlaneseq
        %v858 = vshrl.u32 %v857, 7
        %v859 = vsub.s32 0, %v858
        %v860 = vrot.slane %v662, %v859
        %v861 = vlaneseq
        %v862 = vshrl.u32 %v861, 7
        %v863 = vsub.s32 0, %v862
        %v864 = vrot.slane %v664, %v863
        %v865 = vlaneseq
        %v866 = vshrl.u32 %v865, 7
        %v867 = vsub.s32 0, %v866
        %v868 = vrot.slane %v733, %v867
        %v869 = vlaneseq
        %v870 = vshrl.u32 %v869, 7
        %v871 = vsub.s32 0, %v870
        %v872 = vrot.slane %v735, %v871
        %v873 = vmul.f32 %v844, %v809
        %v874 = vmul.f32 %v848, %v810
        %v875 = vmul.f32 %v852, %v811
        %v876 = vmul.f32 %v856, %v812
        %v877 = vmul.f32 %v860, %v813
        %v878 = vmul.f32 %v864, %v814
        %v879 = vmul.f32 %v868, %v815
        %v880 = vmul.f32 %v872, %v816
        %v881 = vmul.f32 %v844, %v817
        %v882 = vmul.f32 %v848, %v818
        %v883 = vmul.f32 %v852, %v819
        %v884 = vmul.f32 %v856, %v820
        %v885 = vmul.f32 %v860, %v821
        %v886 = vmul.f32 %v864, %v822
        %v887 = vmul.f32 %v868, %v823
        %v888 = vmul.f32 %v872, %v824
        %v889 = vmul.f32 %v844, %v825
        %v890 = vmul.f32 %v848, %v826
        %v891 = vmul.f32 %v852, %v827
        %v892 = vmul.f32 %v856, %v828
        %v893 = vmul.f32 %v860, %v829
        %v894 = vmul.f32 %v864, %v830
        %v895 = vmul.f32 %v868, %v831
        %v896 = vmul.f32 %v872, %v832
        %v897 = vmul.f32 %v844, %v833
        %v898 = vmul.f32 %v848, %v834
        %v899 = vmul.f32 %v852, %v835
        %v900 = vmul.f32 %v856, %v836
        %v901 = vmul.f32 %v860, %v837
        %v902 = vmul.f32 %v864, %v838
        %v903 = vmul.f32 %v868, %v839
        %v904 = vmul.f32 %v872, %v840
        %v905 = vld [vmem:[#allocation7] sm:$0xff]
        %v906 = vld [vmem:[#allocation7 + $0x8] sm:$0xff]
        %v907 = vld [vmem:[#allocation7 + $0x10] sm:$0xff]
        %v908 = vld [vmem:[#allocation7 + $0x18] sm:$0xff]
        %v909 = vld [vmem:[#allocation7 + $0x20] sm:$0xff]
        %v910 = vld [vmem:[#allocation7 + $0x28] sm:$0xff]
        %v911 = vld [vmem:[#allocation7 + $0x30] sm:$0xff]
        %v912 = vld [vmem:[#allocation7 + $0x38] sm:$0xff]
        %v913 = vld [vmem:[#allocation7 + $0x40] sm:$0xff]
        %v914 = vld [vmem:[#allocation7 + $0x48] sm:$0xff]
        %v915 = vld [vmem:[#allocation7 + $0x50] sm:$0xff]
        %v916 = vld [vmem:[#allocation7 + $0x58] sm:$0xff]
        %v917 = vld [vmem:[#allocation7 + $0x60] sm:$0xff]
        %v918 = vld [vmem:[#allocation7 + $0x68] sm:$0xff]
        %v919 = vld [vmem:[#allocation7 + $0x70] sm:$0xff]
        %v920 = vld [vmem:[#allocation7 + $0x78] sm:$0xff]
        %v921 = vld [vmem:[#allocation7 + $0x80] sm:$0xff]
        %v922 = vld [vmem:[#allocation7 + $0x88] sm:$0xff]
        %v923 = vld [vmem:[#allocation7 + $0x90] sm:$0xff]
        %v924 = vld [vmem:[#allocation7 + $0x98] sm:$0xff]
        %v925 = vld [vmem:[#allocation7 + $0xa0] sm:$0xff]
        %v926 = vld [vmem:[#allocation7 + $0xa8] sm:$0xff]
        %v927 = vld [vmem:[#allocation7 + $0xb0] sm:$0xff]
        %v928 = vld [vmem:[#allocation7 + $0xb8] sm:$0xff]
        %v929 = vld [vmem:[#allocation7 + $0xc0] sm:$0xff]
        %v930 = vld [vmem:[#allocation7 + $0xc8] sm:$0xff]
        %v931 = vld [vmem:[#allocation7 + $0xd0] sm:$0xff]
        %v932 = vld [vmem:[#allocation7 + $0xd8] sm:$0xff]
        %v933 = vld [vmem:[#allocation7 + $0xe0] sm:$0xff]
        %v934 = vld [vmem:[#allocation7 + $0xe8] sm:$0xff]
        %v935 = vld [vmem:[#allocation7 + $0xf0] sm:$0xff]
        %v936 = vld [vmem:[#allocation7 + $0xf8] sm:$0xff]
        %v937 = vld [vmem:[#allocation7 + $0x100] sm:$0xff]
        %v938 = vld [vmem:[#allocation7 + $0x108] sm:$0xff]
        %v939 = vld [vmem:[#allocation7 + $0x110] sm:$0xff]
        %v940 = vld [vmem:[#allocation7 + $0x118] sm:$0xff]
        %v941 = vld [vmem:[#allocation7 + $0x120] sm:$0xff]
        %v942 = vld [vmem:[#allocation7 + $0x128] sm:$0xff]
        %v943 = vld [vmem:[#allocation7 + $0x130] sm:$0xff]
        %v944 = vld [vmem:[#allocation7 + $0x138] sm:$0xff]
        %v945 = vld [vmem:[#allocation7 + $0x140] sm:$0xff]
        %v946 = vld [vmem:[#allocation7 + $0x148] sm:$0xff]
        %v947 = vld [vmem:[#allocation7 + $0x150] sm:$0xff]
        %v948 = vld [vmem:[#allocation7 + $0x158] sm:$0xff]
        %v949 = vld [vmem:[#allocation7 + $0x160] sm:$0xff]
        %v950 = vld [vmem:[#allocation7 + $0x168] sm:$0xff]
        %v951 = vld [vmem:[#allocation7 + $0x170] sm:$0xff]
        %v952 = vld [vmem:[#allocation7 + $0x178] sm:$0xff]
        %v953 = vld [vmem:[#allocation7 + $0x180] sm:$0xff]
        %v954 = vld [vmem:[#allocation7 + $0x188] sm:$0xff]
        %v955 = vld [vmem:[#allocation7 + $0x190] sm:$0xff]
        %v956 = vld [vmem:[#allocation7 + $0x198] sm:$0xff]
        %v957 = vld [vmem:[#allocation7 + $0x1a0] sm:$0xff]
        %v958 = vld [vmem:[#allocation7 + $0x1a8] sm:$0xff]
        %v959 = vld [vmem:[#allocation7 + $0x1b0] sm:$0xff]
        %v960 = vld [vmem:[#allocation7 + $0x1b8] sm:$0xff]
        %v961 = vld [vmem:[#allocation7 + $0x1c0] sm:$0xff]
        %v962 = vld [vmem:[#allocation7 + $0x1c8] sm:$0xff]
        %v963 = vld [vmem:[#allocation7 + $0x1d0] sm:$0xff]
        %v964 = vld [vmem:[#allocation7 + $0x1d8] sm:$0xff]
        %v965 = vld [vmem:[#allocation7 + $0x1e0] sm:$0xff]
        %v966 = vld [vmem:[#allocation7 + $0x1e8] sm:$0xff]
        %v967 = vld [vmem:[#allocation7 + $0x1f0] sm:$0xff]
        %v968 = vld [vmem:[#allocation7 + $0x1f8] sm:$0xff]
        %v969 = vld [vmem:[#allocation7 + $0x200] sm:$0xff]
        %v970 = vld [vmem:[#allocation7 + $0x208] sm:$0xff]
        %v971 = vld [vmem:[#allocation7 + $0x210] sm:$0xff]
        %v972 = vld [vmem:[#allocation7 + $0x218] sm:$0xff]
        %v973 = vld [vmem:[#allocation7 + $0x220] sm:$0xff]
        %v974 = vld [vmem:[#allocation7 + $0x228] sm:$0xff]
        %v975 = vld [vmem:[#allocation7 + $0x230] sm:$0xff]
        %v976 = vld [vmem:[#allocation7 + $0x238] sm:$0xff]
        %v977 = vld [vmem:[#allocation7 + $0x240] sm:$0xff]
        %v978 = vld [vmem:[#allocation7 + $0x248] sm:$0xff]
        %v979 = vld [vmem:[#allocation7 + $0x250] sm:$0xff]
        %v980 = vld [vmem:[#allocation7 + $0x258] sm:$0xff]
        %v981 = vld [vmem:[#allocation7 + $0x260] sm:$0xff]
        %v982 = vld [vmem:[#allocation7 + $0x268] sm:$0xff]
        %v983 = vld [vmem:[#allocation7 + $0x270] sm:$0xff]
        %v984 = vld [vmem:[#allocation7 + $0x278] sm:$0xff]
        %v985 = vld [vmem:[#allocation7 + $0x280] sm:$0xff]
        %v986 = vld [vmem:[#allocation7 + $0x288] sm:$0xff]
        %v987 = vld [vmem:[#allocation7 + $0x290] sm:$0xff]
        %v988 = vld [vmem:[#allocation7 + $0x298] sm:$0xff]
        %v989 = vld [vmem:[#allocation7 + $0x2a0] sm:$0xff]
        %v990 = vld [vmem:[#allocation7 + $0x2a8] sm:$0xff]
        %v991 = vld [vmem:[#allocation7 + $0x2b0] sm:$0xff]
        %v992 = vld [vmem:[#allocation7 + $0x2b8] sm:$0xff]
        %v993 = vld [vmem:[#allocation7 + $0x2c0] sm:$0xff]
        %v994 = vld [vmem:[#allocation7 + $0x2c8] sm:$0xff]
        %v995 = vld [vmem:[#allocation7 + $0x2d0] sm:$0xff]
        %v996 = vld [vmem:[#allocation7 + $0x2d8] sm:$0xff]
        %v997 = vld [vmem:[#allocation7 + $0x2e0] sm:$0xff]
        %v998 = vld [vmem:[#allocation7 + $0x2e8] sm:$0xff]
        %v999 = vld [vmem:[#allocation7 + $0x2f0] sm:$0xff]
        %v1000 = vld [vmem:[#allocation7 + $0x2f8] sm:$0xff]
        %v1001 = vld [vmem:[#allocation7 + $0x300] sm:$0xff]
        %v1002 = vld [vmem:[#allocation7 + $0x308] sm:$0xff]
        %v1003 = vld [vmem:[#allocation7 + $0x310] sm:$0xff]
        %v1004 = vld [vmem:[#allocation7 + $0x318] sm:$0xff]
        %v1005 = vld [vmem:[#allocation7 + $0x320] sm:$0xff]
        %v1006 = vld [vmem:[#allocation7 + $0x328] sm:$0xff]
        %v1007 = vld [vmem:[#allocation7 + $0x330] sm:$0xff]
        %v1008 = vld [vmem:[#allocation7 + $0x338] sm:$0xff]
        %v1009 = vld [vmem:[#allocation7 + $0x340] sm:$0xff]
        %v1010 = vld [vmem:[#allocation7 + $0x348] sm:$0xff]
        %v1011 = vld [vmem:[#allocation7 + $0x350] sm:$0xff]
        %v1012 = vld [vmem:[#allocation7 + $0x358] sm:$0xff]
        %v1013 = vld [vmem:[#allocation7 + $0x360] sm:$0xff]
        %v1014 = vld [vmem:[#allocation7 + $0x368] sm:$0xff]
        %v1015 = vld [vmem:[#allocation7 + $0x370] sm:$0xff]
        %v1016 = vld [vmem:[#allocation7 + $0x378] sm:$0xff]
        %v1017 = vld [vmem:[#allocation7 + $0x380] sm:$0xff]
        %v1018 = vld [vmem:[#allocation7 + $0x388] sm:$0xff]
        %v1019 = vld [vmem:[#allocation7 + $0x390] sm:$0xff]
        %v1020 = vld [vmem:[#allocation7 + $0x398] sm:$0xff]
        %v1021 = vld [vmem:[#allocation7 + $0x3a0] sm:$0xff]
        %v1022 = vld [vmem:[#allocation7 + $0x3a8] sm:$0xff]
        %v1023 = vld [vmem:[#allocation7 + $0x3b0] sm:$0xff]
        %v1024 = vld [vmem:[#allocation7 + $0x3b8] sm:$0xff]
        %v1025 = vld [vmem:[#allocation7 + $0x3c0] sm:$0xff]
        %v1026 = vld [vmem:[#allocation7 + $0x3c8] sm:$0xff]
        %v1027 = vld [vmem:[#allocation7 + $0x3d0] sm:$0xff]
        %v1028 = vld [vmem:[#allocation7 + $0x3d8] sm:$0xff]
        %v1029 = vld [vmem:[#allocation7 + $0x3e0] sm:$0xff]
        %v1030 = vld [vmem:[#allocation7 + $0x3e8] sm:$0xff]
        %v1031 = vld [vmem:[#allocation7 + $0x3f0] sm:$0xff]
        %v1032 = vld [vmem:[#allocation7 + $0x3f8] sm:$0xff]
        %v1033 = vld [vmem:[#allocation7 + $0x400] sm:$0xff]
        %v1034 = vld [vmem:[#allocation7 + $0x408] sm:$0xff]
        %v1035 = vld [vmem:[#allocation7 + $0x410] sm:$0xff]
        %v1036 = vld [vmem:[#allocation7 + $0x418] sm:$0xff]
        %v1037 = vld [vmem:[#allocation7 + $0x420] sm:$0xff]
        %v1038 = vld [vmem:[#allocation7 + $0x428] sm:$0xff]
        %v1039 = vld [vmem:[#allocation7 + $0x430] sm:$0xff]
        %v1040 = vld [vmem:[#allocation7 + $0x438] sm:$0xff]
        %v1041 = vld [vmem:[#allocation7 + $0x440] sm:$0xff]
        %v1042 = vld [vmem:[#allocation7 + $0x448] sm:$0xff]
        %v1043 = vld [vmem:[#allocation7 + $0x450] sm:$0xff]
        %v1044 = vld [vmem:[#allocation7 + $0x458] sm:$0xff]
        %v1045 = vld [vmem:[#allocation7 + $0x460] sm:$0xff]
        %v1046 = vld [vmem:[#allocation7 + $0x468] sm:$0xff]
        %v1047 = vld [vmem:[#allocation7 + $0x470] sm:$0xff]
        %v1048 = vld [vmem:[#allocation7 + $0x478] sm:$0xff]
        %v1049 = vld [vmem:[#allocation7 + $0x480] sm:$0xff]
        %v1050 = vld [vmem:[#allocation7 + $0x488] sm:$0xff]
        %v1051 = vld [vmem:[#allocation7 + $0x490] sm:$0xff]
        %v1052 = vld [vmem:[#allocation7 + $0x498] sm:$0xff]
        %v1053 = vld [vmem:[#allocation7 + $0x4a0] sm:$0xff]
        %v1054 = vld [vmem:[#allocation7 + $0x4a8] sm:$0xff]
        %v1055 = vld [vmem:[#allocation7 + $0x4b0] sm:$0xff]
        %v1056 = vld [vmem:[#allocation7 + $0x4b8] sm:$0xff]
        %v1057 = vld [vmem:[#allocation7 + $0x4c0] sm:$0xff]
        %v1058 = vld [vmem:[#allocation7 + $0x4c8] sm:$0xff]
        %v1059 = vld [vmem:[#allocation7 + $0x4d0] sm:$0xff]
        %v1060 = vld [vmem:[#allocation7 + $0x4d8] sm:$0xff]
        %v1061 = vld [vmem:[#allocation7 + $0x4e0] sm:$0xff]
        %v1062 = vld [vmem:[#allocation7 + $0x4e8] sm:$0xff]
        %v1063 = vld [vmem:[#allocation7 + $0x4f0] sm:$0xff]
        %v1064 = vld [vmem:[#allocation7 + $0x4f8] sm:$0xff]
        %v1065 = vld [vmem:[#allocation7 + $0x500] sm:$0xff]
        %v1066 = vld [vmem:[#allocation7 + $0x508] sm:$0xff]
        %v1067 = vld [vmem:[#allocation7 + $0x510] sm:$0xff]
        %v1068 = vld [vmem:[#allocation7 + $0x518] sm:$0xff]
        %v1069 = vld [vmem:[#allocation7 + $0x520] sm:$0xff]
        %v1070 = vld [vmem:[#allocation7 + $0x528] sm:$0xff]
        %v1071 = vld [vmem:[#allocation7 + $0x530] sm:$0xff]
        %v1072 = vld [vmem:[#allocation7 + $0x538] sm:$0xff]
        %v1073 = vld [vmem:[#allocation7 + $0x540] sm:$0xff]
        %v1074 = vld [vmem:[#allocation7 + $0x548] sm:$0xff]
        %v1075 = vld [vmem:[#allocation7 + $0x550] sm:$0xff]
        %v1076 = vld [vmem:[#allocation7 + $0x558] sm:$0xff]
        %v1077 = vld [vmem:[#allocation7 + $0x560] sm:$0xff]
        %v1078 = vld [vmem:[#allocation7 + $0x568] sm:$0xff]
        %v1079 = vld [vmem:[#allocation7 + $0x570] sm:$0xff]
        %v1080 = vld [vmem:[#allocation7 + $0x578] sm:$0xff]
        %v1081 = vld [vmem:[#allocation7 + $0x580] sm:$0xff]
        %v1082 = vld [vmem:[#allocation7 + $0x588] sm:$0xff]
        %v1083 = vld [vmem:[#allocation7 + $0x590] sm:$0xff]
        %v1084 = vld [vmem:[#allocation7 + $0x598] sm:$0xff]
        %v1085 = vld [vmem:[#allocation7 + $0x5a0] sm:$0xff]
        %v1086 = vld [vmem:[#allocation7 + $0x5a8] sm:$0xff]
        %v1087 = vld [vmem:[#allocation7 + $0x5b0] sm:$0xff]
        %v1088 = vld [vmem:[#allocation7 + $0x5b8] sm:$0xff]
        %v1089 = vld [vmem:[#allocation7 + $0x5c0] sm:$0xff]
        %v1090 = vld [vmem:[#allocation7 + $0x5c8] sm:$0xff]
        %v1091 = vld [vmem:[#allocation7 + $0x5d0] sm:$0xff]
        %v1092 = vld [vmem:[#allocation7 + $0x5d8] sm:$0xff]
        %v1093 = vld [vmem:[#allocation7 + $0x5e0] sm:$0xff]
        %v1094 = vld [vmem:[#allocation7 + $0x5e8] sm:$0xff]
        %v1095 = vld [vmem:[#allocation7 + $0x5f0] sm:$0xff]
        %v1096 = vld [vmem:[#allocation7 + $0x5f8] sm:$0xff]
        %v1097 = vld [vmem:[#allocation7 + $0x600] sm:$0xff]
        %v1098 = vld [vmem:[#allocation7 + $0x608] sm:$0xff]
        %v1099 = vld [vmem:[#allocation7 + $0x610] sm:$0xff]
        %v1100 = vld [vmem:[#allocation7 + $0x618] sm:$0xff]
        %v1101 = vld [vmem:[#allocation7 + $0x620] sm:$0xff]
        %v1102 = vld [vmem:[#allocation7 + $0x628] sm:$0xff]
        %v1103 = vld [vmem:[#allocation7 + $0x630] sm:$0xff]
        %v1104 = vld [vmem:[#allocation7 + $0x638] sm:$0xff]
        %v1105 = vld [vmem:[#allocation7 + $0x640] sm:$0xff]
        %v1106 = vld [vmem:[#allocation7 + $0x648] sm:$0xff]
        %v1107 = vld [vmem:[#allocation7 + $0x650] sm:$0xff]
        %v1108 = vld [vmem:[#allocation7 + $0x658] sm:$0xff]
        %v1109 = vld [vmem:[#allocation7 + $0x660] sm:$0xff]
        %v1110 = vld [vmem:[#allocation7 + $0x668] sm:$0xff]
        %v1111 = vld [vmem:[#allocation7 + $0x670] sm:$0xff]
        %v1112 = vld [vmem:[#allocation7 + $0x678] sm:$0xff]
        %v1113 = vld [vmem:[#allocation7 + $0x680] sm:$0xff]
        %v1114 = vld [vmem:[#allocation7 + $0x688] sm:$0xff]
        %v1115 = vld [vmem:[#allocation7 + $0x690] sm:$0xff]
        %v1116 = vld [vmem:[#allocation7 + $0x698] sm:$0xff]
        %v1117 = vld [vmem:[#allocation7 + $0x6a0] sm:$0xff]
        %v1118 = vld [vmem:[#allocation7 + $0x6a8] sm:$0xff]
        %v1119 = vld [vmem:[#allocation7 + $0x6b0] sm:$0xff]
        %v1120 = vld [vmem:[#allocation7 + $0x6b8] sm:$0xff]
        %v1121 = vld [vmem:[#allocation7 + $0x6c0] sm:$0xff]
        %v1122 = vld [vmem:[#allocation7 + $0x6c8] sm:$0xff]
        %v1123 = vld [vmem:[#allocation7 + $0x6d0] sm:$0xff]
        %v1124 = vld [vmem:[#allocation7 + $0x6d8] sm:$0xff]
        %v1125 = vld [vmem:[#allocation7 + $0x6e0] sm:$0xff]
        %v1126 = vld [vmem:[#allocation7 + $0x6e8] sm:$0xff]
        %v1127 = vld [vmem:[#allocation7 + $0x6f0] sm:$0xff]
        %v1128 = vld [vmem:[#allocation7 + $0x6f8] sm:$0xff]
        %v1129 = vld [vmem:[#allocation7 + $0x700] sm:$0xff]
        %v1130 = vld [vmem:[#allocation7 + $0x708] sm:$0xff]
        %v1131 = vld [vmem:[#allocation7 + $0x710] sm:$0xff]
        %v1132 = vld [vmem:[#allocation7 + $0x718] sm:$0xff]
        %v1133 = vld [vmem:[#allocation7 + $0x720] sm:$0xff]
        %v1134 = vld [vmem:[#allocation7 + $0x728] sm:$0xff]
        %v1135 = vld [vmem:[#allocation7 + $0x730] sm:$0xff]
        %v1136 = vld [vmem:[#allocation7 + $0x738] sm:$0xff]
        %v1137 = vld [vmem:[#allocation7 + $0x740] sm:$0xff]
        %v1138 = vld [vmem:[#allocation7 + $0x748] sm:$0xff]
        %v1139 = vld [vmem:[#allocation7 + $0x750] sm:$0xff]
        %v1140 = vld [vmem:[#allocation7 + $0x758] sm:$0xff]
        %v1141 = vld [vmem:[#allocation7 + $0x760] sm:$0xff]
        %v1142 = vld [vmem:[#allocation7 + $0x768] sm:$0xff]
        %v1143 = vld [vmem:[#allocation7 + $0x770] sm:$0xff]
        %v1144 = vld [vmem:[#allocation7 + $0x778] sm:$0xff]
        %v1145 = vld [vmem:[#allocation7 + $0x780] sm:$0xff]
        %v1146 = vld [vmem:[#allocation7 + $0x788] sm:$0xff]
        %v1147 = vld [vmem:[#allocation7 + $0x790] sm:$0xff]
        %v1148 = vld [vmem:[#allocation7 + $0x798] sm:$0xff]
        %v1149 = vld [vmem:[#allocation7 + $0x7a0] sm:$0xff]
        %v1150 = vld [vmem:[#allocation7 + $0x7a8] sm:$0xff]
        %v1151 = vld [vmem:[#allocation7 + $0x7b0] sm:$0xff]
        %v1152 = vld [vmem:[#allocation7 + $0x7b8] sm:$0xff]
        %v1153 = vld [vmem:[#allocation7 + $0x7c0] sm:$0xff]
        %v1154 = vld [vmem:[#allocation7 + $0x7c8] sm:$0xff]
        %v1155 = vld [vmem:[#allocation7 + $0x7d0] sm:$0xff]
        %v1156 = vld [vmem:[#allocation7 + $0x7d8] sm:$0xff]
        %v1157 = vld [vmem:[#allocation7 + $0x7e0] sm:$0xff]
        %v1158 = vld [vmem:[#allocation7 + $0x7e8] sm:$0xff]
        %v1159 = vld [vmem:[#allocation7 + $0x7f0] sm:$0xff]
        %v1160 = vld [vmem:[#allocation7 + $0x7f8] sm:$0xff]
        %v1161 = vld [vmem:[#allocation7 + $0x800] sm:$0xff]
        %v1162 = vld [vmem:[#allocation7 + $0x808] sm:$0xff]
        %v1163 = vld [vmem:[#allocation7 + $0x810] sm:$0xff]
        %v1164 = vld [vmem:[#allocation7 + $0x818] sm:$0xff]
        %v1165 = vld [vmem:[#allocation7 + $0x820] sm:$0xff]
        %v1166 = vld [vmem:[#allocation7 + $0x828] sm:$0xff]
        %v1167 = vld [vmem:[#allocation7 + $0x830] sm:$0xff]
        %v1168 = vld [vmem:[#allocation7 + $0x838] sm:$0xff]
        %v1169 = vld [vmem:[#allocation7 + $0x840] sm:$0xff]
        %v1170 = vld [vmem:[#allocation7 + $0x848] sm:$0xff]
        %v1171 = vld [vmem:[#allocation7 + $0x850] sm:$0xff]
        %v1172 = vld [vmem:[#allocation7 + $0x858] sm:$0xff]
        %v1173 = vld [vmem:[#allocation7 + $0x860] sm:$0xff]
        %v1174 = vld [vmem:[#allocation7 + $0x868] sm:$0xff]
        %v1175 = vld [vmem:[#allocation7 + $0x870] sm:$0xff]
        %v1176 = vld [vmem:[#allocation7 + $0x878] sm:$0xff]
        %v1177 = vld [vmem:[#allocation7 + $0x880] sm:$0xff]
        %v1178 = vld [vmem:[#allocation7 + $0x888] sm:$0xff]
        %v1179 = vld [vmem:[#allocation7 + $0x890] sm:$0xff]
        %v1180 = vld [vmem:[#allocation7 + $0x898] sm:$0xff]
        %v1181 = vld [vmem:[#allocation7 + $0x8a0] sm:$0xff]
        %v1182 = vld [vmem:[#allocation7 + $0x8a8] sm:$0xff]
        %v1183 = vld [vmem:[#allocation7 + $0x8b0] sm:$0xff]
        %v1184 = vld [vmem:[#allocation7 + $0x8b8] sm:$0xff]
        %v1185 = vld [vmem:[#allocation7 + $0x8c0] sm:$0xff]
        %v1186 = vld [vmem:[#allocation7 + $0x8c8] sm:$0xff]
        %v1187 = vld [vmem:[#allocation7 + $0x8d0] sm:$0xff]
        %v1188 = vld [vmem:[#allocation7 + $0x8d8] sm:$0xff]
        %v1189 = vld [vmem:[#allocation7 + $0x8e0] sm:$0xff]
        %v1190 = vld [vmem:[#allocation7 + $0x8e8] sm:$0xff]
        %v1191 = vld [vmem:[#allocation7 + $0x8f0] sm:$0xff]
        %v1192 = vld [vmem:[#allocation7 + $0x8f8] sm:$0xff]
        %v1193 = vld [vmem:[#allocation7 + $0x900] sm:$0xff]
        %v1194 = vld [vmem:[#allocation7 + $0x908] sm:$0xff]
        %v1195 = vld [vmem:[#allocation7 + $0x910] sm:$0xff]
        %v1196 = vld [vmem:[#allocation7 + $0x918] sm:$0xff]
        %v1197 = vld [vmem:[#allocation7 + $0x920] sm:$0xff]
        %v1198 = vld [vmem:[#allocation7 + $0x928] sm:$0xff]
        %v1199 = vld [vmem:[#allocation7 + $0x930] sm:$0xff]
        %v1200 = vld [vmem:[#allocation7 + $0x938] sm:$0xff]
        %v1201 = vld [vmem:[#allocation7 + $0x940] sm:$0xff]
        %v1202 = vld [vmem:[#allocation7 + $0x948] sm:$0xff]
        %v1203 = vld [vmem:[#allocation7 + $0x950] sm:$0xff]
        %v1204 = vld [vmem:[#allocation7 + $0x958] sm:$0xff]
        %v1205 = vld [vmem:[#allocation7 + $0x960] sm:$0xff]
        %v1206 = vld [vmem:[#allocation7 + $0x968] sm:$0xff]
        %v1207 = vld [vmem:[#allocation7 + $0x970] sm:$0xff]
        %v1208 = vld [vmem:[#allocation7 + $0x978] sm:$0xff]
        %v1209 = vld [vmem:[#allocation7 + $0x980] sm:$0xff]
        %v1210 = vld [vmem:[#allocation7 + $0x988] sm:$0xff]
        %v1211 = vld [vmem:[#allocation7 + $0x990] sm:$0xff]
        %v1212 = vld [vmem:[#allocation7 + $0x998] sm:$0xff]
        %v1213 = vld [vmem:[#allocation7 + $0x9a0] sm:$0xff]
        %v1214 = vld [vmem:[#allocation7 + $0x9a8] sm:$0xff]
        %v1215 = vld [vmem:[#allocation7 + $0x9b0] sm:$0xff]
        %v1216 = vld [vmem:[#allocation7 + $0x9b8] sm:$0xff]
        %v1217 = vld [vmem:[#allocation7 + $0x9c0] sm:$0xff]
        %v1218 = vld [vmem:[#allocation7 + $0x9c8] sm:$0xff]
        %v1219 = vld [vmem:[#allocation7 + $0x9d0] sm:$0xff]
        %v1220 = vld [vmem:[#allocation7 + $0x9d8] sm:$0xff]
        %v1221 = vld [vmem:[#allocation7 + $0x9e0] sm:$0xff]
        %v1222 = vld [vmem:[#allocation7 + $0x9e8] sm:$0xff]
        %v1223 = vld [vmem:[#allocation7 + $0x9f0] sm:$0xff]
        %v1224 = vld [vmem:[#allocation7 + $0x9f8] sm:$0xff]
        %v1225 = vld [vmem:[#allocation7 + $0xa00] sm:$0xff]
        %v1226 = vld [vmem:[#allocation7 + $0xa08] sm:$0xff]
        %v1227 = vld [vmem:[#allocation7 + $0xa10] sm:$0xff]
        %v1228 = vld [vmem:[#allocation7 + $0xa18] sm:$0xff]
        %v1229 = vld [vmem:[#allocation7 + $0xa20] sm:$0xff]
        %v1230 = vld [vmem:[#allocation7 + $0xa28] sm:$0xff]
        %v1231 = vld [vmem:[#allocation7 + $0xa30] sm:$0xff]
        %v1232 = vld [vmem:[#allocation7 + $0xa38] sm:$0xff]
        %v1233 = vld [vmem:[#allocation7 + $0xa40] sm:$0xff]
        %v1234 = vld [vmem:[#allocation7 + $0xa48] sm:$0xff]
        %v1235 = vld [vmem:[#allocation7 + $0xa50] sm:$0xff]
        %v1236 = vld [vmem:[#allocation7 + $0xa58] sm:$0xff]
        %v1237 = vld [vmem:[#allocation7 + $0xa60] sm:$0xff]
        %v1238 = vld [vmem:[#allocation7 + $0xa68] sm:$0xff]
        %v1239 = vld [vmem:[#allocation7 + $0xa70] sm:$0xff]
        %v1240 = vld [vmem:[#allocation7 + $0xa78] sm:$0xff]
        %v1241 = vld [vmem:[#allocation7 + $0xa80] sm:$0xff]
        %v1242 = vld [vmem:[#allocation7 + $0xa88] sm:$0xff]
        %v1243 = vld [vmem:[#allocation7 + $0xa90] sm:$0xff]
        %v1244 = vld [vmem:[#allocation7 + $0xa98] sm:$0xff]
        %v1245 = vld [vmem:[#allocation7 + $0xaa0] sm:$0xff]
        %v1246 = vld [vmem:[#allocation7 + $0xaa8] sm:$0xff]
        %v1247 = vld [vmem:[#allocation7 + $0xab0] sm:$0xff]
        %v1248 = vld [vmem:[#allocation7 + $0xab8] sm:$0xff]
        %v1249 = vld [vmem:[#allocation7 + $0xac0] sm:$0xff]
        %v1250 = vld [vmem:[#allocation7 + $0xac8] sm:$0xff]
        %v1251 = vld [vmem:[#allocation7 + $0xad0] sm:$0xff]
        %v1252 = vld [vmem:[#allocation7 + $0xad8] sm:$0xff]
        %v1253 = vld [vmem:[#allocation7 + $0xae0] sm:$0xff]
        %v1254 = vld [vmem:[#allocation7 + $0xae8] sm:$0xff]
        %v1255 = vld [vmem:[#allocation7 + $0xaf0] sm:$0xff]
        %v1256 = vld [vmem:[#allocation7 + $0xaf8] sm:$0xff]
        %v1257 = vld [vmem:[#allocation7 + $0xb00] sm:$0xff]
        %v1258 = vld [vmem:[#allocation7 + $0xb08] sm:$0xff]
        %v1259 = vld [vmem:[#allocation7 + $0xb10] sm:$0xff]
        %v1260 = vld [vmem:[#allocation7 + $0xb18] sm:$0xff]
        %v1261 = vld [vmem:[#allocation7 + $0xb20] sm:$0xff]
        %v1262 = vld [vmem:[#allocation7 + $0xb28] sm:$0xff]
        %v1263 = vld [vmem:[#allocation7 + $0xb30] sm:$0xff]
        %v1264 = vld [vmem:[#allocation7 + $0xb38] sm:$0xff]
        %v1265 = vld [vmem:[#allocation7 + $0xb40] sm:$0xff]
        %v1266 = vld [vmem:[#allocation7 + $0xb48] sm:$0xff]
        %v1267 = vld [vmem:[#allocation7 + $0xb50] sm:$0xff]
        %v1268 = vld [vmem:[#allocation7 + $0xb58] sm:$0xff]
        %v1269 = vld [vmem:[#allocation7 + $0xb60] sm:$0xff]
        %v1270 = vld [vmem:[#allocation7 + $0xb68] sm:$0xff]
        %v1271 = vld [vmem:[#allocation7 + $0xb70] sm:$0xff]
        %v1272 = vld [vmem:[#allocation7 + $0xb78] sm:$0xff]
        %v1273 = vld [vmem:[#allocation7 + $0xb80] sm:$0xff]
        %v1274 = vld [vmem:[#allocation7 + $0xb88] sm:$0xff]
        %v1275 = vld [vmem:[#allocation7 + $0xb90] sm:$0xff]
        %v1276 = vld [vmem:[#allocation7 + $0xb98] sm:$0xff]
        %v1277 = vld [vmem:[#allocation7 + $0xba0] sm:$0xff]
        %v1278 = vld [vmem:[#allocation7 + $0xba8] sm:$0xff]
        %v1279 = vld [vmem:[#allocation7 + $0xbb0] sm:$0xff]
        %v1280 = vld [vmem:[#allocation7 + $0xbb8] sm:$0xff]
        %v1281 = vld [vmem:[#allocation7 + $0xbc0] sm:$0xff]
        %v1282 = vld [vmem:[#allocation7 + $0xbc8] sm:$0xff]
        %v1283 = vld [vmem:[#allocation7 + $0xbd0] sm:$0xff]
        %v1284 = vld [vmem:[#allocation7 + $0xbd8] sm:$0xff]
        %v1285 = vld [vmem:[#allocation7 + $0xbe0] sm:$0xff]
        %v1286 = vld [vmem:[#allocation7 + $0xbe8] sm:$0xff]
        %v1287 = vld [vmem:[#allocation7 + $0xbf0] sm:$0xff]
        %v1288 = vld [vmem:[#allocation7 + $0xbf8] sm:$0xff]
        %v1289 = vld [vmem:[#allocation7 + $0xc00] sm:$0xff]
        %v1290 = vld [vmem:[#allocation7 + $0xc08] sm:$0xff]
        %v1291 = vld [vmem:[#allocation7 + $0xc10] sm:$0xff]
        %v1292 = vld [vmem:[#allocation7 + $0xc18] sm:$0xff]
        %v1293 = vld [vmem:[#allocation7 + $0xc20] sm:$0xff]
        %v1294 = vld [vmem:[#allocation7 + $0xc28] sm:$0xff]
        %v1295 = vld [vmem:[#allocation7 + $0xc30] sm:$0xff]
        %v1296 = vld [vmem:[#allocation7 + $0xc38] sm:$0xff]
        %v1297 = vld [vmem:[#allocation7 + $0xc40] sm:$0xff]
        %v1298 = vld [vmem:[#allocation7 + $0xc48] sm:$0xff]
        %v1299 = vld [vmem:[#allocation7 + $0xc50] sm:$0xff]
        %v1300 = vld [vmem:[#allocation7 + $0xc58] sm:$0xff]
        %v1301 = vld [vmem:[#allocation7 + $0xc60] sm:$0xff]
        %v1302 = vld [vmem:[#allocation7 + $0xc68] sm:$0xff]
        %v1303 = vld [vmem:[#allocation7 + $0xc70] sm:$0xff]
        %v1304 = vld [vmem:[#allocation7 + $0xc78] sm:$0xff]
        %v1305 = vld [vmem:[#allocation7 + $0xc80] sm:$0xff]
        %v1306 = vld [vmem:[#allocation7 + $0xc88] sm:$0xff]
        %v1307 = vld [vmem:[#allocation7 + $0xc90] sm:$0xff]
        %v1308 = vld [vmem:[#allocation7 + $0xc98] sm:$0xff]
        %v1309 = vld [vmem:[#allocation7 + $0xca0] sm:$0xff]
        %v1310 = vld [vmem:[#allocation7 + $0xca8] sm:$0xff]
        %v1311 = vld [vmem:[#allocation7 + $0xcb0] sm:$0xff]
        %v1312 = vld [vmem:[#allocation7 + $0xcb8] sm:$0xff]
        %v1313 = vld [vmem:[#allocation7 + $0xcc0] sm:$0xff]
        %v1314 = vld [vmem:[#allocation7 + $0xcc8] sm:$0xff]
        %v1315 = vld [vmem:[#allocation7 + $0xcd0] sm:$0xff]
        %v1316 = vld [vmem:[#allocation7 + $0xcd8] sm:$0xff]
        %v1317 = vld [vmem:[#allocation7 + $0xce0] sm:$0xff]
        %v1318 = vld [vmem:[#allocation7 + $0xce8] sm:$0xff]
        %v1319 = vld [vmem:[#allocation7 + $0xcf0] sm:$0xff]
        %v1320 = vld [vmem:[#allocation7 + $0xcf8] sm:$0xff]
        %v1321 = vld [vmem:[#allocation7 + $0xd00] sm:$0xff]
        %v1322 = vld [vmem:[#allocation7 + $0xd08] sm:$0xff]
        %v1323 = vld [vmem:[#allocation7 + $0xd10] sm:$0xff]
        %v1324 = vld [vmem:[#allocation7 + $0xd18] sm:$0xff]
        %v1325 = vld [vmem:[#allocation7 + $0xd20] sm:$0xff]
        %v1326 = vld [vmem:[#allocation7 + $0xd28] sm:$0xff]
        %v1327 = vld [vmem:[#allocation7 + $0xd30] sm:$0xff]
        %v1328 = vld [vmem:[#allocation7 + $0xd38] sm:$0xff]
        %v1329 = vld [vmem:[#allocation7 + $0xd40] sm:$0xff]
        %v1330 = vld [vmem:[#allocation7 + $0xd48] sm:$0xff]
        %v1331 = vld [vmem:[#allocation7 + $0xd50] sm:$0xff]
        %v1332 = vld [vmem:[#allocation7 + $0xd58] sm:$0xff]
        %v1333 = vld [vmem:[#allocation7 + $0xd60] sm:$0xff]
        %v1334 = vld [vmem:[#allocation7 + $0xd68] sm:$0xff]
        %v1335 = vld [vmem:[#allocation7 + $0xd70] sm:$0xff]
        %v1336 = vld [vmem:[#allocation7 + $0xd78] sm:$0xff]
        %v1337 = vld [vmem:[#allocation7 + $0xd80] sm:$0xff]
        %v1338 = vld [vmem:[#allocation7 + $0xd88] sm:$0xff]
        %v1339 = vld [vmem:[#allocation7 + $0xd90] sm:$0xff]
        %v1340 = vld [vmem:[#allocation7 + $0xd98] sm:$0xff]
        %v1341 = vld [vmem:[#allocation7 + $0xda0] sm:$0xff]
        %v1342 = vld [vmem:[#allocation7 + $0xda8] sm:$0xff]
        %v1343 = vld [vmem:[#allocation7 + $0xdb0] sm:$0xff]
        %v1344 = vld [vmem:[#allocation7 + $0xdb8] sm:$0xff]
        %v1345 = vld [vmem:[#allocation7 + $0xdc0] sm:$0xff]
        %v1346 = vld [vmem:[#allocation7 + $0xdc8] sm:$0xff]
        %v1347 = vld [vmem:[#allocation7 + $0xdd0] sm:$0xff]
        %v1348 = vld [vmem:[#allocation7 + $0xdd8] sm:$0xff]
        %v1349 = vld [vmem:[#allocation7 + $0xde0] sm:$0xff]
        %v1350 = vld [vmem:[#allocation7 + $0xde8] sm:$0xff]
        %v1351 = vld [vmem:[#allocation7 + $0xdf0] sm:$0xff]
        %v1352 = vld [vmem:[#allocation7 + $0xdf8] sm:$0xff]
        %v1353 = vld [vmem:[#allocation7 + $0xe00] sm:$0xff]
        %v1354 = vld [vmem:[#allocation7 + $0xe08] sm:$0xff]
        %v1355 = vld [vmem:[#allocation7 + $0xe10] sm:$0xff]
        %v1356 = vld [vmem:[#allocation7 + $0xe18] sm:$0xff]
        %v1357 = vld [vmem:[#allocation7 + $0xe20] sm:$0xff]
        %v1358 = vld [vmem:[#allocation7 + $0xe28] sm:$0xff]
        %v1359 = vld [vmem:[#allocation7 + $0xe30] sm:$0xff]
        %v1360 = vld [vmem:[#allocation7 + $0xe38] sm:$0xff]
        %v1361 = vld [vmem:[#allocation7 + $0xe40] sm:$0xff]
        %v1362 = vld [vmem:[#allocation7 + $0xe48] sm:$0xff]
        %v1363 = vld [vmem:[#allocation7 + $0xe50] sm:$0xff]
        %v1364 = vld [vmem:[#allocation7 + $0xe58] sm:$0xff]
        %v1365 = vld [vmem:[#allocation7 + $0xe60] sm:$0xff]
        %v1366 = vld [vmem:[#allocation7 + $0xe68] sm:$0xff]
        %v1367 = vld [vmem:[#allocation7 + $0xe70] sm:$0xff]
        %v1368 = vld [vmem:[#allocation7 + $0xe78] sm:$0xff]
        %v1369 = vld [vmem:[#allocation7 + $0xe80] sm:$0xff]
        %v1370 = vld [vmem:[#allocation7 + $0xe88] sm:$0xff]
        %v1371 = vld [vmem:[#allocation7 + $0xe90] sm:$0xff]
        %v1372 = vld [vmem:[#allocation7 + $0xe98] sm:$0xff]
        %v1373 = vld [vmem:[#allocation7 + $0xea0] sm:$0xff]
        %v1374 = vld [vmem:[#allocation7 + $0xea8] sm:$0xff]
        %v1375 = vld [vmem:[#allocation7 + $0xeb0] sm:$0xff]
        %v1376 = vld [vmem:[#allocation7 + $0xeb8] sm:$0xff]
        %v1377 = vld [vmem:[#allocation7 + $0xec0] sm:$0xff]
        %v1378 = vld [vmem:[#allocation7 + $0xec8] sm:$0xff]
        %v1379 = vld [vmem:[#allocation7 + $0xed0] sm:$0xff]
        %v1380 = vld [vmem:[#allocation7 + $0xed8] sm:$0xff]
        %v1381 = vld [vmem:[#allocation7 + $0xee0] sm:$0xff]
        %v1382 = vld [vmem:[#allocation7 + $0xee8] sm:$0xff]
        %v1383 = vld [vmem:[#allocation7 + $0xef0] sm:$0xff]
        %v1384 = vld [vmem:[#allocation7 + $0xef8] sm:$0xff]
        %v1385 = vld [vmem:[#allocation7 + $0xf00] sm:$0xff]
        %v1386 = vld [vmem:[#allocation7 + $0xf08] sm:$0xff]
        %v1387 = vld [vmem:[#allocation7 + $0xf10] sm:$0xff]
        %v1388 = vld [vmem:[#allocation7 + $0xf18] sm:$0xff]
        %v1389 = vld [vmem:[#allocation7 + $0xf20] sm:$0xff]
        %v1390 = vld [vmem:[#allocation7 + $0xf28] sm:$0xff]
        %v1391 = vld [vmem:[#allocation7 + $0xf30] sm:$0xff]
        %v1392 = vld [vmem:[#allocation7 + $0xf38] sm:$0xff]
        %v1393 = vld [vmem:[#allocation7 + $0xf40] sm:$0xff]
        %v1394 = vld [vmem:[#allocation7 + $0xf48] sm:$0xff]
        %v1395 = vld [vmem:[#allocation7 + $0xf50] sm:$0xff]
        %v1396 = vld [vmem:[#allocation7 + $0xf58] sm:$0xff]
        %v1397 = vld [vmem:[#allocation7 + $0xf60] sm:$0xff]
        %v1398 = vld [vmem:[#allocation7 + $0xf68] sm:$0xff]
        %v1399 = vld [vmem:[#allocation7 + $0xf70] sm:$0xff]
        %v1400 = vld [vmem:[#allocation7 + $0xf78] sm:$0xff]
        %v1401 = vld [vmem:[#allocation7 + $0xf80] sm:$0xff]
        %v1402 = vld [vmem:[#allocation7 + $0xf88] sm:$0xff]
        %v1403 = vld [vmem:[#allocation7 + $0xf90] sm:$0xff]
        %v1404 = vld [vmem:[#allocation7 + $0xf98] sm:$0xff]
        %v1405 = vld [vmem:[#allocation7 + $0xfa0] sm:$0xff]
        %v1406 = vld [vmem:[#allocation7 + $0xfa8] sm:$0xff]
        %v1407 = vld [vmem:[#allocation7 + $0xfb0] sm:$0xff]
        %v1408 = vld [vmem:[#allocation7 + $0xfb8] sm:$0xff]
        %v1409 = vld [vmem:[#allocation7 + $0xfc0] sm:$0xff]
        %v1410 = vld [vmem:[#allocation7 + $0xfc8] sm:$0xff]
        %v1411 = vld [vmem:[#allocation7 + $0xfd0] sm:$0xff]
        %v1412 = vld [vmem:[#allocation7 + $0xfd8] sm:$0xff]
        %v1413 = vld [vmem:[#allocation7 + $0xfe0] sm:$0xff]
        %v1414 = vld [vmem:[#allocation7 + $0xfe8] sm:$0xff]
        %v1415 = vld [vmem:[#allocation7 + $0xff0] sm:$0xff]
        %v1416 = vld [vmem:[#allocation7 + $0xff8] sm:$0xff]
        %v1417 = vld [vmem:[#allocation9] sm:$0xff]
        %v1418 = vld [vmem:[#allocation9 + $0x8] sm:$0xff]
        %v1419 = vld [vmem:[#allocation9 + $0x10] sm:$0xff]
        %v1420 = vld [vmem:[#allocation9 + $0x18] sm:$0xff]
        %v1421 = vld [vmem:[#allocation9 + $0x20] sm:$0xff]
        %v1422 = vld [vmem:[#allocation9 + $0x28] sm:$0xff]
        %v1423 = vld [vmem:[#allocation9 + $0x30] sm:$0xff]
        %v1424 = vld [vmem:[#allocation9 + $0x38] sm:$0xff]
        %v1425 = vld [vmem:[#allocation9 + $0x40] sm:$0xff]
        %v1426 = vld [vmem:[#allocation9 + $0x48] sm:$0xff]
        %v1427 = vld [vmem:[#allocation9 + $0x50] sm:$0xff]
        %v1428 = vld [vmem:[#allocation9 + $0x58] sm:$0xff]
        %v1429 = vld [vmem:[#allocation9 + $0x60] sm:$0xff]
        %v1430 = vld [vmem:[#allocation9 + $0x68] sm:$0xff]
        %v1431 = vld [vmem:[#allocation9 + $0x70] sm:$0xff]
        %v1432 = vld [vmem:[#allocation9 + $0x78] sm:$0xff]
        %1433 = vmatprep.subr.mxu0 %v906
        %1434 = vmatpush1.msra.mxu0 %v905
        %1435 = vmatprep.subr.mxu0 %v910
        %1436 = vmatpush1.msra.mxu0 %v909
        %1437 = vmatprep.subr.mxu0 %v914
        %1438 = vmatpush1.msra.mxu0 %v913
        %1439 = vmatprep.subr.mxu0 %v918
        %1440 = vmatpush1.msra.mxu0 %v917
        %1441 = vmatprep.subr.mxu0 %v922
        %1442 = vmatpush1.msra.mxu0 %v921
        %1443 = vmatprep.subr.mxu0 %v926
        %1444 = vmatpush1.msra.mxu0 %v925
        %1445 = vmatprep.subr.mxu0 %v930
        %1446 = vmatpush1.msra.mxu0 %v929
        %1447 = vmatprep.subr.mxu0 %v934
        %1448 = vmatpush1.msra.mxu0 %v933
        %1449 = vmatprep.subr.mxu0 %v938
        %1450 = vmatpush1.msra.mxu0 %v937
        %1451 = vmatprep.subr.mxu0 %v942
        %1452 = vmatpush1.msra.mxu0 %v941
        %1453 = vmatprep.subr.mxu0 %v946
        %1454 = vmatpush1.msra.mxu0 %v945
        %1455 = vmatprep.subr.mxu0 %v950
        %1456 = vmatpush1.msra.mxu0 %v949
        %1457 = vmatprep.subr.mxu0 %v954
        %1458 = vmatpush1.msra.mxu0 %v953
        %1459 = vmatprep.subr.mxu0 %v958
        %1460 = vmatpush1.msra.mxu0 %v957
        %1461 = vmatprep.subr.mxu0 %v962
        %1462 = vmatpush1.msra.mxu0 %v961
        %1463 = vmatprep.subr.mxu0 %v966
        %1464 = vmatpush1.msra.mxu0 %v965
        %1465 = vmatprep.subr.mxu0 %v970
        %1466 = vmatpush1.msra.mxu0 %v969
        %1467 = vmatprep.subr.mxu0 %v974
        %1468 = vmatpush1.msra.mxu0 %v973
        %1469 = vmatprep.subr.mxu0 %v978
        %1470 = vmatpush1.msra.mxu0 %v977
        %1471 = vmatprep.subr.mxu0 %v982
        %1472 = vmatpush1.msra.mxu0 %v981
        %1473 = vmatprep.subr.mxu0 %v986
        %1474 = vmatpush1.msra.mxu0 %v985
        %1475 = vmatprep.subr.mxu0 %v990
        %1476 = vmatpush1.msra.mxu0 %v989
        %1477 = vmatprep.subr.mxu0 %v994
        %1478 = vmatpush1.msra.mxu0 %v993
        %1479 = vmatprep.subr.mxu0 %v998
        %1480 = vmatpush1.msra.mxu0 %v997
        %1481 = vmatprep.subr.mxu0 %v1002
        %1482 = vmatpush1.msra.mxu0 %v1001
        %1483 = vmatprep.subr.mxu0 %v1006
        %1484 = vmatpush1.msra.mxu0 %v1005
        %1485 = vmatprep.subr.mxu0 %v1010
        %1486 = vmatpush1.msra.mxu0 %v1009
        %1487 = vmatprep.subr.mxu0 %v1014
        %1488 = vmatpush1.msra.mxu0 %v1013
        %1489 = vmatprep.subr.mxu0 %v1018
        %1490 = vmatpush1.msra.mxu0 %v1017
        %1491 = vmatprep.subr.mxu0 %v1022
        %1492 = vmatpush1.msra.mxu0 %v1021
        %1493 = vmatprep.subr.mxu0 %v1026
        %1494 = vmatpush1.msra.mxu0 %v1025
        %1495 = vmatprep.subr.mxu0 %v1030
        %1496 = vmatpush1.msra.mxu0 %v1029
        %1497 = vmatprep.mubr.f32.mxu0 %v874
        %1498 = vmatmul.mubr.f32.gmra.mrb[0].mxu0 %v873
        %v1499 = vpop.f32.mrb[0].mxu0
        %v1500 = vadd.f32 %v1417, %v1499
        %v1501 = vpop.f32.mrb[0].mxu0
        %v1502 = vadd.f32 %v1418, %v1501
        %1503 = vmatprep.mubr.f32.mxu0 %v882
        %1504 = vmatmul.mubr.f32.gmra.mrb[0].mxu0 %v881
        %v1505 = vpop.f32.mrb[0].mxu0
        %v1506 = vadd.f32 %v1421, %v1505
        %v1507 = vpop.f32.mrb[0].mxu0
        %v1508 = vadd.f32 %v1422, %v1507
        %1509 = vmatprep.mubr.f32.mxu0 %v890
        %1510 = vmatmul.mubr.f32.gmra.mrb[0].mxu0 %v889
        %v1511 = vpop.f32.mrb[0].mxu0
        %v1512 = vadd.f32 %v1425, %v1511
        %v1513 = vpop.f32.mrb[0].mxu0
        %v1514 = vadd.f32 %v1426, %v1513
        %1515 = vmatprep.mubr.f32.mxu0 %v898
        %1516 = vmatmul.mubr.f32.gmra.mrb[0].mxu0 %v897
        %v1517 = vpop.f32.mrb[0].mxu0
        %v1518 = vadd.f32 %v1429, %v1517
        %v1519 = vpop.f32.mrb[0].mxu0
        %v1520 = vadd.f32 %v1430, %v1519
        %1521 = vdwg.mxu0
        %1522 = vmatprep.subr.mxu0 %v1034
        %1523 = vmatpush1.msra.mxu0 %v1033
        %1524 = vmatprep.subr.mxu0 %v1038
        %1525 = vmatpush1.msra.mxu0 %v1037
        %1526 = vmatprep.subr.mxu0 %v1042
        %1527 = vmatpush1.msra.mxu0 %v1041
        %1528 = vmatprep.subr.mxu0 %v1046
        %1529 = vmatpush1.msra.mxu0 %v1045
        %1530 = vmatprep.subr.mxu0 %v1050
        %1531 = vmatpush1.msra.mxu0 %v1049
        %1532 = vmatprep.subr.mxu0 %v1054
        %1533 = vmatpush1.msra.mxu0 %v1053
        %1534 = vmatprep.subr.mxu0 %v1058
        %1535 = vmatpush1.msra.mxu0 %v1057
        %1536 = vmatprep.subr.mxu0 %v1062
        %1537 = vmatpush1.msra.mxu0 %v1061
        %1538 = vmatprep.subr.mxu0 %v1066
        %1539 = vmatpush1.msra.mxu0 %v1065
        %1540 = vmatprep.subr.mxu0 %v1070
        %1541 = vmatpush1.msra.mxu0 %v1069
        %1542 = vmatprep.subr.mxu0 %v1074
        %1543 = vmatpush1.msra.mxu0 %v1073
        %1544 = vmatprep.subr.mxu0 %v1078
        %1545 = vmatpush1.msra.mxu0 %v1077
        %1546 = vmatprep.subr.mxu0 %v1082
        %1547 = vmatpush1.msra.mxu0 %v1081
        %1548 = vmatprep.subr.mxu0 %v1086
        %1549 = vmatpush1.msra.mxu0 %v1085
        %1550 = vmatprep.subr.mxu0 %v1090
        %1551 = vmatpush1.msra.mxu0 %v1089
        %1552 = vmatprep.subr.mxu0 %v1094
        %1553 = vmatpush1.msra.mxu0 %v1093
        %1554 = vmatprep.subr.mxu0 %v1098
        %1555 = vmatpush1.msra.mxu0 %v1097
        %1556 = vmatprep.subr.mxu0 %v1102
        %1557 = vmatpush1.msra.mxu0 %v1101
        %1558 = vmatprep.subr.mxu0 %v1106
        %1559 = vmatpush1.msra.mxu0 %v1105
        %1560 = vmatprep.subr.mxu0 %v1110
        %1561 = vmatpush1.msra.mxu0 %v1109
        %1562 = vmatprep.subr.mxu0 %v1114
        %1563 = vmatpush1.msra.mxu0 %v1113
        %1564 = vmatprep.subr.mxu0 %v1118
        %1565 = vmatpush1.msra.mxu0 %v1117
        %1566 = vmatprep.subr.mxu0 %v1122
        %1567 = vmatpush1.msra.mxu0 %v1121
        %1568 = vmatprep.subr.mxu0 %v1126
        %1569 = vmatpush1.msra.mxu0 %v1125
        %1570 = vmatprep.subr.mxu0 %v1130
        %1571 = vmatpush1.msra.mxu0 %v1129
        %1572 = vmatprep.subr.mxu0 %v1134
        %1573 = vmatpush1.msra.mxu0 %v1133
        %1574 = vmatprep.subr.mxu0 %v1138
        %1575 = vmatpush1.msra.mxu0 %v1137
        %1576 = vmatprep.subr.mxu0 %v1142
        %1577 = vmatpush1.msra.mxu0 %v1141
        %1578 = vmatprep.subr.mxu0 %v1146
        %1579 = vmatpush1.msra.mxu0 %v1145
        %1580 = vmatprep.subr.mxu0 %v1150
        %1581 = vmatpush1.msra.mxu0 %v1149
        %1582 = vmatprep.subr.mxu0 %v1154
        %1583 = vmatpush1.msra.mxu0 %v1153
        %1584 = vmatprep.subr.mxu0 %v1158
        %1585 = vmatpush1.msra.mxu0 %v1157
        %1586 = vmatprep.mubr.f32.mxu0 %v876
        %1587 = vmatmul.mubr.f32.gmra.mrb[0].mxu0 %v875
        %v1588 = vpop.f32.mrb[0].mxu0
        %v1589 = vadd.f32 %v1500, %v1588
        %v1590 = vpop.f32.mrb[0].mxu0
        %v1591 = vadd.f32 %v1502, %v1590
        %1592 = vmatprep.mubr.f32.mxu0 %v884
        %1593 = vmatmul.mubr.f32.gmra.mrb[0].mxu0 %v883
        %v1594 = vpop.f32.mrb[0].mxu0
        %v1595 = vadd.f32 %v1506, %v1594
        %v1596 = vpop.f32.mrb[0].mxu0
        %v1597 = vadd.f32 %v1508, %v1596
        %1598 = vmatprep.mubr.f32.mxu0 %v892
        %1599 = vmatmul.mubr.f32.gmra.mrb[0].mxu0 %v891
        %v1600 = vpop.f32.mrb[0].mxu0
        %v1601 = vadd.f32 %v1512, %v1600
        %v1602 = vpop.f32.mrb[0].mxu0
        %v1603 = vadd.f32 %v1514, %v1602
        %1604 = vmatprep.mubr.f32.mxu0 %v900
        %1605 = vmatmul.mubr.f32.gmra.mrb[0].mxu0 %v899
        %v1606 = vpop.f32.mrb[0].mxu0
        %v1607 = vadd.f32 %v1518, %v1606
        %v1608 = vpop.f32.mrb[0].mxu0
        %v1609 = vadd.f32 %v1520, %v1608
        %1610 = vdwg.mxu0
        %1611 = vmatprep.subr.mxu0 %v1162
        %1612 = vmatpush1.msra.mxu0 %v1161
        %1613 = vmatprep.subr.mxu0 %v1166
        %1614 = vmatpush1.msra.mxu0 %v1165
        %1615 = vmatprep.subr.mxu0 %v1170
        %1616 = vmatpush1.msra.mxu0 %v1169
        %1617 = vmatprep.subr.mxu0 %v1174
        %1618 = vmatpush1.msra.mxu0 %v1173
        %1619 = vmatprep.subr.mxu0 %v1178
        %1620 = vmatpush1.msra.mxu0 %v1177
        %1621 = vmatprep.subr.mxu0 %v1182
        %1622 = vmatpush1.msra.mxu0 %v1181
        %1623 = vmatprep.subr.mxu0 %v1186
        %1624 = vmatpush1.msra.mxu0 %v1185
        %1625 = vmatprep.subr.mxu0 %v1190
        %1626 = vmatpush1.msra.mxu0 %v1189
        %1627 = vmatprep.subr.mxu0 %v1194
        %1628 = vmatpush1.msra.mxu0 %v1193
        %1629 = vmatprep.subr.mxu0 %v1198
        %1630 = vmatpush1.msra.mxu0 %v1197
        %1631 = vmatprep.subr.mxu0 %v1202
        %1632 = vmatpush1.msra.mxu0 %v1201
        %1633 = vmatprep.subr.mxu0 %v1206
        %1634 = vmatpush1.msra.mxu0 %v1205
        %1635 = vmatprep.subr.mxu0 %v1210
        %1636 = vmatpush1.msra.mxu0 %v1209
        %1637 = vmatprep.subr.mxu0 %v1214
        %1638 = vmatpush1.msra.mxu0 %v1213
        %1639 = vmatprep.subr.mxu0 %v1218
        %1640 = vmatpush1.msra.mxu0 %v1217
        %1641 = vmatprep.subr.mxu0 %v1222
        %1642 = vmatpush1.msra.mxu0 %v1221
        %1643 = vmatprep.subr.mxu0 %v1226
        %1644 = vmatpush1.msra.mxu0 %v1225
        %1645 = vmatprep.subr.mxu0 %v1230
        %1646 = vmatpush1.msra.mxu0 %v1229
        %1647 = vmatprep.subr.mxu0 %v1234
        %1648 = vmatpush1.msra.mxu0 %v1233
        %1649 = vmatprep.subr.mxu0 %v1238
        %1650 = vmatpush1.msra.mxu0 %v1237
        %1651 = vmatprep.subr.mxu0 %v1242
        %1652 = vmatpush1.msra.mxu0 %v1241
        %1653 = vmatprep.subr.mxu0 %v1246
        %1654 = vmatpush1.msra.mxu0 %v1245
        %1655 = vmatprep.subr.mxu0 %v1250
        %1656 = vmatpush1.msra.mxu0 %v1249
        %1657 = vmatprep.subr.mxu0 %v1254
        %1658 = vmatpush1.msra.mxu0 %v1253
        %1659 = vmatprep.subr.mxu0 %v1258
        %1660 = vmatpush1.msra.mxu0 %v1257
        %1661 = vmatprep.subr.mxu0 %v1262
        %1662 = vmatpush1.msra.mxu0 %v1261
        %1663 = vmatprep.subr.mxu0 %v1266
        %1664 = vmatpush1.msra.mxu0 %v1265
        %1665 = vmatprep.subr.mxu0 %v1270
        %1666 = vmatpush1.msra.mxu0 %v1269
        %1667 = vmatprep.subr.mxu0 %v1274
        %1668 = vmatpush1.msra.mxu0 %v1273
        %1669 = vmatprep.subr.mxu0 %v1278
        %1670 = vmatpush1.msra.mxu0 %v1277
        %1671 = vmatprep.subr.mxu0 %v1282
        %1672 = vmatpush1.msra.mxu0 %v1281
        %1673 = vmatprep.subr.mxu0 %v1286
        %1674 = vmatpush1.msra.mxu0 %v1285
        %1675 = vmatprep.mubr.f32.mxu0 %v878
        %1676 = vmatmul.mubr.f32.gmra.mrb[0].mxu0 %v877
        %v1677 = vpop.f32.mrb[0].mxu0
        %v1678 = vadd.f32 %v1589, %v1677
        %v1679 = vpop.f32.mrb[0].mxu0
        %v1680 = vadd.f32 %v1591, %v1679
        %1681 = vmatprep.mubr.f32.mxu0 %v886
        %1682 = vmatmul.mubr.f32.gmra.mrb[0].mxu0 %v885
        %v1683 = vpop.f32.mrb[0].mxu0
        %v1684 = vadd.f32 %v1595, %v1683
        %v1685 = vpop.f32.mrb[0].mxu0
        %v1686 = vadd.f32 %v1597, %v1685
        %1687 = vmatprep.mubr.f32.mxu0 %v894
        %1688 = vmatmul.mubr.f32.gmra.mrb[0].mxu0 %v893
        %v1689 = vpop.f32.mrb[0].mxu0
        %v1690 = vadd.f32 %v1601, %v1689
        %v1691 = vpop.f32.mrb[0].mxu0
        %v1692 = vadd.f32 %v1603, %v1691
        %1693 = vmatprep.mubr.f32.mxu0 %v902
        %1694 = vmatmul.mubr.f32.gmra.mrb[0].mxu0 %v901
        %v1695 = vpop.f32.mrb[0].mxu0
        %v1696 = vadd.f32 %v1607, %v1695
        %v1697 = vpop.f32.mrb[0].mxu0
        %v1698 = vadd.f32 %v1609, %v1697
        %1699 = vdwg.mxu0
        %1700 = vmatprep.subr.mxu0 %v1290
        %1701 = vmatpush1.msra.mxu0 %v1289
        %1702 = vmatprep.subr.mxu0 %v1294
        %1703 = vmatpush1.msra.mxu0 %v1293
        %1704 = vmatprep.subr.mxu0 %v1298
        %1705 = vmatpush1.msra.mxu0 %v1297
        %1706 = vmatprep.subr.mxu0 %v1302
        %1707 = vmatpush1.msra.mxu0 %v1301
        %1708 = vmatprep.subr.mxu0 %v1306
        %1709 = vmatpush1.msra.mxu0 %v1305
        %1710 = vmatprep.subr.mxu0 %v1310
        %1711 = vmatpush1.msra.mxu0 %v1309
        %1712 = vmatprep.subr.mxu0 %v1314
        %1713 = vmatpush1.msra.mxu0 %v1313
        %1714 = vmatprep.subr.mxu0 %v1318
        %1715 = vmatpush1.msra.mxu0 %v1317
        %1716 = vmatprep.subr.mxu0 %v1322
        %1717 = vmatpush1.msra.mxu0 %v1321
        %1718 = vmatprep.subr.mxu0 %v1326
        %1719 = vmatpush1.msra.mxu0 %v1325
        %1720 = vmatprep.subr.mxu0 %v1330
        %1721 = vmatpush1.msra.mxu0 %v1329
        %1722 = vmatprep.subr.mxu0 %v1334
        %1723 = vmatpush1.msra.mxu0 %v1333
        %1724 = vmatprep.subr.mxu0 %v1338
        %1725 = vmatpush1.msra.mxu0 %v1337
        %1726 = vmatprep.subr.mxu0 %v1342
        %1727 = vmatpush1.msra.mxu0 %v1341
        %1728 = vmatprep.subr.mxu0 %v1346
        %1729 = vmatpush1.msra.mxu0 %v1345
        %1730 = vmatprep.subr.mxu0 %v1350
        %1731 = vmatpush1.msra.mxu0 %v1349
        %1732 = vmatprep.subr.mxu0 %v1354
        %1733 = vmatpush1.msra.mxu0 %v1353
        %1734 = vmatprep.subr.mxu0 %v1358
        %1735 = vmatpush1.msra.mxu0 %v1357
        %1736 = vmatprep.subr.mxu0 %v1362
        %1737 = vmatpush1.msra.mxu0 %v1361
        %1738 = vmatprep.subr.mxu0 %v1366
        %1739 = vmatpush1.msra.mxu0 %v1365
        %1740 = vmatprep.subr.mxu0 %v1370
        %1741 = vmatpush1.msra.mxu0 %v1369
        %1742 = vmatprep.subr.mxu0 %v1374
        %1743 = vmatpush1.msra.mxu0 %v1373
        %1744 = vmatprep.subr.mxu0 %v1378
        %1745 = vmatpush1.msra.mxu0 %v1377
        %1746 = vmatprep.subr.mxu0 %v1382
        %1747 = vmatpush1.msra.mxu0 %v1381
        %1748 = vmatprep.subr.mxu0 %v1386
        %1749 = vmatpush1.msra.mxu0 %v1385
        %1750 = vmatprep.subr.mxu0 %v1390
        %1751 = vmatpush1.msra.mxu0 %v1389
        %1752 = vmatprep.subr.mxu0 %v1394
        %1753 = vmatpush1.msra.mxu0 %v1393
        %1754 = vmatprep.subr.mxu0 %v1398
        %1755 = vmatpush1.msra.mxu0 %v1397
        %1756 = vmatprep.subr.mxu0 %v1402
        %1757 = vmatpush1.msra.mxu0 %v1401
        %1758 = vmatprep.subr.mxu0 %v1406
        %1759 = vmatpush1.msra.mxu0 %v1405
        %1760 = vmatprep.subr.mxu0 %v1410
        %1761 = vmatpush1.msra.mxu0 %v1409
        %1762 = vmatprep.subr.mxu0 %v1414
        %1763 = vmatpush1.msra.mxu0 %v1413
        %1764 = vmatprep.mubr.f32.mxu0 %v880
        %1765 = vmatmul.mubr.f32.gmra.mrb[0].mxu0 %v879
        %v1766 = vpop.f32.mrb[0].mxu0
        %v1767 = vadd.f32 %v1678, %v1766
        %v1768 = vpop.f32.mrb[0].mxu0
        %v1769 = vadd.f32 %v1680, %v1768
        %1770 = vmatprep.mubr.f32.mxu0 %v888
        %1771 = vmatmul.mubr.f32.gmra.mrb[0].mxu0 %v887
        %v1772 = vpop.f32.mrb[0].mxu0
        %v1773 = vadd.f32 %v1684, %v1772
        %v1774 = vpop.f32.mrb[0].mxu0
        %v1775 = vadd.f32 %v1686, %v1774
        %1776 = vmatprep.mubr.f32.mxu0 %v896
        %1777 = vmatmul.mubr.f32.gmra.mrb[0].mxu0 %v895
        %v1778 = vpop.f32.mrb[0].mxu0
        %v1779 = vadd.f32 %v1690, %v1778
        %v1780 = vpop.f32.mrb[0].mxu0
        %v1781 = vadd.f32 %v1692, %v1780
        %1782 = vmatprep.mubr.f32.mxu0 %v904
        %1783 = vmatmul.mubr.f32.gmra.mrb[0].mxu0 %v903
        %v1784 = vpop.f32.mrb[0].mxu0
        %v1785 = vadd.f32 %v1696, %v1784
        %v1786 = vpop.f32.mrb[0].mxu0
        %v1787 = vadd.f32 %v1698, %v1786
        %1788 = vdwg.mxu0
        %1789 = vmatprep.subr.mxu0 %v908
        %1790 = vmatpush1.msra.mxu0 %v907
        %1791 = vmatprep.subr.mxu0 %v912
        %1792 = vmatpush1.msra.mxu0 %v911
        %1793 = vmatprep.subr.mxu0 %v916
        %1794 = vmatpush1.msra.mxu0 %v915
        %1795 = vmatprep.subr.mxu0 %v920
        %1796 = vmatpush1.msra.mxu0 %v919
        %1797 = vmatprep.subr.mxu0 %v924
        %1798 = vmatpush1.msra.mxu0 %v923
        %1799 = vmatprep.subr.mxu0 %v928
        %1800 = vmatpush1.msra.mxu0 %v927
        %1801 = vmatprep.subr.mxu0 %v932
        %1802 = vmatpush1.msra.mxu0 %v931
        %1803 = vmatprep.subr.mxu0 %v936
        %1804 = vmatpush1.msra.mxu0 %v935
        %1805 = vmatprep.subr.mxu0 %v940
        %1806 = vmatpush1.msra.mxu0 %v939
        %1807 = vmatprep.subr.mxu0 %v944
        %1808 = vmatpush1.msra.mxu0 %v943
        %1809 = vmatprep.subr.mxu0 %v948
        %1810 = vmatpush1.msra.mxu0 %v947
        %1811 = vmatprep.subr.mxu0 %v952
        %1812 = vmatpush1.msra.mxu0 %v951
        %1813 = vmatprep.subr.mxu0 %v956
        %1814 = vmatpush1.msra.mxu0 %v955
        %1815 = vmatprep.subr.mxu0 %v960
        %1816 = vmatpush1.msra.mxu0 %v959
        %1817 = vmatprep.subr.mxu0 %v964
        %1818 = vmatpush1.msra.mxu0 %v963
        %1819 = vmatprep.subr.mxu0 %v968
        %1820 = vmatpush1.msra.mxu0 %v967
        %1821 = vmatprep.subr.mxu0 %v972
        %1822 = vmatpush1.msra.mxu0 %v971
        %1823 = vmatprep.subr.mxu0 %v976
        %1824 = vmatpush1.msra.mxu0 %v975
        %1825 = vmatprep.subr.mxu0 %v980
        %1826 = vmatpush1.msra.mxu0 %v979
        %1827 = vmatprep.subr.mxu0 %v984
        %1828 = vmatpush1.msra.mxu0 %v983
        %1829 = vmatprep.subr.mxu0 %v988
        %1830 = vmatpush1.msra.mxu0 %v987
        %1831 = vmatprep.subr.mxu0 %v992
        %1832 = vmatpush1.msra.mxu0 %v991
        %1833 = vmatprep.subr.mxu0 %v996
        %1834 = vmatpush1.msra.mxu0 %v995
        %1835 = vmatprep.subr.mxu0 %v1000
        %1836 = vmatpush1.msra.mxu0 %v999
        %1837 = vmatprep.subr.mxu0 %v1004
        %1838 = vmatpush1.msra.mxu0 %v1003
        %1839 = vmatprep.subr.mxu0 %v1008
        %1840 = vmatpush1.msra.mxu0 %v1007
        %1841 = vmatprep.subr.mxu0 %v1012
        %1842 = vmatpush1.msra.mxu0 %v1011
        %1843 = vmatprep.subr.mxu0 %v1016
        %1844 = vmatpush1.msra.mxu0 %v1015
        %1845 = vmatprep.subr.mxu0 %v1020
        %1846 = vmatpush1.msra.mxu0 %v1019
        %1847 = vmatprep.subr.mxu0 %v1024
        %1848 = vmatpush1.msra.mxu0 %v1023
        %1849 = vmatprep.subr.mxu0 %v1028
        %1850 = vmatpush1.msra.mxu0 %v1027
        %1851 = vmatprep.subr.mxu0 %v1032
        %1852 = vmatpush1.msra.mxu0 %v1031
        %1853 = vmatprep.mubr.f32.mxu0 %v874
        %1854 = vmatmul.mubr.f32.gmra.mrb[0].mxu0 %v873
        %v1855 = vpop.f32.mrb[0].mxu0
        %v1856 = vadd.f32 %v1419, %v1855
        %v1857 = vpop.f32.mrb[0].mxu0
        %v1858 = vadd.f32 %v1420, %v1857
        %1859 = vmatprep.mubr.f32.mxu0 %v882
        %1860 = vmatmul.mubr.f32.gmra.mrb[0].mxu0 %v881
        %v1861 = vpop.f32.mrb[0].mxu0
        %v1862 = vadd.f32 %v1423, %v1861
        %v1863 = vpop.f32.mrb[0].mxu0
        %v1864 = vadd.f32 %v1424, %v1863
        %1865 = vmatprep.mubr.f32.mxu0 %v890
        %1866 = vmatmul.mubr.f32.gmra.mrb[0].mxu0 %v889
        %v1867 = vpop.f32.mrb[0].mxu0
        %v1868 = vadd.f32 %v1427, %v1867
        %v1869 = vpop.f32.mrb[0].mxu0
        %v1870 = vadd.f32 %v1428, %v1869
        %1871 = vmatprep.mubr.f32.mxu0 %v898
        %1872 = vmatmul.mubr.f32.gmra.mrb[0].mxu0 %v897
        %v1873 = vpop.f32.mrb[0].mxu0
        %v1874 = vadd.f32 %v1431, %v1873
        %v1875 = vpop.f32.mrb[0].mxu0
        %v1876 = vadd.f32 %v1432, %v1875
        %1877 = vdwg.mxu0
        %1878 = vmatprep.subr.mxu0 %v1036
        %1879 = vmatpush1.msra.mxu0 %v1035
        %1880 = vmatprep.subr.mxu0 %v1040
        %1881 = vmatpush1.msra.mxu0 %v1039
        %1882 = vmatprep.subr.mxu0 %v1044
        %1883 = vmatpush1.msra.mxu0 %v1043
        %1884 = vmatprep.subr.mxu0 %v1048
        %1885 = vmatpush1.msra.mxu0 %v1047
        %1886 = vmatprep.subr.mxu0 %v1052
        %1887 = vmatpush1.msra.mxu0 %v1051
        %1888 = vmatprep.subr.mxu0 %v1056
        %1889 = vmatpush1.msra.mxu0 %v1055
        %1890 = vmatprep.subr.mxu0 %v1060
        %1891 = vmatpush1.msra.mxu0 %v1059
        %1892 = vmatprep.subr.mxu0 %v1064
        %1893 = vmatpush1.msra.mxu0 %v1063
        %1894 = vmatprep.subr.mxu0 %v1068
        %1895 = vmatpush1.msra.mxu0 %v1067
        %1896 = vmatprep.subr.mxu0 %v1072
        %1897 = vmatpush1.msra.mxu0 %v1071
        %1898 = vmatprep.subr.mxu0 %v1076
        %1899 = vmatpush1.msra.mxu0 %v1075
        %1900 = vmatprep.subr.mxu0 %v1080
        %1901 = vmatpush1.msra.mxu0 %v1079
        %1902 = vmatprep.subr.mxu0 %v1084
        %1903 = vmatpush1.msra.mxu0 %v1083
        %1904 = vmatprep.subr.mxu0 %v1088
        %1905 = vmatpush1.msra.mxu0 %v1087
        %1906 = vmatprep.subr.mxu0 %v1092
        %1907 = vmatpush1.msra.mxu0 %v1091
        %1908 = vmatprep.subr.mxu0 %v1096
        %1909 = vmatpush1.msra.mxu0 %v1095
        %1910 = vmatprep.subr.mxu0 %v1100
        %1911 = vmatpush1.msra.mxu0 %v1099
        %1912 = vmatprep.subr.mxu0 %v1104
        %1913 = vmatpush1.msra.mxu0 %v1103
        %1914 = vmatprep.subr.mxu0 %v1108
        %1915 = vmatpush1.msra.mxu0 %v1107
        %1916 = vmatprep.subr.mxu0 %v1112
        %1917 = vmatpush1.msra.mxu0 %v1111
        %1918 = vmatprep.subr.mxu0 %v1116
        %1919 = vmatpush1.msra.mxu0 %v1115
        %1920 = vmatprep.subr.mxu0 %v1120
        %1921 = vmatpush1.msra.mxu0 %v1119
        %1922 = vmatprep.subr.mxu0 %v1124
        %1923 = vmatpush1.msra.mxu0 %v1123
        %1924 = vmatprep.subr.mxu0 %v1128
        %1925 = vmatpush1.msra.mxu0 %v1127
        %1926 = vmatprep.subr.mxu0 %v1132
        %1927 = vmatpush1.msra.mxu0 %v1131
        %1928 = vmatprep.subr.mxu0 %v1136
        %1929 = vmatpush1.msra.mxu0 %v1135
        %1930 = vmatprep.subr.mxu0 %v1140
        %1931 = vmatpush1.msra.mxu0 %v1139
        %1932 = vmatprep.subr.mxu0 %v1144
        %1933 = vmatpush1.msra.mxu0 %v1143
        %1934 = vmatprep.subr.mxu0 %v1148
        %1935 = vmatpush1.msra.mxu0 %v1147
        %1936 = vmatprep.subr.mxu0 %v1152
        %1937 = vmatpush1.msra.mxu0 %v1151
        %1938 = vmatprep.subr.mxu0 %v1156
        %1939 = vmatpush1.msra.mxu0 %v1155
        %1940 = vmatprep.subr.mxu0 %v1160
        %1941 = vmatpush1.msra.mxu0 %v1159
        %1942 = vmatprep.mubr.f32.mxu0 %v876
        %1943 = vmatmul.mubr.f32.gmra.mrb[0].mxu0 %v875
        %v1944 = vpop.f32.mrb[0].mxu0
        %v1945 = vadd.f32 %v1856, %v1944
        %v1946 = vpop.f32.mrb[0].mxu0
        %v1947 = vadd.f32 %v1858, %v1946
        %1948 = vmatprep.mubr.f32.mxu0 %v884
        %1949 = vmatmul.mubr.f32.gmra.mrb[0].mxu0 %v883
        %v1950 = vpop.f32.mrb[0].mxu0
        %v1951 = vadd.f32 %v1862, %v1950
        %v1952 = vpop.f32.mrb[0].mxu0
        %v1953 = vadd.f32 %v1864, %v1952
        %1954 = vmatprep.mubr.f32.mxu0 %v892
        %1955 = vmatmul.mubr.f32.gmra.mrb[0].mxu0 %v891
        %v1956 = vpop.f32.mrb[0].mxu0
        %v1957 = vadd.f32 %v1868, %v1956
        %v1958 = vpop.f32.mrb[0].mxu0
        %v1959 = vadd.f32 %v1870, %v1958
        %1960 = vmatprep.mubr.f32.mxu0 %v900
        %1961 = vmatmul.mubr.f32.gmra.mrb[0].mxu0 %v899
        %v1962 = vpop.f32.mrb[0].mxu0
        %v1963 = vadd.f32 %v1874, %v1962
        %v1964 = vpop.f32.mrb[0].mxu0
        %v1965 = vadd.f32 %v1876, %v1964
        %1966 = vdwg.mxu0
        %1967 = vmatprep.subr.mxu0 %v1164
        %1968 = vmatpush1.msra.mxu0 %v1163
        %1969 = vmatprep.subr.mxu0 %v1168
        %1970 = vmatpush1.msra.mxu0 %v1167
        %1971 = vmatprep.subr.mxu0 %v1172
        %1972 = vmatpush1.msra.mxu0 %v1171
        %1973 = vmatprep.subr.mxu0 %v1176
        %1974 = vmatpush1.msra.mxu0 %v1175
        %1975 = vmatprep.subr.mxu0 %v1180
        %1976 = vmatpush1.msra.mxu0 %v1179
        %1977 = vmatprep.subr.mxu0 %v1184
        %1978 = vmatpush1.msra.mxu0 %v1183
        %1979 = vmatprep.subr.mxu0 %v1188
        %1980 = vmatpush1.msra.mxu0 %v1187
        %1981 = vmatprep.subr.mxu0 %v1192
        %1982 = vmatpush1.msra.mxu0 %v1191
        %1983 = vmatprep.subr.mxu0 %v1196
        %1984 = vmatpush1.msra.mxu0 %v1195
        %1985 = vmatprep.subr.mxu0 %v1200
        %1986 = vmatpush1.msra.mxu0 %v1199
        %1987 = vmatprep.subr.mxu0 %v1204
        %1988 = vmatpush1.msra.mxu0 %v1203
        %1989 = vmatprep.subr.mxu0 %v1208
        %1990 = vmatpush1.msra.mxu0 %v1207
        %1991 = vmatprep.subr.mxu0 %v1212
        %1992 = vmatpush1.msra.mxu0 %v1211
        %1993 = vmatprep.subr.mxu0 %v1216
        %1994 = vmatpush1.msra.mxu0 %v1215
        %1995 = vmatprep.subr.mxu0 %v1220
        %1996 = vmatpush1.msra.mxu0 %v1219
        %1997 = vmatprep.subr.mxu0 %v1224
        %1998 = vmatpush1.msra.mxu0 %v1223
        %1999 = vmatprep.subr.mxu0 %v1228
        %2000 = vmatpush1.msra.mxu0 %v1227
        %2001 = vmatprep.subr.mxu0 %v1232
        %2002 = vmatpush1.msra.mxu0 %v1231
        %2003 = vmatprep.subr.mxu0 %v1236
        %2004 = vmatpush1.msra.mxu0 %v1235
        %2005 = vmatprep.subr.mxu0 %v1240
        %2006 = vmatpush1.msra.mxu0 %v1239
        %2007 = vmatprep.subr.mxu0 %v1244
        %2008 = vmatpush1.msra.mxu0 %v1243
        %2009 = vmatprep.subr.mxu0 %v1248
        %2010 = vmatpush1.msra.mxu0 %v1247
        %2011 = vmatprep.subr.mxu0 %v1252
        %2012 = vmatpush1.msra.mxu0 %v1251
        %2013 = vmatprep.subr.mxu0 %v1256
        %2014 = vmatpush1.msra.mxu0 %v1255
        %2015 = vmatprep.subr.mxu0 %v1260
        %2016 = vmatpush1.msra.mxu0 %v1259
        %2017 = vmatprep.subr.mxu0 %v1264
        %2018 = vmatpush1.msra.mxu0 %v1263
        %2019 = vmatprep.subr.mxu0 %v1268
        %2020 = vmatpush1.msra.mxu0 %v1267
        %2021 = vmatprep.subr.mxu0 %v1272
        %2022 = vmatpush1.msra.mxu0 %v1271
        %2023 = vmatprep.subr.mxu0 %v1276
        %2024 = vmatpush1.msra.mxu0 %v1275
        %2025 = vmatprep.subr.mxu0 %v1280
        %2026 = vmatpush1.msra.mxu0 %v1279
        %2027 = vmatprep.subr.mxu0 %v1284
        %2028 = vmatpush1.msra.mxu0 %v1283
        %2029 = vmatprep.subr.mxu0 %v1288
        %2030 = vmatpush1.msra.mxu0 %v1287
        %2031 = vmatprep.mubr.f32.mxu0 %v878
        %2032 = vmatmul.mubr.f32.gmra.mrb[0].mxu0 %v877
        %v2033 = vpop.f32.mrb[0].mxu0
        %v2034 = vadd.f32 %v1945, %v2033
        %v2035 = vpop.f32.mrb[0].mxu0
        %v2036 = vadd.f32 %v1947, %v2035
        %2037 = vmatprep.mubr.f32.mxu0 %v886
        %2038 = vmatmul.mubr.f32.gmra.mrb[0].mxu0 %v885
        %v2039 = vpop.f32.mrb[0].mxu0
        %v2040 = vadd.f32 %v1951, %v2039
        %v2041 = vpop.f32.mrb[0].mxu0
        %v2042 = vadd.f32 %v1953, %v2041
        %2043 = vmatprep.mubr.f32.mxu0 %v894
        %2044 = vmatmul.mubr.f32.gmra.mrb[0].mxu0 %v893
        %v2045 = vpop.f32.mrb[0].mxu0
        %v2046 = vadd.f32 %v1957, %v2045
        %v2047 = vpop.f32.mrb[0].mxu0
        %v2048 = vadd.f32 %v1959, %v2047
        %2049 = vmatprep.mubr.f32.mxu0 %v902
        %2050 = vmatmul.mubr.f32.gmra.mrb[0].mxu0 %v901
        %v2051 = vpop.f32.mrb[0].mxu0
        %v2052 = vadd.f32 %v1963, %v2051
        %v2053 = vpop.f32.mrb[0].mxu0
        %v2054 = vadd.f32 %v1965, %v2053
        %2055 = vdwg.mxu0
        %2056 = vmatprep.subr.mxu0 %v1292
        %2057 = vmatpush1.msra.mxu0 %v1291
        %2058 = vmatprep.subr.mxu0 %v1296
        %2059 = vmatpush1.msra.mxu0 %v1295
        %2060 = vmatprep.subr.mxu0 %v1300
        %2061 = vmatpush1.msra.mxu0 %v1299
        %2062 = vmatprep.subr.mxu0 %v1304
        %2063 = vmatpush1.msra.mxu0 %v1303
        %2064 = vmatprep.subr.mxu0 %v1308
        %2065 = vmatpush1.msra.mxu0 %v1307
        %2066 = vmatprep.subr.mxu0 %v1312
        %2067 = vmatpush1.msra.mxu0 %v1311
        %2068 = vmatprep.subr.mxu0 %v1316
        %2069 = vmatpush1.msra.mxu0 %v1315
        %2070 = vmatprep.subr.mxu0 %v1320
        %2071 = vmatpush1.msra.mxu0 %v1319
        %2072 = vmatprep.subr.mxu0 %v1324
        %2073 = vmatpush1.msra.mxu0 %v1323
        %2074 = vmatprep.subr.mxu0 %v1328
        %2075 = vmatpush1.msra.mxu0 %v1327
        %2076 = vmatprep.subr.mxu0 %v1332
        %2077 = vmatpush1.msra.mxu0 %v1331
        %2078 = vmatprep.subr.mxu0 %v1336
        %2079 = vmatpush1.msra.mxu0 %v1335
        %2080 = vmatprep.subr.mxu0 %v1340
        %2081 = vmatpush1.msra.mxu0 %v1339
        %2082 = vmatprep.subr.mxu0 %v1344
        %2083 = vmatpush1.msra.mxu0 %v1343
        %2084 = vmatprep.subr.mxu0 %v1348
        %2085 = vmatpush1.msra.mxu0 %v1347
        %2086 = vmatprep.subr.mxu0 %v1352
        %2087 = vmatpush1.msra.mxu0 %v1351
        %2088 = vmatprep.subr.mxu0 %v1356
        %2089 = vmatpush1.msra.mxu0 %v1355
        %2090 = vmatprep.subr.mxu0 %v1360
        %2091 = vmatpush1.msra.mxu0 %v1359
        %2092 = vmatprep.subr.mxu0 %v1364
        %2093 = vmatpush1.msra.mxu0 %v1363
        %2094 = vmatprep.subr.mxu0 %v1368
        %2095 = vmatpush1.msra.mxu0 %v1367
        %2096 = vmatprep.subr.mxu0 %v1372
        %2097 = vmatpush1.msra.mxu0 %v1371
        %2098 = vmatprep.subr.mxu0 %v1376
        %2099 = vmatpush1.msra.mxu0 %v1375
        %2100 = vmatprep.subr.mxu0 %v1380
        %2101 = vmatpush1.msra.mxu0 %v1379
        %2102 = vmatprep.subr.mxu0 %v1384
        %2103 = vmatpush1.msra.mxu0 %v1383
        %2104 = vmatprep.subr.mxu0 %v1388
        %2105 = vmatpush1.msra.mxu0 %v1387
        %2106 = vmatprep.subr.mxu0 %v1392
        %2107 = vmatpush1.msra.mxu0 %v1391
        %2108 = vmatprep.subr.mxu0 %v1396
        %2109 = vmatpush1.msra.mxu0 %v1395
        %2110 = vmatprep.subr.mxu0 %v1400
        %2111 = vmatpush1.msra.mxu0 %v1399
        %2112 = vmatprep.subr.mxu0 %v1404
        %2113 = vmatpush1.msra.mxu0 %v1403
        %2114 = vmatprep.subr.mxu0 %v1408
        %2115 = vmatpush1.msra.mxu0 %v1407
        %2116 = vmatprep.subr.mxu0 %v1412
        %2117 = vmatpush1.msra.mxu0 %v1411
        %2118 = vmatprep.subr.mxu0 %v1416
        %2119 = vmatpush1.msra.mxu0 %v1415
        %2120 = vmatprep.mubr.f32.mxu0 %v880
        %2121 = vmatmul.mubr.f32.gmra.mrb[0].mxu0 %v879
        %v2122 = vpop.f32.mrb[0].mxu0
        %v2123 = vadd.f32 %v2034, %v2122
        %v2124 = vpop.f32.mrb[0].mxu0
        %v2125 = vadd.f32 %v2036, %v2124
        %2126 = vmatprep.mubr.f32.mxu0 %v888
        %2127 = vmatmul.mubr.f32.gmra.mrb[0].mxu0 %v887
        %v2128 = vpop.f32.mrb[0].mxu0
        %v2129 = vadd.f32 %v2040, %v2128
        %v2130 = vpop.f32.mrb[0].mxu0
        %v2131 = vadd.f32 %v2042, %v2130
        %2132 = vmatprep.mubr.f32.mxu0 %v896
        %2133 = vmatmul.mubr.f32.gmra.mrb[0].mxu0 %v895
        %v2134 = vpop.f32.mrb[0].mxu0
        %v2135 = vadd.f32 %v2046, %v2134
        %v2136 = vpop.f32.mrb[0].mxu0
        %v2137 = vadd.f32 %v2048, %v2136
        %2138 = vmatprep.mubr.f32.mxu0 %v904
        %2139 = vmatmul.mubr.f32.gmra.mrb[0].mxu0 %v903
        %v2140 = vpop.f32.mrb[0].mxu0
        %v2141 = vadd.f32 %v2052, %v2140
        %v2142 = vpop.f32.mrb[0].mxu0
        %v2143 = vadd.f32 %v2054, %v2142
        %2144 = vdwg.mxu0
        %s2145 = sld [smem:[#allocation12]]
        %v2146 = vstv %s2145
        %v2147 = vmul.f32 %v1767, %v2146
        %v2148 = vmul.f32 %v1773, %v2146
        %v2149 = vmul.f32 %v1779, %v2146
        %v2150 = vmul.f32 %v1785, %v2146
        %s2151 = sld [smem:[#allocation12 + $0x1]]
        %v2152 = vstv %s2151
        %v2153 = vmul.f32 %v1767, %v2152
        %v2154 = vmul.f32 %v1773, %v2152
        %v2155 = vmul.f32 %v1779, %v2152
        %v2156 = vmul.f32 %v1785, %v2152
        %2161 = vrot.lane.b32.xlu0 %v2153, 96
        %v2162 = vpop.permute.xlu0 %2161
        %2163 = vrot.lane.b32.xlu0 %v2154, 96
        %v2164 = vpop.permute.xlu0 %2163
        %2165 = vrot.lane.b32.xlu0 %v2155, 96
        %v2166 = vpop.permute.xlu0 %2165
        %2167 = vrot.lane.b32.xlu0 %v2156, 96
        %v2168 = vpop.permute.xlu0 %2167
        %v2173 = vadd.f32 %v2147, %v2162
        %v2174 = vadd.f32 %v2148, %v2164
        %v2175 = vadd.f32 %v2149, %v2166
        %v2176 = vadd.f32 %v2150, %v2168
        %s2177 = sld [smem:[#allocation12 + $0x2]]
        %v2178 = vstv %s2177
        %v2179 = vmul.f32 %v1767, %v2178
        %v2180 = vmul.f32 %v1773, %v2178
        %v2181 = vmul.f32 %v1779, %v2178
        %v2182 = vmul.f32 %v1785, %v2178
        %2187 = vrot.lane.b32.xlu0 %v2179, 64
        %v2188 = vpop.permute.xlu0 %2187
        %2189 = vrot.lane.b32.xlu0 %v2180, 64
        %v2190 = vpop.permute.xlu0 %2189
        %2191 = vrot.lane.b32.xlu0 %v2181, 64
        %v2192 = vpop.permute.xlu0 %2191
        %2193 = vrot.lane.b32.xlu0 %v2182, 64
        %v2194 = vpop.permute.xlu0 %2193
        %v2199 = vadd.f32 %v2173, %v2188
        %v2200 = vadd.f32 %v2174, %v2190
        %v2201 = vadd.f32 %v2175, %v2192
        %v2202 = vadd.f32 %v2176, %v2194
        %s2203 = sld [smem:[#allocation12 + $0x3]]
        %v2204 = vstv %s2203
        %v2205 = vmul.f32 %v1767, %v2204
        %v2206 = vmul.f32 %v1773, %v2204
        %v2207 = vmul.f32 %v1779, %v2204
        %v2208 = vmul.f32 %v1785, %v2204
        %2213 = vrot.lane.b32.xlu0 %v2205, 32
        %v2214 = vpop.permute.xlu0 %2213
        %2215 = vrot.lane.b32.xlu0 %v2206, 32
        %v2216 = vpop.permute.xlu0 %2215
        %2217 = vrot.lane.b32.xlu0 %v2207, 32
        %v2218 = vpop.permute.xlu0 %2217
        %2219 = vrot.lane.b32.xlu0 %v2208, 32
        %v2220 = vpop.permute.xlu0 %2219
        %v2225 = vadd.f32 %v2199, %v2214
        %v2226 = vadd.f32 %v2200, %v2216
        %v2227 = vadd.f32 %v2201, %v2218
        %v2228 = vadd.f32 %v2202, %v2220
        %s2229 = sld [smem:[#allocation12 + $0x4]]
        %v2230 = vstv %s2229
        %v2231 = vmul.f32 %v1769, %v2230
        %v2232 = vmul.f32 %v1775, %v2230
        %v2233 = vmul.f32 %v1781, %v2230
        %v2234 = vmul.f32 %v1787, %v2230
        %v2235 = vadd.f32 %v2225, %v2231
        %v2236 = vadd.f32 %v2226, %v2232
        %v2237 = vadd.f32 %v2227, %v2233
        %v2238 = vadd.f32 %v2228, %v2234
        %s2239 = sld [smem:[#allocation12 + $0x5]]
        %v2240 = vstv %s2239
        %v2241 = vmul.f32 %v1769, %v2240
        %v2242 = vmul.f32 %v1775, %v2240
        %v2243 = vmul.f32 %v1781, %v2240
        %v2244 = vmul.f32 %v1787, %v2240
        %2249 = vrot.lane.b32.xlu0 %v2241, 96
        %v2250 = vpop.permute.xlu0 %2249
        %2251 = vrot.lane.b32.xlu0 %v2242, 96
        %v2252 = vpop.permute.xlu0 %2251
        %2253 = vrot.lane.b32.xlu0 %v2243, 96
        %v2254 = vpop.permute.xlu0 %2253
        %2255 = vrot.lane.b32.xlu0 %v2244, 96
        %v2256 = vpop.permute.xlu0 %2255
        %v2261 = vadd.f32 %v2235, %v2250
        %v2262 = vadd.f32 %v2236, %v2252
        %v2263 = vadd.f32 %v2237, %v2254
        %v2264 = vadd.f32 %v2238, %v2256
        %s2265 = sld [smem:[#allocation12 + $0x6]]
        %v2266 = vstv %s2265
        %v2267 = vmul.f32 %v1769, %v2266
        %v2268 = vmul.f32 %v1775, %v2266
        %v2269 = vmul.f32 %v1781, %v2266
        %v2270 = vmul.f32 %v1787, %v2266
        %2275 = vrot.lane.b32.xlu0 %v2267, 64
        %v2276 = vpop.permute.xlu0 %2275
        %2277 = vrot.lane.b32.xlu0 %v2268, 64
        %v2278 = vpop.permute.xlu0 %2277
        %2279 = vrot.lane.b32.xlu0 %v2269, 64
        %v2280 = vpop.permute.xlu0 %2279
        %2281 = vrot.lane.b32.xlu0 %v2270, 64
        %v2282 = vpop.permute.xlu0 %2281
        %v2287 = vadd.f32 %v2261, %v2276
        %v2288 = vadd.f32 %v2262, %v2278
        %v2289 = vadd.f32 %v2263, %v2280
        %v2290 = vadd.f32 %v2264, %v2282
        %s2291 = sld [smem:[#allocation12 + $0x7]]
        %v2292 = vstv %s2291
        %v2293 = vmul.f32 %v1769, %v2292
        %v2294 = vmul.f32 %v1775, %v2292
        %v2295 = vmul.f32 %v1781, %v2292
        %v2296 = vmul.f32 %v1787, %v2292
        %2301 = vrot.lane.b32.xlu0 %v2293, 32
        %v2302 = vpop.permute.xlu0 %2301
        %2303 = vrot.lane.b32.xlu0 %v2294, 32
        %v2304 = vpop.permute.xlu0 %2303
        %2305 = vrot.lane.b32.xlu0 %v2295, 32
        %v2306 = vpop.permute.xlu0 %2305
        %2307 = vrot.lane.b32.xlu0 %v2296, 32
        %v2308 = vpop.permute.xlu0 %2307
        %v2313 = vadd.f32 %v2287, %v2302
        %v2314 = vadd.f32 %v2288, %v2304
        %v2315 = vadd.f32 %v2289, %v2306
        %v2316 = vadd.f32 %v2290, %v2308
        %s2317 = sld [smem:[#allocation12 + $0x8]]
        %v2318 = vstv %s2317
        %v2319 = vmul.f32 %v2123, %v2318
        %v2320 = vmul.f32 %v2129, %v2318
        %v2321 = vmul.f32 %v2135, %v2318
        %v2322 = vmul.f32 %v2141, %v2318
        %v2323 = vadd.f32 %v2313, %v2319
        %v2324 = vadd.f32 %v2314, %v2320
        %v2325 = vadd.f32 %v2315, %v2321
        %v2326 = vadd.f32 %v2316, %v2322
        %s2327 = sld [smem:[#allocation12 + $0x9]]
        %v2328 = vstv %s2327
        %v2329 = vmul.f32 %v2123, %v2328
        %v2330 = vmul.f32 %v2129, %v2328
        %v2331 = vmul.f32 %v2135, %v2328
        %v2332 = vmul.f32 %v2141, %v2328
        %2337 = vrot.lane.b32.xlu0 %v2329, 96
        %v2338 = vpop.permute.xlu0 %2337
        %2339 = vrot.lane.b32.xlu0 %v2330, 96
        %v2340 = vpop.permute.xlu0 %2339
        %2341 = vrot.lane.b32.xlu0 %v2331, 96
        %v2342 = vpop.permute.xlu0 %2341
        %2343 = vrot.lane.b32.xlu0 %v2332, 96
        %v2344 = vpop.permute.xlu0 %2343
        %v2349 = vadd.f32 %v2323, %v2338
        %v2350 = vadd.f32 %v2324, %v2340
        %v2351 = vadd.f32 %v2325, %v2342
        %v2352 = vadd.f32 %v2326, %v2344
        %s2353 = sld [smem:[#allocation12 + $0xa]]
        %v2354 = vstv %s2353
        %v2355 = vmul.f32 %v2123, %v2354
        %v2356 = vmul.f32 %v2129, %v2354
        %v2357 = vmul.f32 %v2135, %v2354
        %v2358 = vmul.f32 %v2141, %v2354
        %2363 = vrot.lane.b32.xlu0 %v2355, 64
        %v2364 = vpop.permute.xlu0 %2363
        %2365 = vrot.lane.b32.xlu0 %v2356, 64
        %v2366 = vpop.permute.xlu0 %2365
        %2367 = vrot.lane.b32.xlu0 %v2357, 64
        %v2368 = vpop.permute.xlu0 %2367
        %2369 = vrot.lane.b32.xlu0 %v2358, 64
        %v2370 = vpop.permute.xlu0 %2369
        %v2375 = vadd.f32 %v2349, %v2364
        %v2376 = vadd.f32 %v2350, %v2366
        %v2377 = vadd.f32 %v2351, %v2368
        %v2378 = vadd.f32 %v2352, %v2370
        %s2379 = sld [smem:[#allocation12 + $0xb]]
        %v2380 = vstv %s2379
        %v2381 = vmul.f32 %v2123, %v2380
        %v2382 = vmul.f32 %v2129, %v2380
        %v2383 = vmul.f32 %v2135, %v2380
        %v2384 = vmul.f32 %v2141, %v2380
        %2389 = vrot.lane.b32.xlu0 %v2381, 32
        %v2390 = vpop.permute.xlu0 %2389
        %2391 = vrot.lane.b32.xlu0 %v2382, 32
        %v2392 = vpop.permute.xlu0 %2391
        %2393 = vrot.lane.b32.xlu0 %v2383, 32
        %v2394 = vpop.permute.xlu0 %2393
        %2395 = vrot.lane.b32.xlu0 %v2384, 32
        %v2396 = vpop.permute.xlu0 %2395
        %v2401 = vadd.f32 %v2375, %v2390
        %v2402 = vadd.f32 %v2376, %v2392
        %v2403 = vadd.f32 %v2377, %v2394
        %v2404 = vadd.f32 %v2378, %v2396
        %s2405 = sld [smem:[#allocation12 + $0xc]]
        %v2406 = vstv %s2405
        %v2407 = vmul.f32 %v2125, %v2406
        %v2408 = vmul.f32 %v2131, %v2406
        %v2409 = vmul.f32 %v2137, %v2406
        %v2410 = vmul.f32 %v2143, %v2406
        %v2411 = vadd.f32 %v2401, %v2407
        %v2412 = vadd.f32 %v2402, %v2408
        %v2413 = vadd.f32 %v2403, %v2409
        %v2414 = vadd.f32 %v2404, %v2410
        %s2415 = sld [smem:[#allocation12 + $0xd]]
        %v2416 = vstv %s2415
        %v2417 = vmul.f32 %v2125, %v2416
        %v2418 = vmul.f32 %v2131, %v2416
        %v2419 = vmul.f32 %v2137, %v2416
        %v2420 = vmul.f32 %v2143, %v2416
        %2425 = vrot.lane.b32.xlu0 %v2417, 96
        %v2426 = vpop.permute.xlu0 %2425
        %2427 = vrot.lane.b32.xlu0 %v2418, 96
        %v2428 = vpop.permute.xlu0 %2427
        %2429 = vrot.lane.b32.xlu0 %v2419, 96
        %v2430 = vpop.permute.xlu0 %2429
        %2431 = vrot.lane.b32.xlu0 %v2420, 96
        %v2432 = vpop.permute.xlu0 %2431
        %v2437 = vadd.f32 %v2411, %v2426
        %v2438 = vadd.f32 %v2412, %v2428
        %v2439 = vadd.f32 %v2413, %v2430
        %v2440 = vadd.f32 %v2414, %v2432
        %s2441 = sld [smem:[#allocation12 + $0xe]]
        %v2442 = vstv %s2441
        %v2443 = vmul.f32 %v2125, %v2442
        %v2444 = vmul.f32 %v2131, %v2442
        %v2445 = vmul.f32 %v2137, %v2442
        %v2446 = vmul.f32 %v2143, %v2442
        %2451 = vrot.lane.b32.xlu0 %v2443, 64
        %v2452 = vpop.permute.xlu0 %2451
        %2453 = vrot.lane.b32.xlu0 %v2444, 64
        %v2454 = vpop.permute.xlu0 %2453
        %2455 = vrot.lane.b32.xlu0 %v2445, 64
        %v2456 = vpop.permute.xlu0 %2455
        %2457 = vrot.lane.b32.xlu0 %v2446, 64
        %v2458 = vpop.permute.xlu0 %2457
        %v2463 = vadd.f32 %v2437, %v2452
        %v2464 = vadd.f32 %v2438, %v2454
        %v2465 = vadd.f32 %v2439, %v2456
        %v2466 = vadd.f32 %v2440, %v2458
        %s2467 = sld [smem:[#allocation12 + $0xf]]
        %v2468 = vstv %s2467
        %v2469 = vmul.f32 %v2125, %v2468
        %v2470 = vmul.f32 %v2131, %v2468
        %v2471 = vmul.f32 %v2137, %v2468
        %v2472 = vmul.f32 %v2143, %v2468
        %2477 = vrot.lane.b32.xlu0 %v2469, 32
        %v2478 = vpop.permute.xlu0 %2477
        %2479 = vrot.lane.b32.xlu0 %v2470, 32
        %v2480 = vpop.permute.xlu0 %2479
        %2481 = vrot.lane.b32.xlu0 %v2471, 32
        %v2482 = vpop.permute.xlu0 %2481
        %2483 = vrot.lane.b32.xlu0 %v2472, 32
        %v2484 = vpop.permute.xlu0 %2483
        %v2489 = vadd.f32 %v2463, %v2478
        %v2490 = vadd.f32 %v2464, %v2480
        %v2491 = vadd.f32 %v2465, %v2482
        %v2492 = vadd.f32 %v2466, %v2484
        %s2493 = sld [smem:[#allocation12 + $0x80]]
        %v2494 = vstv %s2493
        %v2495 = vmul.f32 %v1767, %v2494
        %v2496 = vmul.f32 %v1773, %v2494
        %v2497 = vmul.f32 %v1779, %v2494
        %v2498 = vmul.f32 %v1785, %v2494
        %s2499 = sld [smem:[#allocation12 + $0x81]]
        %v2500 = vstv %s2499
        %v2501 = vmul.f32 %v1767, %v2500
        %v2502 = vmul.f32 %v1773, %v2500
        %v2503 = vmul.f32 %v1779, %v2500
        %v2504 = vmul.f32 %v1785, %v2500
        %2509 = vrot.lane.b32.xlu0 %v2501, 96
        %v2510 = vpop.permute.xlu0 %2509
        %2511 = vrot.lane.b32.xlu0 %v2502, 96
        %v2512 = vpop.permute.xlu0 %2511
        %2513 = vrot.lane.b32.xlu0 %v2503, 96
        %v2514 = vpop.permute.xlu0 %2513
        %2515 = vrot.lane.b32.xlu0 %v2504, 96
        %v2516 = vpop.permute.xlu0 %2515
        %v2521 = vadd.f32 %v2495, %v2510
        %v2522 = vadd.f32 %v2496, %v2512
        %v2523 = vadd.f32 %v2497, %v2514
        %v2524 = vadd.f32 %v2498, %v2516
        %s2525 = sld [smem:[#allocation12 + $0x82]]
        %v2526 = vstv %s2525
        %v2527 = vmul.f32 %v1767, %v2526
        %v2528 = vmul.f32 %v1773, %v2526
        %v2529 = vmul.f32 %v1779, %v2526
        %v2530 = vmul.f32 %v1785, %v2526
        %2535 = vrot.lane.b32.xlu0 %v2527, 64
        %v2536 = vpop.permute.xlu0 %2535
        %2537 = vrot.lane.b32.xlu0 %v2528, 64
        %v2538 = vpop.permute.xlu0 %2537
        %2539 = vrot.lane.b32.xlu0 %v2529, 64
        %v2540 = vpop.permute.xlu0 %2539
        %2541 = vrot.lane.b32.xlu0 %v2530, 64
        %v2542 = vpop.permute.xlu0 %2541
        %v2547 = vadd.f32 %v2521, %v2536
        %v2548 = vadd.f32 %v2522, %v2538
        %v2549 = vadd.f32 %v2523, %v2540
        %v2550 = vadd.f32 %v2524, %v2542
        %s2551 = sld [smem:[#allocation12 + $0x83]]
        %v2552 = vstv %s2551
        %v2553 = vmul.f32 %v1767, %v2552
        %v2554 = vmul.f32 %v1773, %v2552
        %v2555 = vmul.f32 %v1779, %v2552
        %v2556 = vmul.f32 %v1785, %v2552
        %2561 = vrot.lane.b32.xlu0 %v2553, 32
        %v2562 = vpop.permute.xlu0 %2561
        %2563 = vrot.lane.b32.xlu0 %v2554, 32
        %v2564 = vpop.permute.xlu0 %2563
        %2565 = vrot.lane.b32.xlu0 %v2555, 32
        %v2566 = vpop.permute.xlu0 %2565
        %2567 = vrot.lane.b32.xlu0 %v2556, 32
        %v2568 = vpop.permute.xlu0 %2567
        %v2573 = vadd.f32 %v2547, %v2562
        %v2574 = vadd.f32 %v2548, %v2564
        %v2575 = vadd.f32 %v2549, %v2566
        %v2576 = vadd.f32 %v2550, %v2568
        %s2577 = sld [smem:[#allocation12 + $0x84]]
        %v2578 = vstv %s2577
        %v2579 = vmul.f32 %v1769, %v2578
        %v2580 = vmul.f32 %v1775, %v2578
        %v2581 = vmul.f32 %v1781, %v2578
        %v2582 = vmul.f32 %v1787, %v2578
        %v2583 = vadd.f32 %v2573, %v2579
        %v2584 = vadd.f32 %v2574, %v2580
        %v2585 = vadd.f32 %v2575, %v2581
        %v2586 = vadd.f32 %v2576, %v2582
        %s2587 = sld [smem:[#allocation12 + $0x85]]
        %v2588 = vstv %s2587
        %v2589 = vmul.f32 %v1769, %v2588
        %v2590 = vmul.f32 %v1775, %v2588
        %v2591 = vmul.f32 %v1781, %v2588
        %v2592 = vmul.f32 %v1787, %v2588
        %2597 = vrot.lane.b32.xlu0 %v2589, 96
        %v2598 = vpop.permute.xlu0 %2597
        %2599 = vrot.lane.b32.xlu0 %v2590, 96
        %v2600 = vpop.permute.xlu0 %2599
        %2601 = vrot.lane.b32.xlu0 %v2591, 96
        %v2602 = vpop.permute.xlu0 %2601
        %2603 = vrot.lane.b32.xlu0 %v2592, 96
        %v2604 = vpop.permute.xlu0 %2603
        %v2609 = vadd.f32 %v2583, %v2598
        %v2610 = vadd.f32 %v2584, %v2600
        %v2611 = vadd.f32 %v2585, %v2602
        %v2612 = vadd.f32 %v2586, %v2604
        %s2613 = sld [smem:[#allocation12 + $0x86]]
        %v2614 = vstv %s2613
        %v2615 = vmul.f32 %v1769, %v2614
        %v2616 = vmul.f32 %v1775, %v2614
        %v2617 = vmul.f32 %v1781, %v2614
        %v2618 = vmul.f32 %v1787, %v2614
        %2623 = vrot.lane.b32.xlu0 %v2615, 64
        %v2624 = vpop.permute.xlu0 %2623
        %2625 = vrot.lane.b32.xlu0 %v2616, 64
        %v2626 = vpop.permute.xlu0 %2625
        %2627 = vrot.lane.b32.xlu0 %v2617, 64
        %v2628 = vpop.permute.xlu0 %2627
        %2629 = vrot.lane.b32.xlu0 %v2618, 64
        %v2630 = vpop.permute.xlu0 %2629
        %v2635 = vadd.f32 %v2609, %v2624
        %v2636 = vadd.f32 %v2610, %v2626
        %v2637 = vadd.f32 %v2611, %v2628
        %v2638 = vadd.f32 %v2612, %v2630
        %s2639 = sld [smem:[#allocation12 + $0x87]]
        %v2640 = vstv %s2639
        %v2641 = vmul.f32 %v1769, %v2640
        %v2642 = vmul.f32 %v1775, %v2640
        %v2643 = vmul.f32 %v1781, %v2640
        %v2644 = vmul.f32 %v1787, %v2640
        %2649 = vrot.lane.b32.xlu0 %v2641, 32
        %v2650 = vpop.permute.xlu0 %2649
        %2651 = vrot.lane.b32.xlu0 %v2642, 32
        %v2652 = vpop.permute.xlu0 %2651
        %2653 = vrot.lane.b32.xlu0 %v2643, 32
        %v2654 = vpop.permute.xlu0 %2653
        %2655 = vrot.lane.b32.xlu0 %v2644, 32
        %v2656 = vpop.permute.xlu0 %2655
        %v2661 = vadd.f32 %v2635, %v2650
        %v2662 = vadd.f32 %v2636, %v2652
        %v2663 = vadd.f32 %v2637, %v2654
        %v2664 = vadd.f32 %v2638, %v2656
        %s2665 = sld [smem:[#allocation12 + $0x88]]
        %v2666 = vstv %s2665
        %v2667 = vmul.f32 %v2123, %v2666
        %v2668 = vmul.f32 %v2129, %v2666
        %v2669 = vmul.f32 %v2135, %v2666
        %v2670 = vmul.f32 %v2141, %v2666
        %v2671 = vadd.f32 %v2661, %v2667
        %v2672 = vadd.f32 %v2662, %v2668
        %v2673 = vadd.f32 %v2663, %v2669
        %v2674 = vadd.f32 %v2664, %v2670
        %s2675 = sld [smem:[#allocation12 + $0x89]]
        %v2676 = vstv %s2675
        %v2677 = vmul.f32 %v2123, %v2676
        %v2678 = vmul.f32 %v2129, %v2676
        %v2679 = vmul.f32 %v2135, %v2676
        %v2680 = vmul.f32 %v2141, %v2676
        %2685 = vrot.lane.b32.xlu0 %v2677, 96
        %v2686 = vpop.permute.xlu0 %2685
        %2687 = vrot.lane.b32.xlu0 %v2678, 96
        %v2688 = vpop.permute.xlu0 %2687
        %2689 = vrot.lane.b32.xlu0 %v2679, 96
        %v2690 = vpop.permute.xlu0 %2689
        %2691 = vrot.lane.b32.xlu0 %v2680, 96
        %v2692 = vpop.permute.xlu0 %2691
        %v2697 = vadd.f32 %v2671, %v2686
        %v2698 = vadd.f32 %v2672, %v2688
        %v2699 = vadd.f32 %v2673, %v2690
        %v2700 = vadd.f32 %v2674, %v2692
        %s2701 = sld [smem:[#allocation12 + $0x8a]]
        %v2702 = vstv %s2701
        %v2703 = vmul.f32 %v2123, %v2702
        %v2704 = vmul.f32 %v2129, %v2702
        %v2705 = vmul.f32 %v2135, %v2702
        %v2706 = vmul.f32 %v2141, %v2702
        %2711 = vrot.lane.b32.xlu0 %v2703, 64
        %v2712 = vpop.permute.xlu0 %2711
        %2713 = vrot.lane.b32.xlu0 %v2704, 64
        %v2714 = vpop.permute.xlu0 %2713
        %2715 = vrot.lane.b32.xlu0 %v2705, 64
        %v2716 = vpop.permute.xlu0 %2715
        %2717 = vrot.lane.b32.xlu0 %v2706, 64
        %v2718 = vpop.permute.xlu0 %2717
        %v2723 = vadd.f32 %v2697, %v2712
        %v2724 = vadd.f32 %v2698, %v2714
        %v2725 = vadd.f32 %v2699, %v2716
        %v2726 = vadd.f32 %v2700, %v2718
        %s2727 = sld [smem:[#allocation12 + $0x8b]]
        %v2728 = vstv %s2727
        %v2729 = vmul.f32 %v2123, %v2728
        %v2730 = vmul.f32 %v2129, %v2728
        %v2731 = vmul.f32 %v2135, %v2728
        %v2732 = vmul.f32 %v2141, %v2728
        %2737 = vrot.lane.b32.xlu0 %v2729, 32
        %v2738 = vpop.permute.xlu0 %2737
        %2739 = vrot.lane.b32.xlu0 %v2730, 32
        %v2740 = vpop.permute.xlu0 %2739
        %2741 = vrot.lane.b32.xlu0 %v2731, 32
        %v2742 = vpop.permute.xlu0 %2741
        %2743 = vrot.lane.b32.xlu0 %v2732, 32
        %v2744 = vpop.permute.xlu0 %2743
        %v2749 = vadd.f32 %v2723, %v2738
        %v2750 = vadd.f32 %v2724, %v2740
        %v2751 = vadd.f32 %v2725, %v2742
        %v2752 = vadd.f32 %v2726, %v2744
        %s2753 = sld [smem:[#allocation12 + $0x8c]]
        %v2754 = vstv %s2753
        %v2755 = vmul.f32 %v2125, %v2754
        %v2756 = vmul.f32 %v2131, %v2754
        %v2757 = vmul.f32 %v2137, %v2754
        %v2758 = vmul.f32 %v2143, %v2754
        %v2759 = vadd.f32 %v2749, %v2755
        %v2760 = vadd.f32 %v2750, %v2756
        %v2761 = vadd.f32 %v2751, %v2757
        %v2762 = vadd.f32 %v2752, %v2758
        %s2763 = sld [smem:[#allocation12 + $0x8d]]
        %v2764 = vstv %s2763
        %v2765 = vmul.f32 %v2125, %v2764
        %v2766 = vmul.f32 %v2131, %v2764
        %v2767 = vmul.f32 %v2137, %v2764
        %v2768 = vmul.f32 %v2143, %v2764
        %2773 = vrot.lane.b32.xlu0 %v2765, 96
        %v2774 = vpop.permute.xlu0 %2773
        %2775 = vrot.lane.b32.xlu0 %v2766, 96
        %v2776 = vpop.permute.xlu0 %2775
        %2777 = vrot.lane.b32.xlu0 %v2767, 96
        %v2778 = vpop.permute.xlu0 %2777
        %2779 = vrot.lane.b32.xlu0 %v2768, 96
        %v2780 = vpop.permute.xlu0 %2779
        %v2785 = vadd.f32 %v2759, %v2774
        %v2786 = vadd.f32 %v2760, %v2776
        %v2787 = vadd.f32 %v2761, %v2778
        %v2788 = vadd.f32 %v2762, %v2780
        %s2789 = sld [smem:[#allocation12 + $0x8e]]
        %v2790 = vstv %s2789
        %v2791 = vmul.f32 %v2125, %v2790
        %v2792 = vmul.f32 %v2131, %v2790
        %v2793 = vmul.f32 %v2137, %v2790
        %v2794 = vmul.f32 %v2143, %v2790
        %2799 = vrot.lane.b32.xlu0 %v2791, 64
        %v2800 = vpop.permute.xlu0 %2799
        %2801 = vrot.lane.b32.xlu0 %v2792, 64
        %v2802 = vpop.permute.xlu0 %2801
        %2803 = vrot.lane.b32.xlu0 %v2793, 64
        %v2804 = vpop.permute.xlu0 %2803
        %2805 = vrot.lane.b32.xlu0 %v2794, 64
        %v2806 = vpop.permute.xlu0 %2805
        %v2811 = vadd.f32 %v2785, %v2800
        %v2812 = vadd.f32 %v2786, %v2802
        %v2813 = vadd.f32 %v2787, %v2804
        %v2814 = vadd.f32 %v2788, %v2806
        %s2815 = sld [smem:[#allocation12 + $0x8f]]
        %v2816 = vstv %s2815
        %v2817 = vmul.f32 %v2125, %v2816
        %v2818 = vmul.f32 %v2131, %v2816
        %v2819 = vmul.f32 %v2137, %v2816
        %v2820 = vmul.f32 %v2143, %v2816
        %2825 = vrot.lane.b32.xlu0 %v2817, 32
        %v2826 = vpop.permute.xlu0 %2825
        %2827 = vrot.lane.b32.xlu0 %v2818, 32
        %v2828 = vpop.permute.xlu0 %2827
        %2829 = vrot.lane.b32.xlu0 %v2819, 32
        %v2830 = vpop.permute.xlu0 %2829
        %2831 = vrot.lane.b32.xlu0 %v2820, 32
        %v2832 = vpop.permute.xlu0 %2831
        %v2837 = vadd.f32 %v2811, %v2826
        %v2838 = vadd.f32 %v2812, %v2828
        %v2839 = vadd.f32 %v2813, %v2830
        %v2840 = vadd.f32 %v2814, %v2832
        %s2841 = sld [smem:[#allocation12 + $0x100]]
        %v2842 = vstv %s2841
        %v2843 = vmul.f32 %v1767, %v2842
        %v2844 = vmul.f32 %v1773, %v2842
        %v2845 = vmul.f32 %v1779, %v2842
        %v2846 = vmul.f32 %v1785, %v2842
        %s2847 = sld [smem:[#allocation12 + $0x101]]
        %v2848 = vstv %s2847
        %v2849 = vmul.f32 %v1767, %v2848
        %v2850 = vmul.f32 %v1773, %v2848
        %v2851 = vmul.f32 %v1779, %v2848
        %v2852 = vmul.f32 %v1785, %v2848
        %2857 = vrot.lane.b32.xlu0 %v2849, 96
        %v2858 = vpop.permute.xlu0 %2857
        %2859 = vrot.lane.b32.xlu0 %v2850, 96
        %v2860 = vpop.permute.xlu0 %2859
        %2861 = vrot.lane.b32.xlu0 %v2851, 96
        %v2862 = vpop.permute.xlu0 %2861
        %2863 = vrot.lane.b32.xlu0 %v2852, 96
        %v2864 = vpop.permute.xlu0 %2863
        %v2869 = vadd.f32 %v2843, %v2858
        %v2870 = vadd.f32 %v2844, %v2860
        %v2871 = vadd.f32 %v2845, %v2862
        %v2872 = vadd.f32 %v2846, %v2864
        %s2873 = sld [smem:[#allocation12 + $0x102]]
        %v2874 = vstv %s2873
        %v2875 = vmul.f32 %v1767, %v2874
        %v2876 = vmul.f32 %v1773, %v2874
        %v2877 = vmul.f32 %v1779, %v2874
        %v2878 = vmul.f32 %v1785, %v2874
        %2883 = vrot.lane.b32.xlu0 %v2875, 64
        %v2884 = vpop.permute.xlu0 %2883
        %2885 = vrot.lane.b32.xlu0 %v2876, 64
        %v2886 = vpop.permute.xlu0 %2885
        %2887 = vrot.lane.b32.xlu0 %v2877, 64
        %v2888 = vpop.permute.xlu0 %2887
        %2889 = vrot.lane.b32.xlu0 %v2878, 64
        %v2890 = vpop.permute.xlu0 %2889
        %v2895 = vadd.f32 %v2869, %v2884
        %v2896 = vadd.f32 %v2870, %v2886
        %v2897 = vadd.f32 %v2871, %v2888
        %v2898 = vadd.f32 %v2872, %v2890
        %s2899 = sld [smem:[#allocation12 + $0x103]]
        %v2900 = vstv %s2899
        %v2901 = vmul.f32 %v1767, %v2900
        %v2902 = vmul.f32 %v1773, %v2900
        %v2903 = vmul.f32 %v1779, %v2900
        %v2904 = vmul.f32 %v1785, %v2900
        %2909 = vrot.lane.b32.xlu0 %v2901, 32
        %v2910 = vpop.permute.xlu0 %2909
        %2911 = vrot.lane.b32.xlu0 %v2902, 32
        %v2912 = vpop.permute.xlu0 %2911
        %2913 = vrot.lane.b32.xlu0 %v2903, 32
        %v2914 = vpop.permute.xlu0 %2913
        %2915 = vrot.lane.b32.xlu0 %v2904, 32
        %v2916 = vpop.permute.xlu0 %2915
        %v2921 = vadd.f32 %v2895, %v2910
        %v2922 = vadd.f32 %v2896, %v2912
        %v2923 = vadd.f32 %v2897, %v2914
        %v2924 = vadd.f32 %v2898, %v2916
        %s2925 = sld [smem:[#allocation12 + $0x104]]
        %v2926 = vstv %s2925
        %v2927 = vmul.f32 %v1769, %v2926
        %v2928 = vmul.f32 %v1775, %v2926
        %v2929 = vmul.f32 %v1781, %v2926
        %v2930 = vmul.f32 %v1787, %v2926
        %v2931 = vadd.f32 %v2921, %v2927
        %v2932 = vadd.f32 %v2922, %v2928
        %v2933 = vadd.f32 %v2923, %v2929
        %v2934 = vadd.f32 %v2924, %v2930
        %s2935 = sld [smem:[#allocation12 + $0x105]]
        %v2936 = vstv %s2935
        %v2937 = vmul.f32 %v1769, %v2936
        %v2938 = vmul.f32 %v1775, %v2936
        %v2939 = vmul.f32 %v1781, %v2936
        %v2940 = vmul.f32 %v1787, %v2936
        %2945 = vrot.lane.b32.xlu0 %v2937, 96
        %v2946 = vpop.permute.xlu0 %2945
        %2947 = vrot.lane.b32.xlu0 %v2938, 96
        %v2948 = vpop.permute.xlu0 %2947
        %2949 = vrot.lane.b32.xlu0 %v2939, 96
        %v2950 = vpop.permute.xlu0 %2949
        %2951 = vrot.lane.b32.xlu0 %v2940, 96
        %v2952 = vpop.permute.xlu0 %2951
        %v2957 = vadd.f32 %v2931, %v2946
        %v2958 = vadd.f32 %v2932, %v2948
        %v2959 = vadd.f32 %v2933, %v2950
        %v2960 = vadd.f32 %v2934, %v2952
        %s2961 = sld [smem:[#allocation12 + $0x106]]
        %v2962 = vstv %s2961
        %v2963 = vmul.f32 %v1769, %v2962
        %v2964 = vmul.f32 %v1775, %v2962
        %v2965 = vmul.f32 %v1781, %v2962
        %v2966 = vmul.f32 %v1787, %v2962
        %2971 = vrot.lane.b32.xlu0 %v2963, 64
        %v2972 = vpop.permute.xlu0 %2971
        %2973 = vrot.lane.b32.xlu0 %v2964, 64
        %v2974 = vpop.permute.xlu0 %2973
        %2975 = vrot.lane.b32.xlu0 %v2965, 64
        %v2976 = vpop.permute.xlu0 %2975
        %2977 = vrot.lane.b32.xlu0 %v2966, 64
        %v2978 = vpop.permute.xlu0 %2977
        %v2983 = vadd.f32 %v2957, %v2972
        %v2984 = vadd.f32 %v2958, %v2974
        %v2985 = vadd.f32 %v2959, %v2976
        %v2986 = vadd.f32 %v2960, %v2978
        %s2987 = sld [smem:[#allocation12 + $0x107]]
        %v2988 = vstv %s2987
        %v2989 = vmul.f32 %v1769, %v2988
        %v2990 = vmul.f32 %v1775, %v2988
        %v2991 = vmul.f32 %v1781, %v2988
        %v2992 = vmul.f32 %v1787, %v2988
        %2997 = vrot.lane.b32.xlu0 %v2989, 32
        %v2998 = vpop.permute.xlu0 %2997
        %2999 = vrot.lane.b32.xlu0 %v2990, 32
        %v3000 = vpop.permute.xlu0 %2999
        %3001 = vrot.lane.b32.xlu0 %v2991, 32
        %v3002 = vpop.permute.xlu0 %3001
        %3003 = vrot.lane.b32.xlu0 %v2992, 32
        %v3004 = vpop.permute.xlu0 %3003
        %v3009 = vadd.f32 %v2983, %v2998
        %v3010 = vadd.f32 %v2984, %v3000
        %v3011 = vadd.f32 %v2985, %v3002
        %v3012 = vadd.f32 %v2986, %v3004
        %s3013 = sld [smem:[#allocation12 + $0x108]]
        %v3014 = vstv %s3013
        %v3015 = vmul.f32 %v2123, %v3014
        %v3016 = vmul.f32 %v2129, %v3014
        %v3017 = vmul.f32 %v2135, %v3014
        %v3018 = vmul.f32 %v2141, %v3014
        %v3019 = vadd.f32 %v3009, %v3015
        %v3020 = vadd.f32 %v3010, %v3016
        %v3021 = vadd.f32 %v3011, %v3017
        %v3022 = vadd.f32 %v3012, %v3018
        %s3023 = sld [smem:[#allocation12 + $0x109]]
        %v3024 = vstv %s3023
        %v3025 = vmul.f32 %v2123, %v3024
        %v3026 = vmul.f32 %v2129, %v3024
        %v3027 = vmul.f32 %v2135, %v3024
        %v3028 = vmul.f32 %v2141, %v3024
        %3033 = vrot.lane.b32.xlu0 %v3025, 96
        %v3034 = vpop.permute.xlu0 %3033
        %3035 = vrot.lane.b32.xlu0 %v3026, 96
        %v3036 = vpop.permute.xlu0 %3035
        %3037 = vrot.lane.b32.xlu0 %v3027, 96
        %v3038 = vpop.permute.xlu0 %3037
        %3039 = vrot.lane.b32.xlu0 %v3028, 96
        %v3040 = vpop.permute.xlu0 %3039
        %v3045 = vadd.f32 %v3019, %v3034
        %v3046 = vadd.f32 %v3020, %v3036
        %v3047 = vadd.f32 %v3021, %v3038
        %v3048 = vadd.f32 %v3022, %v3040
        %s3049 = sld [smem:[#allocation12 + $0x10a]]
        %v3050 = vstv %s3049
        %v3051 = vmul.f32 %v2123, %v3050
        %v3052 = vmul.f32 %v2129, %v3050
        %v3053 = vmul.f32 %v2135, %v3050
        %v3054 = vmul.f32 %v2141, %v3050
        %3059 = vrot.lane.b32.xlu0 %v3051, 64
        %v3060 = vpop.permute.xlu0 %3059
        %3061 = vrot.lane.b32.xlu0 %v3052, 64
        %v3062 = vpop.permute.xlu0 %3061
        %3063 = vrot.lane.b32.xlu0 %v3053, 64
        %v3064 = vpop.permute.xlu0 %3063
        %3065 = vrot.lane.b32.xlu0 %v3054, 64
        %v3066 = vpop.permute.xlu0 %3065
        %v3071 = vadd.f32 %v3045, %v3060
        %v3072 = vadd.f32 %v3046, %v3062
        %v3073 = vadd.f32 %v3047, %v3064
        %v3074 = vadd.f32 %v3048, %v3066
        %s3075 = sld [smem:[#allocation12 + $0x10b]]
        %v3076 = vstv %s3075
        %v3077 = vmul.f32 %v2123, %v3076
        %v3078 = vmul.f32 %v2129, %v3076
        %v3079 = vmul.f32 %v2135, %v3076
        %v3080 = vmul.f32 %v2141, %v3076
        %3085 = vrot.lane.b32.xlu0 %v3077, 32
        %v3086 = vpop.permute.xlu0 %3085
        %3087 = vrot.lane.b32.xlu0 %v3078, 32
        %v3088 = vpop.permute.xlu0 %3087
        %3089 = vrot.lane.b32.xlu0 %v3079, 32
        %v3090 = vpop.permute.xlu0 %3089
        %3091 = vrot.lane.b32.xlu0 %v3080, 32
        %v3092 = vpop.permute.xlu0 %3091
        %v3097 = vadd.f32 %v3071, %v3086
        %v3098 = vadd.f32 %v3072, %v3088
        %v3099 = vadd.f32 %v3073, %v3090
        %v3100 = vadd.f32 %v3074, %v3092
        %s3101 = sld [smem:[#allocation12 + $0x10c]]
        %v3102 = vstv %s3101
        %v3103 = vmul.f32 %v2125, %v3102
        %v3104 = vmul.f32 %v2131, %v3102
        %v3105 = vmul.f32 %v2137, %v3102
        %v3106 = vmul.f32 %v2143, %v3102
        %v3107 = vadd.f32 %v3097, %v3103
        %v3108 = vadd.f32 %v3098, %v3104
        %v3109 = vadd.f32 %v3099, %v3105
        %v3110 = vadd.f32 %v3100, %v3106
        %s3111 = sld [smem:[#allocation12 + $0x10d]]
        %v3112 = vstv %s3111
        %v3113 = vmul.f32 %v2125, %v3112
        %v3114 = vmul.f32 %v2131, %v3112
        %v3115 = vmul.f32 %v2137, %v3112
        %v3116 = vmul.f32 %v2143, %v3112
        %3121 = vrot.lane.b32.xlu0 %v3113, 96
        %v3122 = vpop.permute.xlu0 %3121
        %3123 = vrot.lane.b32.xlu0 %v3114, 96
        %v3124 = vpop.permute.xlu0 %3123
        %3125 = vrot.lane.b32.xlu0 %v3115, 96
        %v3126 = vpop.permute.xlu0 %3125
        %3127 = vrot.lane.b32.xlu0 %v3116, 96
        %v3128 = vpop.permute.xlu0 %3127
        %v3133 = vadd.f32 %v3107, %v3122
        %v3134 = vadd.f32 %v3108, %v3124
        %v3135 = vadd.f32 %v3109, %v3126
        %v3136 = vadd.f32 %v3110, %v3128
        %s3137 = sld [smem:[#allocation12 + $0x10e]]
        %v3138 = vstv %s3137
        %v3139 = vmul.f32 %v2125, %v3138
        %v3140 = vmul.f32 %v2131, %v3138
        %v3141 = vmul.f32 %v2137, %v3138
        %v3142 = vmul.f32 %v2143, %v3138
        %3147 = vrot.lane.b32.xlu0 %v3139, 64
        %v3148 = vpop.permute.xlu0 %3147
        %3149 = vrot.lane.b32.xlu0 %v3140, 64
        %v3150 = vpop.permute.xlu0 %3149
        %3151 = vrot.lane.b32.xlu0 %v3141, 64
        %v3152 = vpop.permute.xlu0 %3151
        %3153 = vrot.lane.b32.xlu0 %v3142, 64
        %v3154 = vpop.permute.xlu0 %3153
        %v3159 = vadd.f32 %v3133, %v3148
        %v3160 = vadd.f32 %v3134, %v3150
        %v3161 = vadd.f32 %v3135, %v3152
        %v3162 = vadd.f32 %v3136, %v3154
        %s3163 = sld [smem:[#allocation12 + $0x10f]]
        %v3164 = vstv %s3163
        %v3165 = vmul.f32 %v2125, %v3164
        %v3166 = vmul.f32 %v2131, %v3164
        %v3167 = vmul.f32 %v2137, %v3164
        %v3168 = vmul.f32 %v2143, %v3164
        %3173 = vrot.lane.b32.xlu0 %v3165, 32
        %v3174 = vpop.permute.xlu0 %3173
        %3175 = vrot.lane.b32.xlu0 %v3166, 32
        %v3176 = vpop.permute.xlu0 %3175
        %3177 = vrot.lane.b32.xlu0 %v3167, 32
        %v3178 = vpop.permute.xlu0 %3177
        %3179 = vrot.lane.b32.xlu0 %v3168, 32
        %v3180 = vpop.permute.xlu0 %3179
        %v3185 = vadd.f32 %v3159, %v3174
        %v3186 = vadd.f32 %v3160, %v3176
        %v3187 = vadd.f32 %v3161, %v3178
        %v3188 = vadd.f32 %v3162, %v3180
        %s3189 = sld [smem:[#allocation12 + $0x180]]
        %v3190 = vstv %s3189
        %v3191 = vmul.f32 %v1767, %v3190
        %v3192 = vmul.f32 %v1773, %v3190
        %v3193 = vmul.f32 %v1779, %v3190
        %v3194 = vmul.f32 %v1785, %v3190
        %s3195 = sld [smem:[#allocation12 + $0x181]]
        %v3196 = vstv %s3195
        %v3197 = vmul.f32 %v1767, %v3196
        %v3198 = vmul.f32 %v1773, %v3196
        %v3199 = vmul.f32 %v1779, %v3196
        %v3200 = vmul.f32 %v1785, %v3196
        %3205 = vrot.lane.b32.xlu0 %v3197, 96
        %v3206 = vpop.permute.xlu0 %3205
        %3207 = vrot.lane.b32.xlu0 %v3198, 96
        %v3208 = vpop.permute.xlu0 %3207
        %3209 = vrot.lane.b32.xlu0 %v3199, 96
        %v3210 = vpop.permute.xlu0 %3209
        %3211 = vrot.lane.b32.xlu0 %v3200, 96
        %v3212 = vpop.permute.xlu0 %3211
        %v3217 = vadd.f32 %v3191, %v3206
        %v3218 = vadd.f32 %v3192, %v3208
        %v3219 = vadd.f32 %v3193, %v3210
        %v3220 = vadd.f32 %v3194, %v3212
        %s3221 = sld [smem:[#allocation12 + $0x182]]
        %v3222 = vstv %s3221
        %v3223 = vmul.f32 %v1767, %v3222
        %v3224 = vmul.f32 %v1773, %v3222
        %v3225 = vmul.f32 %v1779, %v3222
        %v3226 = vmul.f32 %v1785, %v3222
        %3231 = vrot.lane.b32.xlu0 %v3223, 64
        %v3232 = vpop.permute.xlu0 %3231
        %3233 = vrot.lane.b32.xlu0 %v3224, 64
        %v3234 = vpop.permute.xlu0 %3233
        %3235 = vrot.lane.b32.xlu0 %v3225, 64
        %v3236 = vpop.permute.xlu0 %3235
        %3237 = vrot.lane.b32.xlu0 %v3226, 64
        %v3238 = vpop.permute.xlu0 %3237
        %v3243 = vadd.f32 %v3217, %v3232
        %v3244 = vadd.f32 %v3218, %v3234
        %v3245 = vadd.f32 %v3219, %v3236
        %v3246 = vadd.f32 %v3220, %v3238
        %s3247 = sld [smem:[#allocation12 + $0x183]]
        %v3248 = vstv %s3247
        %v3249 = vmul.f32 %v1767, %v3248
        %v3250 = vmul.f32 %v1773, %v3248
        %v3251 = vmul.f32 %v1779, %v3248
        %v3252 = vmul.f32 %v1785, %v3248
        %3257 = vrot.lane.b32.xlu0 %v3249, 32
        %v3258 = vpop.permute.xlu0 %3257
        %3259 = vrot.lane.b32.xlu0 %v3250, 32
        %v3260 = vpop.permute.xlu0 %3259
        %3261 = vrot.lane.b32.xlu0 %v3251, 32
        %v3262 = vpop.permute.xlu0 %3261
        %3263 = vrot.lane.b32.xlu0 %v3252, 32
        %v3264 = vpop.permute.xlu0 %3263
        %v3269 = vadd.f32 %v3243, %v3258
        %v3270 = vadd.f32 %v3244, %v3260
        %v3271 = vadd.f32 %v3245, %v3262
        %v3272 = vadd.f32 %v3246, %v3264
        %s3273 = sld [smem:[#allocation12 + $0x184]]
        %v3274 = vstv %s3273
        %v3275 = vmul.f32 %v1769, %v3274
        %v3276 = vmul.f32 %v1775, %v3274
        %v3277 = vmul.f32 %v1781, %v3274
        %v3278 = vmul.f32 %v1787, %v3274
        %v3279 = vadd.f32 %v3269, %v3275
        %v3280 = vadd.f32 %v3270, %v3276
        %v3281 = vadd.f32 %v3271, %v3277
        %v3282 = vadd.f32 %v3272, %v3278
        %s3283 = sld [smem:[#allocation12 + $0x185]]
        %v3284 = vstv %s3283
        %v3285 = vmul.f32 %v1769, %v3284
        %v3286 = vmul.f32 %v1775, %v3284
        %v3287 = vmul.f32 %v1781, %v3284
        %v3288 = vmul.f32 %v1787, %v3284
        %3293 = vrot.lane.b32.xlu0 %v3285, 96
        %v3294 = vpop.permute.xlu0 %3293
        %3295 = vrot.lane.b32.xlu0 %v3286, 96
        %v3296 = vpop.permute.xlu0 %3295
        %3297 = vrot.lane.b32.xlu0 %v3287, 96
        %v3298 = vpop.permute.xlu0 %3297
        %3299 = vrot.lane.b32.xlu0 %v3288, 96
        %v3300 = vpop.permute.xlu0 %3299
        %v3305 = vadd.f32 %v3279, %v3294
        %v3306 = vadd.f32 %v3280, %v3296
        %v3307 = vadd.f32 %v3281, %v3298
        %v3308 = vadd.f32 %v3282, %v3300
        %s3309 = sld [smem:[#allocation12 + $0x186]]
        %v3310 = vstv %s3309
        %v3311 = vmul.f32 %v1769, %v3310
        %v3312 = vmul.f32 %v1775, %v3310
        %v3313 = vmul.f32 %v1781, %v3310
        %v3314 = vmul.f32 %v1787, %v3310
        %3319 = vrot.lane.b32.xlu0 %v3311, 64
        %v3320 = vpop.permute.xlu0 %3319
        %3321 = vrot.lane.b32.xlu0 %v3312, 64
        %v3322 = vpop.permute.xlu0 %3321
        %3323 = vrot.lane.b32.xlu0 %v3313, 64
        %v3324 = vpop.permute.xlu0 %3323
        %3325 = vrot.lane.b32.xlu0 %v3314, 64
        %v3326 = vpop.permute.xlu0 %3325
        %v3331 = vadd.f32 %v3305, %v3320
        %v3332 = vadd.f32 %v3306, %v3322
        %v3333 = vadd.f32 %v3307, %v3324
        %v3334 = vadd.f32 %v3308, %v3326
        %s3335 = sld [smem:[#allocation12 + $0x187]]
        %v3336 = vstv %s3335
        %v3337 = vmul.f32 %v1769, %v3336
        %v3338 = vmul.f32 %v1775, %v3336
        %v3339 = vmul.f32 %v1781, %v3336
        %v3340 = vmul.f32 %v1787, %v3336
        %3345 = vrot.lane.b32.xlu0 %v3337, 32
        %v3346 = vpop.permute.xlu0 %3345
        %3347 = vrot.lane.b32.xlu0 %v3338, 32
        %v3348 = vpop.permute.xlu0 %3347
        %3349 = vrot.lane.b32.xlu0 %v3339, 32
        %v3350 = vpop.permute.xlu0 %3349
        %3351 = vrot.lane.b32.xlu0 %v3340, 32
        %v3352 = vpop.permute.xlu0 %3351
        %v3357 = vadd.f32 %v3331, %v3346
        %v3358 = vadd.f32 %v3332, %v3348
        %v3359 = vadd.f32 %v3333, %v3350
        %v3360 = vadd.f32 %v3334, %v3352
        %s3361 = sld [smem:[#allocation12 + $0x188]]
        %v3362 = vstv %s3361
        %v3363 = vmul.f32 %v2123, %v3362
        %v3364 = vmul.f32 %v2129, %v3362
        %v3365 = vmul.f32 %v2135, %v3362
        %v3366 = vmul.f32 %v2141, %v3362
        %v3367 = vadd.f32 %v3357, %v3363
        %v3368 = vadd.f32 %v3358, %v3364
        %v3369 = vadd.f32 %v3359, %v3365
        %v3370 = vadd.f32 %v3360, %v3366
        %s3371 = sld [smem:[#allocation12 + $0x189]]
        %v3372 = vstv %s3371
        %v3373 = vmul.f32 %v2123, %v3372
        %v3374 = vmul.f32 %v2129, %v3372
        %v3375 = vmul.f32 %v2135, %v3372
        %v3376 = vmul.f32 %v2141, %v3372
        %3381 = vrot.lane.b32.xlu0 %v3373, 96
        %v3382 = vpop.permute.xlu0 %3381
        %3383 = vrot.lane.b32.xlu0 %v3374, 96
        %v3384 = vpop.permute.xlu0 %3383
        %3385 = vrot.lane.b32.xlu0 %v3375, 96
        %v3386 = vpop.permute.xlu0 %3385
        %3387 = vrot.lane.b32.xlu0 %v3376, 96
        %v3388 = vpop.permute.xlu0 %3387
        %v3393 = vadd.f32 %v3367, %v3382
        %v3394 = vadd.f32 %v3368, %v3384
        %v3395 = vadd.f32 %v3369, %v3386
        %v3396 = vadd.f32 %v3370, %v3388
        %s3397 = sld [smem:[#allocation12 + $0x18a]]
        %v3398 = vstv %s3397
        %v3399 = vmul.f32 %v2123, %v3398
        %v3400 = vmul.f32 %v2129, %v3398
        %v3401 = vmul.f32 %v2135, %v3398
        %v3402 = vmul.f32 %v2141, %v3398
        %3407 = vrot.lane.b32.xlu0 %v3399, 64
        %v3408 = vpop.permute.xlu0 %3407
        %3409 = vrot.lane.b32.xlu0 %v3400, 64
        %v3410 = vpop.permute.xlu0 %3409
        %3411 = vrot.lane.b32.xlu0 %v3401, 64
        %v3412 = vpop.permute.xlu0 %3411
        %3413 = vrot.lane.b32.xlu0 %v3402, 64
        %v3414 = vpop.permute.xlu0 %3413
        %v3419 = vadd.f32 %v3393, %v3408
        %v3420 = vadd.f32 %v3394, %v3410
        %v3421 = vadd.f32 %v3395, %v3412
        %v3422 = vadd.f32 %v3396, %v3414
        %s3423 = sld [smem:[#allocation12 + $0x18b]]
        %v3424 = vstv %s3423
        %v3425 = vmul.f32 %v2123, %v3424
        %v3426 = vmul.f32 %v2129, %v3424
        %v3427 = vmul.f32 %v2135, %v3424
        %v3428 = vmul.f32 %v2141, %v3424
        %3433 = vrot.lane.b32.xlu0 %v3425, 32
        %v3434 = vpop.permute.xlu0 %3433
        %3435 = vrot.lane.b32.xlu0 %v3426, 32
        %v3436 = vpop.permute.xlu0 %3435
        %3437 = vrot.lane.b32.xlu0 %v3427, 32
        %v3438 = vpop.permute.xlu0 %3437
        %3439 = vrot.lane.b32.xlu0 %v3428, 32
        %v3440 = vpop.permute.xlu0 %3439
        %v3445 = vadd.f32 %v3419, %v3434
        %v3446 = vadd.f32 %v3420, %v3436
        %v3447 = vadd.f32 %v3421, %v3438
        %v3448 = vadd.f32 %v3422, %v3440
        %s3449 = sld [smem:[#allocation12 + $0x18c]]
        %v3450 = vstv %s3449
        %v3451 = vmul.f32 %v2125, %v3450
        %v3452 = vmul.f32 %v2131, %v3450
        %v3453 = vmul.f32 %v2137, %v3450
        %v3454 = vmul.f32 %v2143, %v3450
        %v3455 = vadd.f32 %v3445, %v3451
        %v3456 = vadd.f32 %v3446, %v3452
        %v3457 = vadd.f32 %v3447, %v3453
        %v3458 = vadd.f32 %v3448, %v3454
        %s3459 = sld [smem:[#allocation12 + $0x18d]]
        %v3460 = vstv %s3459
        %v3461 = vmul.f32 %v2125, %v3460
        %v3462 = vmul.f32 %v2131, %v3460
        %v3463 = vmul.f32 %v2137, %v3460
        %v3464 = vmul.f32 %v2143, %v3460
        %3469 = vrot.lane.b32.xlu0 %v3461, 96
        %v3470 = vpop.permute.xlu0 %3469
        %3471 = vrot.lane.b32.xlu0 %v3462, 96
        %v3472 = vpop.permute.xlu0 %3471
        %3473 = vrot.lane.b32.xlu0 %v3463, 96
        %v3474 = vpop.permute.xlu0 %3473
        %3475 = vrot.lane.b32.xlu0 %v3464, 96
        %v3476 = vpop.permute.xlu0 %3475
        %v3481 = vadd.f32 %v3455, %v3470
        %v3482 = vadd.f32 %v3456, %v3472
        %v3483 = vadd.f32 %v3457, %v3474
        %v3484 = vadd.f32 %v3458, %v3476
        %s3485 = sld [smem:[#allocation12 + $0x18e]]
        %v3486 = vstv %s3485
        %v3487 = vmul.f32 %v2125, %v3486
        %v3488 = vmul.f32 %v2131, %v3486
        %v3489 = vmul.f32 %v2137, %v3486
        %v3490 = vmul.f32 %v2143, %v3486
        %3495 = vrot.lane.b32.xlu0 %v3487, 64
        %v3496 = vpop.permute.xlu0 %3495
        %3497 = vrot.lane.b32.xlu0 %v3488, 64
        %v3498 = vpop.permute.xlu0 %3497
        %3499 = vrot.lane.b32.xlu0 %v3489, 64
        %v3500 = vpop.permute.xlu0 %3499
        %3501 = vrot.lane.b32.xlu0 %v3490, 64
        %v3502 = vpop.permute.xlu0 %3501
        %v3507 = vadd.f32 %v3481, %v3496
        %v3508 = vadd.f32 %v3482, %v3498
        %v3509 = vadd.f32 %v3483, %v3500
        %v3510 = vadd.f32 %v3484, %v3502
        %s3511 = sld [smem:[#allocation12 + $0x18f]]
        %v3512 = vstv %s3511
        %v3513 = vmul.f32 %v2125, %v3512
        %v3514 = vmul.f32 %v2131, %v3512
        %v3515 = vmul.f32 %v2137, %v3512
        %v3516 = vmul.f32 %v2143, %v3512
        %3521 = vrot.lane.b32.xlu0 %v3513, 32
        %v3522 = vpop.permute.xlu0 %3521
        %3523 = vrot.lane.b32.xlu0 %v3514, 32
        %v3524 = vpop.permute.xlu0 %3523
        %3525 = vrot.lane.b32.xlu0 %v3515, 32
        %v3526 = vpop.permute.xlu0 %3525
        %3527 = vrot.lane.b32.xlu0 %v3516, 32
        %v3528 = vpop.permute.xlu0 %3527
        %v3533 = vadd.f32 %v3507, %v3522
        %v3534 = vadd.f32 %v3508, %v3524
        %v3535 = vadd.f32 %v3509, %v3526
        %v3536 = vadd.f32 %v3510, %v3528
        %s3537 = sld [smem:[#allocation12 + $0x200]]
        %v3538 = vstv %s3537
        %v3539 = vmul.f32 %v1767, %v3538
        %v3540 = vmul.f32 %v1773, %v3538
        %v3541 = vmul.f32 %v1779, %v3538
        %v3542 = vmul.f32 %v1785, %v3538
        %s3543 = sld [smem:[#allocation12 + $0x201]]
        %v3544 = vstv %s3543
        %v3545 = vmul.f32 %v1767, %v3544
        %v3546 = vmul.f32 %v1773, %v3544
        %v3547 = vmul.f32 %v1779, %v3544
        %v3548 = vmul.f32 %v1785, %v3544
        %3553 = vrot.lane.b32.xlu0 %v3545, 96
        %v3554 = vpop.permute.xlu0 %3553
        %3555 = vrot.lane.b32.xlu0 %v3546, 96
        %v3556 = vpop.permute.xlu0 %3555
        %3557 = vrot.lane.b32.xlu0 %v3547, 96
        %v3558 = vpop.permute.xlu0 %3557
        %3559 = vrot.lane.b32.xlu0 %v3548, 96
        %v3560 = vpop.permute.xlu0 %3559
        %v3565 = vadd.f32 %v3539, %v3554
        %v3566 = vadd.f32 %v3540, %v3556
        %v3567 = vadd.f32 %v3541, %v3558
        %v3568 = vadd.f32 %v3542, %v3560
        %s3569 = sld [smem:[#allocation12 + $0x202]]
        %v3570 = vstv %s3569
        %v3571 = vmul.f32 %v1767, %v3570
        %v3572 = vmul.f32 %v1773, %v3570
        %v3573 = vmul.f32 %v1779, %v3570
        %v3574 = vmul.f32 %v1785, %v3570
        %3579 = vrot.lane.b32.xlu0 %v3571, 64
        %v3580 = vpop.permute.xlu0 %3579
        %3581 = vrot.lane.b32.xlu0 %v3572, 64
        %v3582 = vpop.permute.xlu0 %3581
        %3583 = vrot.lane.b32.xlu0 %v3573, 64
        %v3584 = vpop.permute.xlu0 %3583
        %3585 = vrot.lane.b32.xlu0 %v3574, 64
        %v3586 = vpop.permute.xlu0 %3585
        %v3591 = vadd.f32 %v3565, %v3580
        %v3592 = vadd.f32 %v3566, %v3582
        %v3593 = vadd.f32 %v3567, %v3584
        %v3594 = vadd.f32 %v3568, %v3586
        %s3595 = sld [smem:[#allocation12 + $0x203]]
        %v3596 = vstv %s3595
        %v3597 = vmul.f32 %v1767, %v3596
        %v3598 = vmul.f32 %v1773, %v3596
        %v3599 = vmul.f32 %v1779, %v3596
        %v3600 = vmul.f32 %v1785, %v3596
        %3605 = vrot.lane.b32.xlu0 %v3597, 32
        %v3606 = vpop.permute.xlu0 %3605
        %3607 = vrot.lane.b32.xlu0 %v3598, 32
        %v3608 = vpop.permute.xlu0 %3607
        %3609 = vrot.lane.b32.xlu0 %v3599, 32
        %v3610 = vpop.permute.xlu0 %3609
        %3611 = vrot.lane.b32.xlu0 %v3600, 32
        %v3612 = vpop.permute.xlu0 %3611
        %v3617 = vadd.f32 %v3591, %v3606
        %v3618 = vadd.f32 %v3592, %v3608
        %v3619 = vadd.f32 %v3593, %v3610
        %v3620 = vadd.f32 %v3594, %v3612
        %s3621 = sld [smem:[#allocation12 + $0x204]]
        %v3622 = vstv %s3621
        %v3623 = vmul.f32 %v1769, %v3622
        %v3624 = vmul.f32 %v1775, %v3622
        %v3625 = vmul.f32 %v1781, %v3622
        %v3626 = vmul.f32 %v1787, %v3622
        %v3627 = vadd.f32 %v3617, %v3623
        %v3628 = vadd.f32 %v3618, %v3624
        %v3629 = vadd.f32 %v3619, %v3625
        %v3630 = vadd.f32 %v3620, %v3626
        %s3631 = sld [smem:[#allocation12 + $0x205]]
        %v3632 = vstv %s3631
        %v3633 = vmul.f32 %v1769, %v3632
        %v3634 = vmul.f32 %v1775, %v3632
        %v3635 = vmul.f32 %v1781, %v3632
        %v3636 = vmul.f32 %v1787, %v3632
        %3641 = vrot.lane.b32.xlu0 %v3633, 96
        %v3642 = vpop.permute.xlu0 %3641
        %3643 = vrot.lane.b32.xlu0 %v3634, 96
        %v3644 = vpop.permute.xlu0 %3643
        %3645 = vrot.lane.b32.xlu0 %v3635, 96
        %v3646 = vpop.permute.xlu0 %3645
        %3647 = vrot.lane.b32.xlu0 %v3636, 96
        %v3648 = vpop.permute.xlu0 %3647
        %v3653 = vadd.f32 %v3627, %v3642
        %v3654 = vadd.f32 %v3628, %v3644
        %v3655 = vadd.f32 %v3629, %v3646
        %v3656 = vadd.f32 %v3630, %v3648
        %s3657 = sld [smem:[#allocation12 + $0x206]]
        %v3658 = vstv %s3657
        %v3659 = vmul.f32 %v1769, %v3658
        %v3660 = vmul.f32 %v1775, %v3658
        %v3661 = vmul.f32 %v1781, %v3658
        %v3662 = vmul.f32 %v1787, %v3658
        %3667 = vrot.lane.b32.xlu0 %v3659, 64
        %v3668 = vpop.permute.xlu0 %3667
        %3669 = vrot.lane.b32.xlu0 %v3660, 64
        %v3670 = vpop.permute.xlu0 %3669
        %3671 = vrot.lane.b32.xlu0 %v3661, 64
        %v3672 = vpop.permute.xlu0 %3671
        %3673 = vrot.lane.b32.xlu0 %v3662, 64
        %v3674 = vpop.permute.xlu0 %3673
        %v3679 = vadd.f32 %v3653, %v3668
        %v3680 = vadd.f32 %v3654, %v3670
        %v3681 = vadd.f32 %v3655, %v3672
        %v3682 = vadd.f32 %v3656, %v3674
        %s3683 = sld [smem:[#allocation12 + $0x207]]
        %v3684 = vstv %s3683
        %v3685 = vmul.f32 %v1769, %v3684
        %v3686 = vmul.f32 %v1775, %v3684
        %v3687 = vmul.f32 %v1781, %v3684
        %v3688 = vmul.f32 %v1787, %v3684
        %3693 = vrot.lane.b32.xlu0 %v3685, 32
        %v3694 = vpop.permute.xlu0 %3693
        %3695 = vrot.lane.b32.xlu0 %v3686, 32
        %v3696 = vpop.permute.xlu0 %3695
        %3697 = vrot.lane.b32.xlu0 %v3687, 32
        %v3698 = vpop.permute.xlu0 %3697
        %3699 = vrot.lane.b32.xlu0 %v3688, 32
        %v3700 = vpop.permute.xlu0 %3699
        %v3705 = vadd.f32 %v3679, %v3694
        %v3706 = vadd.f32 %v3680, %v3696
        %v3707 = vadd.f32 %v3681, %v3698
        %v3708 = vadd.f32 %v3682, %v3700
        %s3709 = sld [smem:[#allocation12 + $0x208]]
        %v3710 = vstv %s3709
        %v3711 = vmul.f32 %v2123, %v3710
        %v3712 = vmul.f32 %v2129, %v3710
        %v3713 = vmul.f32 %v2135, %v3710
        %v3714 = vmul.f32 %v2141, %v3710
        %v3715 = vadd.f32 %v3705, %v3711
        %v3716 = vadd.f32 %v3706, %v3712
        %v3717 = vadd.f32 %v3707, %v3713
        %v3718 = vadd.f32 %v3708, %v3714
        %s3719 = sld [smem:[#allocation12 + $0x209]]
        %v3720 = vstv %s3719
        %v3721 = vmul.f32 %v2123, %v3720
        %v3722 = vmul.f32 %v2129, %v3720
        %v3723 = vmul.f32 %v2135, %v3720
        %v3724 = vmul.f32 %v2141, %v3720
        %3729 = vrot.lane.b32.xlu0 %v3721, 96
        %v3730 = vpop.permute.xlu0 %3729
        %3731 = vrot.lane.b32.xlu0 %v3722, 96
        %v3732 = vpop.permute.xlu0 %3731
        %3733 = vrot.lane.b32.xlu0 %v3723, 96
        %v3734 = vpop.permute.xlu0 %3733
        %3735 = vrot.lane.b32.xlu0 %v3724, 96
        %v3736 = vpop.permute.xlu0 %3735
        %v3741 = vadd.f32 %v3715, %v3730
        %v3742 = vadd.f32 %v3716, %v3732
        %v3743 = vadd.f32 %v3717, %v3734
        %v3744 = vadd.f32 %v3718, %v3736
        %s3745 = sld [smem:[#allocation12 + $0x20a]]
        %v3746 = vstv %s3745
        %v3747 = vmul.f32 %v2123, %v3746
        %v3748 = vmul.f32 %v2129, %v3746
        %v3749 = vmul.f32 %v2135, %v3746
        %v3750 = vmul.f32 %v2141, %v3746
        %3755 = vrot.lane.b32.xlu0 %v3747, 64
        %v3756 = vpop.permute.xlu0 %3755
        %3757 = vrot.lane.b32.xlu0 %v3748, 64
        %v3758 = vpop.permute.xlu0 %3757
        %3759 = vrot.lane.b32.xlu0 %v3749, 64
        %v3760 = vpop.permute.xlu0 %3759
        %3761 = vrot.lane.b32.xlu0 %v3750, 64
        %v3762 = vpop.permute.xlu0 %3761
        %v3767 = vadd.f32 %v3741, %v3756
        %v3768 = vadd.f32 %v3742, %v3758
        %v3769 = vadd.f32 %v3743, %v3760
        %v3770 = vadd.f32 %v3744, %v3762
        %s3771 = sld [smem:[#allocation12 + $0x20b]]
        %v3772 = vstv %s3771
        %v3773 = vmul.f32 %v2123, %v3772
        %v3774 = vmul.f32 %v2129, %v3772
        %v3775 = vmul.f32 %v2135, %v3772
        %v3776 = vmul.f32 %v2141, %v3772
        %3781 = vrot.lane.b32.xlu0 %v3773, 32
        %v3782 = vpop.permute.xlu0 %3781
        %3783 = vrot.lane.b32.xlu0 %v3774, 32
        %v3784 = vpop.permute.xlu0 %3783
        %3785 = vrot.lane.b32.xlu0 %v3775, 32
        %v3786 = vpop.permute.xlu0 %3785
        %3787 = vrot.lane.b32.xlu0 %v3776, 32
        %v3788 = vpop.permute.xlu0 %3787
        %v3793 = vadd.f32 %v3767, %v3782
        %v3794 = vadd.f32 %v3768, %v3784
        %v3795 = vadd.f32 %v3769, %v3786
        %v3796 = vadd.f32 %v3770, %v3788
        %s3797 = sld [smem:[#allocation12 + $0x20c]]
        %v3798 = vstv %s3797
        %v3799 = vmul.f32 %v2125, %v3798
        %v3800 = vmul.f32 %v2131, %v3798
        %v3801 = vmul.f32 %v2137, %v3798
        %v3802 = vmul.f32 %v2143, %v3798
        %v3803 = vadd.f32 %v3793, %v3799
        %v3804 = vadd.f32 %v3794, %v3800
        %v3805 = vadd.f32 %v3795, %v3801
        %v3806 = vadd.f32 %v3796, %v3802
        %s3807 = sld [smem:[#allocation12 + $0x20d]]
        %v3808 = vstv %s3807
        %v3809 = vmul.f32 %v2125, %v3808
        %v3810 = vmul.f32 %v2131, %v3808
        %v3811 = vmul.f32 %v2137, %v3808
        %v3812 = vmul.f32 %v2143, %v3808
        %3817 = vrot.lane.b32.xlu0 %v3809, 96
        %v3818 = vpop.permute.xlu0 %3817
        %3819 = vrot.lane.b32.xlu0 %v3810, 96
        %v3820 = vpop.permute.xlu0 %3819
        %3821 = vrot.lane.b32.xlu0 %v3811, 96
        %v3822 = vpop.permute.xlu0 %3821
        %3823 = vrot.lane.b32.xlu0 %v3812, 96
        %v3824 = vpop.permute.xlu0 %3823
        %v3829 = vadd.f32 %v3803, %v3818
        %v3830 = vadd.f32 %v3804, %v3820
        %v3831 = vadd.f32 %v3805, %v3822
        %v3832 = vadd.f32 %v3806, %v3824
        %s3833 = sld [smem:[#allocation12 + $0x20e]]
        %v3834 = vstv %s3833
        %v3835 = vmul.f32 %v2125, %v3834
        %v3836 = vmul.f32 %v2131, %v3834
        %v3837 = vmul.f32 %v2137, %v3834
        %v3838 = vmul.f32 %v2143, %v3834
        %3843 = vrot.lane.b32.xlu0 %v3835, 64
        %v3844 = vpop.permute.xlu0 %3843
        %3845 = vrot.lane.b32.xlu0 %v3836, 64
        %v3846 = vpop.permute.xlu0 %3845
        %3847 = vrot.lane.b32.xlu0 %v3837, 64
        %v3848 = vpop.permute.xlu0 %3847
        %3849 = vrot.lane.b32.xlu0 %v3838, 64
        %v3850 = vpop.permute.xlu0 %3849
        %v3855 = vadd.f32 %v3829, %v3844
        %v3856 = vadd.f32 %v3830, %v3846
        %v3857 = vadd.f32 %v3831, %v3848
        %v3858 = vadd.f32 %v3832, %v3850
        %s3859 = sld [smem:[#allocation12 + $0x20f]]
        %v3860 = vstv %s3859
        %v3861 = vmul.f32 %v2125, %v3860
        %v3862 = vmul.f32 %v2131, %v3860
        %v3863 = vmul.f32 %v2137, %v3860
        %v3864 = vmul.f32 %v2143, %v3860
        %3869 = vrot.lane.b32.xlu0 %v3861, 32
        %v3870 = vpop.permute.xlu0 %3869
        %3871 = vrot.lane.b32.xlu0 %v3862, 32
        %v3872 = vpop.permute.xlu0 %3871
        %3873 = vrot.lane.b32.xlu0 %v3863, 32
        %v3874 = vpop.permute.xlu0 %3873
        %3875 = vrot.lane.b32.xlu0 %v3864, 32
        %v3876 = vpop.permute.xlu0 %3875
        %v3881 = vadd.f32 %v3855, %v3870
        %v3882 = vadd.f32 %v3856, %v3872
        %v3883 = vadd.f32 %v3857, %v3874
        %v3884 = vadd.f32 %v3858, %v3876
        %s3885 = sld [smem:[#allocation12 + $0x280]]
        %v3886 = vstv %s3885
        %v3887 = vmul.f32 %v1767, %v3886
        %v3888 = vmul.f32 %v1773, %v3886
        %v3889 = vmul.f32 %v1779, %v3886
        %v3890 = vmul.f32 %v1785, %v3886
        %s3891 = sld [smem:[#allocation12 + $0x281]]
        %v3892 = vstv %s3891
        %v3893 = vmul.f32 %v1767, %v3892
        %v3894 = vmul.f32 %v1773, %v3892
        %v3895 = vmul.f32 %v1779, %v3892
        %v3896 = vmul.f32 %v1785, %v3892
        %3901 = vrot.lane.b32.xlu0 %v3893, 96
        %v3902 = vpop.permute.xlu0 %3901
        %3903 = vrot.lane.b32.xlu0 %v3894, 96
        %v3904 = vpop.permute.xlu0 %3903
        %3905 = vrot.lane.b32.xlu0 %v3895, 96
        %v3906 = vpop.permute.xlu0 %3905
        %3907 = vrot.lane.b32.xlu0 %v3896, 96
        %v3908 = vpop.permute.xlu0 %3907
        %v3913 = vadd.f32 %v3887, %v3902
        %v3914 = vadd.f32 %v3888, %v3904
        %v3915 = vadd.f32 %v3889, %v3906
        %v3916 = vadd.f32 %v3890, %v3908
        %s3917 = sld [smem:[#allocation12 + $0x282]]
        %v3918 = vstv %s3917
        %v3919 = vmul.f32 %v1767, %v3918
        %v3920 = vmul.f32 %v1773, %v3918
        %v3921 = vmul.f32 %v1779, %v3918
        %v3922 = vmul.f32 %v1785, %v3918
        %3927 = vrot.lane.b32.xlu0 %v3919, 64
        %v3928 = vpop.permute.xlu0 %3927
        %3929 = vrot.lane.b32.xlu0 %v3920, 64
        %v3930 = vpop.permute.xlu0 %3929
        %3931 = vrot.lane.b32.xlu0 %v3921, 64
        %v3932 = vpop.permute.xlu0 %3931
        %3933 = vrot.lane.b32.xlu0 %v3922, 64
        %v3934 = vpop.permute.xlu0 %3933
        %v3939 = vadd.f32 %v3913, %v3928
        %v3940 = vadd.f32 %v3914, %v3930
        %v3941 = vadd.f32 %v3915, %v3932
        %v3942 = vadd.f32 %v3916, %v3934
        %s3943 = sld [smem:[#allocation12 + $0x283]]
        %v3944 = vstv %s3943
        %v3945 = vmul.f32 %v1767, %v3944
        %v3946 = vmul.f32 %v1773, %v3944
        %v3947 = vmul.f32 %v1779, %v3944
        %v3948 = vmul.f32 %v1785, %v3944
        %3953 = vrot.lane.b32.xlu0 %v3945, 32
        %v3954 = vpop.permute.xlu0 %3953
        %3955 = vrot.lane.b32.xlu0 %v3946, 32
        %v3956 = vpop.permute.xlu0 %3955
        %3957 = vrot.lane.b32.xlu0 %v3947, 32
        %v3958 = vpop.permute.xlu0 %3957
        %3959 = vrot.lane.b32.xlu0 %v3948, 32
        %v3960 = vpop.permute.xlu0 %3959
        %v3965 = vadd.f32 %v3939, %v3954
        %v3966 = vadd.f32 %v3940, %v3956
        %v3967 = vadd.f32 %v3941, %v3958
        %v3968 = vadd.f32 %v3942, %v3960
        %s3969 = sld [smem:[#allocation12 + $0x284]]
        %v3970 = vstv %s3969
        %v3971 = vmul.f32 %v1769, %v3970
        %v3972 = vmul.f32 %v1775, %v3970
        %v3973 = vmul.f32 %v1781, %v3970
        %v3974 = vmul.f32 %v1787, %v3970
        %v3975 = vadd.f32 %v3965, %v3971
        %v3976 = vadd.f32 %v3966, %v3972
        %v3977 = vadd.f32 %v3967, %v3973
        %v3978 = vadd.f32 %v3968, %v3974
        %s3979 = sld [smem:[#allocation12 + $0x285]]
        %v3980 = vstv %s3979
        %v3981 = vmul.f32 %v1769, %v3980
        %v3982 = vmul.f32 %v1775, %v3980
        %v3983 = vmul.f32 %v1781, %v3980
        %v3984 = vmul.f32 %v1787, %v3980
        %3989 = vrot.lane.b32.xlu0 %v3981, 96
        %v3990 = vpop.permute.xlu0 %3989
        %3991 = vrot.lane.b32.xlu0 %v3982, 96
        %v3992 = vpop.permute.xlu0 %3991
        %3993 = vrot.lane.b32.xlu0 %v3983, 96
        %v3994 = vpop.permute.xlu0 %3993
        %3995 = vrot.lane.b32.xlu0 %v3984, 96
        %v3996 = vpop.permute.xlu0 %3995
        %v4001 = vadd.f32 %v3975, %v3990
        %v4002 = vadd.f32 %v3976, %v3992
        %v4003 = vadd.f32 %v3977, %v3994
        %v4004 = vadd.f32 %v3978, %v3996
        %s4005 = sld [smem:[#allocation12 + $0x286]]
        %v4006 = vstv %s4005
        %v4007 = vmul.f32 %v1769, %v4006
        %v4008 = vmul.f32 %v1775, %v4006
        %v4009 = vmul.f32 %v1781, %v4006
        %v4010 = vmul.f32 %v1787, %v4006
        %4015 = vrot.lane.b32.xlu0 %v4007, 64
        %v4016 = vpop.permute.xlu0 %4015
        %4017 = vrot.lane.b32.xlu0 %v4008, 64
        %v4018 = vpop.permute.xlu0 %4017
        %4019 = vrot.lane.b32.xlu0 %v4009, 64
        %v4020 = vpop.permute.xlu0 %4019
        %4021 = vrot.lane.b32.xlu0 %v4010, 64
        %v4022 = vpop.permute.xlu0 %4021
        %v4027 = vadd.f32 %v4001, %v4016
        %v4028 = vadd.f32 %v4002, %v4018
        %v4029 = vadd.f32 %v4003, %v4020
        %v4030 = vadd.f32 %v4004, %v4022
        %s4031 = sld [smem:[#allocation12 + $0x287]]
        %v4032 = vstv %s4031
        %v4033 = vmul.f32 %v1769, %v4032
        %v4034 = vmul.f32 %v1775, %v4032
        %v4035 = vmul.f32 %v1781, %v4032
        %v4036 = vmul.f32 %v1787, %v4032
        %4041 = vrot.lane.b32.xlu0 %v4033, 32
        %v4042 = vpop.permute.xlu0 %4041
        %4043 = vrot.lane.b32.xlu0 %v4034, 32
        %v4044 = vpop.permute.xlu0 %4043
        %4045 = vrot.lane.b32.xlu0 %v4035, 32
        %v4046 = vpop.permute.xlu0 %4045
        %4047 = vrot.lane.b32.xlu0 %v4036, 32
        %v4048 = vpop.permute.xlu0 %4047
        %v4053 = vadd.f32 %v4027, %v4042
        %v4054 = vadd.f32 %v4028, %v4044
        %v4055 = vadd.f32 %v4029, %v4046
        %v4056 = vadd.f32 %v4030, %v4048
        %s4057 = sld [smem:[#allocation12 + $0x288]]
        %v4058 = vstv %s4057
        %v4059 = vmul.f32 %v2123, %v4058
        %v4060 = vmul.f32 %v2129, %v4058
        %v4061 = vmul.f32 %v2135, %v4058
        %v4062 = vmul.f32 %v2141, %v4058
        %v4063 = vadd.f32 %v4053, %v4059
        %v4064 = vadd.f32 %v4054, %v4060
        %v4065 = vadd.f32 %v4055, %v4061
        %v4066 = vadd.f32 %v4056, %v4062
        %s4067 = sld [smem:[#allocation12 + $0x289]]
        %v4068 = vstv %s4067
        %v4069 = vmul.f32 %v2123, %v4068
        %v4070 = vmul.f32 %v2129, %v4068
        %v4071 = vmul.f32 %v2135, %v4068
        %v4072 = vmul.f32 %v2141, %v4068
        %4077 = vrot.lane.b32.xlu0 %v4069, 96
        %v4078 = vpop.permute.xlu0 %4077
        %4079 = vrot.lane.b32.xlu0 %v4070, 96
        %v4080 = vpop.permute.xlu0 %4079
        %4081 = vrot.lane.b32.xlu0 %v4071, 96
        %v4082 = vpop.permute.xlu0 %4081
        %4083 = vrot.lane.b32.xlu0 %v4072, 96
        %v4084 = vpop.permute.xlu0 %4083
        %v4089 = vadd.f32 %v4063, %v4078
        %v4090 = vadd.f32 %v4064, %v4080
        %v4091 = vadd.f32 %v4065, %v4082
        %v4092 = vadd.f32 %v4066, %v4084
        %s4093 = sld [smem:[#allocation12 + $0x28a]]
        %v4094 = vstv %s4093
        %v4095 = vmul.f32 %v2123, %v4094
        %v4096 = vmul.f32 %v2129, %v4094
        %v4097 = vmul.f32 %v2135, %v4094
        %v4098 = vmul.f32 %v2141, %v4094
        %4103 = vrot.lane.b32.xlu0 %v4095, 64
        %v4104 = vpop.permute.xlu0 %4103
        %4105 = vrot.lane.b32.xlu0 %v4096, 64
        %v4106 = vpop.permute.xlu0 %4105
        %4107 = vrot.lane.b32.xlu0 %v4097, 64
        %v4108 = vpop.permute.xlu0 %4107
        %4109 = vrot.lane.b32.xlu0 %v4098, 64
        %v4110 = vpop.permute.xlu0 %4109
        %v4115 = vadd.f32 %v4089, %v4104
        %v4116 = vadd.f32 %v4090, %v4106
        %v4117 = vadd.f32 %v4091, %v4108
        %v4118 = vadd.f32 %v4092, %v4110
        %s4119 = sld [smem:[#allocation12 + $0x28b]]
        %v4120 = vstv %s4119
        %v4121 = vmul.f32 %v2123, %v4120
        %v4122 = vmul.f32 %v2129, %v4120
        %v4123 = vmul.f32 %v2135, %v4120
        %v4124 = vmul.f32 %v2141, %v4120
        %4129 = vrot.lane.b32.xlu0 %v4121, 32
        %v4130 = vpop.permute.xlu0 %4129
        %4131 = vrot.lane.b32.xlu0 %v4122, 32
        %v4132 = vpop.permute.xlu0 %4131
        %4133 = vrot.lane.b32.xlu0 %v4123, 32
        %v4134 = vpop.permute.xlu0 %4133
        %4135 = vrot.lane.b32.xlu0 %v4124, 32
        %v4136 = vpop.permute.xlu0 %4135
        %v4141 = vadd.f32 %v4115, %v4130
        %v4142 = vadd.f32 %v4116, %v4132
        %v4143 = vadd.f32 %v4117, %v4134
        %v4144 = vadd.f32 %v4118, %v4136
        %s4145 = sld [smem:[#allocation12 + $0x28c]]
        %v4146 = vstv %s4145
        %v4147 = vmul.f32 %v2125, %v4146
        %v4148 = vmul.f32 %v2131, %v4146
        %v4149 = vmul.f32 %v2137, %v4146
        %v4150 = vmul.f32 %v2143, %v4146
        %v4151 = vadd.f32 %v4141, %v4147
        %v4152 = vadd.f32 %v4142, %v4148
        %v4153 = vadd.f32 %v4143, %v4149
        %v4154 = vadd.f32 %v4144, %v4150
        %s4155 = sld [smem:[#allocation12 + $0x28d]]
        %v4156 = vstv %s4155
        %v4157 = vmul.f32 %v2125, %v4156
        %v4158 = vmul.f32 %v2131, %v4156
        %v4159 = vmul.f32 %v2137, %v4156
        %v4160 = vmul.f32 %v2143, %v4156
        %4165 = vrot.lane.b32.xlu0 %v4157, 96
        %v4166 = vpop.permute.xlu0 %4165
        %4167 = vrot.lane.b32.xlu0 %v4158, 96
        %v4168 = vpop.permute.xlu0 %4167
        %4169 = vrot.lane.b32.xlu0 %v4159, 96
        %v4170 = vpop.permute.xlu0 %4169
        %4171 = vrot.lane.b32.xlu0 %v4160, 96
        %v4172 = vpop.permute.xlu0 %4171
        %v4177 = vadd.f32 %v4151, %v4166
        %v4178 = vadd.f32 %v4152, %v4168
        %v4179 = vadd.f32 %v4153, %v4170
        %v4180 = vadd.f32 %v4154, %v4172
        %s4181 = sld [smem:[#allocation12 + $0x28e]]
        %v4182 = vstv %s4181
        %v4183 = vmul.f32 %v2125, %v4182
        %v4184 = vmul.f32 %v2131, %v4182
        %v4185 = vmul.f32 %v2137, %v4182
        %v4186 = vmul.f32 %v2143, %v4182
        %4191 = vrot.lane.b32.xlu0 %v4183, 64
        %v4192 = vpop.permute.xlu0 %4191
        %4193 = vrot.lane.b32.xlu0 %v4184, 64
        %v4194 = vpop.permute.xlu0 %4193
        %4195 = vrot.lane.b32.xlu0 %v4185, 64
        %v4196 = vpop.permute.xlu0 %4195
        %4197 = vrot.lane.b32.xlu0 %v4186, 64
        %v4198 = vpop.permute.xlu0 %4197
        %v4203 = vadd.f32 %v4177, %v4192
        %v4204 = vadd.f32 %v4178, %v4194
        %v4205 = vadd.f32 %v4179, %v4196
        %v4206 = vadd.f32 %v4180, %v4198
        %s4207 = sld [smem:[#allocation12 + $0x28f]]
        %v4208 = vstv %s4207
        %v4209 = vmul.f32 %v2125, %v4208
        %v4210 = vmul.f32 %v2131, %v4208
        %v4211 = vmul.f32 %v2137, %v4208
        %v4212 = vmul.f32 %v2143, %v4208
        %4217 = vrot.lane.b32.xlu0 %v4209, 32
        %v4218 = vpop.permute.xlu0 %4217
        %4219 = vrot.lane.b32.xlu0 %v4210, 32
        %v4220 = vpop.permute.xlu0 %4219
        %4221 = vrot.lane.b32.xlu0 %v4211, 32
        %v4222 = vpop.permute.xlu0 %4221
        %4223 = vrot.lane.b32.xlu0 %v4212, 32
        %v4224 = vpop.permute.xlu0 %4223
        %v4229 = vadd.f32 %v4203, %v4218
        %v4230 = vadd.f32 %v4204, %v4220
        %v4231 = vadd.f32 %v4205, %v4222
        %v4232 = vadd.f32 %v4206, %v4224
        %s4233 = sld [smem:[#allocation12 + $0x300]]
        %v4234 = vstv %s4233
        %v4235 = vmul.f32 %v1767, %v4234
        %v4236 = vmul.f32 %v1773, %v4234
        %v4237 = vmul.f32 %v1779, %v4234
        %v4238 = vmul.f32 %v1785, %v4234
        %s4239 = sld [smem:[#allocation12 + $0x301]]
        %v4240 = vstv %s4239
        %v4241 = vmul.f32 %v1767, %v4240
        %v4242 = vmul.f32 %v1773, %v4240
        %v4243 = vmul.f32 %v1779, %v4240
        %v4244 = vmul.f32 %v1785, %v4240
        %4249 = vrot.lane.b32.xlu0 %v4241, 96
        %v4250 = vpop.permute.xlu0 %4249
        %4251 = vrot.lane.b32.xlu0 %v4242, 96
        %v4252 = vpop.permute.xlu0 %4251
        %4253 = vrot.lane.b32.xlu0 %v4243, 96
        %v4254 = vpop.permute.xlu0 %4253
        %4255 = vrot.lane.b32.xlu0 %v4244, 96
        %v4256 = vpop.permute.xlu0 %4255
        %v4261 = vadd.f32 %v4235, %v4250
        %v4262 = vadd.f32 %v4236, %v4252
        %v4263 = vadd.f32 %v4237, %v4254
        %v4264 = vadd.f32 %v4238, %v4256
        %s4265 = sld [smem:[#allocation12 + $0x302]]
        %v4266 = vstv %s4265
        %v4267 = vmul.f32 %v1767, %v4266
        %v4268 = vmul.f32 %v1773, %v4266
        %v4269 = vmul.f32 %v1779, %v4266
        %v4270 = vmul.f32 %v1785, %v4266
        %4275 = vrot.lane.b32.xlu0 %v4267, 64
        %v4276 = vpop.permute.xlu0 %4275
        %4277 = vrot.lane.b32.xlu0 %v4268, 64
        %v4278 = vpop.permute.xlu0 %4277
        %4279 = vrot.lane.b32.xlu0 %v4269, 64
        %v4280 = vpop.permute.xlu0 %4279
        %4281 = vrot.lane.b32.xlu0 %v4270, 64
        %v4282 = vpop.permute.xlu0 %4281
        %v4287 = vadd.f32 %v4261, %v4276
        %v4288 = vadd.f32 %v4262, %v4278
        %v4289 = vadd.f32 %v4263, %v4280
        %v4290 = vadd.f32 %v4264, %v4282
        %s4291 = sld [smem:[#allocation12 + $0x303]]
        %v4292 = vstv %s4291
        %v4293 = vmul.f32 %v1767, %v4292
        %v4294 = vmul.f32 %v1773, %v4292
        %v4295 = vmul.f32 %v1779, %v4292
        %v4296 = vmul.f32 %v1785, %v4292
        %4301 = vrot.lane.b32.xlu0 %v4293, 32
        %v4302 = vpop.permute.xlu0 %4301
        %4303 = vrot.lane.b32.xlu0 %v4294, 32
        %v4304 = vpop.permute.xlu0 %4303
        %4305 = vrot.lane.b32.xlu0 %v4295, 32
        %v4306 = vpop.permute.xlu0 %4305
        %4307 = vrot.lane.b32.xlu0 %v4296, 32
        %v4308 = vpop.permute.xlu0 %4307
        %v4313 = vadd.f32 %v4287, %v4302
        %v4314 = vadd.f32 %v4288, %v4304
        %v4315 = vadd.f32 %v4289, %v4306
        %v4316 = vadd.f32 %v4290, %v4308
        %s4317 = sld [smem:[#allocation12 + $0x304]]
        %v4318 = vstv %s4317
        %v4319 = vmul.f32 %v1769, %v4318
        %v4320 = vmul.f32 %v1775, %v4318
        %v4321 = vmul.f32 %v1781, %v4318
        %v4322 = vmul.f32 %v1787, %v4318
        %v4323 = vadd.f32 %v4313, %v4319
        %v4324 = vadd.f32 %v4314, %v4320
        %v4325 = vadd.f32 %v4315, %v4321
        %v4326 = vadd.f32 %v4316, %v4322
        %s4327 = sld [smem:[#allocation12 + $0x305]]
        %v4328 = vstv %s4327
        %v4329 = vmul.f32 %v1769, %v4328
        %v4330 = vmul.f32 %v1775, %v4328
        %v4331 = vmul.f32 %v1781, %v4328
        %v4332 = vmul.f32 %v1787, %v4328
        %4337 = vrot.lane.b32.xlu0 %v4329, 96
        %v4338 = vpop.permute.xlu0 %4337
        %4339 = vrot.lane.b32.xlu0 %v4330, 96
        %v4340 = vpop.permute.xlu0 %4339
        %4341 = vrot.lane.b32.xlu0 %v4331, 96
        %v4342 = vpop.permute.xlu0 %4341
        %4343 = vrot.lane.b32.xlu0 %v4332, 96
        %v4344 = vpop.permute.xlu0 %4343
        %v4349 = vadd.f32 %v4323, %v4338
        %v4350 = vadd.f32 %v4324, %v4340
        %v4351 = vadd.f32 %v4325, %v4342
        %v4352 = vadd.f32 %v4326, %v4344
        %s4353 = sld [smem:[#allocation12 + $0x306]]
        %v4354 = vstv %s4353
        %v4355 = vmul.f32 %v1769, %v4354
        %v4356 = vmul.f32 %v1775, %v4354
        %v4357 = vmul.f32 %v1781, %v4354
        %v4358 = vmul.f32 %v1787, %v4354
        %4363 = vrot.lane.b32.xlu0 %v4355, 64
        %v4364 = vpop.permute.xlu0 %4363
        %4365 = vrot.lane.b32.xlu0 %v4356, 64
        %v4366 = vpop.permute.xlu0 %4365
        %4367 = vrot.lane.b32.xlu0 %v4357, 64
        %v4368 = vpop.permute.xlu0 %4367
        %4369 = vrot.lane.b32.xlu0 %v4358, 64
        %v4370 = vpop.permute.xlu0 %4369
        %v4375 = vadd.f32 %v4349, %v4364
        %v4376 = vadd.f32 %v4350, %v4366
        %v4377 = vadd.f32 %v4351, %v4368
        %v4378 = vadd.f32 %v4352, %v4370
        %s4379 = sld [smem:[#allocation12 + $0x307]]
        %v4380 = vstv %s4379
        %v4381 = vmul.f32 %v1769, %v4380
        %v4382 = vmul.f32 %v1775, %v4380
        %v4383 = vmul.f32 %v1781, %v4380
        %v4384 = vmul.f32 %v1787, %v4380
        %4389 = vrot.lane.b32.xlu0 %v4381, 32
        %v4390 = vpop.permute.xlu0 %4389
        %4391 = vrot.lane.b32.xlu0 %v4382, 32
        %v4392 = vpop.permute.xlu0 %4391
        %4393 = vrot.lane.b32.xlu0 %v4383, 32
        %v4394 = vpop.permute.xlu0 %4393
        %4395 = vrot.lane.b32.xlu0 %v4384, 32
        %v4396 = vpop.permute.xlu0 %4395
        %v4401 = vadd.f32 %v4375, %v4390
        %v4402 = vadd.f32 %v4376, %v4392
        %v4403 = vadd.f32 %v4377, %v4394
        %v4404 = vadd.f32 %v4378, %v4396
        %s4405 = sld [smem:[#allocation12 + $0x308]]
        %v4406 = vstv %s4405
        %v4407 = vmul.f32 %v2123, %v4406
        %v4408 = vmul.f32 %v2129, %v4406
        %v4409 = vmul.f32 %v2135, %v4406
        %v4410 = vmul.f32 %v2141, %v4406
        %v4411 = vadd.f32 %v4401, %v4407
        %v4412 = vadd.f32 %v4402, %v4408
        %v4413 = vadd.f32 %v4403, %v4409
        %v4414 = vadd.f32 %v4404, %v4410
        %s4415 = sld [smem:[#allocation12 + $0x309]]
        %v4416 = vstv %s4415
        %v4417 = vmul.f32 %v2123, %v4416
        %v4418 = vmul.f32 %v2129, %v4416
        %v4419 = vmul.f32 %v2135, %v4416
        %v4420 = vmul.f32 %v2141, %v4416
        %4425 = vrot.lane.b32.xlu0 %v4417, 96
        %v4426 = vpop.permute.xlu0 %4425
        %4427 = vrot.lane.b32.xlu0 %v4418, 96
        %v4428 = vpop.permute.xlu0 %4427
        %4429 = vrot.lane.b32.xlu0 %v4419, 96
        %v4430 = vpop.permute.xlu0 %4429
        %4431 = vrot.lane.b32.xlu0 %v4420, 96
        %v4432 = vpop.permute.xlu0 %4431
        %v4437 = vadd.f32 %v4411, %v4426
        %v4438 = vadd.f32 %v4412, %v4428
        %v4439 = vadd.f32 %v4413, %v4430
        %v4440 = vadd.f32 %v4414, %v4432
        %s4441 = sld [smem:[#allocation12 + $0x30a]]
        %v4442 = vstv %s4441
        %v4443 = vmul.f32 %v2123, %v4442
        %v4444 = vmul.f32 %v2129, %v4442
        %v4445 = vmul.f32 %v2135, %v4442
        %v4446 = vmul.f32 %v2141, %v4442
        %4451 = vrot.lane.b32.xlu0 %v4443, 64
        %v4452 = vpop.permute.xlu0 %4451
        %4453 = vrot.lane.b32.xlu0 %v4444, 64
        %v4454 = vpop.permute.xlu0 %4453
        %4455 = vrot.lane.b32.xlu0 %v4445, 64
        %v4456 = vpop.permute.xlu0 %4455
        %4457 = vrot.lane.b32.xlu0 %v4446, 64
        %v4458 = vpop.permute.xlu0 %4457
        %v4463 = vadd.f32 %v4437, %v4452
        %v4464 = vadd.f32 %v4438, %v4454
        %v4465 = vadd.f32 %v4439, %v4456
        %v4466 = vadd.f32 %v4440, %v4458
        %s4467 = sld [smem:[#allocation12 + $0x30b]]
        %v4468 = vstv %s4467
        %v4469 = vmul.f32 %v2123, %v4468
        %v4470 = vmul.f32 %v2129, %v4468
        %v4471 = vmul.f32 %v2135, %v4468
        %v4472 = vmul.f32 %v2141, %v4468
        %4477 = vrot.lane.b32.xlu0 %v4469, 32
        %v4478 = vpop.permute.xlu0 %4477
        %4479 = vrot.lane.b32.xlu0 %v4470, 32
        %v4480 = vpop.permute.xlu0 %4479
        %4481 = vrot.lane.b32.xlu0 %v4471, 32
        %v4482 = vpop.permute.xlu0 %4481
        %4483 = vrot.lane.b32.xlu0 %v4472, 32
        %v4484 = vpop.permute.xlu0 %4483
        %v4489 = vadd.f32 %v4463, %v4478
        %v4490 = vadd.f32 %v4464, %v4480
        %v4491 = vadd.f32 %v4465, %v4482
        %v4492 = vadd.f32 %v4466, %v4484
        %s4493 = sld [smem:[#allocation12 + $0x30c]]
        %v4494 = vstv %s4493
        %v4495 = vmul.f32 %v2125, %v4494
        %v4496 = vmul.f32 %v2131, %v4494
        %v4497 = vmul.f32 %v2137, %v4494
        %v4498 = vmul.f32 %v2143, %v4494
        %v4499 = vadd.f32 %v4489, %v4495
        %v4500 = vadd.f32 %v4490, %v4496
        %v4501 = vadd.f32 %v4491, %v4497
        %v4502 = vadd.f32 %v4492, %v4498
        %s4503 = sld [smem:[#allocation12 + $0x30d]]
        %v4504 = vstv %s4503
        %v4505 = vmul.f32 %v2125, %v4504
        %v4506 = vmul.f32 %v2131, %v4504
        %v4507 = vmul.f32 %v2137, %v4504
        %v4508 = vmul.f32 %v2143, %v4504
        %4513 = vrot.lane.b32.xlu0 %v4505, 96
        %v4514 = vpop.permute.xlu0 %4513
        %4515 = vrot.lane.b32.xlu0 %v4506, 96
        %v4516 = vpop.permute.xlu0 %4515
        %4517 = vrot.lane.b32.xlu0 %v4507, 96
        %v4518 = vpop.permute.xlu0 %4517
        %4519 = vrot.lane.b32.xlu0 %v4508, 96
        %v4520 = vpop.permute.xlu0 %4519
        %v4525 = vadd.f32 %v4499, %v4514
        %v4526 = vadd.f32 %v4500, %v4516
        %v4527 = vadd.f32 %v4501, %v4518
        %v4528 = vadd.f32 %v4502, %v4520
        %s4529 = sld [smem:[#allocation12 + $0x30e]]
        %v4530 = vstv %s4529
        %v4531 = vmul.f32 %v2125, %v4530
        %v4532 = vmul.f32 %v2131, %v4530
        %v4533 = vmul.f32 %v2137, %v4530
        %v4534 = vmul.f32 %v2143, %v4530
        %4539 = vrot.lane.b32.xlu0 %v4531, 64
        %v4540 = vpop.permute.xlu0 %4539
        %4541 = vrot.lane.b32.xlu0 %v4532, 64
        %v4542 = vpop.permute.xlu0 %4541
        %4543 = vrot.lane.b32.xlu0 %v4533, 64
        %v4544 = vpop.permute.xlu0 %4543
        %4545 = vrot.lane.b32.xlu0 %v4534, 64
        %v4546 = vpop.permute.xlu0 %4545
        %v4551 = vadd.f32 %v4525, %v4540
        %v4552 = vadd.f32 %v4526, %v4542
        %v4553 = vadd.f32 %v4527, %v4544
        %v4554 = vadd.f32 %v4528, %v4546
        %s4555 = sld [smem:[#allocation12 + $0x30f]]
        %v4556 = vstv %s4555
        %v4557 = vmul.f32 %v2125, %v4556
        %v4558 = vmul.f32 %v2131, %v4556
        %v4559 = vmul.f32 %v2137, %v4556
        %v4560 = vmul.f32 %v2143, %v4556
        %4565 = vrot.lane.b32.xlu0 %v4557, 32
        %v4566 = vpop.permute.xlu0 %4565
        %4567 = vrot.lane.b32.xlu0 %v4558, 32
        %v4568 = vpop.permute.xlu0 %4567
        %4569 = vrot.lane.b32.xlu0 %v4559, 32
        %v4570 = vpop.permute.xlu0 %4569
        %4571 = vrot.lane.b32.xlu0 %v4560, 32
        %v4572 = vpop.permute.xlu0 %4571
        %v4577 = vadd.f32 %v4551, %v4566
        %v4578 = vadd.f32 %v4552, %v4568
        %v4579 = vadd.f32 %v4553, %v4570
        %v4580 = vadd.f32 %v4554, %v4572
        %s4581 = sld [smem:[#allocation12 + $0x380]]
        %v4582 = vstv %s4581
        %v4583 = vmul.f32 %v1767, %v4582
        %v4584 = vmul.f32 %v1773, %v4582
        %v4585 = vmul.f32 %v1779, %v4582
        %v4586 = vmul.f32 %v1785, %v4582
        %s4587 = sld [smem:[#allocation12 + $0x381]]
        %v4588 = vstv %s4587
        %v4589 = vmul.f32 %v1767, %v4588
        %v4590 = vmul.f32 %v1773, %v4588
        %v4591 = vmul.f32 %v1779, %v4588
        %v4592 = vmul.f32 %v1785, %v4588
        %4597 = vrot.lane.b32.xlu0 %v4589, 96
        %v4598 = vpop.permute.xlu0 %4597
        %4599 = vrot.lane.b32.xlu0 %v4590, 96
        %v4600 = vpop.permute.xlu0 %4599
        %4601 = vrot.lane.b32.xlu0 %v4591, 96
        %v4602 = vpop.permute.xlu0 %4601
        %4603 = vrot.lane.b32.xlu0 %v4592, 96
        %v4604 = vpop.permute.xlu0 %4603
        %v4609 = vadd.f32 %v4583, %v4598
        %v4610 = vadd.f32 %v4584, %v4600
        %v4611 = vadd.f32 %v4585, %v4602
        %v4612 = vadd.f32 %v4586, %v4604
        %s4613 = sld [smem:[#allocation12 + $0x382]]
        %v4614 = vstv %s4613
        %v4615 = vmul.f32 %v1767, %v4614
        %v4616 = vmul.f32 %v1773, %v4614
        %v4617 = vmul.f32 %v1779, %v4614
        %v4618 = vmul.f32 %v1785, %v4614
        %4623 = vrot.lane.b32.xlu0 %v4615, 64
        %v4624 = vpop.permute.xlu0 %4623
        %4625 = vrot.lane.b32.xlu0 %v4616, 64
        %v4626 = vpop.permute.xlu0 %4625
        %4627 = vrot.lane.b32.xlu0 %v4617, 64
        %v4628 = vpop.permute.xlu0 %4627
        %4629 = vrot.lane.b32.xlu0 %v4618, 64
        %v4630 = vpop.permute.xlu0 %4629
        %v4635 = vadd.f32 %v4609, %v4624
        %v4636 = vadd.f32 %v4610, %v4626
        %v4637 = vadd.f32 %v4611, %v4628
        %v4638 = vadd.f32 %v4612, %v4630
        %s4639 = sld [smem:[#allocation12 + $0x383]]
        %v4640 = vstv %s4639
        %v4641 = vmul.f32 %v1767, %v4640
        %v4642 = vmul.f32 %v1773, %v4640
        %v4643 = vmul.f32 %v1779, %v4640
        %v4644 = vmul.f32 %v1785, %v4640
        %4649 = vrot.lane.b32.xlu0 %v4641, 32
        %v4650 = vpop.permute.xlu0 %4649
        %4651 = vrot.lane.b32.xlu0 %v4642, 32
        %v4652 = vpop.permute.xlu0 %4651
        %4653 = vrot.lane.b32.xlu0 %v4643, 32
        %v4654 = vpop.permute.xlu0 %4653
        %4655 = vrot.lane.b32.xlu0 %v4644, 32
        %v4656 = vpop.permute.xlu0 %4655
        %v4661 = vadd.f32 %v4635, %v4650
        %v4662 = vadd.f32 %v4636, %v4652
        %v4663 = vadd.f32 %v4637, %v4654
        %v4664 = vadd.f32 %v4638, %v4656
        %s4665 = sld [smem:[#allocation12 + $0x384]]
        %v4666 = vstv %s4665
        %v4667 = vmul.f32 %v1769, %v4666
        %v4668 = vmul.f32 %v1775, %v4666
        %v4669 = vmul.f32 %v1781, %v4666
        %v4670 = vmul.f32 %v1787, %v4666
        %v4671 = vadd.f32 %v4661, %v4667
        %v4672 = vadd.f32 %v4662, %v4668
        %v4673 = vadd.f32 %v4663, %v4669
        %v4674 = vadd.f32 %v4664, %v4670
        %s4675 = sld [smem:[#allocation12 + $0x385]]
        %v4676 = vstv %s4675
        %v4677 = vmul.f32 %v1769, %v4676
        %v4678 = vmul.f32 %v1775, %v4676
        %v4679 = vmul.f32 %v1781, %v4676
        %v4680 = vmul.f32 %v1787, %v4676
        %4685 = vrot.lane.b32.xlu0 %v4677, 96
        %v4686 = vpop.permute.xlu0 %4685
        %4687 = vrot.lane.b32.xlu0 %v4678, 96
        %v4688 = vpop.permute.xlu0 %4687
        %4689 = vrot.lane.b32.xlu0 %v4679, 96
        %v4690 = vpop.permute.xlu0 %4689
        %4691 = vrot.lane.b32.xlu0 %v4680, 96
        %v4692 = vpop.permute.xlu0 %4691
        %v4697 = vadd.f32 %v4671, %v4686
        %v4698 = vadd.f32 %v4672, %v4688
        %v4699 = vadd.f32 %v4673, %v4690
        %v4700 = vadd.f32 %v4674, %v4692
        %s4701 = sld [smem:[#allocation12 + $0x386]]
        %v4702 = vstv %s4701
        %v4703 = vmul.f32 %v1769, %v4702
        %v4704 = vmul.f32 %v1775, %v4702
        %v4705 = vmul.f32 %v1781, %v4702
        %v4706 = vmul.f32 %v1787, %v4702
        %4711 = vrot.lane.b32.xlu0 %v4703, 64
        %v4712 = vpop.permute.xlu0 %4711
        %4713 = vrot.lane.b32.xlu0 %v4704, 64
        %v4714 = vpop.permute.xlu0 %4713
        %4715 = vrot.lane.b32.xlu0 %v4705, 64
        %v4716 = vpop.permute.xlu0 %4715
        %4717 = vrot.lane.b32.xlu0 %v4706, 64
        %v4718 = vpop.permute.xlu0 %4717
        %v4723 = vadd.f32 %v4697, %v4712
        %v4724 = vadd.f32 %v4698, %v4714
        %v4725 = vadd.f32 %v4699, %v4716
        %v4726 = vadd.f32 %v4700, %v4718
        %s4727 = sld [smem:[#allocation12 + $0x387]]
        %v4728 = vstv %s4727
        %v4729 = vmul.f32 %v1769, %v4728
        %v4730 = vmul.f32 %v1775, %v4728
        %v4731 = vmul.f32 %v1781, %v4728
        %v4732 = vmul.f32 %v1787, %v4728
        %4737 = vrot.lane.b32.xlu0 %v4729, 32
        %v4738 = vpop.permute.xlu0 %4737
        %4739 = vrot.lane.b32.xlu0 %v4730, 32
        %v4740 = vpop.permute.xlu0 %4739
        %4741 = vrot.lane.b32.xlu0 %v4731, 32
        %v4742 = vpop.permute.xlu0 %4741
        %4743 = vrot.lane.b32.xlu0 %v4732, 32
        %v4744 = vpop.permute.xlu0 %4743
        %v4749 = vadd.f32 %v4723, %v4738
        %v4750 = vadd.f32 %v4724, %v4740
        %v4751 = vadd.f32 %v4725, %v4742
        %v4752 = vadd.f32 %v4726, %v4744
        %s4753 = sld [smem:[#allocation12 + $0x388]]
        %v4754 = vstv %s4753
        %v4755 = vmul.f32 %v2123, %v4754
        %v4756 = vmul.f32 %v2129, %v4754
        %v4757 = vmul.f32 %v2135, %v4754
        %v4758 = vmul.f32 %v2141, %v4754
        %v4759 = vadd.f32 %v4749, %v4755
        %v4760 = vadd.f32 %v4750, %v4756
        %v4761 = vadd.f32 %v4751, %v4757
        %v4762 = vadd.f32 %v4752, %v4758
        %s4763 = sld [smem:[#allocation12 + $0x389]]
        %v4764 = vstv %s4763
        %v4765 = vmul.f32 %v2123, %v4764
        %v4766 = vmul.f32 %v2129, %v4764
        %v4767 = vmul.f32 %v2135, %v4764
        %v4768 = vmul.f32 %v2141, %v4764
        %4773 = vrot.lane.b32.xlu0 %v4765, 96
        %v4774 = vpop.permute.xlu0 %4773
        %4775 = vrot.lane.b32.xlu0 %v4766, 96
        %v4776 = vpop.permute.xlu0 %4775
        %4777 = vrot.lane.b32.xlu0 %v4767, 96
        %v4778 = vpop.permute.xlu0 %4777
        %4779 = vrot.lane.b32.xlu0 %v4768, 96
        %v4780 = vpop.permute.xlu0 %4779
        %v4785 = vadd.f32 %v4759, %v4774
        %v4786 = vadd.f32 %v4760, %v4776
        %v4787 = vadd.f32 %v4761, %v4778
        %v4788 = vadd.f32 %v4762, %v4780
        %s4789 = sld [smem:[#allocation12 + $0x38a]]
        %v4790 = vstv %s4789
        %v4791 = vmul.f32 %v2123, %v4790
        %v4792 = vmul.f32 %v2129, %v4790
        %v4793 = vmul.f32 %v2135, %v4790
        %v4794 = vmul.f32 %v2141, %v4790
        %4799 = vrot.lane.b32.xlu0 %v4791, 64
        %v4800 = vpop.permute.xlu0 %4799
        %4801 = vrot.lane.b32.xlu0 %v4792, 64
        %v4802 = vpop.permute.xlu0 %4801
        %4803 = vrot.lane.b32.xlu0 %v4793, 64
        %v4804 = vpop.permute.xlu0 %4803
        %4805 = vrot.lane.b32.xlu0 %v4794, 64
        %v4806 = vpop.permute.xlu0 %4805
        %v4811 = vadd.f32 %v4785, %v4800
        %v4812 = vadd.f32 %v4786, %v4802
        %v4813 = vadd.f32 %v4787, %v4804
        %v4814 = vadd.f32 %v4788, %v4806
        %s4815 = sld [smem:[#allocation12 + $0x38b]]
        %v4816 = vstv %s4815
        %v4817 = vmul.f32 %v2123, %v4816
        %v4818 = vmul.f32 %v2129, %v4816
        %v4819 = vmul.f32 %v2135, %v4816
        %v4820 = vmul.f32 %v2141, %v4816
        %4825 = vrot.lane.b32.xlu0 %v4817, 32
        %v4826 = vpop.permute.xlu0 %4825
        %4827 = vrot.lane.b32.xlu0 %v4818, 32
        %v4828 = vpop.permute.xlu0 %4827
        %4829 = vrot.lane.b32.xlu0 %v4819, 32
        %v4830 = vpop.permute.xlu0 %4829
        %4831 = vrot.lane.b32.xlu0 %v4820, 32
        %v4832 = vpop.permute.xlu0 %4831
        %v4837 = vadd.f32 %v4811, %v4826
        %v4838 = vadd.f32 %v4812, %v4828
        %v4839 = vadd.f32 %v4813, %v4830
        %v4840 = vadd.f32 %v4814, %v4832
        %s4841 = sld [smem:[#allocation12 + $0x38c]]
        %v4842 = vstv %s4841
        %v4843 = vmul.f32 %v2125, %v4842
        %v4844 = vmul.f32 %v2131, %v4842
        %v4845 = vmul.f32 %v2137, %v4842
        %v4846 = vmul.f32 %v2143, %v4842
        %v4847 = vadd.f32 %v4837, %v4843
        %v4848 = vadd.f32 %v4838, %v4844
        %v4849 = vadd.f32 %v4839, %v4845
        %v4850 = vadd.f32 %v4840, %v4846
        %s4851 = sld [smem:[#allocation12 + $0x38d]]
        %v4852 = vstv %s4851
        %v4853 = vmul.f32 %v2125, %v4852
        %v4854 = vmul.f32 %v2131, %v4852
        %v4855 = vmul.f32 %v2137, %v4852
        %v4856 = vmul.f32 %v2143, %v4852
        %4861 = vrot.lane.b32.xlu0 %v4853, 96
        %v4862 = vpop.permute.xlu0 %4861
        %4863 = vrot.lane.b32.xlu0 %v4854, 96
        %v4864 = vpop.permute.xlu0 %4863
        %4865 = vrot.lane.b32.xlu0 %v4855, 96
        %v4866 = vpop.permute.xlu0 %4865
        %4867 = vrot.lane.b32.xlu0 %v4856, 96
        %v4868 = vpop.permute.xlu0 %4867
        %v4873 = vadd.f32 %v4847, %v4862
        %v4874 = vadd.f32 %v4848, %v4864
        %v4875 = vadd.f32 %v4849, %v4866
        %v4876 = vadd.f32 %v4850, %v4868
        %s4877 = sld [smem:[#allocation12 + $0x38e]]
        %v4878 = vstv %s4877
        %v4879 = vmul.f32 %v2125, %v4878
        %v4880 = vmul.f32 %v2131, %v4878
        %v4881 = vmul.f32 %v2137, %v4878
        %v4882 = vmul.f32 %v2143, %v4878
        %4887 = vrot.lane.b32.xlu0 %v4879, 64
        %v4888 = vpop.permute.xlu0 %4887
        %4889 = vrot.lane.b32.xlu0 %v4880, 64
        %v4890 = vpop.permute.xlu0 %4889
        %4891 = vrot.lane.b32.xlu0 %v4881, 64
        %v4892 = vpop.permute.xlu0 %4891
        %4893 = vrot.lane.b32.xlu0 %v4882, 64
        %v4894 = vpop.permute.xlu0 %4893
        %v4899 = vadd.f32 %v4873, %v4888
        %v4900 = vadd.f32 %v4874, %v4890
        %v4901 = vadd.f32 %v4875, %v4892
        %v4902 = vadd.f32 %v4876, %v4894
        %s4903 = sld [smem:[#allocation12 + $0x38f]]
        %v4904 = vstv %s4903
        %v4905 = vmul.f32 %v2125, %v4904
        %v4906 = vmul.f32 %v2131, %v4904
        %v4907 = vmul.f32 %v2137, %v4904
        %v4908 = vmul.f32 %v2143, %v4904
        %4913 = vrot.lane.b32.xlu0 %v4905, 32
        %v4914 = vpop.permute.xlu0 %4913
        %4915 = vrot.lane.b32.xlu0 %v4906, 32
        %v4916 = vpop.permute.xlu0 %4915
        %4917 = vrot.lane.b32.xlu0 %v4907, 32
        %v4918 = vpop.permute.xlu0 %4917
        %4919 = vrot.lane.b32.xlu0 %v4908, 32
        %v4920 = vpop.permute.xlu0 %4919
        %v4925 = vadd.f32 %v4899, %v4914
        %v4926 = vadd.f32 %v4900, %v4916
        %v4927 = vadd.f32 %v4901, %v4918
        %v4928 = vadd.f32 %v4902, %v4920
        %s4929 = sld [smem:[#allocation12 + $0x400]]
        %v4930 = vstv %s4929
        %v4931 = vmul.f32 %v1767, %v4930
        %v4932 = vmul.f32 %v1773, %v4930
        %v4933 = vmul.f32 %v1779, %v4930
        %v4934 = vmul.f32 %v1785, %v4930
        %s4935 = sld [smem:[#allocation12 + $0x401]]
        %v4936 = vstv %s4935
        %v4937 = vmul.f32 %v1767, %v4936
        %v4938 = vmul.f32 %v1773, %v4936
        %v4939 = vmul.f32 %v1779, %v4936
        %v4940 = vmul.f32 %v1785, %v4936
        %4945 = vrot.lane.b32.xlu0 %v4937, 96
        %v4946 = vpop.permute.xlu0 %4945
        %4947 = vrot.lane.b32.xlu0 %v4938, 96
        %v4948 = vpop.permute.xlu0 %4947
        %4949 = vrot.lane.b32.xlu0 %v4939, 96
        %v4950 = vpop.permute.xlu0 %4949
        %4951 = vrot.lane.b32.xlu0 %v4940, 96
        %v4952 = vpop.permute.xlu0 %4951
        %v4957 = vadd.f32 %v4931, %v4946
        %v4958 = vadd.f32 %v4932, %v4948
        %v4959 = vadd.f32 %v4933, %v4950
        %v4960 = vadd.f32 %v4934, %v4952
        %s4961 = sld [smem:[#allocation12 + $0x402]]
        %v4962 = vstv %s4961
        %v4963 = vmul.f32 %v1767, %v4962
        %v4964 = vmul.f32 %v1773, %v4962
        %v4965 = vmul.f32 %v1779, %v4962
        %v4966 = vmul.f32 %v1785, %v4962
        %4971 = vrot.lane.b32.xlu0 %v4963, 64
        %v4972 = vpop.permute.xlu0 %4971
        %4973 = vrot.lane.b32.xlu0 %v4964, 64
        %v4974 = vpop.permute.xlu0 %4973
        %4975 = vrot.lane.b32.xlu0 %v4965, 64
        %v4976 = vpop.permute.xlu0 %4975
        %4977 = vrot.lane.b32.xlu0 %v4966, 64
        %v4978 = vpop.permute.xlu0 %4977
        %v4983 = vadd.f32 %v4957, %v4972
        %v4984 = vadd.f32 %v4958, %v4974
        %v4985 = vadd.f32 %v4959, %v4976
        %v4986 = vadd.f32 %v4960, %v4978
        %s4987 = sld [smem:[#allocation12 + $0x403]]
        %v4988 = vstv %s4987
        %v4989 = vmul.f32 %v1767, %v4988
        %v4990 = vmul.f32 %v1773, %v4988
        %v4991 = vmul.f32 %v1779, %v4988
        %v4992 = vmul.f32 %v1785, %v4988
        %4997 = vrot.lane.b32.xlu0 %v4989, 32
        %v4998 = vpop.permute.xlu0 %4997
        %4999 = vrot.lane.b32.xlu0 %v4990, 32
        %v5000 = vpop.permute.xlu0 %4999
        %5001 = vrot.lane.b32.xlu0 %v4991, 32
        %v5002 = vpop.permute.xlu0 %5001
        %5003 = vrot.lane.b32.xlu0 %v4992, 32
        %v5004 = vpop.permute.xlu0 %5003
        %v5009 = vadd.f32 %v4983, %v4998
        %v5010 = vadd.f32 %v4984, %v5000
        %v5011 = vadd.f32 %v4985, %v5002
        %v5012 = vadd.f32 %v4986, %v5004
        %s5013 = sld [smem:[#allocation12 + $0x404]]
        %v5014 = vstv %s5013
        %v5015 = vmul.f32 %v1769, %v5014
        %v5016 = vmul.f32 %v1775, %v5014
        %v5017 = vmul.f32 %v1781, %v5014
        %v5018 = vmul.f32 %v1787, %v5014
        %v5019 = vadd.f32 %v5009, %v5015
        %v5020 = vadd.f32 %v5010, %v5016
        %v5021 = vadd.f32 %v5011, %v5017
        %v5022 = vadd.f32 %v5012, %v5018
        %s5023 = sld [smem:[#allocation12 + $0x405]]
        %v5024 = vstv %s5023
        %v5025 = vmul.f32 %v1769, %v5024
        %v5026 = vmul.f32 %v1775, %v5024
        %v5027 = vmul.f32 %v1781, %v5024
        %v5028 = vmul.f32 %v1787, %v5024
        %5033 = vrot.lane.b32.xlu0 %v5025, 96
        %v5034 = vpop.permute.xlu0 %5033
        %5035 = vrot.lane.b32.xlu0 %v5026, 96
        %v5036 = vpop.permute.xlu0 %5035
        %5037 = vrot.lane.b32.xlu0 %v5027, 96
        %v5038 = vpop.permute.xlu0 %5037
        %5039 = vrot.lane.b32.xlu0 %v5028, 96
        %v5040 = vpop.permute.xlu0 %5039
        %v5045 = vadd.f32 %v5019, %v5034
        %v5046 = vadd.f32 %v5020, %v5036
        %v5047 = vadd.f32 %v5021, %v5038
        %v5048 = vadd.f32 %v5022, %v5040
        %s5049 = sld [smem:[#allocation12 + $0x406]]
        %v5050 = vstv %s5049
        %v5051 = vmul.f32 %v1769, %v5050
        %v5052 = vmul.f32 %v1775, %v5050
        %v5053 = vmul.f32 %v1781, %v5050
        %v5054 = vmul.f32 %v1787, %v5050
        %5059 = vrot.lane.b32.xlu0 %v5051, 64
        %v5060 = vpop.permute.xlu0 %5059
        %5061 = vrot.lane.b32.xlu0 %v5052, 64
        %v5062 = vpop.permute.xlu0 %5061
        %5063 = vrot.lane.b32.xlu0 %v5053, 64
        %v5064 = vpop.permute.xlu0 %5063
        %5065 = vrot.lane.b32.xlu0 %v5054, 64
        %v5066 = vpop.permute.xlu0 %5065
        %v5071 = vadd.f32 %v5045, %v5060
        %v5072 = vadd.f32 %v5046, %v5062
        %v5073 = vadd.f32 %v5047, %v5064
        %v5074 = vadd.f32 %v5048, %v5066
        %s5075 = sld [smem:[#allocation12 + $0x407]]
        %v5076 = vstv %s5075
        %v5077 = vmul.f32 %v1769, %v5076
        %v5078 = vmul.f32 %v1775, %v5076
        %v5079 = vmul.f32 %v1781, %v5076
        %v5080 = vmul.f32 %v1787, %v5076
        %5085 = vrot.lane.b32.xlu0 %v5077, 32
        %v5086 = vpop.permute.xlu0 %5085
        %5087 = vrot.lane.b32.xlu0 %v5078, 32
        %v5088 = vpop.permute.xlu0 %5087
        %5089 = vrot.lane.b32.xlu0 %v5079, 32
        %v5090 = vpop.permute.xlu0 %5089
        %5091 = vrot.lane.b32.xlu0 %v5080, 32
        %v5092 = vpop.permute.xlu0 %5091
        %v5097 = vadd.f32 %v5071, %v5086
        %v5098 = vadd.f32 %v5072, %v5088
        %v5099 = vadd.f32 %v5073, %v5090
        %v5100 = vadd.f32 %v5074, %v5092
        %s5101 = sld [smem:[#allocation12 + $0x408]]
        %v5102 = vstv %s5101
        %v5103 = vmul.f32 %v2123, %v5102
        %v5104 = vmul.f32 %v2129, %v5102
        %v5105 = vmul.f32 %v2135, %v5102
        %v5106 = vmul.f32 %v2141, %v5102
        %v5107 = vadd.f32 %v5097, %v5103
        %v5108 = vadd.f32 %v5098, %v5104
        %v5109 = vadd.f32 %v5099, %v5105
        %v5110 = vadd.f32 %v5100, %v5106
        %s5111 = sld [smem:[#allocation12 + $0x409]]
        %v5112 = vstv %s5111
        %v5113 = vmul.f32 %v2123, %v5112
        %v5114 = vmul.f32 %v2129, %v5112
        %v5115 = vmul.f32 %v2135, %v5112
        %v5116 = vmul.f32 %v2141, %v5112
        %5121 = vrot.lane.b32.xlu0 %v5113, 96
        %v5122 = vpop.permute.xlu0 %5121
        %5123 = vrot.lane.b32.xlu0 %v5114, 96
        %v5124 = vpop.permute.xlu0 %5123
        %5125 = vrot.lane.b32.xlu0 %v5115, 96
        %v5126 = vpop.permute.xlu0 %5125
        %5127 = vrot.lane.b32.xlu0 %v5116, 96
        %v5128 = vpop.permute.xlu0 %5127
        %v5133 = vadd.f32 %v5107, %v5122
        %v5134 = vadd.f32 %v5108, %v5124
        %v5135 = vadd.f32 %v5109, %v5126
        %v5136 = vadd.f32 %v5110, %v5128
        %s5137 = sld [smem:[#allocation12 + $0x40a]]
        %v5138 = vstv %s5137
        %v5139 = vmul.f32 %v2123, %v5138
        %v5140 = vmul.f32 %v2129, %v5138
        %v5141 = vmul.f32 %v2135, %v5138
        %v5142 = vmul.f32 %v2141, %v5138
        %5147 = vrot.lane.b32.xlu0 %v5139, 64
        %v5148 = vpop.permute.xlu0 %5147
        %5149 = vrot.lane.b32.xlu0 %v5140, 64
        %v5150 = vpop.permute.xlu0 %5149
        %5151 = vrot.lane.b32.xlu0 %v5141, 64
        %v5152 = vpop.permute.xlu0 %5151
        %5153 = vrot.lane.b32.xlu0 %v5142, 64
        %v5154 = vpop.permute.xlu0 %5153
        %v5159 = vadd.f32 %v5133, %v5148
        %v5160 = vadd.f32 %v5134, %v5150
        %v5161 = vadd.f32 %v5135, %v5152
        %v5162 = vadd.f32 %v5136, %v5154
        %s5163 = sld [smem:[#allocation12 + $0x40b]]
        %v5164 = vstv %s5163
        %v5165 = vmul.f32 %v2123, %v5164
        %v5166 = vmul.f32 %v2129, %v5164
        %v5167 = vmul.f32 %v2135, %v5164
        %v5168 = vmul.f32 %v2141, %v5164
        %5173 = vrot.lane.b32.xlu0 %v5165, 32
        %v5174 = vpop.permute.xlu0 %5173
        %5175 = vrot.lane.b32.xlu0 %v5166, 32
        %v5176 = vpop.permute.xlu0 %5175
        %5177 = vrot.lane.b32.xlu0 %v5167, 32
        %v5178 = vpop.permute.xlu0 %5177
        %5179 = vrot.lane.b32.xlu0 %v5168, 32
        %v5180 = vpop.permute.xlu0 %5179
        %v5185 = vadd.f32 %v5159, %v5174
        %v5186 = vadd.f32 %v5160, %v5176
        %v5187 = vadd.f32 %v5161, %v5178
        %v5188 = vadd.f32 %v5162, %v5180
        %s5189 = sld [smem:[#allocation12 + $0x40c]]
        %v5190 = vstv %s5189
        %v5191 = vmul.f32 %v2125, %v5190
        %v5192 = vmul.f32 %v2131, %v5190
        %v5193 = vmul.f32 %v2137, %v5190
        %v5194 = vmul.f32 %v2143, %v5190
        %v5195 = vadd.f32 %v5185, %v5191
        %v5196 = vadd.f32 %v5186, %v5192
        %v5197 = vadd.f32 %v5187, %v5193
        %v5198 = vadd.f32 %v5188, %v5194
        %s5199 = sld [smem:[#allocation12 + $0x40d]]
        %v5200 = vstv %s5199
        %v5201 = vmul.f32 %v2125, %v5200
        %v5202 = vmul.f32 %v2131, %v5200
        %v5203 = vmul.f32 %v2137, %v5200
        %v5204 = vmul.f32 %v2143, %v5200
        %5209 = vrot.lane.b32.xlu0 %v5201, 96
        %v5210 = vpop.permute.xlu0 %5209
        %5211 = vrot.lane.b32.xlu0 %v5202, 96
        %v5212 = vpop.permute.xlu0 %5211
        %5213 = vrot.lane.b32.xlu0 %v5203, 96
        %v5214 = vpop.permute.xlu0 %5213
        %5215 = vrot.lane.b32.xlu0 %v5204, 96
        %v5216 = vpop.permute.xlu0 %5215
        %v5221 = vadd.f32 %v5195, %v5210
        %v5222 = vadd.f32 %v5196, %v5212
        %v5223 = vadd.f32 %v5197, %v5214
        %v5224 = vadd.f32 %v5198, %v5216
        %s5225 = sld [smem:[#allocation12 + $0x40e]]
        %v5226 = vstv %s5225
        %v5227 = vmul.f32 %v2125, %v5226
        %v5228 = vmul.f32 %v2131, %v5226
        %v5229 = vmul.f32 %v2137, %v5226
        %v5230 = vmul.f32 %v2143, %v5226
        %5235 = vrot.lane.b32.xlu0 %v5227, 64
        %v5236 = vpop.permute.xlu0 %5235
        %5237 = vrot.lane.b32.xlu0 %v5228, 64
        %v5238 = vpop.permute.xlu0 %5237
        %5239 = vrot.lane.b32.xlu0 %v5229, 64
        %v5240 = vpop.permute.xlu0 %5239
        %5241 = vrot.lane.b32.xlu0 %v5230, 64
        %v5242 = vpop.permute.xlu0 %5241
        %v5247 = vadd.f32 %v5221, %v5236
        %v5248 = vadd.f32 %v5222, %v5238
        %v5249 = vadd.f32 %v5223, %v5240
        %v5250 = vadd.f32 %v5224, %v5242
        %s5251 = sld [smem:[#allocation12 + $0x40f]]
        %v5252 = vstv %s5251
        %v5253 = vmul.f32 %v2125, %v5252
        %v5254 = vmul.f32 %v2131, %v5252
        %v5255 = vmul.f32 %v2137, %v5252
        %v5256 = vmul.f32 %v2143, %v5252
        %5261 = vrot.lane.b32.xlu0 %v5253, 32
        %v5262 = vpop.permute.xlu0 %5261
        %5263 = vrot.lane.b32.xlu0 %v5254, 32
        %v5264 = vpop.permute.xlu0 %5263
        %5265 = vrot.lane.b32.xlu0 %v5255, 32
        %v5266 = vpop.permute.xlu0 %5265
        %5267 = vrot.lane.b32.xlu0 %v5256, 32
        %v5268 = vpop.permute.xlu0 %5267
        %v5273 = vadd.f32 %v5247, %v5262
        %v5274 = vadd.f32 %v5248, %v5264
        %v5275 = vadd.f32 %v5249, %v5266
        %v5276 = vadd.f32 %v5250, %v5268
        %v5277 = vld [vmem:[#allocation10] sm:$0xff]
        %v5278 = vld [vmem:[#allocation10 + $0x8] sm:$0xff]
        %v5279 = vld [vmem:[#allocation10 + $0x10] sm:$0xff]
        %v5280 = vld [vmem:[#allocation10 + $0x18] sm:$0xff]
        %s5281 = scalar_lea.vmem [#allocation10], 32
        %v5282 = vld [vmem:[%s5281] sm:$0xff]
        %v5283 = vld [vmem:[%s5281 + $0x8] sm:$0xff]
        %v5284 = vld [vmem:[%s5281 + $0x10] sm:$0xff]
        %v5285 = vld [vmem:[%s5281 + $0x18] sm:$0xff]
        %v5287 = vsel %vm449, %v2837, 0
        %v5290 = vsel %vm449, %v2838, 0
        %v5293 = vsel %vm449, %v2839, 0
        %v5296 = vsel %vm449, %v2840, 0
        %5298 = vmatprep.subr.mxu0 0.0
        %5299 = vmatpush1.msra.mxu0 %v5282
        %5300 = vmatprep.subr.mxu0 0.0
        %5301 = vmatpush1.msra.mxu0 %v5283
        %5302 = vmatprep.subr.mxu0 0.0
        %5303 = vmatpush1.msra.mxu0 %v5284
        %5304 = vmatprep.subr.mxu0 0.0
        %5305 = vmatpush1.msra.mxu0 %v5285
        %5306 = vmatprep.subr.mxu0 0.0
        %5307 = vmatpush1.msra.mxu0 0.0
        %5308 = vmatprep.subr.mxu0 0.0
        %5309 = vmatpush1.msra.mxu0 0.0
        %5310 = vmatprep.subr.mxu0 0.0
        %5311 = vmatpush1.msra.mxu0 0.0
        %5312 = vmatprep.subr.mxu0 0.0
        %5313 = vmatpush1.msra.mxu0 0.0
        %5314 = vmatprep.subr.mxu0 0.0
        %5315 = vmatpush1.msra.mxu0 0.0
        %5316 = vmatprep.subr.mxu0 0.0
        %5317 = vmatpush1.msra.mxu0 0.0
        %5318 = vmatprep.subr.mxu0 0.0
        %5319 = vmatpush1.msra.mxu0 0.0
        %5320 = vmatprep.subr.mxu0 0.0
        %5321 = vmatpush1.msra.mxu0 0.0
        %5322 = vmatprep.subr.mxu0 0.0
        %5323 = vmatpush1.msra.mxu0 0.0
        %5324 = vmatprep.subr.mxu0 0.0
        %5325 = vmatpush1.msra.mxu0 0.0
        %5326 = vmatprep.subr.mxu0 0.0
        %5327 = vmatpush1.msra.mxu0 0.0
        %5328 = vmatprep.subr.mxu0 0.0
        %5329 = vmatpush1.msra.mxu0 0.0
        %5330 = vmatprep.subr.mxu0 0.0
        %5331 = vmatpush1.msra.mxu0 0.0
        %5332 = vmatprep.subr.mxu0 0.0
        %5333 = vmatpush1.msra.mxu0 0.0
        %5334 = vmatprep.subr.mxu0 0.0
        %5335 = vmatpush1.msra.mxu0 0.0
        %5336 = vmatprep.subr.mxu0 0.0
        %5337 = vmatpush1.msra.mxu0 0.0
        %5338 = vmatprep.subr.mxu0 0.0
        %5339 = vmatpush1.msra.mxu0 0.0
        %5340 = vmatprep.subr.mxu0 0.0
        %5341 = vmatpush1.msra.mxu0 0.0
        %5342 = vmatprep.subr.mxu0 0.0
        %5343 = vmatpush1.msra.mxu0 0.0
        %5344 = vmatprep.subr.mxu0 0.0
        %5345 = vmatpush1.msra.mxu0 0.0
        %5346 = vmatprep.subr.mxu0 0.0
        %5347 = vmatpush1.msra.mxu0 0.0
        %5348 = vmatprep.subr.mxu0 0.0
        %5349 = vmatpush1.msra.mxu0 0.0
        %5350 = vmatprep.subr.mxu0 0.0
        %5351 = vmatpush1.msra.mxu0 0.0
        %5352 = vmatprep.subr.mxu0 0.0
        %5353 = vmatpush1.msra.mxu0 0.0
        %5354 = vmatprep.subr.mxu0 0.0
        %5355 = vmatpush1.msra.mxu0 0.0
        %5356 = vmatprep.subr.mxu0 0.0
        %5357 = vmatpush1.msra.mxu0 0.0
        %5358 = vmatprep.subr.mxu0 0.0
        %5359 = vmatpush1.msra.mxu0 0.0
        %5360 = vmatprep.subr.mxu0 0.0
        %5361 = vmatpush1.msra.mxu0 0.0
        %5362 = vmatprep.mubr.f32.mxu0 0.0
        %5363 = vmatmul.mubr.f32.gmra.mrb[0].mxu0 %v5287
        %v5364 = vpop.f32.mrb[0].mxu0
        %v5365 = vadd.f32 0.0, %v5364
        %v5366 = vpop.f32.mrb[0].mxu0
        %5367 = vmatprep.mubr.f32.mxu0 0.0
        %5368 = vmatmul.mubr.f32.gmra.mrb[0].mxu0 %v5290
        %v5369 = vpop.f32.mrb[0].mxu0
        %v5370 = vadd.f32 0.0, %v5369
        %v5371 = vpop.f32.mrb[0].mxu0
        %5372 = vmatprep.mubr.f32.mxu0 0.0
        %5373 = vmatmul.mubr.f32.gmra.mrb[0].mxu0 %v5293
        %v5374 = vpop.f32.mrb[0].mxu0
        %v5375 = vadd.f32 0.0, %v5374
        %v5376 = vpop.f32.mrb[0].mxu0
        %5377 = vmatprep.mubr.f32.mxu0 0.0
        %5378 = vmatmul.mubr.f32.gmra.mrb[0].mxu0 %v5296
        %v5379 = vpop.f32.mrb[0].mxu0
        %v5380 = vadd.f32 0.0, %v5379
        %v5381 = vpop.f32.mrb[0].mxu0
        %5382 = vdwg.mxu0
        %v5384 = vsel %vm449, %v2489, 0
        %v5387 = vsel %vm449, %v2490, 0
        %v5390 = vsel %vm449, %v2491, 0
        %v5393 = vsel %vm449, %v2492, 0
        %5395 = vmatprep.subr.mxu0 0.0
        %5396 = vmatpush1.msra.mxu0 %v5277
        %5397 = vmatprep.subr.mxu0 0.0
        %5398 = vmatpush1.msra.mxu0 %v5278
        %5399 = vmatprep.subr.mxu0 0.0
        %5400 = vmatpush1.msra.mxu0 %v5279
        %5401 = vmatprep.subr.mxu0 0.0
        %5402 = vmatpush1.msra.mxu0 %v5280
        %5403 = vmatprep.subr.mxu0 0.0
        %5404 = vmatpush1.msra.mxu0 0.0
        %5405 = vmatprep.subr.mxu0 0.0
        %5406 = vmatpush1.msra.mxu0 0.0
        %5407 = vmatprep.subr.mxu0 0.0
        %5408 = vmatpush1.msra.mxu0 0.0
        %5409 = vmatprep.subr.mxu0 0.0
        %5410 = vmatpush1.msra.mxu0 0.0
        %5411 = vmatprep.subr.mxu0 0.0
        %5412 = vmatpush1.msra.mxu0 0.0
        %5413 = vmatprep.subr.mxu0 0.0
        %5414 = vmatpush1.msra.mxu0 0.0
        %5415 = vmatprep.subr.mxu0 0.0
        %5416 = vmatpush1.msra.mxu0 0.0
        %5417 = vmatprep.subr.mxu0 0.0
        %5418 = vmatpush1.msra.mxu0 0.0
        %5419 = vmatprep.subr.mxu0 0.0
        %5420 = vmatpush1.msra.mxu0 0.0
        %5421 = vmatprep.subr.mxu0 0.0
        %5422 = vmatpush1.msra.mxu0 0.0
        %5423 = vmatprep.subr.mxu0 0.0
        %5424 = vmatpush1.msra.mxu0 0.0
        %5425 = vmatprep.subr.mxu0 0.0
        %5426 = vmatpush1.msra.mxu0 0.0
        %5427 = vmatprep.subr.mxu0 0.0
        %5428 = vmatpush1.msra.mxu0 0.0
        %5429 = vmatprep.subr.mxu0 0.0
        %5430 = vmatpush1.msra.mxu0 0.0
        %5431 = vmatprep.subr.mxu0 0.0
        %5432 = vmatpush1.msra.mxu0 0.0
        %5433 = vmatprep.subr.mxu0 0.0
        %5434 = vmatpush1.msra.mxu0 0.0
        %5435 = vmatprep.subr.mxu0 0.0
        %5436 = vmatpush1.msra.mxu0 0.0
        %5437 = vmatprep.subr.mxu0 0.0
        %5438 = vmatpush1.msra.mxu0 0.0
        %5439 = vmatprep.subr.mxu0 0.0
        %5440 = vmatpush1.msra.mxu0 0.0
        %5441 = vmatprep.subr.mxu0 0.0
        %5442 = vmatpush1.msra.mxu0 0.0
        %5443 = vmatprep.subr.mxu0 0.0
        %5444 = vmatpush1.msra.mxu0 0.0
        %5445 = vmatprep.subr.mxu0 0.0
        %5446 = vmatpush1.msra.mxu0 0.0
        %5447 = vmatprep.subr.mxu0 0.0
        %5448 = vmatpush1.msra.mxu0 0.0
        %5449 = vmatprep.subr.mxu0 0.0
        %5450 = vmatpush1.msra.mxu0 0.0
        %5451 = vmatprep.subr.mxu0 0.0
        %5452 = vmatpush1.msra.mxu0 0.0
        %5453 = vmatprep.subr.mxu0 0.0
        %5454 = vmatpush1.msra.mxu0 0.0
        %5455 = vmatprep.subr.mxu0 0.0
        %5456 = vmatpush1.msra.mxu0 0.0
        %5457 = vmatprep.subr.mxu0 0.0
        %5458 = vmatpush1.msra.mxu0 0.0
        %5459 = vmatprep.mubr.f32.mxu0 0.0
        %5460 = vmatmul.mubr.f32.gmra.mrb[0].mxu0 %v5384
        %v5461 = vpop.f32.mrb[0].mxu0
        %v5462 = vadd.f32 %v5365, %v5461
        %v5463 = vpop.f32.mrb[0].mxu0
        %5464 = vmatprep.mubr.f32.mxu0 0.0
        %5465 = vmatmul.mubr.f32.gmra.mrb[0].mxu0 %v5387
        %v5466 = vpop.f32.mrb[0].mxu0
        %v5467 = vadd.f32 %v5370, %v5466
        %v5468 = vpop.f32.mrb[0].mxu0
        %5469 = vmatprep.mubr.f32.mxu0 0.0
        %5470 = vmatmul.mubr.f32.gmra.mrb[0].mxu0 %v5390
        %v5471 = vpop.f32.mrb[0].mxu0
        %v5472 = vadd.f32 %v5375, %v5471
        %v5473 = vpop.f32.mrb[0].mxu0
        %5474 = vmatprep.mubr.f32.mxu0 0.0
        %5475 = vmatmul.mubr.f32.gmra.mrb[0].mxu0 %v5393
        %v5476 = vpop.f32.mrb[0].mxu0
        %v5477 = vadd.f32 %v5380, %v5476
        %v5478 = vpop.f32.mrb[0].mxu0
        %5479 = vdwg.mxu0
        %s5480 = scalar_lea.vmem [#allocation10], 64
        %v5481 = vld [vmem:[%s5480] sm:$0xff]
        %v5482 = vld [vmem:[%s5480 + $0x8] sm:$0xff]
        %v5483 = vld [vmem:[%s5480 + $0x10] sm:$0xff]
        %v5484 = vld [vmem:[%s5480 + $0x18] sm:$0xff]
        %v5486 = vsel %vm449, %v3185, 0
        %v5489 = vsel %vm449, %v3186, 0
        %v5492 = vsel %vm449, %v3187, 0
        %v5495 = vsel %vm449, %v3188, 0
        %5497 = vmatprep.subr.mxu0 0.0
        %5498 = vmatpush1.msra.mxu0 %v5481
        %5499 = vmatprep.subr.mxu0 0.0
        %5500 = vmatpush1.msra.mxu0 %v5482
        %5501 = vmatprep.subr.mxu0 0.0
        %5502 = vmatpush1.msra.mxu0 %v5483
        %5503 = vmatprep.subr.mxu0 0.0
        %5504 = vmatpush1.msra.mxu0 %v5484
        %5505 = vmatprep.subr.mxu0 0.0
        %5506 = vmatpush1.msra.mxu0 0.0
        %5507 = vmatprep.subr.mxu0 0.0
        %5508 = vmatpush1.msra.mxu0 0.0
        %5509 = vmatprep.subr.mxu0 0.0
        %5510 = vmatpush1.msra.mxu0 0.0
        %5511 = vmatprep.subr.mxu0 0.0
        %5512 = vmatpush1.msra.mxu0 0.0
        %5513 = vmatprep.subr.mxu0 0.0
        %5514 = vmatpush1.msra.mxu0 0.0
        %5515 = vmatprep.subr.mxu0 0.0
        %5516 = vmatpush1.msra.mxu0 0.0
        %5517 = vmatprep.subr.mxu0 0.0
        %5518 = vmatpush1.msra.mxu0 0.0
        %5519 = vmatprep.subr.mxu0 0.0
        %5520 = vmatpush1.msra.mxu0 0.0
        %5521 = vmatprep.subr.mxu0 0.0
        %5522 = vmatpush1.msra.mxu0 0.0
        %5523 = vmatprep.subr.mxu0 0.0
        %5524 = vmatpush1.msra.mxu0 0.0
        %5525 = vmatprep.subr.mxu0 0.0
        %5526 = vmatpush1.msra.mxu0 0.0
        %5527 = vmatprep.subr.mxu0 0.0
        %5528 = vmatpush1.msra.mxu0 0.0
        %5529 = vmatprep.subr.mxu0 0.0
        %5530 = vmatpush1.msra.mxu0 0.0
        %5531 = vmatprep.subr.mxu0 0.0
        %5532 = vmatpush1.msra.mxu0 0.0
        %5533 = vmatprep.subr.mxu0 0.0
        %5534 = vmatpush1.msra.mxu0 0.0
        %5535 = vmatprep.subr.mxu0 0.0
        %5536 = vmatpush1.msra.mxu0 0.0
        %5537 = vmatprep.subr.mxu0 0.0
        %5538 = vmatpush1.msra.mxu0 0.0
        %5539 = vmatprep.subr.mxu0 0.0
        %5540 = vmatpush1.msra.mxu0 0.0
        %5541 = vmatprep.subr.mxu0 0.0
        %5542 = vmatpush1.msra.mxu0 0.0
        %5543 = vmatprep.subr.mxu0 0.0
        %5544 = vmatpush1.msra.mxu0 0.0
        %5545 = vmatprep.subr.mxu0 0.0
        %5546 = vmatpush1.msra.mxu0 0.0
        %5547 = vmatprep.subr.mxu0 0.0
        %5548 = vmatpush1.msra.mxu0 0.0
        %5549 = vmatprep.subr.mxu0 0.0
        %5550 = vmatpush1.msra.mxu0 0.0
        %5551 = vmatprep.subr.mxu0 0.0
        %5552 = vmatpush1.msra.mxu0 0.0
        %5553 = vmatprep.subr.mxu0 0.0
        %5554 = vmatpush1.msra.mxu0 0.0
        %5555 = vmatprep.subr.mxu0 0.0
        %5556 = vmatpush1.msra.mxu0 0.0
        %5557 = vmatprep.subr.mxu0 0.0
        %5558 = vmatpush1.msra.mxu0 0.0
        %5559 = vmatprep.subr.mxu0 0.0
        %5560 = vmatpush1.msra.mxu0 0.0
        %5561 = vmatprep.mubr.f32.mxu0 0.0
        %5562 = vmatmul.mubr.f32.gmra.mrb[0].mxu0 %v5486
        %v5563 = vpop.f32.mrb[0].mxu0
        %v5564 = vadd.f32 0.0, %v5563
        %v5565 = vpop.f32.mrb[0].mxu0
        %5566 = vmatprep.mubr.f32.mxu0 0.0
        %5567 = vmatmul.mubr.f32.gmra.mrb[0].mxu0 %v5489
        %v5568 = vpop.f32.mrb[0].mxu0
        %v5569 = vadd.f32 0.0, %v5568
        %v5570 = vpop.f32.mrb[0].mxu0
        %5571 = vmatprep.mubr.f32.mxu0 0.0
        %5572 = vmatmul.mubr.f32.gmra.mrb[0].mxu0 %v5492
        %v5573 = vpop.f32.mrb[0].mxu0
        %v5574 = vadd.f32 0.0, %v5573
        %v5575 = vpop.f32.mrb[0].mxu0
        %5576 = vmatprep.mubr.f32.mxu0 0.0
        %5577 = vmatmul.mubr.f32.gmra.mrb[0].mxu0 %v5495
        %v5578 = vpop.f32.mrb[0].mxu0
        %v5579 = vadd.f32 0.0, %v5578
        %v5580 = vpop.f32.mrb[0].mxu0
        %5581 = vdwg.mxu0
        %v5582 = vadd.f32 %v5462, %v5564
        %v5583 = vadd.f32 %v5467, %v5569
        %v5584 = vadd.f32 %v5472, %v5574
        %v5585 = vadd.f32 %v5477, %v5579
        %v5586 = vld [vmem:[%s3] sm:$0xff]
        %v5587 = vld [vmem:[%s3 + $0x8] sm:$0xff]
        %v5588 = vld [vmem:[%s3 + $0x10] sm:$0xff]
        %v5589 = vld [vmem:[%s3 + $0x18] sm:$0xff]
        %v5590 = vld [vmem:[%s3 + $0x20] sm:$0xff]
        %v5591 = vld [vmem:[%s3 + $0x28] sm:$0xff]
        %v5592 = vld [vmem:[%s3 + $0x30] sm:$0xff]
        %v5593 = vld [vmem:[%s3 + $0x38] sm:$0xff]
        %v5595 = vsel %vm449, %v3881, 0
        %v5598 = vsel %vm449, %v3882, 0
        %v5601 = vsel %vm449, %v3883, 0
        %v5604 = vsel %vm449, %v3884, 0
        %5606 = vmatprep.subr.mxu0 0.0
        %5607 = vmatpush1.msra.mxu0 %v5282
        %5608 = vmatprep.subr.mxu0 0.0
        %5609 = vmatpush1.msra.mxu0 %v5283
        %5610 = vmatprep.subr.mxu0 0.0
        %5611 = vmatpush1.msra.mxu0 %v5284
        %5612 = vmatprep.subr.mxu0 0.0
        %5613 = vmatpush1.msra.mxu0 %v5285
        %5614 = vmatprep.subr.mxu0 0.0
        %5615 = vmatpush1.msra.mxu0 0.0
        %5616 = vmatprep.subr.mxu0 0.0
        %5617 = vmatpush1.msra.mxu0 0.0
        %5618 = vmatprep.subr.mxu0 0.0
        %5619 = vmatpush1.msra.mxu0 0.0
        %5620 = vmatprep.subr.mxu0 0.0
        %5621 = vmatpush1.msra.mxu0 0.0
        %5622 = vmatprep.subr.mxu0 0.0
        %5623 = vmatpush1.msra.mxu0 0.0
        %5624 = vmatprep.subr.mxu0 0.0
        %5625 = vmatpush1.msra.mxu0 0.0
        %5626 = vmatprep.subr.mxu0 0.0
        %5627 = vmatpush1.msra.mxu0 0.0
        %5628 = vmatprep.subr.mxu0 0.0
        %5629 = vmatpush1.msra.mxu0 0.0
        %5630 = vmatprep.subr.mxu0 0.0
        %5631 = vmatpush1.msra.mxu0 0.0
        %5632 = vmatprep.subr.mxu0 0.0
        %5633 = vmatpush1.msra.mxu0 0.0
        %5634 = vmatprep.subr.mxu0 0.0
        %5635 = vmatpush1.msra.mxu0 0.0
        %5636 = vmatprep.subr.mxu0 0.0
        %5637 = vmatpush1.msra.mxu0 0.0
        %5638 = vmatprep.subr.mxu0 0.0
        %5639 = vmatpush1.msra.mxu0 0.0
        %5640 = vmatprep.subr.mxu0 0.0
        %5641 = vmatpush1.msra.mxu0 0.0
        %5642 = vmatprep.subr.mxu0 0.0
        %5643 = vmatpush1.msra.mxu0 0.0
        %5644 = vmatprep.subr.mxu0 0.0
        %5645 = vmatpush1.msra.mxu0 0.0
        %5646 = vmatprep.subr.mxu0 0.0
        %5647 = vmatpush1.msra.mxu0 0.0
        %5648 = vmatprep.subr.mxu0 0.0
        %5649 = vmatpush1.msra.mxu0 0.0
        %5650 = vmatprep.subr.mxu0 0.0
        %5651 = vmatpush1.msra.mxu0 0.0
        %5652 = vmatprep.subr.mxu0 0.0
        %5653 = vmatpush1.msra.mxu0 0.0
        %5654 = vmatprep.subr.mxu0 0.0
        %5655 = vmatpush1.msra.mxu0 0.0
        %5656 = vmatprep.subr.mxu0 0.0
        %5657 = vmatpush1.msra.mxu0 0.0
        %5658 = vmatprep.subr.mxu0 0.0
        %5659 = vmatpush1.msra.mxu0 0.0
        %5660 = vmatprep.subr.mxu0 0.0
        %5661 = vmatpush1.msra.mxu0 0.0
        %5662 = vmatprep.subr.mxu0 0.0
        %5663 = vmatpush1.msra.mxu0 0.0
        %5664 = vmatprep.subr.mxu0 0.0
        %5665 = vmatpush1.msra.mxu0 0.0
        %5666 = vmatprep.subr.mxu0 0.0
        %5667 = vmatpush1.msra.mxu0 0.0
        %5668 = vmatprep.subr.mxu0 0.0
        %5669 = vmatpush1.msra.mxu0 0.0
        %5670 = vmatprep.mubr.f32.mxu0 0.0
        %5671 = vmatmul.mubr.f32.gmra.mrb[0].mxu0 %v5595
        %v5672 = vpop.f32.mrb[0].mxu0
        %v5673 = vadd.f32 0.0, %v5672
        %v5674 = vpop.f32.mrb[0].mxu0
        %5675 = vmatprep.mubr.f32.mxu0 0.0
        %5676 = vmatmul.mubr.f32.gmra.mrb[0].mxu0 %v5598
        %v5677 = vpop.f32.mrb[0].mxu0
        %v5678 = vadd.f32 0.0, %v5677
        %v5679 = vpop.f32.mrb[0].mxu0
        %5680 = vmatprep.mubr.f32.mxu0 0.0
        %5681 = vmatmul.mubr.f32.gmra.mrb[0].mxu0 %v5601
        %v5682 = vpop.f32.mrb[0].mxu0
        %v5683 = vadd.f32 0.0, %v5682
        %v5684 = vpop.f32.mrb[0].mxu0
        %5685 = vmatprep.mubr.f32.mxu0 0.0
        %5686 = vmatmul.mubr.f32.gmra.mrb[0].mxu0 %v5604
        %v5687 = vpop.f32.mrb[0].mxu0
        %v5688 = vadd.f32 0.0, %v5687
        %v5689 = vpop.f32.mrb[0].mxu0
        %5690 = vdwg.mxu0
        %v5692 = vsel %vm449, %v3533, 0
        %v5695 = vsel %vm449, %v3534, 0
        %v5698 = vsel %vm449, %v3535, 0
        %v5701 = vsel %vm449, %v3536, 0
        %5703 = vmatprep.subr.mxu0 0.0
        %5704 = vmatpush1.msra.mxu0 %v5277
        %5705 = vmatprep.subr.mxu0 0.0
        %5706 = vmatpush1.msra.mxu0 %v5278
        %5707 = vmatprep.subr.mxu0 0.0
        %5708 = vmatpush1.msra.mxu0 %v5279
        %5709 = vmatprep.subr.mxu0 0.0
        %5710 = vmatpush1.msra.mxu0 %v5280
        %5711 = vmatprep.subr.mxu0 0.0
        %5712 = vmatpush1.msra.mxu0 0.0
        %5713 = vmatprep.subr.mxu0 0.0
        %5714 = vmatpush1.msra.mxu0 0.0
        %5715 = vmatprep.subr.mxu0 0.0
        %5716 = vmatpush1.msra.mxu0 0.0
        %5717 = vmatprep.subr.mxu0 0.0
        %5718 = vmatpush1.msra.mxu0 0.0
        %5719 = vmatprep.subr.mxu0 0.0
        %5720 = vmatpush1.msra.mxu0 0.0
        %5721 = vmatprep.subr.mxu0 0.0
        %5722 = vmatpush1.msra.mxu0 0.0
        %5723 = vmatprep.subr.mxu0 0.0
        %5724 = vmatpush1.msra.mxu0 0.0
        %5725 = vmatprep.subr.mxu0 0.0
        %5726 = vmatpush1.msra.mxu0 0.0
        %5727 = vmatprep.subr.mxu0 0.0
        %5728 = vmatpush1.msra.mxu0 0.0
        %5729 = vmatprep.subr.mxu0 0.0
        %5730 = vmatpush1.msra.mxu0 0.0
        %5731 = vmatprep.subr.mxu0 0.0
        %5732 = vmatpush1.msra.mxu0 0.0
        %5733 = vmatprep.subr.mxu0 0.0
        %5734 = vmatpush1.msra.mxu0 0.0
        %5735 = vmatprep.subr.mxu0 0.0
        %5736 = vmatpush1.msra.mxu0 0.0
        %5737 = vmatprep.subr.mxu0 0.0
        %5738 = vmatpush1.msra.mxu0 0.0
        %5739 = vmatprep.subr.mxu0 0.0
        %5740 = vmatpush1.msra.mxu0 0.0
        %5741 = vmatprep.subr.mxu0 0.0
        %5742 = vmatpush1.msra.mxu0 0.0
        %5743 = vmatprep.subr.mxu0 0.0
        %5744 = vmatpush1.msra.mxu0 0.0
        %5745 = vmatprep.subr.mxu0 0.0
        %5746 = vmatpush1.msra.mxu0 0.0
        %5747 = vmatprep.subr.mxu0 0.0
        %5748 = vmatpush1.msra.mxu0 0.0
        %5749 = vmatprep.subr.mxu0 0.0
        %5750 = vmatpush1.msra.mxu0 0.0
        %5751 = vmatprep.subr.mxu0 0.0
        %5752 = vmatpush1.msra.mxu0 0.0
        %5753 = vmatprep.subr.mxu0 0.0
        %5754 = vmatpush1.msra.mxu0 0.0
        %5755 = vmatprep.subr.mxu0 0.0
        %5756 = vmatpush1.msra.mxu0 0.0
        %5757 = vmatprep.subr.mxu0 0.0
        %5758 = vmatpush1.msra.mxu0 0.0
        %5759 = vmatprep.subr.mxu0 0.0
        %5760 = vmatpush1.msra.mxu0 0.0
        %5761 = vmatprep.subr.mxu0 0.0
        %5762 = vmatpush1.msra.mxu0 0.0
        %5763 = vmatprep.subr.mxu0 0.0
        %5764 = vmatpush1.msra.mxu0 0.0
        %5765 = vmatprep.subr.mxu0 0.0
        %5766 = vmatpush1.msra.mxu0 0.0
        %5767 = vmatprep.mubr.f32.mxu0 0.0
        %5768 = vmatmul.mubr.f32.gmra.mrb[0].mxu0 %v5692
        %v5769 = vpop.f32.mrb[0].mxu0
        %v5770 = vadd.f32 %v5673, %v5769
        %v5771 = vpop.f32.mrb[0].mxu0
        %5772 = vmatprep.mubr.f32.mxu0 0.0
        %5773 = vmatmul.mubr.f32.gmra.mrb[0].mxu0 %v5695
        %v5774 = vpop.f32.mrb[0].mxu0
        %v5775 = vadd.f32 %v5678, %v5774
        %v5776 = vpop.f32.mrb[0].mxu0
        %5777 = vmatprep.mubr.f32.mxu0 0.0
        %5778 = vmatmul.mubr.f32.gmra.mrb[0].mxu0 %v5698
        %v5779 = vpop.f32.mrb[0].mxu0
        %v5780 = vadd.f32 %v5683, %v5779
        %v5781 = vpop.f32.mrb[0].mxu0
        %5782 = vmatprep.mubr.f32.mxu0 0.0
        %5783 = vmatmul.mubr.f32.gmra.mrb[0].mxu0 %v5701
        %v5784 = vpop.f32.mrb[0].mxu0
        %v5785 = vadd.f32 %v5688, %v5784
        %v5786 = vpop.f32.mrb[0].mxu0
        %5787 = vdwg.mxu0
        %v5789 = vsel %vm449, %v4229, 0
        %v5792 = vsel %vm449, %v4230, 0
        %v5795 = vsel %vm449, %v4231, 0
        %v5798 = vsel %vm449, %v4232, 0
        %5800 = vmatprep.subr.mxu0 0.0
        %5801 = vmatpush1.msra.mxu0 %v5481
        %5802 = vmatprep.subr.mxu0 0.0
        %5803 = vmatpush1.msra.mxu0 %v5482
        %5804 = vmatprep.subr.mxu0 0.0
        %5805 = vmatpush1.msra.mxu0 %v5483
        %5806 = vmatprep.subr.mxu0 0.0
        %5807 = vmatpush1.msra.mxu0 %v5484
        %5808 = vmatprep.subr.mxu0 0.0
        %5809 = vmatpush1.msra.mxu0 0.0
        %5810 = vmatprep.subr.mxu0 0.0
        %5811 = vmatpush1.msra.mxu0 0.0
        %5812 = vmatprep.subr.mxu0 0.0
        %5813 = vmatpush1.msra.mxu0 0.0
        %5814 = vmatprep.subr.mxu0 0.0
        %5815 = vmatpush1.msra.mxu0 0.0
        %5816 = vmatprep.subr.mxu0 0.0
        %5817 = vmatpush1.msra.mxu0 0.0
        %5818 = vmatprep.subr.mxu0 0.0
        %5819 = vmatpush1.msra.mxu0 0.0
        %5820 = vmatprep.subr.mxu0 0.0
        %5821 = vmatpush1.msra.mxu0 0.0
        %5822 = vmatprep.subr.mxu0 0.0
        %5823 = vmatpush1.msra.mxu0 0.0
        %5824 = vmatprep.subr.mxu0 0.0
        %5825 = vmatpush1.msra.mxu0 0.0
        %5826 = vmatprep.subr.mxu0 0.0
        %5827 = vmatpush1.msra.mxu0 0.0
        %5828 = vmatprep.subr.mxu0 0.0
        %5829 = vmatpush1.msra.mxu0 0.0
        %5830 = vmatprep.subr.mxu0 0.0
        %5831 = vmatpush1.msra.mxu0 0.0
        %5832 = vmatprep.subr.mxu0 0.0
        %5833 = vmatpush1.msra.mxu0 0.0
        %5834 = vmatprep.subr.mxu0 0.0
        %5835 = vmatpush1.msra.mxu0 0.0
        %5836 = vmatprep.subr.mxu0 0.0
        %5837 = vmatpush1.msra.mxu0 0.0
        %5838 = vmatprep.subr.mxu0 0.0
        %5839 = vmatpush1.msra.mxu0 0.0
        %5840 = vmatprep.subr.mxu0 0.0
        %5841 = vmatpush1.msra.mxu0 0.0
        %5842 = vmatprep.subr.mxu0 0.0
        %5843 = vmatpush1.msra.mxu0 0.0
        %5844 = vmatprep.subr.mxu0 0.0
        %5845 = vmatpush1.msra.mxu0 0.0
        %5846 = vmatprep.subr.mxu0 0.0
        %5847 = vmatpush1.msra.mxu0 0.0
        %5848 = vmatprep.subr.mxu0 0.0
        %5849 = vmatpush1.msra.mxu0 0.0
        %5850 = vmatprep.subr.mxu0 0.0
        %5851 = vmatpush1.msra.mxu0 0.0
        %5852 = vmatprep.subr.mxu0 0.0
        %5853 = vmatpush1.msra.mxu0 0.0
        %5854 = vmatprep.subr.mxu0 0.0
        %5855 = vmatpush1.msra.mxu0 0.0
        %5856 = vmatprep.subr.mxu0 0.0
        %5857 = vmatpush1.msra.mxu0 0.0
        %5858 = vmatprep.subr.mxu0 0.0
        %5859 = vmatpush1.msra.mxu0 0.0
        %5860 = vmatprep.subr.mxu0 0.0
        %5861 = vmatpush1.msra.mxu0 0.0
        %5862 = vmatprep.subr.mxu0 0.0
        %5863 = vmatpush1.msra.mxu0 0.0
        %5864 = vmatprep.mubr.f32.mxu0 0.0
        %5865 = vmatmul.mubr.f32.gmra.mrb[0].mxu0 %v5789
        %v5866 = vpop.f32.mrb[0].mxu0
        %v5867 = vadd.f32 0.0, %v5866
        %v5868 = vpop.f32.mrb[0].mxu0
        %5869 = vmatprep.mubr.f32.mxu0 0.0
        %5870 = vmatmul.mubr.f32.gmra.mrb[0].mxu0 %v5792
        %v5871 = vpop.f32.mrb[0].mxu0
        %v5872 = vadd.f32 0.0, %v5871
        %v5873 = vpop.f32.mrb[0].mxu0
        %5874 = vmatprep.mubr.f32.mxu0 0.0
        %5875 = vmatmul.mubr.f32.gmra.mrb[0].mxu0 %v5795
        %v5876 = vpop.f32.mrb[0].mxu0
        %v5877 = vadd.f32 0.0, %v5876
        %v5878 = vpop.f32.mrb[0].mxu0
        %5879 = vmatprep.mubr.f32.mxu0 0.0
        %5880 = vmatmul.mubr.f32.gmra.mrb[0].mxu0 %v5798
        %v5881 = vpop.f32.mrb[0].mxu0
        %v5882 = vadd.f32 0.0, %v5881
        %v5883 = vpop.f32.mrb[0].mxu0
        %5884 = vdwg.mxu0
        %v5885 = vadd.f32 %v5770, %v5867
        %v5886 = vadd.f32 %v5775, %v5872
        %v5887 = vadd.f32 %v5780, %v5877
        %v5888 = vadd.f32 %v5785, %v5882
        %s5889 = scalar_lea.vmem %s3, 64
        %v5890 = vld [vmem:[%s5889] sm:$0xff]
        %v5891 = vld [vmem:[%s5889 + $0x8] sm:$0xff]
        %v5892 = vld [vmem:[%s5889 + $0x10] sm:$0xff]
        %v5893 = vld [vmem:[%s5889 + $0x18] sm:$0xff]
        %v5894 = vld [vmem:[%s5889 + $0x20] sm:$0xff]
        %v5895 = vld [vmem:[%s5889 + $0x28] sm:$0xff]
        %v5896 = vld [vmem:[%s5889 + $0x30] sm:$0xff]
        %v5897 = vld [vmem:[%s5889 + $0x38] sm:$0xff]
        %v5899 = vsel %vm449, %v5890, 0
        %v5902 = vsel %vm449, %v5891, 0
        %v5905 = vsel %vm449, %v5892, 0
        %v5908 = vsel %vm449, %v5893, 0
        %v5911 = vsel %vm449, %v5894, 0
        %v5914 = vsel %vm449, %v5895, 0
        %v5917 = vsel %vm449, %v5896, 0
        %v5920 = vsel %vm449, %v5897, 0
        %5922 = vmatprep.subr.mxu0 0.0
        %5923 = vmatpush1.msra.mxu0 %v5885
        %5924 = vmatprep.subr.mxu0 0.0
        %5925 = vmatpush1.msra.mxu0 %v5886
        %5926 = vmatprep.subr.mxu0 0.0
        %5927 = vmatpush1.msra.mxu0 %v5887
        %5928 = vmatprep.subr.mxu0 0.0
        %5929 = vmatpush1.msra.mxu0 %v5888
        %5930 = vmatprep.subr.mxu0 0.0
        %5931 = vmatpush1.msra.mxu0 0.0
        %5932 = vmatprep.subr.mxu0 0.0
        %5933 = vmatpush1.msra.mxu0 0.0
        %5934 = vmatprep.subr.mxu0 0.0
        %5935 = vmatpush1.msra.mxu0 0.0
        %5936 = vmatprep.subr.mxu0 0.0
        %5937 = vmatpush1.msra.mxu0 0.0
        %5938 = vmatprep.subr.mxu0 0.0
        %5939 = vmatpush1.msra.mxu0 0.0
        %5940 = vmatprep.subr.mxu0 0.0
        %5941 = vmatpush1.msra.mxu0 0.0
        %5942 = vmatprep.subr.mxu0 0.0
        %5943 = vmatpush1.msra.mxu0 0.0
        %5944 = vmatprep.subr.mxu0 0.0
        %5945 = vmatpush1.msra.mxu0 0.0
        %5946 = vmatprep.subr.mxu0 0.0
        %5947 = vmatpush1.msra.mxu0 0.0
        %5948 = vmatprep.subr.mxu0 0.0
        %5949 = vmatpush1.msra.mxu0 0.0
        %5950 = vmatprep.subr.mxu0 0.0
        %5951 = vmatpush1.msra.mxu0 0.0
        %5952 = vmatprep.subr.mxu0 0.0
        %5953 = vmatpush1.msra.mxu0 0.0
        %5954 = vmatprep.subr.mxu0 0.0
        %5955 = vmatpush1.msra.mxu0 0.0
        %5956 = vmatprep.subr.mxu0 0.0
        %5957 = vmatpush1.msra.mxu0 0.0
        %5958 = vmatprep.subr.mxu0 0.0
        %5959 = vmatpush1.msra.mxu0 0.0
        %5960 = vmatprep.subr.mxu0 0.0
        %5961 = vmatpush1.msra.mxu0 0.0
        %5962 = vmatprep.subr.mxu0 0.0
        %5963 = vmatpush1.msra.mxu0 0.0
        %5964 = vmatprep.subr.mxu0 0.0
        %5965 = vmatpush1.msra.mxu0 0.0
        %5966 = vmatprep.subr.mxu0 0.0
        %5967 = vmatpush1.msra.mxu0 0.0
        %5968 = vmatprep.subr.mxu0 0.0
        %5969 = vmatpush1.msra.mxu0 0.0
        %5970 = vmatprep.subr.mxu0 0.0
        %5971 = vmatpush1.msra.mxu0 0.0
        %5972 = vmatprep.subr.mxu0 0.0
        %5973 = vmatpush1.msra.mxu0 0.0
        %5974 = vmatprep.subr.mxu0 0.0
        %5975 = vmatpush1.msra.mxu0 0.0
        %5976 = vmatprep.subr.mxu0 0.0
        %5977 = vmatpush1.msra.mxu0 0.0
        %5978 = vmatprep.subr.mxu0 0.0
        %5979 = vmatpush1.msra.mxu0 0.0
        %5980 = vmatprep.subr.mxu0 0.0
        %5981 = vmatpush1.msra.mxu0 0.0
        %5982 = vmatprep.subr.mxu0 0.0
        %5983 = vmatpush1.msra.mxu0 0.0
        %5984 = vmatprep.subr.mxu0 0.0
        %5985 = vmatpush1.msra.mxu0 0.0
        %5986 = vmatprep.mubr.f32.mxu0 0.0
        %5987 = vmatmul.mubr.f32.gmra.mrb[0].mxu0 %v5899
        %v5988 = vpop.f32.mrb[0].mxu0
        %v5989 = vadd.f32 0.0, %v5988
        %v5990 = vpop.f32.mrb[0].mxu0
        %5991 = vmatprep.mubr.f32.mxu0 0.0
        %5992 = vmatmul.mubr.f32.gmra.mrb[0].mxu0 %v5902
        %v5993 = vpop.f32.mrb[0].mxu0
        %v5994 = vadd.f32 0.0, %v5993
        %v5995 = vpop.f32.mrb[0].mxu0
        %5996 = vmatprep.mubr.f32.mxu0 0.0
        %5997 = vmatmul.mubr.f32.gmra.mrb[0].mxu0 %v5905
        %v5998 = vpop.f32.mrb[0].mxu0
        %v5999 = vadd.f32 0.0, %v5998
        %v6000 = vpop.f32.mrb[0].mxu0
        %6001 = vmatprep.mubr.f32.mxu0 0.0
        %6002 = vmatmul.mubr.f32.gmra.mrb[0].mxu0 %v5908
        %v6003 = vpop.f32.mrb[0].mxu0
        %v6004 = vadd.f32 0.0, %v6003
        %v6005 = vpop.f32.mrb[0].mxu0
        %6006 = vmatprep.mubr.f32.mxu0 0.0
        %6007 = vmatmul.mubr.f32.gmra.mrb[0].mxu0 %v5911
        %v6008 = vpop.f32.mrb[0].mxu0
        %v6009 = vadd.f32 0.0, %v6008
        %v6010 = vpop.f32.mrb[0].mxu0
        %6011 = vmatprep.mubr.f32.mxu0 0.0
        %6012 = vmatmul.mubr.f32.gmra.mrb[0].mxu0 %v5914
        %v6013 = vpop.f32.mrb[0].mxu0
        %v6014 = vadd.f32 0.0, %v6013
        %v6015 = vpop.f32.mrb[0].mxu0
        %6016 = vmatprep.mubr.f32.mxu0 0.0
        %6017 = vmatmul.mubr.f32.gmra.mrb[0].mxu0 %v5917
        %v6018 = vpop.f32.mrb[0].mxu0
        %v6019 = vadd.f32 0.0, %v6018
        %v6020 = vpop.f32.mrb[0].mxu0
        %6021 = vmatprep.mubr.f32.mxu0 0.0
        %6022 = vmatmul.mubr.f32.gmra.mrb[0].mxu0 %v5920
        %v6023 = vpop.f32.mrb[0].mxu0
        %v6024 = vadd.f32 0.0, %v6023
        %v6025 = vpop.f32.mrb[0].mxu0
        %6026 = vdwg.mxu0
        %v6028 = vsel %vm449, %v5586, 0
        %v6031 = vsel %vm449, %v5587, 0
        %v6034 = vsel %vm449, %v5588, 0
        %v6037 = vsel %vm449, %v5589, 0
        %v6040 = vsel %vm449, %v5590, 0
        %v6043 = vsel %vm449, %v5591, 0
        %v6046 = vsel %vm449, %v5592, 0
        %v6049 = vsel %vm449, %v5593, 0
        %6051 = vmatprep.subr.mxu0 0.0
        %6052 = vmatpush1.msra.mxu0 %v5582
        %6053 = vmatprep.subr.mxu0 0.0
        %6054 = vmatpush1.msra.mxu0 %v5583
        %6055 = vmatprep.subr.mxu0 0.0
        %6056 = vmatpush1.msra.mxu0 %v5584
        %6057 = vmatprep.subr.mxu0 0.0
        %6058 = vmatpush1.msra.mxu0 %v5585
        %6059 = vmatprep.subr.mxu0 0.0
        %6060 = vmatpush1.msra.mxu0 0.0
        %6061 = vmatprep.subr.mxu0 0.0
        %6062 = vmatpush1.msra.mxu0 0.0
        %6063 = vmatprep.subr.mxu0 0.0
        %6064 = vmatpush1.msra.mxu0 0.0
        %6065 = vmatprep.subr.mxu0 0.0
        %6066 = vmatpush1.msra.mxu0 0.0
        %6067 = vmatprep.subr.mxu0 0.0
        %6068 = vmatpush1.msra.mxu0 0.0
        %6069 = vmatprep.subr.mxu0 0.0
        %6070 = vmatpush1.msra.mxu0 0.0
        %6071 = vmatprep.subr.mxu0 0.0
        %6072 = vmatpush1.msra.mxu0 0.0
        %6073 = vmatprep.subr.mxu0 0.0
        %6074 = vmatpush1.msra.mxu0 0.0
        %6075 = vmatprep.subr.mxu0 0.0
        %6076 = vmatpush1.msra.mxu0 0.0
        %6077 = vmatprep.subr.mxu0 0.0
        %6078 = vmatpush1.msra.mxu0 0.0
        %6079 = vmatprep.subr.mxu0 0.0
        %6080 = vmatpush1.msra.mxu0 0.0
        %6081 = vmatprep.subr.mxu0 0.0
        %6082 = vmatpush1.msra.mxu0 0.0
        %6083 = vmatprep.subr.mxu0 0.0
        %6084 = vmatpush1.msra.mxu0 0.0
        %6085 = vmatprep.subr.mxu0 0.0
        %6086 = vmatpush1.msra.mxu0 0.0
        %6087 = vmatprep.subr.mxu0 0.0
        %6088 = vmatpush1.msra.mxu0 0.0
        %6089 = vmatprep.subr.mxu0 0.0
        %6090 = vmatpush1.msra.mxu0 0.0
        %6091 = vmatprep.subr.mxu0 0.0
        %6092 = vmatpush1.msra.mxu0 0.0
        %6093 = vmatprep.subr.mxu0 0.0
        %6094 = vmatpush1.msra.mxu0 0.0
        %6095 = vmatprep.subr.mxu0 0.0
        %6096 = vmatpush1.msra.mxu0 0.0
        %6097 = vmatprep.subr.mxu0 0.0
        %6098 = vmatpush1.msra.mxu0 0.0
        %6099 = vmatprep.subr.mxu0 0.0
        %6100 = vmatpush1.msra.mxu0 0.0
        %6101 = vmatprep.subr.mxu0 0.0
        %6102 = vmatpush1.msra.mxu0 0.0
        %6103 = vmatprep.subr.mxu0 0.0
        %6104 = vmatpush1.msra.mxu0 0.0
        %6105 = vmatprep.subr.mxu0 0.0
        %6106 = vmatpush1.msra.mxu0 0.0
        %6107 = vmatprep.subr.mxu0 0.0
        %6108 = vmatpush1.msra.mxu0 0.0
        %6109 = vmatprep.subr.mxu0 0.0
        %6110 = vmatpush1.msra.mxu0 0.0
        %6111 = vmatprep.subr.mxu0 0.0
        %6112 = vmatpush1.msra.mxu0 0.0
        %6113 = vmatprep.subr.mxu0 0.0
        %6114 = vmatpush1.msra.mxu0 0.0
        %6115 = vmatprep.mubr.f32.mxu0 0.0
        %6116 = vmatmul.mubr.f32.gmra.mrb[0].mxu0 %v6028
        %v6117 = vpop.f32.mrb[0].mxu0
        %v6118 = vadd.f32 %v5989, %v6117
        %v6119 = vpop.f32.mrb[0].mxu0
        %6120 = vmatprep.mubr.f32.mxu0 0.0
        %6121 = vmatmul.mubr.f32.gmra.mrb[0].mxu0 %v6031
        %v6122 = vpop.f32.mrb[0].mxu0
        %v6123 = vadd.f32 %v5994, %v6122
        %v6124 = vpop.f32.mrb[0].mxu0
        %6125 = vmatprep.mubr.f32.mxu0 0.0
        %6126 = vmatmul.mubr.f32.gmra.mrb[0].mxu0 %v6034
        %v6127 = vpop.f32.mrb[0].mxu0
        %v6128 = vadd.f32 %v5999, %v6127
        %v6129 = vpop.f32.mrb[0].mxu0
        %6130 = vmatprep.mubr.f32.mxu0 0.0
        %6131 = vmatmul.mubr.f32.gmra.mrb[0].mxu0 %v6037
        %v6132 = vpop.f32.mrb[0].mxu0
        %v6133 = vadd.f32 %v6004, %v6132
        %v6134 = vpop.f32.mrb[0].mxu0
        %6135 = vmatprep.mubr.f32.mxu0 0.0
        %6136 = vmatmul.mubr.f32.gmra.mrb[0].mxu0 %v6040
        %v6137 = vpop.f32.mrb[0].mxu0
        %v6138 = vadd.f32 %v6009, %v6137
        %v6139 = vpop.f32.mrb[0].mxu0
        %6140 = vmatprep.mubr.f32.mxu0 0.0
        %6141 = vmatmul.mubr.f32.gmra.mrb[0].mxu0 %v6043
        %v6142 = vpop.f32.mrb[0].mxu0
        %v6143 = vadd.f32 %v6014, %v6142
        %v6144 = vpop.f32.mrb[0].mxu0
        %6145 = vmatprep.mubr.f32.mxu0 0.0
        %6146 = vmatmul.mubr.f32.gmra.mrb[0].mxu0 %v6046
        %v6147 = vpop.f32.mrb[0].mxu0
        %v6148 = vadd.f32 %v6019, %v6147
        %v6149 = vpop.f32.mrb[0].mxu0
        %6150 = vmatprep.mubr.f32.mxu0 0.0
        %6151 = vmatmul.mubr.f32.gmra.mrb[0].mxu0 %v6049
        %v6152 = vpop.f32.mrb[0].mxu0
        %v6153 = vadd.f32 %v6024, %v6152
        %v6154 = vpop.f32.mrb[0].mxu0
        %6155 = vdwg.mxu0
        %v6157 = vsel %vm449, %v4925, 0
        %v6160 = vsel %vm449, %v4926, 0
        %v6163 = vsel %vm449, %v4927, 0
        %v6166 = vsel %vm449, %v4928, 0
        %6168 = vmatprep.subr.mxu0 0.0
        %6169 = vmatpush1.msra.mxu0 %v5282
        %6170 = vmatprep.subr.mxu0 0.0
        %6171 = vmatpush1.msra.mxu0 %v5283
        %6172 = vmatprep.subr.mxu0 0.0
        %6173 = vmatpush1.msra.mxu0 %v5284
        %6174 = vmatprep.subr.mxu0 0.0
        %6175 = vmatpush1.msra.mxu0 %v5285
        %6176 = vmatprep.subr.mxu0 0.0
        %6177 = vmatpush1.msra.mxu0 0.0
        %6178 = vmatprep.subr.mxu0 0.0
        %6179 = vmatpush1.msra.mxu0 0.0
        %6180 = vmatprep.subr.mxu0 0.0
        %6181 = vmatpush1.msra.mxu0 0.0
        %6182 = vmatprep.subr.mxu0 0.0
        %6183 = vmatpush1.msra.mxu0 0.0
        %6184 = vmatprep.subr.mxu0 0.0
        %6185 = vmatpush1.msra.mxu0 0.0
        %6186 = vmatprep.subr.mxu0 0.0
        %6187 = vmatpush1.msra.mxu0 0.0
        %6188 = vmatprep.subr.mxu0 0.0
        %6189 = vmatpush1.msra.mxu0 0.0
        %6190 = vmatprep.subr.mxu0 0.0
        %6191 = vmatpush1.msra.mxu0 0.0
        %6192 = vmatprep.subr.mxu0 0.0
        %6193 = vmatpush1.msra.mxu0 0.0
        %6194 = vmatprep.subr.mxu0 0.0
        %6195 = vmatpush1.msra.mxu0 0.0
        %6196 = vmatprep.subr.mxu0 0.0
        %6197 = vmatpush1.msra.mxu0 0.0
        %6198 = vmatprep.subr.mxu0 0.0
        %6199 = vmatpush1.msra.mxu0 0.0
        %6200 = vmatprep.subr.mxu0 0.0
        %6201 = vmatpush1.msra.mxu0 0.0
        %6202 = vmatprep.subr.mxu0 0.0
        %6203 = vmatpush1.msra.mxu0 0.0
        %6204 = vmatprep.subr.mxu0 0.0
        %6205 = vmatpush1.msra.mxu0 0.0
        %6206 = vmatprep.subr.mxu0 0.0
        %6207 = vmatpush1.msra.mxu0 0.0
        %6208 = vmatprep.subr.mxu0 0.0
        %6209 = vmatpush1.msra.mxu0 0.0
        %6210 = vmatprep.subr.mxu0 0.0
        %6211 = vmatpush1.msra.mxu0 0.0
        %6212 = vmatprep.subr.mxu0 0.0
        %6213 = vmatpush1.msra.mxu0 0.0
        %6214 = vmatprep.subr.mxu0 0.0
        %6215 = vmatpush1.msra.mxu0 0.0
        %6216 = vmatprep.subr.mxu0 0.0
        %6217 = vmatpush1.msra.mxu0 0.0
        %6218 = vmatprep.subr.mxu0 0.0
        %6219 = vmatpush1.msra.mxu0 0.0
        %6220 = vmatprep.subr.mxu0 0.0
        %6221 = vmatpush1.msra.mxu0 0.0
        %6222 = vmatprep.subr.mxu0 0.0
        %6223 = vmatpush1.msra.mxu0 0.0
        %6224 = vmatprep.subr.mxu0 0.0
        %6225 = vmatpush1.msra.mxu0 0.0
        %6226 = vmatprep.subr.mxu0 0.0
        %6227 = vmatpush1.msra.mxu0 0.0
        %6228 = vmatprep.subr.mxu0 0.0
        %6229 = vmatpush1.msra.mxu0 0.0
        %6230 = vmatprep.subr.mxu0 0.0
        %6231 = vmatpush1.msra.mxu0 0.0
        %6232 = vmatprep.mubr.f32.mxu0 0.0
        %6233 = vmatmul.mubr.f32.gmra.mrb[0].mxu0 %v6157
        %v6234 = vpop.f32.mrb[0].mxu0
        %v6235 = vadd.f32 0.0, %v6234
        %v6236 = vpop.f32.mrb[0].mxu0
        %6237 = vmatprep.mubr.f32.mxu0 0.0
        %6238 = vmatmul.mubr.f32.gmra.mrb[0].mxu0 %v6160
        %v6239 = vpop.f32.mrb[0].mxu0
        %v6240 = vadd.f32 0.0, %v6239
        %v6241 = vpop.f32.mrb[0].mxu0
        %6242 = vmatprep.mubr.f32.mxu0 0.0
        %6243 = vmatmul.mubr.f32.gmra.mrb[0].mxu0 %v6163
        %v6244 = vpop.f32.mrb[0].mxu0
        %v6245 = vadd.f32 0.0, %v6244
        %v6246 = vpop.f32.mrb[0].mxu0
        %6247 = vmatprep.mubr.f32.mxu0 0.0
        %6248 = vmatmul.mubr.f32.gmra.mrb[0].mxu0 %v6166
        %v6249 = vpop.f32.mrb[0].mxu0
        %v6250 = vadd.f32 0.0, %v6249
        %v6251 = vpop.f32.mrb[0].mxu0
        %6252 = vdwg.mxu0
        %v6254 = vsel %vm449, %v4577, 0
        %v6257 = vsel %vm449, %v4578, 0
        %v6260 = vsel %vm449, %v4579, 0
        %v6263 = vsel %vm449, %v4580, 0
        %6265 = vmatprep.subr.mxu0 0.0
        %6266 = vmatpush1.msra.mxu0 %v5277
        %6267 = vmatprep.subr.mxu0 0.0
        %6268 = vmatpush1.msra.mxu0 %v5278
        %6269 = vmatprep.subr.mxu0 0.0
        %6270 = vmatpush1.msra.mxu0 %v5279
        %6271 = vmatprep.subr.mxu0 0.0
        %6272 = vmatpush1.msra.mxu0 %v5280
        %6273 = vmatprep.subr.mxu0 0.0
        %6274 = vmatpush1.msra.mxu0 0.0
        %6275 = vmatprep.subr.mxu0 0.0
        %6276 = vmatpush1.msra.mxu0 0.0
        %6277 = vmatprep.subr.mxu0 0.0
        %6278 = vmatpush1.msra.mxu0 0.0
        %6279 = vmatprep.subr.mxu0 0.0
        %6280 = vmatpush1.msra.mxu0 0.0
        %6281 = vmatprep.subr.mxu0 0.0
        %6282 = vmatpush1.msra.mxu0 0.0
        %6283 = vmatprep.subr.mxu0 0.0
        %6284 = vmatpush1.msra.mxu0 0.0
        %6285 = vmatprep.subr.mxu0 0.0
        %6286 = vmatpush1.msra.mxu0 0.0
        %6287 = vmatprep.subr.mxu0 0.0
        %6288 = vmatpush1.msra.mxu0 0.0
        %6289 = vmatprep.subr.mxu0 0.0
        %6290 = vmatpush1.msra.mxu0 0.0
        %6291 = vmatprep.subr.mxu0 0.0
        %6292 = vmatpush1.msra.mxu0 0.0
        %6293 = vmatprep.subr.mxu0 0.0
        %6294 = vmatpush1.msra.mxu0 0.0
        %6295 = vmatprep.subr.mxu0 0.0
        %6296 = vmatpush1.msra.mxu0 0.0
        %6297 = vmatprep.subr.mxu0 0.0
        %6298 = vmatpush1.msra.mxu0 0.0
        %6299 = vmatprep.subr.mxu0 0.0
        %6300 = vmatpush1.msra.mxu0 0.0
        %6301 = vmatprep.subr.mxu0 0.0
        %6302 = vmatpush1.msra.mxu0 0.0
        %6303 = vmatprep.subr.mxu0 0.0
        %6304 = vmatpush1.msra.mxu0 0.0
        %6305 = vmatprep.subr.mxu0 0.0
        %6306 = vmatpush1.msra.mxu0 0.0
        %6307 = vmatprep.subr.mxu0 0.0
        %6308 = vmatpush1.msra.mxu0 0.0
        %6309 = vmatprep.subr.mxu0 0.0
        %6310 = vmatpush1.msra.mxu0 0.0
        %6311 = vmatprep.subr.mxu0 0.0
        %6312 = vmatpush1.msra.mxu0 0.0
        %6313 = vmatprep.subr.mxu0 0.0
        %6314 = vmatpush1.msra.mxu0 0.0
        %6315 = vmatprep.subr.mxu0 0.0
        %6316 = vmatpush1.msra.mxu0 0.0
        %6317 = vmatprep.subr.mxu0 0.0
        %6318 = vmatpush1.msra.mxu0 0.0
        %6319 = vmatprep.subr.mxu0 0.0
        %6320 = vmatpush1.msra.mxu0 0.0
        %6321 = vmatprep.subr.mxu0 0.0
        %6322 = vmatpush1.msra.mxu0 0.0
        %6323 = vmatprep.subr.mxu0 0.0
        %6324 = vmatpush1.msra.mxu0 0.0
        %6325 = vmatprep.subr.mxu0 0.0
        %6326 = vmatpush1.msra.mxu0 0.0
        %6327 = vmatprep.subr.mxu0 0.0
        %6328 = vmatpush1.msra.mxu0 0.0
        %6329 = vmatprep.mubr.f32.mxu0 0.0
        %6330 = vmatmul.mubr.f32.gmra.mrb[0].mxu0 %v6254
        %v6331 = vpop.f32.mrb[0].mxu0
        %v6332 = vadd.f32 %v6235, %v6331
        %v6333 = vpop.f32.mrb[0].mxu0
        %6334 = vmatprep.mubr.f32.mxu0 0.0
        %6335 = vmatmul.mubr.f32.gmra.mrb[0].mxu0 %v6257
        %v6336 = vpop.f32.mrb[0].mxu0
        %v6337 = vadd.f32 %v6240, %v6336
        %v6338 = vpop.f32.mrb[0].mxu0
        %6339 = vmatprep.mubr.f32.mxu0 0.0
        %6340 = vmatmul.mubr.f32.gmra.mrb[0].mxu0 %v6260
        %v6341 = vpop.f32.mrb[0].mxu0
        %v6342 = vadd.f32 %v6245, %v6341
        %v6343 = vpop.f32.mrb[0].mxu0
        %6344 = vmatprep.mubr.f32.mxu0 0.0
        %6345 = vmatmul.mubr.f32.gmra.mrb[0].mxu0 %v6263
        %v6346 = vpop.f32.mrb[0].mxu0
        %v6347 = vadd.f32 %v6250, %v6346
        %v6348 = vpop.f32.mrb[0].mxu0
        %6349 = vdwg.mxu0
        %v6351 = vsel %vm449, %v5273, 0
        %v6354 = vsel %vm449, %v5274, 0
        %v6357 = vsel %vm449, %v5275, 0
        %v6360 = vsel %vm449, %v5276, 0
        %6362 = vmatprep.subr.mxu0 0.0
        %6363 = vmatpush1.msra.mxu0 %v5481
        %6364 = vmatprep.subr.mxu0 0.0
        %6365 = vmatpush1.msra.mxu0 %v5482
        %6366 = vmatprep.subr.mxu0 0.0
        %6367 = vmatpush1.msra.mxu0 %v5483
        %6368 = vmatprep.subr.mxu0 0.0
        %6369 = vmatpush1.msra.mxu0 %v5484
        %6370 = vmatprep.subr.mxu0 0.0
        %6371 = vmatpush1.msra.mxu0 0.0
        %6372 = vmatprep.subr.mxu0 0.0
        %6373 = vmatpush1.msra.mxu0 0.0
        %6374 = vmatprep.subr.mxu0 0.0
        %6375 = vmatpush1.msra.mxu0 0.0
        %6376 = vmatprep.subr.mxu0 0.0
        %6377 = vmatpush1.msra.mxu0 0.0
        %6378 = vmatprep.subr.mxu0 0.0
        %6379 = vmatpush1.msra.mxu0 0.0
        %6380 = vmatprep.subr.mxu0 0.0
        %6381 = vmatpush1.msra.mxu0 0.0
        %6382 = vmatprep.subr.mxu0 0.0
        %6383 = vmatpush1.msra.mxu0 0.0
        %6384 = vmatprep.subr.mxu0 0.0
        %6385 = vmatpush1.msra.mxu0 0.0
        %6386 = vmatprep.subr.mxu0 0.0
        %6387 = vmatpush1.msra.mxu0 0.0
        %6388 = vmatprep.subr.mxu0 0.0
        %6389 = vmatpush1.msra.mxu0 0.0
        %6390 = vmatprep.subr.mxu0 0.0
        %6391 = vmatpush1.msra.mxu0 0.0
        %6392 = vmatprep.subr.mxu0 0.0
        %6393 = vmatpush1.msra.mxu0 0.0
        %6394 = vmatprep.subr.mxu0 0.0
        %6395 = vmatpush1.msra.mxu0 0.0
        %6396 = vmatprep.subr.mxu0 0.0
        %6397 = vmatpush1.msra.mxu0 0.0
        %6398 = vmatprep.subr.mxu0 0.0
        %6399 = vmatpush1.msra.mxu0 0.0
        %6400 = vmatprep.subr.mxu0 0.0
        %6401 = vmatpush1.msra.mxu0 0.0
        %6402 = vmatprep.subr.mxu0 0.0
        %6403 = vmatpush1.msra.mxu0 0.0
        %6404 = vmatprep.subr.mxu0 0.0
        %6405 = vmatpush1.msra.mxu0 0.0
        %6406 = vmatprep.subr.mxu0 0.0
        %6407 = vmatpush1.msra.mxu0 0.0
        %6408 = vmatprep.subr.mxu0 0.0
        %6409 = vmatpush1.msra.mxu0 0.0
        %6410 = vmatprep.subr.mxu0 0.0
        %6411 = vmatpush1.msra.mxu0 0.0
        %6412 = vmatprep.subr.mxu0 0.0
        %6413 = vmatpush1.msra.mxu0 0.0
        %6414 = vmatprep.subr.mxu0 0.0
        %6415 = vmatpush1.msra.mxu0 0.0
        %6416 = vmatprep.subr.mxu0 0.0
        %6417 = vmatpush1.msra.mxu0 0.0
        %6418 = vmatprep.subr.mxu0 0.0
        %6419 = vmatpush1.msra.mxu0 0.0
        %6420 = vmatprep.subr.mxu0 0.0
        %6421 = vmatpush1.msra.mxu0 0.0
        %6422 = vmatprep.subr.mxu0 0.0
        %6423 = vmatpush1.msra.mxu0 0.0
        %6424 = vmatprep.subr.mxu0 0.0
        %6425 = vmatpush1.msra.mxu0 0.0
        %6426 = vmatprep.mubr.f32.mxu0 0.0
        %6427 = vmatmul.mubr.f32.gmra.mrb[0].mxu0 %v6351
        %v6428 = vpop.f32.mrb[0].mxu0
        %v6429 = vadd.f32 0.0, %v6428
        %v6430 = vpop.f32.mrb[0].mxu0
        %6431 = vmatprep.mubr.f32.mxu0 0.0
        %6432 = vmatmul.mubr.f32.gmra.mrb[0].mxu0 %v6354
        %v6433 = vpop.f32.mrb[0].mxu0
        %v6434 = vadd.f32 0.0, %v6433
        %v6435 = vpop.f32.mrb[0].mxu0
        %6436 = vmatprep.mubr.f32.mxu0 0.0
        %6437 = vmatmul.mubr.f32.gmra.mrb[0].mxu0 %v6357
        %v6438 = vpop.f32.mrb[0].mxu0
        %v6439 = vadd.f32 0.0, %v6438
        %v6440 = vpop.f32.mrb[0].mxu0
        %6441 = vmatprep.mubr.f32.mxu0 0.0
        %6442 = vmatmul.mubr.f32.gmra.mrb[0].mxu0 %v6360
        %v6443 = vpop.f32.mrb[0].mxu0
        %v6444 = vadd.f32 0.0, %v6443
        %v6445 = vpop.f32.mrb[0].mxu0
        %6446 = vdwg.mxu0
        %v6447 = vadd.f32 %v6332, %v6429
        %v6448 = vadd.f32 %v6337, %v6434
        %v6449 = vadd.f32 %v6342, %v6439
        %v6450 = vadd.f32 %v6347, %v6444
        %s6451 = scalar_lea.vmem %s3, 128
        %v6452 = vld [vmem:[%s6451] sm:$0xff]
        %v6453 = vld [vmem:[%s6451 + $0x8] sm:$0xff]
        %v6454 = vld [vmem:[%s6451 + $0x10] sm:$0xff]
        %v6455 = vld [vmem:[%s6451 + $0x18] sm:$0xff]
        %v6456 = vld [vmem:[%s6451 + $0x20] sm:$0xff]
        %v6457 = vld [vmem:[%s6451 + $0x28] sm:$0xff]
        %v6458 = vld [vmem:[%s6451 + $0x30] sm:$0xff]
        %v6459 = vld [vmem:[%s6451 + $0x38] sm:$0xff]
        %v6461 = vsel %vm449, %v6452, 0
        %v6464 = vsel %vm449, %v6453, 0
        %v6467 = vsel %vm449, %v6454, 0
        %v6470 = vsel %vm449, %v6455, 0
        %v6473 = vsel %vm449, %v6456, 0
        %v6476 = vsel %vm449, %v6457, 0
        %v6479 = vsel %vm449, %v6458, 0
        %v6482 = vsel %vm449, %v6459, 0
        %6484 = vmatprep.subr.mxu0 0.0
        %6485 = vmatpush1.msra.mxu0 %v6447
        %6486 = vmatprep.subr.mxu0 0.0
        %6487 = vmatpush1.msra.mxu0 %v6448
        %6488 = vmatprep.subr.mxu0 0.0
        %6489 = vmatpush1.msra.mxu0 %v6449
        %6490 = vmatprep.subr.mxu0 0.0
        %6491 = vmatpush1.msra.mxu0 %v6450
        %6492 = vmatprep.subr.mxu0 0.0
        %6493 = vmatpush1.msra.mxu0 0.0
        %6494 = vmatprep.subr.mxu0 0.0
        %6495 = vmatpush1.msra.mxu0 0.0
        %6496 = vmatprep.subr.mxu0 0.0
        %6497 = vmatpush1.msra.mxu0 0.0
        %6498 = vmatprep.subr.mxu0 0.0
        %6499 = vmatpush1.msra.mxu0 0.0
        %6500 = vmatprep.subr.mxu0 0.0
        %6501 = vmatpush1.msra.mxu0 0.0
        %6502 = vmatprep.subr.mxu0 0.0
        %6503 = vmatpush1.msra.mxu0 0.0
        %6504 = vmatprep.subr.mxu0 0.0
        %6505 = vmatpush1.msra.mxu0 0.0
        %6506 = vmatprep.subr.mxu0 0.0
        %6507 = vmatpush1.msra.mxu0 0.0
        %6508 = vmatprep.subr.mxu0 0.0
        %6509 = vmatpush1.msra.mxu0 0.0
        %6510 = vmatprep.subr.mxu0 0.0
        %6511 = vmatpush1.msra.mxu0 0.0
        %6512 = vmatprep.subr.mxu0 0.0
        %6513 = vmatpush1.msra.mxu0 0.0
        %6514 = vmatprep.subr.mxu0 0.0
        %6515 = vmatpush1.msra.mxu0 0.0
        %6516 = vmatprep.subr.mxu0 0.0
        %6517 = vmatpush1.msra.mxu0 0.0
        %6518 = vmatprep.subr.mxu0 0.0
        %6519 = vmatpush1.msra.mxu0 0.0
        %6520 = vmatprep.subr.mxu0 0.0
        %6521 = vmatpush1.msra.mxu0 0.0
        %6522 = vmatprep.subr.mxu0 0.0
        %6523 = vmatpush1.msra.mxu0 0.0
        %6524 = vmatprep.subr.mxu0 0.0
        %6525 = vmatpush1.msra.mxu0 0.0
        %6526 = vmatprep.subr.mxu0 0.0
        %6527 = vmatpush1.msra.mxu0 0.0
        %6528 = vmatprep.subr.mxu0 0.0
        %6529 = vmatpush1.msra.mxu0 0.0
        %6530 = vmatprep.subr.mxu0 0.0
        %6531 = vmatpush1.msra.mxu0 0.0
        %6532 = vmatprep.subr.mxu0 0.0
        %6533 = vmatpush1.msra.mxu0 0.0
        %6534 = vmatprep.subr.mxu0 0.0
        %6535 = vmatpush1.msra.mxu0 0.0
        %6536 = vmatprep.subr.mxu0 0.0
        %6537 = vmatpush1.msra.mxu0 0.0
        %6538 = vmatprep.subr.mxu0 0.0
        %6539 = vmatpush1.msra.mxu0 0.0
        %6540 = vmatprep.subr.mxu0 0.0
        %6541 = vmatpush1.msra.mxu0 0.0
        %6542 = vmatprep.subr.mxu0 0.0
        %6543 = vmatpush1.msra.mxu0 0.0
        %6544 = vmatprep.subr.mxu0 0.0
        %6545 = vmatpush1.msra.mxu0 0.0
        %6546 = vmatprep.subr.mxu0 0.0
        %6547 = vmatpush1.msra.mxu0 0.0
        %6548 = vmatprep.mubr.f32.mxu0 0.0
        %6549 = vmatmul.mubr.f32.gmra.mrb[0].mxu0 %v6461
        %v6550 = vpop.f32.mrb[0].mxu0
        %v6551 = vadd.f32 0.0, %v6550
        %v6552 = vpop.f32.mrb[0].mxu0
        %6553 = vmatprep.mubr.f32.mxu0 0.0
        %6554 = vmatmul.mubr.f32.gmra.mrb[0].mxu0 %v6464
        %v6555 = vpop.f32.mrb[0].mxu0
        %v6556 = vadd.f32 0.0, %v6555
        %v6557 = vpop.f32.mrb[0].mxu0
        %6558 = vmatprep.mubr.f32.mxu0 0.0
        %6559 = vmatmul.mubr.f32.gmra.mrb[0].mxu0 %v6467
        %v6560 = vpop.f32.mrb[0].mxu0
        %v6561 = vadd.f32 0.0, %v6560
        %v6562 = vpop.f32.mrb[0].mxu0
        %6563 = vmatprep.mubr.f32.mxu0 0.0
        %6564 = vmatmul.mubr.f32.gmra.mrb[0].mxu0 %v6470
        %v6565 = vpop.f32.mrb[0].mxu0
        %v6566 = vadd.f32 0.0, %v6565
        %v6567 = vpop.f32.mrb[0].mxu0
        %6568 = vmatprep.mubr.f32.mxu0 0.0
        %6569 = vmatmul.mubr.f32.gmra.mrb[0].mxu0 %v6473
        %v6570 = vpop.f32.mrb[0].mxu0
        %v6571 = vadd.f32 0.0, %v6570
        %v6572 = vpop.f32.mrb[0].mxu0
        %6573 = vmatprep.mubr.f32.mxu0 0.0
        %6574 = vmatmul.mubr.f32.gmra.mrb[0].mxu0 %v6476
        %v6575 = vpop.f32.mrb[0].mxu0
        %v6576 = vadd.f32 0.0, %v6575
        %v6577 = vpop.f32.mrb[0].mxu0
        %6578 = vmatprep.mubr.f32.mxu0 0.0
        %6579 = vmatmul.mubr.f32.gmra.mrb[0].mxu0 %v6479
        %v6580 = vpop.f32.mrb[0].mxu0
        %v6581 = vadd.f32 0.0, %v6580
        %v6582 = vpop.f32.mrb[0].mxu0
        %6583 = vmatprep.mubr.f32.mxu0 0.0
        %6584 = vmatmul.mubr.f32.gmra.mrb[0].mxu0 %v6482
        %v6585 = vpop.f32.mrb[0].mxu0
        %v6586 = vadd.f32 0.0, %v6585
        %v6587 = vpop.f32.mrb[0].mxu0
        %6588 = vdwg.mxu0
        %v6589 = vadd.f32 %v6118, %v6551
        %v6590 = vadd.f32 %v6123, %v6556
        %v6591 = vadd.f32 %v6128, %v6561
        %v6592 = vadd.f32 %v6133, %v6566
        %v6593 = vadd.f32 %v6138, %v6571
        %v6594 = vadd.f32 %v6143, %v6576
        %v6595 = vadd.f32 %v6148, %v6581
        %v6596 = vadd.f32 %v6153, %v6586
        %s6597 = sld [smem:[#allocation2]]
        %v6598 = vstv %s6597
        %v6599 = vadd.f32 %v6589, %v6598
        %v6600 = vadd.f32 %v6590, %v6598
        %v6601 = vadd.f32 %v6591, %v6598
        %v6602 = vadd.f32 %v6592, %v6598
        %v6603 = vadd.f32 %v6593, %v6598
        %v6604 = vadd.f32 %v6594, %v6598
        %v6605 = vadd.f32 %v6595, %v6598
        %v6606 = vadd.f32 %v6596, %v6598
        %v6607 = vxor.u32 %v6599, 2147483648
        %v6608 = vxor.u32 %v6600, 2147483648
        %v6609 = vxor.u32 %v6601, 2147483648
        %v6610 = vxor.u32 %v6602, 2147483648
        %v6611 = vxor.u32 %v6603, 2147483648
        %v6612 = vxor.u32 %v6604, 2147483648
        %v6613 = vxor.u32 %v6605, 2147483648
        %v6614 = vxor.u32 %v6606, 2147483648
        %v6615 = vmul.f32 %v6607, 1.442695
        %v6616 = vpow.pop %v6615
        %v6617 = vmul.f32 %v6608, 1.442695
        %v6618 = vpow.pop %v6617
        %v6619 = vmul.f32 %v6609, 1.442695
        %v6620 = vpow.pop %v6619
        %v6621 = vmul.f32 %v6610, 1.442695
        %v6622 = vpow.pop %v6621
        %v6623 = vmul.f32 %v6611, 1.442695
        %v6624 = vpow.pop %v6623
        %v6625 = vmul.f32 %v6612, 1.442695
        %v6626 = vpow.pop %v6625
        %v6627 = vmul.f32 %v6613, 1.442695
        %v6628 = vpow.pop %v6627
        %v6629 = vmul.f32 %v6614, 1.442695
        %v6630 = vpow.pop %v6629
        %v6631 = vadd.f32 %v6616, 1.0
        %v6632 = vadd.f32 %v6618, 1.0
        %v6633 = vadd.f32 %v6620, 1.0
        %v6634 = vadd.f32 %v6622, 1.0
        %v6635 = vadd.f32 %v6624, 1.0
        %v6636 = vadd.f32 %v6626, 1.0
        %v6637 = vadd.f32 %v6628, 1.0
        %v6638 = vadd.f32 %v6630, 1.0
        %v6639 = vrcp.pop %v6631
        %v6640 = vmul.f32 1.0, %v6639
        %v6641 = vrcp.pop %v6632
        %v6642 = vmul.f32 1.0, %v6641
        %v6643 = vrcp.pop %v6633
        %v6644 = vmul.f32 1.0, %v6643
        %v6645 = vrcp.pop %v6634
        %v6646 = vmul.f32 1.0, %v6645
        %v6647 = vrcp.pop %v6635
        %v6648 = vmul.f32 1.0, %v6647
        %v6649 = vrcp.pop %v6636
        %v6650 = vmul.f32 1.0, %v6649
        %v6651 = vrcp.pop %v6637
        %v6652 = vmul.f32 1.0, %v6651
        %v6653 = vrcp.pop %v6638
        %v6654 = vmul.f32 1.0, %v6653
        %vm6655 = vcmask 523264
        %6656 = vst.msk [vmem:[%s328] sm:$0xff] %vm6655, %v6640
        %6657 = vst.msk [vmem:[%s328 + $0x8] sm:$0xff] %vm6655, %v6642
        %6658 = vst.msk [vmem:[%s328 + $0x10] sm:$0xff] %vm6655, %v6644
        %6659 = vst.msk [vmem:[%s328 + $0x18] sm:$0xff] %vm6655, %v6646
        %6660 = vst.msk [vmem:[%s328 + $0x20] sm:$0xff] %vm6655, %v6648
        %6661 = vst.msk [vmem:[%s328 + $0x28] sm:$0xff] %vm6655, %v6650
        %6662 = vst.msk [vmem:[%s328 + $0x30] sm:$0xff] %vm6655, %v6652
        %6663 = vst.msk [vmem:[%s328 + $0x38] sm:$0xff] %vm6655, %v6654
        %s6664 = sand.u32 %s181, 1
        %s6665 = scalar_lea.sflag [#allocation5], %s6664
        %s6666 = sand.u32 %s181, 1
        %s6667 = smul.addr %s6666, 64
        %s6668 = scalar_lea.vmem [#allocation13], %s6667
        // Predicated region
        $region69: #{decoder_forward.1} parent=47 // pred_check
          %p6669 = pneg %p191
        $region70: #{decoder_forward.1} parent=47 // pred_check_branch
          %6671 = sbr.rel (%p6669) target = $region72
        $region71: #{decoder_forward.1} parent=47 // pred_region
          %s6673 = ssub.s32 1024, 1024
          %6674 = vsyncadd %s6665, %s6673
          %s6675 = smul.addr %s26, 8
          %s6676 = smul.addr %s6675, 128
          %s6677 = scalar_lea.hbm %s7, %s6676
          %s6678 = sshll.u32 %s6668, 4
          %s6679 = int_to_ptr.vmem [resolvable:$true] %s6678
          %6684 = dma.vmem_to_hbm [thread:$0]  %s6679, 1024, %s6677, %s6665, 128, 128, 8
        $region72: #{decoder_forward.1} parent=47 // pred_fallthru
          _
      $region48: #{decoder_forward.1} parent=5 // pred_fallthru
        _
      %p6685 = scmp.le.s32.totalorder 2, %s21
      // Predicated region
      $region73: #{decoder_forward.1} parent=5 // pred_check
        %p6686 = pneg %p6685
      $region74: #{decoder_forward.1} parent=5 // pred_check_branch
        %6688 = sbr.rel (%p6686) target = $region76
      $region75: #{decoder_forward.1} parent=5 // pred_region
        %s6689 = ssub.s32 %s21, 2
        // Predicated region
        $region77: #{decoder_forward.1} parent=75 // pred_check
          %p6690 = pneg %p197
        $region78: #{decoder_forward.1} parent=75 // pred_check_branch
          %6692 = sbr.rel (%p6690) target = $region80
        $region79: #{decoder_forward.1} parent=75 // pred_region
          %s6693 = sand.u32 %s182, 1
          %s6694 = scalar_lea.sflag [#allocation5], %s6693
          %s6695 = sand.u32 %s182, 1
          %s6696 = smul.addr %s6695, 64
          %s6697 = scalar_lea.vmem [#allocation13], %s6696
          %6698 = dma.done %s6694, 1024
        $region80: #{decoder_forward.1} parent=75 // pred_fallthru
          _
      $region76: #{decoder_forward.1} parent=5 // pred_fallthru
        _
    $region6: #{decoder_forward.1} parent=1 // loop_footer
      %s25 = sadd.s32 1, %s21
    $region7: #{decoder_forward.1} parent=1 // loop_footer_branch
      %20 = sbr.rel target = $region3
    $region8: #{decoder_forward.1} parent=1 // loop_exit
      _
    %6699 = vsyncpa [#allocation4], 1
    %s6700 = scalar_lea.sflag [#allocation4], 1
    %6701 = vsyncpa %s6700, 1
    %6702 = vsyncpa [#allocation8], 1
    %6703 = vsyncpa [#allocation11], 1
    %6704 = vsyncpa [#allocation5], 1
    %s6705 = scalar_lea.sflag [#allocation5], 1
    %6706 = vsyncpa %s6705, 1
    %6707 = vsyncpa [#allocation6], 1
    %s6708 = scalar_lea.sflag [#allocation6], 1
    %6709 = vsyncpa %s6708, 1

</llo_original>
